<compile_context>
chip_gen: v7x
topology: tpu7x:2x2x1
jax: 0.10.0
libtpu: 0.0.40
codegen_flags: <defaults>
</compile_context>

<pallas_src>
import functools

import jax
import jax.numpy as jnp
from jax.experimental import pallas as pl
from jax.experimental.pallas import tpu as pltpu

LATENT = 32


def _round_up(x, m):
    return ((x + m - 1) // m) * m


# ----------------------------------------------------------------------------
# Pallas kernel: fused act(x @ w + b), bf16 MXU inputs, f32 accumulate.
# ----------------------------------------------------------------------------
def _mm_bias_act_kernel(x_ref, w_ref, b_ref, o_ref, *, act):
    y = jnp.dot(x_ref[...], w_ref[...], preferred_element_type=jnp.float32)
    y = y + b_ref[...]
    if act == "elu":
        # alpha=1 ELU; overflow branch of exp is discarded by the select.
        y = jnp.where(y > 0, y, jnp.exp(y) - 1.0)
    elif act == "sigmoid":
        # EUP tanh form: numerically stable, bounded in [0, 1], no VPU divide.
        y = 0.5 * (jnp.tanh(0.5 * y) + 1.0)
    o_ref[...] = y.astype(o_ref.dtype)


def matmul_bias_act(x, w, b, act="none", tm=512):
    """y = act(x @ w + b).  x: (M, K), w: (K, N), b: (N,).

    N is zero-padded to a multiple of 128 (lane-dense output stores), M is
    tiled along a 'parallel' grid with >=2 steps when possible (megacore).
    """
    M, K = x.shape
    K2, N = w.shape
    assert K == K2
    Np = _round_up(N, 128)
    if Np != N:
        w = jnp.pad(w, ((0, 0), (0, Np - N)))
        b = jnp.pad(b, (0, Np - N))

    TM = min(tm, _round_up(M, 16))
    if M > 16 and _round_up(M, TM) // TM < 2:
        TM = _round_up(-(-M // 2), 16)        # split so both TensorCores get work
    M_pad = _round_up(M, TM)
    if M_pad != M:
        x = jnp.pad(x, ((0, M_pad - M), (0, 0)))

    x = x.astype(jnp.bfloat16)
    w = w.astype(jnp.bfloat16)
    b = b.reshape(1, Np).astype(jnp.float32)

    grid = (M_pad // TM,)
    tile_bytes = 2 * (TM * K * 2 + K * Np * 2 + TM * Np * 4 + Np * 4)
    vmem_limit = int(min(max(2 * tile_bytes, 8 << 20), 32 << 20))
    flops = 2 * M_pad * K * Np
    trans = M_pad * Np if act in ("elu", "sigmoid") else 0
    bytes_accessed = M_pad * K * 2 + K * Np * 2 + Np * 4 + M_pad * Np * 4

    out = pl.pallas_call(
        functools.partial(_mm_bias_act_kernel, act=act),
        out_shape=jax.ShapeDtypeStruct((M_pad, Np), jnp.float32),
        grid=grid,
        in_specs=[
            pl.BlockSpec((TM, K), lambda i: (i, 0)),
            pl.BlockSpec((K, Np), lambda i: (0, 0)),
            pl.BlockSpec((1, Np), lambda i: (0, 0)),
        ],
        out_specs=pl.BlockSpec((TM, Np), lambda i: (i, 0)),
        compiler_params=pltpu.CompilerParams(
            dimension_semantics=("parallel",),
            vmem_limit_bytes=vmem_limit,
        ),
        cost_estimate=pl.CostEstimate(
            flops=flops, transcendentals=trans, bytes_accessed=bytes_accessed),
    )(x, w, b)
    if M_pad != M or Np != N:
        out = out[:M, :N]
    return out


# ----------------------------------------------------------------------------
# Pallas kernel: fused means/stds heads + ELU(logvar) + reparameterization.
# ----------------------------------------------------------------------------
def _heads_reparam_kernel(h_ref, wm_ref, bm_ref, ws_ref, bs_ref, eps_ref,
                          mean_ref, logvar_ref, z_ref):
    h = h_ref[...]
    mean = jnp.dot(h, wm_ref[...], preferred_element_type=jnp.float32) + bm_ref[...]
    s = jnp.dot(h, ws_ref[...], preferred_element_type=jnp.float32) + bs_ref[...]
    logvar = jnp.where(s > 0, s, jnp.exp(s) - 1.0)          # F.elu on stds head
    z = mean + eps_ref[...] * jnp.exp(0.5 * logvar)          # uniform eps (rand_like)
    mean_ref[...] = mean
    logvar_ref[...] = logvar
    z_ref[...] = z


def heads_reparam(h, means_w, means_b, stds_w, stds_b, eps):
    """One Pallas call: mean = h@Wm+bm, logvar = elu(h@Ws+bs), z = mu+eps*std."""
    B = h.shape[0]
    f32 = jnp.float32
    vmem = pl.BlockSpec(memory_space=pltpu.MemorySpace.VMEM)
    mean, logvar, z = pl.pallas_call(
        _heads_reparam_kernel,
        out_shape=(jax.ShapeDtypeStruct((B, LATENT), f32),) * 3,
        in_specs=[vmem] * 6,
        out_specs=(vmem, vmem, vmem),
    )(h.astype(f32),
      means_w.T.astype(f32), means_b.reshape(1, -1).astype(f32),
      stds_w.T.astype(f32), stds_b.reshape(1, -1).astype(f32),
      eps.astype(f32))
    return mean, logvar, z


# ----------------------------------------------------------------------------
# Convs in NHWC via im2col + Pallas matmul
# ----------------------------------------------------------------------------
# TODO(synk): im2col/patch extraction is still XLA glue feeding the Pallas matmul;
# an in-kernel gather of overlapping input windows would remove that HBM round-trip.
def _im2col_nhwc(x, kh, kw, stride):
    B, H, W, C = x.shape
    OH = (H - kh) // stride + 1
    OW = (W - kw) // stride + 1
    cols = []
    for i in range(kh):
        for j in range(kw):
            cols.append(x[:, i:i + stride * OH:stride,
                            j:j + stride * OW:stride, :])
    p = jnp.stack(cols, axis=3)                      # (B, OH, OW, kh*kw, C)
    return p.reshape(B * OH * OW, kh * kw * C), OH, OW   # feat = (i*kw+j)*C + c


def conv2d_nhwc(x, w, b, stride, act):
    """x: (B,H,W,IC) NHWC, w: (OC,IC,kh,kw) [PyTorch Conv2d], b: (OC,)."""
    OC, IC, kh, kw = w.shape
    B = x.shape[0]
    patches, OH, OW = _im2col_nhwc(x, kh, kw, stride)
    wmat = w.transpose(2, 3, 1, 0).reshape(kh * kw * IC, OC)   # matches im2col order
    y = matmul_bias_act(patches, wmat, b, act=act)             # (B*OH*OW, OC)
    return y.reshape(B, OH, OW, OC)


def conv_transpose2d_nhwc(x, w, b, stride, act):
    """x: (B,H,W,IC) NHWC, w: (IC,OC,kh,kw) [PyTorch ConvTranspose2d], b: (OC,).

    Sub-pixel (phase) lowering: zero-extend the kernel to k' = ceil(k/stride)*stride,
    then all stride^2 output phases share one stride-1 im2col of the (T-1)-padded
    input (T = k'/stride) and one matmul with N = stride^2*OC; outputs are
    interleaved back and cropped to (H-1)*stride + k (PyTorch, padding=0).
    """
    IC, OC, kh, kw = w.shape
    B, H, W, _ = x.shape
    OH = (H - 1) * stride + kh
    OW = (W - 1) * stride + kw

    if H == 1 and W == 1:
        # 1x1 input: transposed conv is an outer product -> single matmul.
        wmat = w.transpose(0, 2, 3, 1).reshape(IC, kh * kw * OC)
        bvec = jnp.tile(b, kh * kw)
        y = matmul_bias_act(x.reshape(B, IC), wmat, bvec, act=act)
        return y.reshape(B, kh, kw, OC)

    kp = _round_up(max(kh, kw), stride)
    T = kp // stride
    w_ext = jnp.pad(w, ((0, 0), (0, 0), (0, kp - kh), (0, kp - kw)))
    w_ph = w_ext.reshape(IC, OC, T, stride, T, stride)    # ki = m*stride + phase
    w_ph = jnp.flip(w_ph, axis=(2, 4))                    # tap reversal per phase
    w_ph = w_ph.transpose(2, 4, 0, 3, 5, 1)               # (T, T, IC, s, s, OC)
    wmat = w_ph.reshape(T * T * IC, stride * stride * OC)
    bvec = jnp.tile(b, stride * stride)

    xp = jnp.pad(x, ((0, 0), (T - 1, T - 1), (T - 1, T - 1), (0, 0)))
    patches, Qh, Qw = _im2col_nhwc(xp, T, T, 1)           # (B*Qh*Qw, T*T*IC)
    y = matmul_bias_act(patches, wmat, bvec, act=act)     # (B*Qh*Qw, s*s*OC)
    y = y.reshape(B, Qh, Qw, stride, stride, OC)
    y = y.transpose(0, 1, 3, 2, 4, 5).reshape(B, Qh * stride, Qw * stride, OC)
    return y[:, :OH, :OW, :]


# ----------------------------------------------------------------------------
# VAE parameters + forward
# ----------------------------------------------------------------------------
def init_params(key):
    # Deterministic PyTorch-style uniform(-1/sqrt(fan_in), 1/sqrt(fan_in)) init.
    specs = {
        # Conv2d weights: (OC, IC, k, k)
        "c1_w": ((16, 3, 8, 8), 3 * 64),    "c1_b": ((16,), 3 * 64),
        "c2_w": ((32, 16, 4, 4), 16 * 16),  "c2_b": ((32,), 16 * 16),
        "c3_w": ((64, 32, 4, 4), 32 * 16),  "c3_b": ((64,), 32 * 16),
        "c4_w": ((128, 64, 4, 4), 64 * 16), "c4_b": ((128,), 64 * 16),
        # Linear weights: (out, in)
        "means_w": ((32, 128), 128), "means_b": ((32,), 128),
        "stds_w": ((32, 128), 128),  "stds_b": ((32,), 128),
        # ConvTranspose2d weights: (IC, OC, k, k)
        "d1_w": ((32, 128, 6, 6), 128 * 36), "d1_b": ((128,), 128 * 36),
        "d2_w": ((128, 64, 5, 5), 64 * 25),  "d2_b": ((64,), 64 * 25),
        "d3_w": ((64, 32, 4, 4), 32 * 16),   "d3_b": ((32,), 32 * 16),
        "d4_w": ((32, 3, 2, 2), 3 * 4),      "d4_b": ((3,), 3 * 4),
    }
    keys = jax.random.split(key, len(specs))
    params = {}
    for k, (name, (shape, fan_in)) in zip(keys, specs.items()):
        bound = 1.0 / float(fan_in) ** 0.5
        params[name] = jax.random.uniform(k, shape, jnp.float32, -bound, bound)
    return params


def vae_forward(params, x, eps):
    """x: (B, 3, 64, 64) NCHW float32; eps: (B, 32) uniform [0,1) noise."""
    B = x.shape[0]
    h = jnp.transpose(x, (0, 2, 3, 1))                                    # NCHW -> NHWC once
    # encode
    h = conv2d_nhwc(h, params["c1_w"], params["c1_b"], 2, "elu")          # (B,29,29,16)
    h = conv2d_nhwc(h, params["c2_w"], params["c2_b"], 2, "elu")          # (B,13,13,32)
    h = conv2d_nhwc(h, params["c3_w"], params["c3_b"], 2, "elu")          # (B,5,5,64)
    h = conv2d_nhwc(h, params["c4_w"], params["c4_b"], 2, "elu")          # (B,1,1,128)
    h = h.reshape(B, 128)
    # latent heads + reparam (one fused Pallas call)
    mean, logvar, z = heads_reparam(h, params["means_w"], params["means_b"],
                                    params["stds_w"], params["stds_b"], eps)
    # decode
    d = z.reshape(B, 1, 1, LATENT)
    d = conv_transpose2d_nhwc(d, params["d1_w"], params["d1_b"], 2, "elu")      # (B,6,6,128)
    d = conv_transpose2d_nhwc(d, params["d2_w"], params["d2_b"], 2, "elu")      # (B,15,15,64)
    d = conv_transpose2d_nhwc(d, params["d3_w"], params["d3_b"], 2, "elu")      # (B,32,32,32)
    d = conv_transpose2d_nhwc(d, params["d4_w"], params["d4_b"], 2, "sigmoid")  # (B,64,64,3)
    pred = jnp.transpose(d, (0, 3, 1, 2))                                 # NHWC -> NCHW once
    return pred, mean, logvar


# TODO(synk): optimizer (Adam), backward/loss (maj, eval_loss) and demo() are
# training/host utilities with no forward-pass Pallas equivalent; not implemented.

if __name__ == "__main__":
    key = jax.random.PRNGKey(0)
    pkey, xkey, ekey = jax.random.split(key, 3)
    params = init_params(pkey)
    x = jax.random.uniform(xkey, (2, 3, 64, 64), dtype=jnp.float32)
    eps = jax.random.uniform(ekey, (2, 32), dtype=jnp.float32)

    pred, mean, logvar = jax.jit(vae_forward)(params, x, eps)
    jax.block_until_ready((pred, mean, logvar))

    assert pred.shape == (2, 3, 64, 64), pred.shape
    assert mean.shape == (2, 32), mean.shape
    assert logvar.shape == (2, 32), logvar.shape
    assert bool(jnp.all(jnp.isfinite(pred)))
    assert bool(jnp.all((pred >= 0.0) & (pred <= 1.0)))  # sigmoid output
    print("KERNEL_OK")
</pallas_src>

<mosaic_0001>
module attributes {stable_mosaic.version = 11 : i64} {
  func.func @_mm_bias_act_kernel(%arg0: i32, %arg1: memref<512x192xbf16, #tpu.memory_space<vmem>>, %arg2: memref<192x128xbf16, #tpu.memory_space<vmem>>, %arg3: memref<1x128xf32, #tpu.memory_space<vmem>>, %arg4: memref<512x128xf32, #tpu.memory_space<vmem>>) attributes {dimension_semantics = [#tpu.dimension_semantics<parallel>], iteration_bounds = array<i64: 4>, scalar_prefetch = 0 : i64, scratch_operands = 0 : i64, tpu.core_type = #tpu.core_type<tc>, window_params = [{transform_indices = @transform_0, window_bounds = array<i64: 512, 192>}, {pipeline_mode = #tpu.pipeline_mode<synchronous>, transform_indices = @transform_1, window_bounds = array<i64: 192, 128>}, {pipeline_mode = #tpu.pipeline_mode<synchronous>, transform_indices = @transform_2, window_bounds = array<i64: 1, 128>}, {transform_indices = @transform_3, window_bounds = array<i64: 512, 128>}]} {
    %c0 = arith.constant 0 : index
    %c0_0 = arith.constant 0 : index
    %0 = vector.load %arg1[%c0, %c0_0] : memref<512x192xbf16, #tpu.memory_space<vmem>>, vector<512x192xbf16>
    %c0_1 = arith.constant 0 : index
    %c0_2 = arith.constant 0 : index
    %1 = vector.load %arg2[%c0_1, %c0_2] : memref<192x128xbf16, #tpu.memory_space<vmem>>, vector<192x128xbf16>
    %cst = arith.constant dense<0.000000e+00> : vector<512x128xf32>
    %2 = tpu.matmul %0, %1, %cst {dimension_numbers = #tpu.dot_dimension_numbers<[1], [0], [0], [1], [0, 0, 1, 1], [], []>} : vector<512x192xbf16>, vector<192x128xbf16>, vector<512x128xf32> -> vector<512x128xf32>
    %c0_3 = arith.constant 0 : index
    %c0_4 = arith.constant 0 : index
    %3 = vector.load %arg3[%c0_3, %c0_4] : memref<1x128xf32, #tpu.memory_space<vmem>>, vector<1x128xf32>
    %4 = vector.broadcast %3 : vector<1x128xf32> to vector<512x128xf32>
    %5 = arith.addf %2, %4 : vector<512x128xf32>
    %cst_5 = arith.constant 0.000000e+00 : f32
    %6 = vector.broadcast %cst_5 : f32 to vector<512x128xf32>
    %7 = arith.cmpf ogt, %5, %6 : vector<512x128xf32>
    %8 = math.exp %5 : vector<512x128xf32>
    %cst_6 = arith.constant 1.000000e+00 : f32
    %9 = vector.broadcast %cst_6 : f32 to vector<512x128xf32>
    %10 = arith.subf %8, %9 : vector<512x128xf32>
    %11 = arith.select %7, %5, %10 : vector<512x128xi1>, vector<512x128xf32>
    %c0_7 = arith.constant 0 : index
    %c0_8 = arith.constant 0 : index
    %12 = vector.load %arg4[%c0_7, %c0_8] : memref<512x128xf32, #tpu.memory_space<vmem>>, vector<512x128xf32>
    tpu.vector_store %arg4[%c0_7, %c0_8], %11 {strides = array<i32>} : memref<512x128xf32, #tpu.memory_space<vmem>>, vector<512x128xf32>,
    return
  }
  func.func @transform_0(%arg0: i32) -> (i32, i32) {
    %c0_i32 = arith.constant 0 : i32
    %c0_i32_0 = arith.constant 0 : i32
    return %arg0, %c0_i32 : i32, i32
  }
  func.func @transform_1(%arg0: i32) -> (i32, i32) {
    %c0_i32 = arith.constant 0 : i32
    %c0_i32_0 = arith.constant 0 : i32
    %c0_i32_1 = arith.constant 0 : i32
    return %c0_i32, %c0_i32_0 : i32, i32
  }
  func.func @transform_2(%arg0: i32) -> (i32, i32) {
    %c0_i32 = arith.constant 0 : i32
    %c0_i32_0 = arith.constant 0 : i32
    %c0_i32_1 = arith.constant 0 : i32
    return %c0_i32, %c0_i32_0 : i32, i32
  }
  func.func @transform_3(%arg0: i32) -> (i32, i32) {
    %c0_i32 = arith.constant 0 : i32
    %c0_i32_0 = arith.constant 0 : i32
    return %arg0, %c0_i32 : i32, i32
  }
}

module attributes {stable_mosaic.version = 11 : i64} {
  func.func @_mm_bias_act_kernel(%arg0: i32, %arg1: memref<176x256xbf16, #tpu.memory_space<vmem>>, %arg2: memref<256x128xbf16, #tpu.memory_space<vmem>>, %arg3: memref<1x128xf32, #tpu.memory_space<vmem>>, %arg4: memref<176x128xf32, #tpu.memory_space<vmem>>) attributes {dimension_semantics = [#tpu.dimension_semantics<parallel>], iteration_bounds = array<i64: 2>, scalar_prefetch = 0 : i64, scratch_operands = 0 : i64, tpu.core_type = #tpu.core_type<tc>, window_params = [{transform_indices = @transform_0, window_bounds = array<i64: 176, 256>}, {pipeline_mode = #tpu.pipeline_mode<synchronous>, transform_indices = @transform_1, window_bounds = array<i64: 256, 128>}, {pipeline_mode = #tpu.pipeline_mode<synchronous>, transform_indices = @transform_2, window_bounds = array<i64: 1, 128>}, {transform_indices = @transform_3, window_bounds = array<i64: 176, 128>}]} {
    %c0 = arith.constant 0 : index
    %c0_0 = arith.constant 0 : index
    %0 = vector.load %arg1[%c0, %c0_0] : memref<176x256xbf16, #tpu.memory_space<vmem>>, vector<176x256xbf16>
    %c0_1 = arith.constant 0 : index
    %c0_2 = arith.constant 0 : index
    %1 = vector.load %arg2[%c0_1, %c0_2] : memref<256x128xbf16, #tpu.memory_space<vmem>>, vector<256x128xbf16>
    %cst = arith.constant dense<0.000000e+00> : vector<176x128xf32>
    %2 = tpu.matmul %0, %1, %cst {dimension_numbers = #tpu.dot_dimension_numbers<[1], [0], [0], [1], [0, 0, 1, 1], [], []>} : vector<176x256xbf16>, vector<256x128xbf16>, vector<176x128xf32> -> vector<176x128xf32>
    %c0_3 = arith.constant 0 : index
    %c0_4 = arith.constant 0 : index
    %3 = vector.load %arg3[%c0_3, %c0_4] : memref<1x128xf32, #tpu.memory_space<vmem>>, vector<1x128xf32>
    %4 = vector.broadcast %3 : vector<1x128xf32> to vector<176x128xf32>
    %5 = arith.addf %2, %4 : vector<176x128xf32>
    %cst_5 = arith.constant 0.000000e+00 : f32
    %6 = vector.broadcast %cst_5 : f32 to vector<176x128xf32>
    %7 = arith.cmpf ogt, %5, %6 : vector<176x128xf32>
    %8 = math.exp %5 : vector<176x128xf32>
    %cst_6 = arith.constant 1.000000e+00 : f32
    %9 = vector.broadcast %cst_6 : f32 to vector<176x128xf32>
    %10 = arith.subf %8, %9 : vector<176x128xf32>
    %11 = arith.select %7, %5, %10 : vector<176x128xi1>, vector<176x128xf32>
    %c0_7 = arith.constant 0 : index
    %c0_8 = arith.constant 0 : index
    %12 = vector.load %arg4[%c0_7, %c0_8] : memref<176x128xf32, #tpu.memory_space<vmem>>, vector<176x128xf32>
    tpu.vector_store %arg4[%c0_7, %c0_8], %11 {strides = array<i32>} : memref<176x128xf32, #tpu.memory_space<vmem>>, vector<176x128xf32>,
    return
  }
  func.func @transform_0(%arg0: i32) -> (i32, i32) {
    %c0_i32 = arith.constant 0 : i32
    %c0_i32_0 = arith.constant 0 : i32
    return %arg0, %c0_i32 : i32, i32
  }
  func.func @transform_1(%arg0: i32) -> (i32, i32) {
    %c0_i32 = arith.constant 0 : i32
    %c0_i32_0 = arith.constant 0 : i32
    %c0_i32_1 = arith.constant 0 : i32
    return %c0_i32, %c0_i32_0 : i32, i32
  }
  func.func @transform_2(%arg0: i32) -> (i32, i32) {
    %c0_i32 = arith.constant 0 : i32
    %c0_i32_0 = arith.constant 0 : i32
    %c0_i32_1 = arith.constant 0 : i32
    return %c0_i32, %c0_i32_0 : i32, i32
  }
  func.func @transform_3(%arg0: i32) -> (i32, i32) {
    %c0_i32 = arith.constant 0 : i32
    %c0_i32_0 = arith.constant 0 : i32
    return %arg0, %c0_i32 : i32, i32
  }
}

module attributes {stable_mosaic.version = 11 : i64} {
  func.func @_mm_bias_act_kernel(%arg0: i32, %arg1: memref<32x512xbf16, #tpu.memory_space<vmem>>, %arg2: memref<512x128xbf16, #tpu.memory_space<vmem>>, %arg3: memref<1x128xf32, #tpu.memory_space<vmem>>, %arg4: memref<32x128xf32, #tpu.memory_space<vmem>>) attributes {dimension_semantics = [#tpu.dimension_semantics<parallel>], iteration_bounds = array<i64: 2>, scalar_prefetch = 0 : i64, scratch_operands = 0 : i64, tpu.core_type = #tpu.core_type<tc>, window_params = [{transform_indices = @transform_0, window_bounds = array<i64: 32, 512>}, {pipeline_mode = #tpu.pipeline_mode<synchronous>, transform_indices = @transform_1, window_bounds = array<i64: 512, 128>}, {pipeline_mode = #tpu.pipeline_mode<synchronous>, transform_indices = @transform_2, window_bounds = array<i64: 1, 128>}, {transform_indices = @transform_3, window_bounds = array<i64: 32, 128>}]} {
    %c0 = arith.constant 0 : index
    %c0_0 = arith.constant 0 : index
    %0 = vector.load %arg1[%c0, %c0_0] : memref<32x512xbf16, #tpu.memory_space<vmem>>, vector<32x512xbf16>
    %c0_1 = arith.constant 0 : index
    %c0_2 = arith.constant 0 : index
    %1 = vector.load %arg2[%c0_1, %c0_2] : memref<512x128xbf16, #tpu.memory_space<vmem>>, vector<512x128xbf16>
    %cst = arith.constant dense<0.000000e+00> : vector<32x128xf32>
    %2 = tpu.matmul %0, %1, %cst {dimension_numbers = #tpu.dot_dimension_numbers<[1], [0], [0], [1], [0, 0, 1, 1], [], []>} : vector<32x512xbf16>, vector<512x128xbf16>, vector<32x128xf32> -> vector<32x128xf32>
    %c0_3 = arith.constant 0 : index
    %c0_4 = arith.constant 0 : index
    %3 = vector.load %arg3[%c0_3, %c0_4] : memref<1x128xf32, #tpu.memory_space<vmem>>, vector<1x128xf32>
    %4 = vector.broadcast %3 : vector<1x128xf32> to vector<32x128xf32>
    %5 = arith.addf %2, %4 : vector<32x128xf32>
    %cst_5 = arith.constant 0.000000e+00 : f32
    %6 = vector.broadcast %cst_5 : f32 to vector<32x128xf32>
    %7 = arith.cmpf ogt, %5, %6 : vector<32x128xf32>
    %8 = math.exp %5 : vector<32x128xf32>
    %cst_6 = arith.constant 1.000000e+00 : f32
    %9 = vector.broadcast %cst_6 : f32 to vector<32x128xf32>
    %10 = arith.subf %8, %9 : vector<32x128xf32>
    %11 = arith.select %7, %5, %10 : vector<32x128xi1>, vector<32x128xf32>
    %c0_7 = arith.constant 0 : index
    %c0_8 = arith.constant 0 : index
    %12 = vector.load %arg4[%c0_7, %c0_8] : memref<32x128xf32, #tpu.memory_space<vmem>>, vector<32x128xf32>
    tpu.vector_store %arg4[%c0_7, %c0_8], %11 {strides = array<i32>} : memref<32x128xf32, #tpu.memory_space<vmem>>, vector<32x128xf32>,
    return
  }
  func.func @transform_0(%arg0: i32) -> (i32, i32) {
    %c0_i32 = arith.constant 0 : i32
    %c0_i32_0 = arith.constant 0 : i32
    return %arg0, %c0_i32 : i32, i32
  }
  func.func @transform_1(%arg0: i32) -> (i32, i32) {
    %c0_i32 = arith.constant 0 : i32
    %c0_i32_0 = arith.constant 0 : i32
    %c0_i32_1 = arith.constant 0 : i32
    return %c0_i32, %c0_i32_0 : i32, i32
  }
  func.func @transform_2(%arg0: i32) -> (i32, i32) {
    %c0_i32 = arith.constant 0 : i32
    %c0_i32_0 = arith.constant 0 : i32
    %c0_i32_1 = arith.constant 0 : i32
    return %c0_i32, %c0_i32_0 : i32, i32
  }
  func.func @transform_3(%arg0: i32) -> (i32, i32) {
    %c0_i32 = arith.constant 0 : i32
    %c0_i32_0 = arith.constant 0 : i32
    return %arg0, %c0_i32 : i32, i32
  }
}

module attributes {stable_mosaic.version = 11 : i64} {
  func.func @_mm_bias_act_kernel(%arg0: i32, %arg1: memref<16x1024xbf16, #tpu.memory_space<vmem>>, %arg2: memref<1024x128xbf16, #tpu.memory_space<vmem>>, %arg3: memref<1x128xf32, #tpu.memory_space<vmem>>, %arg4: memref<16x128xf32, #tpu.memory_space<vmem>>) attributes {dimension_semantics = [#tpu.dimension_semantics<parallel>], iteration_bounds = array<i64: 1>, scalar_prefetch = 0 : i64, scratch_operands = 0 : i64, tpu.core_type = #tpu.core_type<tc>, window_params = [{transform_indices = @transform_0, window_bounds = array<i64: 16, 1024>}, {pipeline_mode = #tpu.pipeline_mode<synchronous>, transform_indices = @transform_1, window_bounds = array<i64: 1024, 128>}, {pipeline_mode = #tpu.pipeline_mode<synchronous>, transform_indices = @transform_2, window_bounds = array<i64: 1, 128>}, {transform_indices = @transform_3, window_bounds = array<i64: 16, 128>}]} {
    %c0 = arith.constant 0 : index
    %c0_0 = arith.constant 0 : index
    %0 = vector.load %arg1[%c0, %c0_0] : memref<16x1024xbf16, #tpu.memory_space<vmem>>, vector<16x1024xbf16>
    %c0_1 = arith.constant 0 : index
    %c0_2 = arith.constant 0 : index
    %1 = vector.load %arg2[%c0_1, %c0_2] : memref<1024x128xbf16, #tpu.memory_space<vmem>>, vector<1024x128xbf16>
    %cst = arith.constant dense<0.000000e+00> : vector<16x128xf32>
    %2 = tpu.matmul %0, %1, %cst {dimension_numbers = #tpu.dot_dimension_numbers<[1], [0], [0], [1], [0, 0, 1, 1], [], []>} : vector<16x1024xbf16>, vector<1024x128xbf16>, vector<16x128xf32> -> vector<16x128xf32>
    %c0_3 = arith.constant 0 : index
    %c0_4 = arith.constant 0 : index
    %3 = vector.load %arg3[%c0_3, %c0_4] : memref<1x128xf32, #tpu.memory_space<vmem>>, vector<1x128xf32>
    %4 = vector.broadcast %3 : vector<1x128xf32> to vector<16x128xf32>
    %5 = arith.addf %2, %4 : vector<16x128xf32>
    %cst_5 = arith.constant 0.000000e+00 : f32
    %6 = vector.broadcast %cst_5 : f32 to vector<16x128xf32>
    %7 = arith.cmpf ogt, %5, %6 : vector<16x128xf32>
    %8 = math.exp %5 : vector<16x128xf32>
    %cst_6 = arith.constant 1.000000e+00 : f32
    %9 = vector.broadcast %cst_6 : f32 to vector<16x128xf32>
    %10 = arith.subf %8, %9 : vector<16x128xf32>
    %11 = arith.select %7, %5, %10 : vector<16x128xi1>, vector<16x128xf32>
    %c0_7 = arith.constant 0 : index
    %c0_8 = arith.constant 0 : index
    %12 = vector.load %arg4[%c0_7, %c0_8] : memref<16x128xf32, #tpu.memory_space<vmem>>, vector<16x128xf32>
    tpu.vector_store %arg4[%c0_7, %c0_8], %11 {strides = array<i32>} : memref<16x128xf32, #tpu.memory_space<vmem>>, vector<16x128xf32>,
    return
  }
  func.func @transform_0(%arg0: i32) -> (i32, i32) {
    %c0_i32 = arith.constant 0 : i32
    %c0_i32_0 = arith.constant 0 : i32
    return %arg0, %c0_i32 : i32, i32
  }
  func.func @transform_1(%arg0: i32) -> (i32, i32) {
    %c0_i32 = arith.constant 0 : i32
    %c0_i32_0 = arith.constant 0 : i32
    %c0_i32_1 = arith.constant 0 : i32
    return %c0_i32, %c0_i32_0 : i32, i32
  }
  func.func @transform_2(%arg0: i32) -> (i32, i32) {
    %c0_i32 = arith.constant 0 : i32
    %c0_i32_0 = arith.constant 0 : i32
    %c0_i32_1 = arith.constant 0 : i32
    return %c0_i32, %c0_i32_0 : i32, i32
  }
  func.func @transform_3(%arg0: i32) -> (i32, i32) {
    %c0_i32 = arith.constant 0 : i32
    %c0_i32_0 = arith.constant 0 : i32
    return %arg0, %c0_i32 : i32, i32
  }
}

module attributes {stable_mosaic.version = 11 : i64} {
  func.func @_heads_reparam_kernel(%arg0: memref<2x128xf32, #tpu.memory_space<vmem>>, %arg1: memref<128x32xf32, #tpu.memory_space<vmem>>, %arg2: memref<1x32xf32, #tpu.memory_space<vmem>>, %arg3: memref<128x32xf32, #tpu.memory_space<vmem>>, %arg4: memref<1x32xf32, #tpu.memory_space<vmem>>, %arg5: memref<2x32xf32, #tpu.memory_space<vmem>>, %arg6: memref<2x32xf32, #tpu.memory_space<vmem>>, %arg7: memref<2x32xf32, #tpu.memory_space<vmem>>, %arg8: memref<2x32xf32, #tpu.memory_space<vmem>>) attributes {dimension_semantics = [], scalar_prefetch = 0 : i64, scratch_operands = 0 : i64, tpu.core_type = #tpu.core_type<tc>} {
    %c0 = arith.constant 0 : index
    %c0_0 = arith.constant 0 : index
    %0 = vector.load %arg0[%c0, %c0_0] : memref<2x128xf32, #tpu.memory_space<vmem>>, vector<2x128xf32>
    %c0_1 = arith.constant 0 : index
    %c0_2 = arith.constant 0 : index
    %1 = vector.load %arg1[%c0_1, %c0_2] : memref<128x32xf32, #tpu.memory_space<vmem>>, vector<128x32xf32>
    %cst = arith.constant dense<0.000000e+00> : vector<2x32xf32>
    %2 = tpu.matmul %0, %1, %cst {dimension_numbers = #tpu.dot_dimension_numbers<[1], [0], [0], [1], [0, 0, 1, 1], [], []>} : vector<2x128xf32>, vector<128x32xf32>, vector<2x32xf32> -> vector<2x32xf32>
    %c0_3 = arith.constant 0 : index
    %c0_4 = arith.constant 0 : index
    %3 = vector.load %arg2[%c0_3, %c0_4] : memref<1x32xf32, #tpu.memory_space<vmem>>, vector<1x32xf32>
    %4 = vector.broadcast %3 : vector<1x32xf32> to vector<2x32xf32>
    %5 = arith.addf %2, %4 : vector<2x32xf32>
    %c0_5 = arith.constant 0 : index
    %c0_6 = arith.constant 0 : index
    %6 = vector.load %arg3[%c0_5, %c0_6] : memref<128x32xf32, #tpu.memory_space<vmem>>, vector<128x32xf32>
    %cst_7 = arith.constant dense<0.000000e+00> : vector<2x32xf32>
    %7 = tpu.matmul %0, %6, %cst_7 {dimension_numbers = #tpu.dot_dimension_numbers<[1], [0], [0], [1], [0, 0, 1, 1], [], []>} : vector<2x128xf32>, vector<128x32xf32>, vector<2x32xf32> -> vector<2x32xf32>
    %c0_8 = arith.constant 0 : index
    %c0_9 = arith.constant 0 : index
    %8 = vector.load %arg4[%c0_8, %c0_9] : memref<1x32xf32, #tpu.memory_space<vmem>>, vector<1x32xf32>
    %9 = vector.broadcast %8 : vector<1x32xf32> to vector<2x32xf32>
    %10 = arith.addf %7, %9 : vector<2x32xf32>
    %cst_10 = arith.constant 0.000000e+00 : f32
    %11 = vector.broadcast %cst_10 : f32 to vector<2x32xf32>
    %12 = arith.cmpf ogt, %10, %11 : vector<2x32xf32>
    %13 = math.exp %10 : vector<2x32xf32>
    %cst_11 = arith.constant 1.000000e+00 : f32
    %14 = vector.broadcast %cst_11 : f32 to vector<2x32xf32>
    %15 = arith.subf %13, %14 : vector<2x32xf32>
    %16 = arith.select %12, %10, %15 : vector<2x32xi1>, vector<2x32xf32>
    %c0_12 = arith.constant 0 : index
    %c0_13 = arith.constant 0 : index
    %17 = vector.load %arg5[%c0_12, %c0_13] : memref<2x32xf32, #tpu.memory_space<vmem>>, vector<2x32xf32>
    %cst_14 = arith.constant 5.000000e-01 : f32
    %18 = vector.broadcast %cst_14 : f32 to vector<2x32xf32>
    %19 = arith.mulf %18, %16 : vector<2x32xf32>
    %20 = math.exp %19 : vector<2x32xf32>
    %21 = arith.mulf %17, %20 : vector<2x32xf32>
    %22 = arith.addf %5, %21 : vector<2x32xf32>
    %c0_15 = arith.constant 0 : index
    %c0_16 = arith.constant 0 : index
    %23 = vector.load %arg6[%c0_15, %c0_16] : memref<2x32xf32, #tpu.memory_space<vmem>>, vector<2x32xf32>
    tpu.vector_store %arg6[%c0_15, %c0_16], %5 {strides = array<i32>} : memref<2x32xf32, #tpu.memory_space<vmem>>, vector<2x32xf32>,
    %c0_17 = arith.constant 0 : index
    %c0_18 = arith.constant 0 : index
    %24 = vector.load %arg7[%c0_17, %c0_18] : memref<2x32xf32, #tpu.memory_space<vmem>>, vector<2x32xf32>
    tpu.vector_store %arg7[%c0_17, %c0_18], %16 {strides = array<i32>} : memref<2x32xf32, #tpu.memory_space<vmem>>, vector<2x32xf32>,
    %c0_19 = arith.constant 0 : index
    %c0_20 = arith.constant 0 : index
    %25 = vector.load %arg8[%c0_19, %c0_20] : memref<2x32xf32, #tpu.memory_space<vmem>>, vector<2x32xf32>
    tpu.vector_store %arg8[%c0_19, %c0_20], %22 {strides = array<i32>} : memref<2x32xf32, #tpu.memory_space<vmem>>, vector<2x32xf32>,
    return
  }
}

module attributes {stable_mosaic.version = 11 : i64} {
  func.func @_mm_bias_act_kernel(%arg0: i32, %arg1: memref<16x32xbf16, #tpu.memory_space<vmem>>, %arg2: memref<32x4608xbf16, #tpu.memory_space<vmem>>, %arg3: memref<1x4608xf32, #tpu.memory_space<vmem>>, %arg4: memref<16x4608xf32, #tpu.memory_space<vmem>>) attributes {dimension_semantics = [#tpu.dimension_semantics<parallel>], iteration_bounds = array<i64: 1>, scalar_prefetch = 0 : i64, scratch_operands = 0 : i64, tpu.core_type = #tpu.core_type<tc>, window_params = [{transform_indices = @transform_0, window_bounds = array<i64: 16, 32>}, {pipeline_mode = #tpu.pipeline_mode<synchronous>, transform_indices = @transform_1, window_bounds = array<i64: 32, 4608>}, {pipeline_mode = #tpu.pipeline_mode<synchronous>, transform_indices = @transform_2, window_bounds = array<i64: 1, 4608>}, {transform_indices = @transform_3, window_bounds = array<i64: 16, 4608>}]} {
    %c0 = arith.constant 0 : index
    %c0_0 = arith.constant 0 : index
    %0 = vector.load %arg1[%c0, %c0_0] : memref<16x32xbf16, #tpu.memory_space<vmem>>, vector<16x32xbf16>
    %c0_1 = arith.constant 0 : index
    %c0_2 = arith.constant 0 : index
    %1 = vector.load %arg2[%c0_1, %c0_2] : memref<32x4608xbf16, #tpu.memory_space<vmem>>, vector<32x4608xbf16>
    %cst = arith.constant dense<0.000000e+00> : vector<16x4608xf32>
    %2 = tpu.matmul %0, %1, %cst {dimension_numbers = #tpu.dot_dimension_numbers<[1], [0], [0], [1], [0, 0, 1, 1], [], []>} : vector<16x32xbf16>, vector<32x4608xbf16>, vector<16x4608xf32> -> vector<16x4608xf32>
    %c0_3 = arith.constant 0 : index
    %c0_4 = arith.constant 0 : index
    %3 = vector.load %arg3[%c0_3, %c0_4] : memref<1x4608xf32, #tpu.memory_space<vmem>>, vector<1x4608xf32>
    %4 = vector.broadcast %3 : vector<1x4608xf32> to vector<16x4608xf32>
    %5 = arith.addf %2, %4 : vector<16x4608xf32>
    %cst_5 = arith.constant 0.000000e+00 : f32
    %6 = vector.broadcast %cst_5 : f32 to vector<16x4608xf32>
    %7 = arith.cmpf ogt, %5, %6 : vector<16x4608xf32>
    %8 = math.exp %5 : vector<16x4608xf32>
    %cst_6 = arith.constant 1.000000e+00 : f32
    %9 = vector.broadcast %cst_6 : f32 to vector<16x4608xf32>
    %10 = arith.subf %8, %9 : vector<16x4608xf32>
    %11 = arith.select %7, %5, %10 : vector<16x4608xi1>, vector<16x4608xf32>
    %c0_7 = arith.constant 0 : index
    %c0_8 = arith.constant 0 : index
    %12 = vector.load %arg4[%c0_7, %c0_8] : memref<16x4608xf32, #tpu.memory_space<vmem>>, vector<16x4608xf32>
    tpu.vector_store %arg4[%c0_7, %c0_8], %11 {strides = array<i32>} : memref<16x4608xf32, #tpu.memory_space<vmem>>, vector<16x4608xf32>,
    return
  }
  func.func @transform_0(%arg0: i32) -> (i32, i32) {
    %c0_i32 = arith.constant 0 : i32
    %c0_i32_0 = arith.constant 0 : i32
    return %arg0, %c0_i32 : i32, i32
  }
  func.func @transform_1(%arg0: i32) -> (i32, i32) {
    %c0_i32 = arith.constant 0 : i32
    %c0_i32_0 = arith.constant 0 : i32
    %c0_i32_1 = arith.constant 0 : i32
    return %c0_i32, %c0_i32_0 : i32, i32
  }
  func.func @transform_2(%arg0: i32) -> (i32, i32) {
    %c0_i32 = arith.constant 0 : i32
    %c0_i32_0 = arith.constant 0 : i32
    %c0_i32_1 = arith.constant 0 : i32
    return %c0_i32, %c0_i32_0 : i32, i32
  }
  func.func @transform_3(%arg0: i32) -> (i32, i32) {
    %c0_i32 = arith.constant 0 : i32
    %c0_i32_0 = arith.constant 0 : i32
    return %arg0, %c0_i32 : i32, i32
  }
}

module attributes {stable_mosaic.version = 11 : i64} {
  func.func @_mm_bias_act_kernel(%arg0: i32, %arg1: memref<64x1152xbf16, #tpu.memory_space<vmem>>, %arg2: memref<1152x256xbf16, #tpu.memory_space<vmem>>, %arg3: memref<1x256xf32, #tpu.memory_space<vmem>>, %arg4: memref<64x256xf32, #tpu.memory_space<vmem>>) attributes {dimension_semantics = [#tpu.dimension_semantics<parallel>], iteration_bounds = array<i64: 2>, scalar_prefetch = 0 : i64, scratch_operands = 0 : i64, tpu.core_type = #tpu.core_type<tc>, window_params = [{transform_indices = @transform_0, window_bounds = array<i64: 64, 1152>}, {pipeline_mode = #tpu.pipeline_mode<synchronous>, transform_indices = @transform_1, window_bounds = array<i64: 1152, 256>}, {pipeline_mode = #tpu.pipeline_mode<synchronous>, transform_indices = @transform_2, window_bounds = array<i64: 1, 256>}, {transform_indices = @transform_3, window_bounds = array<i64: 64, 256>}]} {
    %c0 = arith.constant 0 : index
    %c0_0 = arith.constant 0 : index
    %0 = vector.load %arg1[%c0, %c0_0] : memref<64x1152xbf16, #tpu.memory_space<vmem>>, vector<64x1152xbf16>
    %c0_1 = arith.constant 0 : index
    %c0_2 = arith.constant 0 : index
    %1 = vector.load %arg2[%c0_1, %c0_2] : memref<1152x256xbf16, #tpu.memory_space<vmem>>, vector<1152x256xbf16>
    %cst = arith.constant dense<0.000000e+00> : vector<64x256xf32>
    %2 = tpu.matmul %0, %1, %cst {dimension_numbers = #tpu.dot_dimension_numbers<[1], [0], [0], [1], [0, 0, 1, 1], [], []>} : vector<64x1152xbf16>, vector<1152x256xbf16>, vector<64x256xf32> -> vector<64x256xf32>
    %c0_3 = arith.constant 0 : index
    %c0_4 = arith.constant 0 : index
    %3 = vector.load %arg3[%c0_3, %c0_4] : memref<1x256xf32, #tpu.memory_space<vmem>>, vector<1x256xf32>
    %4 = vector.broadcast %3 : vector<1x256xf32> to vector<64x256xf32>
    %5 = arith.addf %2, %4 : vector<64x256xf32>
    %cst_5 = arith.constant 0.000000e+00 : f32
    %6 = vector.broadcast %cst_5 : f32 to vector<64x256xf32>
    %7 = arith.cmpf ogt, %5, %6 : vector<64x256xf32>
    %8 = math.exp %5 : vector<64x256xf32>
    %cst_6 = arith.constant 1.000000e+00 : f32
    %9 = vector.broadcast %cst_6 : f32 to vector<64x256xf32>
    %10 = arith.subf %8, %9 : vector<64x256xf32>
    %11 = arith.select %7, %5, %10 : vector<64x256xi1>, vector<64x256xf32>
    %c0_7 = arith.constant 0 : index
    %c0_8 = arith.constant 0 : index
    %12 = vector.load %arg4[%c0_7, %c0_8] : memref<64x256xf32, #tpu.memory_space<vmem>>, vector<64x256xf32>
    tpu.vector_store %arg4[%c0_7, %c0_8], %11 {strides = array<i32>} : memref<64x256xf32, #tpu.memory_space<vmem>>, vector<64x256xf32>,
    return
  }
  func.func @transform_0(%arg0: i32) -> (i32, i32) {
    %c0_i32 = arith.constant 0 : i32
    %c0_i32_0 = arith.constant 0 : i32
    return %arg0, %c0_i32 : i32, i32
  }
  func.func @transform_1(%arg0: i32) -> (i32, i32) {
    %c0_i32 = arith.constant 0 : i32
    %c0_i32_0 = arith.constant 0 : i32
    %c0_i32_1 = arith.constant 0 : i32
    return %c0_i32, %c0_i32_0 : i32, i32
  }
  func.func @transform_2(%arg0: i32) -> (i32, i32) {
    %c0_i32 = arith.constant 0 : i32
    %c0_i32_0 = arith.constant 0 : i32
    %c0_i32_1 = arith.constant 0 : i32
    return %c0_i32, %c0_i32_0 : i32, i32
  }
  func.func @transform_3(%arg0: i32) -> (i32, i32) {
    %c0_i32 = arith.constant 0 : i32
    %c0_i32_0 = arith.constant 0 : i32
    return %arg0, %c0_i32 : i32, i32
  }
}

module attributes {stable_mosaic.version = 11 : i64} {
  func.func @_mm_bias_act_kernel(%arg0: i32, %arg1: memref<256x256xbf16, #tpu.memory_space<vmem>>, %arg2: memref<256x128xbf16, #tpu.memory_space<vmem>>, %arg3: memref<1x128xf32, #tpu.memory_space<vmem>>, %arg4: memref<256x128xf32, #tpu.memory_space<vmem>>) attributes {dimension_semantics = [#tpu.dimension_semantics<parallel>], iteration_bounds = array<i64: 2>, scalar_prefetch = 0 : i64, scratch_operands = 0 : i64, tpu.core_type = #tpu.core_type<tc>, window_params = [{transform_indices = @transform_0, window_bounds = array<i64: 256, 256>}, {pipeline_mode = #tpu.pipeline_mode<synchronous>, transform_indices = @transform_1, window_bounds = array<i64: 256, 128>}, {pipeline_mode = #tpu.pipeline_mode<synchronous>, transform_indices = @transform_2, window_bounds = array<i64: 1, 128>}, {transform_indices = @transform_3, window_bounds = array<i64: 256, 128>}]} {
    %c0 = arith.constant 0 : index
    %c0_0 = arith.constant 0 : index
    %0 = vector.load %arg1[%c0, %c0_0] : memref<256x256xbf16, #tpu.memory_space<vmem>>, vector<256x256xbf16>
    %c0_1 = arith.constant 0 : index
    %c0_2 = arith.constant 0 : index
    %1 = vector.load %arg2[%c0_1, %c0_2] : memref<256x128xbf16, #tpu.memory_space<vmem>>, vector<256x128xbf16>
    %cst = arith.constant dense<0.000000e+00> : vector<256x128xf32>
    %2 = tpu.matmul %0, %1, %cst {dimension_numbers = #tpu.dot_dimension_numbers<[1], [0], [0], [1], [0, 0, 1, 1], [], []>} : vector<256x256xbf16>, vector<256x128xbf16>, vector<256x128xf32> -> vector<256x128xf32>
    %c0_3 = arith.constant 0 : index
    %c0_4 = arith.constant 0 : index
    %3 = vector.load %arg3[%c0_3, %c0_4] : memref<1x128xf32, #tpu.memory_space<vmem>>, vector<1x128xf32>
    %4 = vector.broadcast %3 : vector<1x128xf32> to vector<256x128xf32>
    %5 = arith.addf %2, %4 : vector<256x128xf32>
    %cst_5 = arith.constant 0.000000e+00 : f32
    %6 = vector.broadcast %cst_5 : f32 to vector<256x128xf32>
    %7 = arith.cmpf ogt, %5, %6 : vector<256x128xf32>
    %8 = math.exp %5 : vector<256x128xf32>
    %cst_6 = arith.constant 1.000000e+00 : f32
    %9 = vector.broadcast %cst_6 : f32 to vector<256x128xf32>
    %10 = arith.subf %8, %9 : vector<256x128xf32>
    %11 = arith.select %7, %5, %10 : vector<256x128xi1>, vector<256x128xf32>
    %c0_7 = arith.constant 0 : index
    %c0_8 = arith.constant 0 : index
    %12 = vector.load %arg4[%c0_7, %c0_8] : memref<256x128xf32, #tpu.memory_space<vmem>>, vector<256x128xf32>
    tpu.vector_store %arg4[%c0_7, %c0_8], %11 {strides = array<i32>} : memref<256x128xf32, #tpu.memory_space<vmem>>, vector<256x128xf32>,
    return
  }
  func.func @transform_0(%arg0: i32) -> (i32, i32) {
    %c0_i32 = arith.constant 0 : i32
    %c0_i32_0 = arith.constant 0 : i32
    return %arg0, %c0_i32 : i32, i32
  }
  func.func @transform_1(%arg0: i32) -> (i32, i32) {
    %c0_i32 = arith.constant 0 : i32
    %c0_i32_0 = arith.constant 0 : i32
    %c0_i32_1 = arith.constant 0 : i32
    return %c0_i32, %c0_i32_0 : i32, i32
  }
  func.func @transform_2(%arg0: i32) -> (i32, i32) {
    %c0_i32 = arith.constant 0 : i32
    %c0_i32_0 = arith.constant 0 : i32
    %c0_i32_1 = arith.constant 0 : i32
    return %c0_i32, %c0_i32_0 : i32, i32
  }
  func.func @transform_3(%arg0: i32) -> (i32, i32) {
    %c0_i32 = arith.constant 0 : i32
    %c0_i32_0 = arith.constant 0 : i32
    return %arg0, %c0_i32 : i32, i32
  }
}

module attributes {stable_mosaic.version = 11 : i64} {
  func.func @_mm_bias_act_kernel(%arg0: i32, %arg1: memref<512x32xbf16, #tpu.memory_space<vmem>>, %arg2: memref<32x128xbf16, #tpu.memory_space<vmem>>, %arg3: memref<1x128xf32, #tpu.memory_space<vmem>>, %arg4: memref<512x128xf32, #tpu.memory_space<vmem>>) attributes {dimension_semantics = [#tpu.dimension_semantics<parallel>], iteration_bounds = array<i64: 4>, scalar_prefetch = 0 : i64, scratch_operands = 0 : i64, tpu.core_type = #tpu.core_type<tc>, window_params = [{transform_indices = @transform_0, window_bounds = array<i64: 512, 32>}, {pipeline_mode = #tpu.pipeline_mode<synchronous>, transform_indices = @transform_1, window_bounds = array<i64: 32, 128>}, {pipeline_mode = #tpu.pipeline_mode<synchronous>, transform_indices = @transform_2, window_bounds = array<i64: 1, 128>}, {transform_indices = @transform_3, window_bounds = array<i64: 512, 128>}]} {
    %c0 = arith.constant 0 : index
    %c0_0 = arith.constant 0 : index
    %0 = vector.load %arg1[%c0, %c0_0] : memref<512x32xbf16, #tpu.memory_space<vmem>>, vector<512x32xbf16>
    %c0_1 = arith.constant 0 : index
    %c0_2 = arith.constant 0 : index
    %1 = vector.load %arg2[%c0_1, %c0_2] : memref<32x128xbf16, #tpu.memory_space<vmem>>, vector<32x128xbf16>
    %cst = arith.constant dense<0.000000e+00> : vector<512x128xf32>
    %2 = tpu.matmul %0, %1, %cst {dimension_numbers = #tpu.dot_dimension_numbers<[1], [0], [0], [1], [0, 0, 1, 1], [], []>} : vector<512x32xbf16>, vector<32x128xbf16>, vector<512x128xf32> -> vector<512x128xf32>
    %c0_3 = arith.constant 0 : index
    %c0_4 = arith.constant 0 : index
    %3 = vector.load %arg3[%c0_3, %c0_4] : memref<1x128xf32, #tpu.memory_space<vmem>>, vector<1x128xf32>
    %4 = vector.broadcast %3 : vector<1x128xf32> to vector<512x128xf32>
    %5 = arith.addf %2, %4 : vector<512x128xf32>
    %cst_5 = arith.constant 5.000000e-01 : f32
    %6 = vector.broadcast %cst_5 : f32 to vector<512x128xf32>
    %7 = arith.mulf %6, %5 : vector<512x128xf32>
    %8 = math.tanh %7 : vector<512x128xf32>
    %cst_6 = arith.constant 1.000000e+00 : f32
    %9 = vector.broadcast %cst_6 : f32 to vector<512x128xf32>
    %10 = arith.addf %8, %9 : vector<512x128xf32>
    %cst_7 = arith.constant 5.000000e-01 : f32
    %11 = vector.broadcast %cst_7 : f32 to vector<512x128xf32>
    %12 = arith.mulf %11, %10 : vector<512x128xf32>
    %c0_8 = arith.constant 0 : index
    %c0_9 = arith.constant 0 : index
    %13 = vector.load %arg4[%c0_8, %c0_9] : memref<512x128xf32, #tpu.memory_space<vmem>>, vector<512x128xf32>
    tpu.vector_store %arg4[%c0_8, %c0_9], %12 {strides = array<i32>} : memref<512x128xf32, #tpu.memory_space<vmem>>, vector<512x128xf32>,
    return
  }
  func.func @transform_0(%arg0: i32) -> (i32, i32) {
    %c0_i32 = arith.constant 0 : i32
    %c0_i32_0 = arith.constant 0 : i32
    return %arg0, %c0_i32 : i32, i32
  }
  func.func @transform_1(%arg0: i32) -> (i32, i32) {
    %c0_i32 = arith.constant 0 : i32
    %c0_i32_0 = arith.constant 0 : i32
    %c0_i32_1 = arith.constant 0 : i32
    return %c0_i32, %c0_i32_0 : i32, i32
  }
  func.func @transform_2(%arg0: i32) -> (i32, i32) {
    %c0_i32 = arith.constant 0 : i32
    %c0_i32_0 = arith.constant 0 : i32
    %c0_i32_1 = arith.constant 0 : i32
    return %c0_i32, %c0_i32_0 : i32, i32
  }
  func.func @transform_3(%arg0: i32) -> (i32, i32) {
    %c0_i32 = arith.constant 0 : i32
    %c0_i32_0 = arith.constant 0 : i32
    return %arg0, %c0_i32 : i32, i32
  }
}

</mosaic_0001>

<llo_original>
// kernel: vae_forward.9
$region0: #{vae_forward.9}
  #allocation0 [shape = 'u32[]', space=smem, size = 0x4, offset = 0x4, fixed_abs, tag = 'smem constant byte address 0x4 - core index']
  #allocation1 [shape = 'u32[144,128]{1,0:T(1,128)}', space=vmem, size = 0x12000, scoped, tag = 'internal scratch']
  %s0 = inlined_call_operand.vmem [shape: bf16[2048,192], index: 0, kind: input, shape index: {}]
  %s1 = inlined_call_operand.vmem [shape: bf16[192,128], index: 1, kind: input, shape index: {}]
  %s2 = inlined_call_operand.vmem [shape: f32[1,128], index: 2, kind: input, shape index: {}]
  %s3 = inlined_call_operand.vmem [shape: f32[2048,128], index: 3, kind: output, shape index: {}]
  %s4 = sld [smem:[#allocation0]]
  $region45: #{vae_forward.9} parent=0
    _
  %s6 = ssub.s32 1, %s4
  %s7 = scalar_select 0, %s6, %s4
  loop: start=0, step=1, limit=6
  $region2: #{vae_forward.9} parent=0 // loop_pre_header
    _
  $region3: #{vae_forward.9} parent=0 // loop_header
    %s9 = sphi 0, %s13
    %p10 = scmp.ge.s32.totalorder %s9, 6
    %s19 = sphi 0, %s21
    %s22 = sphi 0, %s19
    %s23 = sphi 0, %s22
    %s39 = sphi 0, %s23
    %s43 = sphi 0, %s43
    %s45 = sphi 0, %s43
    %s46 = sphi 0, %s45
    %s60 = sphi 0, %s46
    %s64 = sphi 0, %s64
    %s66 = sphi 0, %s64
    %s67 = sphi 0, %s66
    %s81 = sphi 0, %s67
    %s87 = sphi 0, %s89
    %s90 = sphi 0, %s87
    %s91 = sphi 0, %s90
    %s107 = sphi 0, %s91
  $region4: #{vae_forward.9} parent=0 // loop_header_branch
    %12 = sbr.rel (%p10) target = $region8
  $region5: #{vae_forward.9} parent=0 // loop_body
    %s14 = ssub.s32 %s9, 1
    %s15 = ssub.s32 %s9, 2
    %s16 = sadd.s32 %s9, 1
    %s17 = ssub.s32 %s9, %s16
    %p18 = scmp.eq.s32.totalorder %s17, 0
    %s20 = sadd.s32 %s19, 1
    %s21 = scalar_select %p18, %s19, %s20
    %p24 = pneg %p18
    %p25 = scmp.eq.s32.totalorder %s9, 3
    %p26 = por %p24, %p25
    %p27 = scmp.ne.s32.totalorder %s19, %s22
    %p28 = scmp.eq.s32.totalorder %s9, 0
    %p29 = por %p27, %p28
    %p30 = scmp.ne.s32.totalorder %s19, %s22
    %p31 = scmp.eq.s32.totalorder %s14, 3
    %p32 = por %p30, %p31
    %p33 = scmp.ne.s32.totalorder %s22, %s23
    %p34 = scmp.eq.s32.totalorder %s14, 0
    %p35 = por %p33, %p34
    %p36 = scmp.ne.s32.totalorder %s22, %s23
    %p37 = scmp.eq.s32.totalorder %s15, 3
    %p38 = por %p36, %p37
    %p40 = scmp.ne.s32.totalorder %s23, %s39
    %p41 = scmp.eq.s32.totalorder %s15, 0
    %p42 = por %p40, %p41
    %s44 = sadd.s32 %s43, 1
    %p47 = scmp.eq.s32.totalorder %s9, 3
    %p48 = scmp.ne.s32.totalorder %s43, %s45
    %p49 = scmp.eq.s32.totalorder %s9, 0
    %p50 = por %p48, %p49
    %p51 = scmp.ne.s32.totalorder %s43, %s45
    %p52 = scmp.eq.s32.totalorder %s14, 3
    %p53 = por %p51, %p52
    %p54 = scmp.ne.s32.totalorder %s45, %s46
    %p55 = scmp.eq.s32.totalorder %s14, 0
    %p56 = por %p54, %p55
    %p57 = scmp.ne.s32.totalorder %s45, %s46
    %p58 = scmp.eq.s32.totalorder %s15, 3
    %p59 = por %p57, %p58
    %p61 = scmp.ne.s32.totalorder %s46, %s60
    %p62 = scmp.eq.s32.totalorder %s15, 0
    %p63 = por %p61, %p62
    %s65 = sadd.s32 %s64, 1
    %p68 = scmp.eq.s32.totalorder %s9, 3
    %p69 = scmp.ne.s32.totalorder %s64, %s66
    %p70 = scmp.eq.s32.totalorder %s9, 0
    %p71 = por %p69, %p70
    %p72 = scmp.ne.s32.totalorder %s64, %s66
    %p73 = scmp.eq.s32.totalorder %s14, 3
    %p74 = por %p72, %p73
    %p75 = scmp.ne.s32.totalorder %s66, %s67
    %p76 = scmp.eq.s32.totalorder %s14, 0
    %p77 = por %p75, %p76
    %p78 = scmp.ne.s32.totalorder %s66, %s67
    %p79 = scmp.eq.s32.totalorder %s15, 3
    %p80 = por %p78, %p79
    %p82 = scmp.ne.s32.totalorder %s67, %s81
    %p83 = scmp.eq.s32.totalorder %s15, 0
    %p84 = por %p82, %p83
    %s85 = ssub.s32 %s9, %s16
    %p86 = scmp.eq.s32.totalorder %s85, 0
    %s88 = sadd.s32 %s87, 1
    %s89 = scalar_select %p86, %s87, %s88
    %p92 = pneg %p86
    %p93 = scmp.eq.s32.totalorder %s9, 3
    %p94 = por %p92, %p93
    %p95 = scmp.ne.s32.totalorder %s87, %s90
    %p96 = scmp.eq.s32.totalorder %s9, 0
    %p97 = por %p95, %p96
    %p98 = scmp.ne.s32.totalorder %s87, %s90
    %p99 = scmp.eq.s32.totalorder %s14, 3
    %p100 = por %p98, %p99
    %p101 = scmp.ne.s32.totalorder %s90, %s91
    %p102 = scmp.eq.s32.totalorder %s14, 0
    %p103 = por %p101, %p102
    %p104 = scmp.ne.s32.totalorder %s90, %s91
    %p105 = scmp.eq.s32.totalorder %s15, 3
    %p106 = por %p104, %p105
    %p108 = scmp.ne.s32.totalorder %s91, %s107
    %p109 = scmp.eq.s32.totalorder %s15, 0
    %p110 = por %p108, %p109
    %p111 = scmp.le.s32.totalorder 1, %s9
    %p112 = scmp.lt.s32.totalorder %s9, 5
    %p113 = pnand %p111, %p112
    %p114 = pneg %p113
    // Predicated region
    $region9: #{vae_forward.9} parent=5 // pred_check
      _
    $region10: #{vae_forward.9} parent=5 // pred_check_branch
      %116 = sbr.rel (%p113) target = $region12
    $region11: #{vae_forward.9} parent=5 // pred_region
      %s117 = ssub.s32 %s9, 1
      // Predicated region
      $region13: #{vae_forward.9} parent=11 // pred_check
        %p118 = pneg %p56
      $region14: #{vae_forward.9} parent=11 // pred_check_branch
        %120 = sbr.rel (%p118) target = $region16
      $region15: #{vae_forward.9} parent=11 // pred_region
        _
      $region16: #{vae_forward.9} parent=11 // pred_fallthru
        _
      // Predicated region
      $region17: #{vae_forward.9} parent=11 // pred_check
        %p121 = pneg %p77
      $region18: #{vae_forward.9} parent=11 // pred_check_branch
        %123 = sbr.rel (%p121) target = $region20
      $region19: #{vae_forward.9} parent=11 // pred_region
        _
      $region20: #{vae_forward.9} parent=11 // pred_fallthru
        _
    $region12: #{vae_forward.9} parent=5 // pred_fallthru
      _
    %p124 = scmp.lt.s32.totalorder %s9, 4
    // Predicated region
    $region21: #{vae_forward.9} parent=5 // pred_check
      %p125 = pneg %p124
    $region22: #{vae_forward.9} parent=5 // pred_check_branch
      %127 = sbr.rel (%p125) target = $region24
    $region23: #{vae_forward.9} parent=5 // pred_region
      // Predicated region
      $region25: #{vae_forward.9} parent=23 // pred_check
        %p128 = pneg %p29
      $region26: #{vae_forward.9} parent=23 // pred_check_branch
        %130 = sbr.rel (%p128) target = $region28
      $region27: #{vae_forward.9} parent=23 // pred_region
        %s131 = smul.u32 64, %s9
        %p132 = scmp.lt.s32.totalorder %s131, 255
        %s133 = scalar_select %p132, %s131, 255
        %s134 = smul.addr %s133, 2
        %s135 = smul.addr %s134, 4
        %s136 = scalar_lea.vmem %s0, %s135
        %s137 = smul.u32 64, %s9
      $region28: #{vae_forward.9} parent=23 // pred_fallthru
        _
    $region24: #{vae_forward.9} parent=5 // pred_fallthru
      _
    %p138 = scmp.le.s32.totalorder 1, %s9
    %p139 = scmp.lt.s32.totalorder %s9, 5
    %p140 = pnand %p138, %p139
    %p141 = pneg %p140
    // Predicated region
    $region29: #{vae_forward.9} parent=5 // pred_check
      _
    $region30: #{vae_forward.9} parent=5 // pred_check_branch
      %143 = sbr.rel (%p140) target = $region32
    $region31: #{vae_forward.9} parent=5 // pred_region
      %s144 = ssub.s32 %s9, 1
      %s145 = smul.u32 64, %s14
      %p146 = scmp.lt.s32.totalorder %s145, 255
      %s147 = scalar_select %p146, %s145, 255
      %s148 = smul.addr %s147, 2
      %s149 = smul.addr %s148, 4
      %s150 = scalar_lea.vmem %s0, %s149
      %p151 = pneg %p35
      %p152 = pneg %p32
      %p153 = pneg %p56
      %p154 = pneg %p53
      %p155 = pneg %p77
      %p156 = pneg %p74
      %p157 = pneg %p103
      %p158 = pneg %p100
      %s159 = smul.u32 64, %s14
      %p160 = scmp.lt.s32.totalorder %s159, 255
      %s161 = scalar_select %p160, %s159, 255
      %s162 = smul.addr %s161, 8
      %s163 = scalar_lea.vmem %s3, %s162
      %s164 = smul.u32 64, %s14
      %p165 = scmp.lt.s32.totalorder %s164, 255
      %s166 = scalar_select %p165, %s164, 255
      %s167 = smul.addr %s166, 2
      %s168 = smul.addr %s167, 4
      %s169 = scalar_lea.vmem %s0, %s168
      %s170 = smul.u32 64, %s14
      %s171 = smul.u32 64, %s14
      %p172 = scmp.lt.s32.totalorder %s171, 255
      %s173 = scalar_select %p172, %s171, 255
      %s174 = smul.addr %s173, 8
      %s175 = scalar_lea.vmem %s3, %s174
      %s176 = smul.u32 64, %s14
      %v178 = vld [vmem:[%s169] sm:$0xff]
      %v179 = vld [vmem:[%s169 + $0x8] sm:$0xff]
      %v180 = vld [vmem:[%s169 + $0x10] sm:$0xff]
      %v181 = vld [vmem:[%s169 + $0x18] sm:$0xff]
      %v182 = vld [vmem:[%s169 + $0x20] sm:$0xff]
      %v183 = vld [vmem:[%s169 + $0x28] sm:$0xff]
      %v184 = vld [vmem:[%s169 + $0x30] sm:$0xff]
      %v185 = vld [vmem:[%s169 + $0x38] sm:$0xff]
      %v186 = vld [vmem:[%s169 + $0x40] sm:$0xff]
      %v187 = vld [vmem:[%s169 + $0x48] sm:$0xff]
      %v188 = vld [vmem:[%s169 + $0x50] sm:$0xff]
      %v189 = vld [vmem:[%s169 + $0x58] sm:$0xff]
      %v190 = vld [vmem:[%s169 + $0x60] sm:$0xff]
      %v191 = vld [vmem:[%s169 + $0x68] sm:$0xff]
      %v192 = vld [vmem:[%s169 + $0x70] sm:$0xff]
      %v193 = vld [vmem:[%s169 + $0x78] sm:$0xff]
      %v194 = vld [vmem:[%s169 + $0x80] sm:$0xff]
      %v195 = vld [vmem:[%s169 + $0x88] sm:$0xff]
      %v196 = vld [vmem:[%s169 + $0x90] sm:$0xff]
      %v197 = vld [vmem:[%s169 + $0x98] sm:$0xff]
      %v198 = vld [vmem:[%s169 + $0xa0] sm:$0xff]
      %v199 = vld [vmem:[%s169 + $0xa8] sm:$0xff]
      %v200 = vld [vmem:[%s169 + $0xb0] sm:$0xff]
      %v201 = vld [vmem:[%s169 + $0xb8] sm:$0xff]
      %v202 = vld [vmem:[%s169 + $0xc0] sm:$0xff]
      %v203 = vld [vmem:[%s169 + $0xc8] sm:$0xff]
      %v204 = vld [vmem:[%s169 + $0xd0] sm:$0xff]
      %v205 = vld [vmem:[%s169 + $0xd8] sm:$0xff]
      %v206 = vld [vmem:[%s169 + $0xe0] sm:$0xff]
      %v207 = vld [vmem:[%s169 + $0xe8] sm:$0xff]
      %v208 = vld [vmem:[%s169 + $0xf0] sm:$0xff]
      %v209 = vld [vmem:[%s169 + $0xf8] sm:$0xff]
      %v210 = vld [vmem:[%s169 + $0x100] sm:$0xff]
      %v211 = vld [vmem:[%s169 + $0x108] sm:$0xff]
      %v212 = vld [vmem:[%s169 + $0x110] sm:$0xff]
      %v213 = vld [vmem:[%s169 + $0x118] sm:$0xff]
      %v214 = vld [vmem:[%s169 + $0x120] sm:$0xff]
      %v215 = vld [vmem:[%s169 + $0x128] sm:$0xff]
      %v216 = vld [vmem:[%s169 + $0x130] sm:$0xff]
      %v217 = vld [vmem:[%s169 + $0x138] sm:$0xff]
      %v218 = vld [vmem:[%s169 + $0x140] sm:$0xff]
      %v219 = vld [vmem:[%s169 + $0x148] sm:$0xff]
      %v220 = vld [vmem:[%s169 + $0x150] sm:$0xff]
      %v221 = vld [vmem:[%s169 + $0x158] sm:$0xff]
      %v222 = vld [vmem:[%s169 + $0x160] sm:$0xff]
      %v223 = vld [vmem:[%s169 + $0x168] sm:$0xff]
      %v224 = vld [vmem:[%s169 + $0x170] sm:$0xff]
      %v225 = vld [vmem:[%s169 + $0x178] sm:$0xff]
      %v226 = vld [vmem:[%s169 + $0x180] sm:$0xff]
      %v227 = vld [vmem:[%s169 + $0x188] sm:$0xff]
      %v228 = vld [vmem:[%s169 + $0x190] sm:$0xff]
      %v229 = vld [vmem:[%s169 + $0x198] sm:$0xff]
      %v230 = vld [vmem:[%s169 + $0x1a0] sm:$0xff]
      %v231 = vld [vmem:[%s169 + $0x1a8] sm:$0xff]
      %v232 = vld [vmem:[%s169 + $0x1b0] sm:$0xff]
      %v233 = vld [vmem:[%s169 + $0x1b8] sm:$0xff]
      %v234 = vld [vmem:[%s169 + $0x1c0] sm:$0xff]
      %v235 = vld [vmem:[%s169 + $0x1c8] sm:$0xff]
      %v236 = vld [vmem:[%s169 + $0x1d0] sm:$0xff]
      %v237 = vld [vmem:[%s169 + $0x1d8] sm:$0xff]
      %v238 = vld [vmem:[%s169 + $0x1e0] sm:$0xff]
      %v239 = vld [vmem:[%s169 + $0x1e8] sm:$0xff]
      %v240 = vld [vmem:[%s169 + $0x1f0] sm:$0xff]
      %v241 = vld [vmem:[%s169 + $0x1f8] sm:$0xff]
      %v242 = vld [vmem:[%s1] sm:$0xf]
      %v243 = vld [vmem:[%s1 + $0x4] sm:$0xf]
      %v244 = vld [vmem:[%s1 + $0x8] sm:$0xf]
      %v245 = vld [vmem:[%s1 + $0xc] sm:$0xf]
      %v246 = vld [vmem:[%s1 + $0x10] sm:$0xf]
      %v247 = vld [vmem:[%s1 + $0x14] sm:$0xf]
      %v248 = vld [vmem:[%s1 + $0x18] sm:$0xf]
      %v249 = vld [vmem:[%s1 + $0x1c] sm:$0xf]
      %v250 = vld [vmem:[%s1 + $0x20] sm:$0xf]
      %v251 = vld [vmem:[%s1 + $0x24] sm:$0xf]
      %v252 = vld [vmem:[%s1 + $0x28] sm:$0xf]
      %v253 = vld [vmem:[%s1 + $0x2c] sm:$0xf]
      %v254 = vld [vmem:[%s1 + $0x30] sm:$0xf]
      %v255 = vld [vmem:[%s1 + $0x34] sm:$0xf]
      %v256 = vld [vmem:[%s1 + $0x38] sm:$0xf]
      %v257 = vld [vmem:[%s1 + $0x3c] sm:$0xf]
      %v258 = vld [vmem:[%s1 + $0x40] sm:$0xf]
      %v259 = vld [vmem:[%s1 + $0x44] sm:$0xf]
      %v260 = vld [vmem:[%s1 + $0x48] sm:$0xf]
      %v261 = vld [vmem:[%s1 + $0x4c] sm:$0xf]
      %v262 = vld [vmem:[%s1 + $0x50] sm:$0xf]
      %v263 = vld [vmem:[%s1 + $0x54] sm:$0xf]
      %v264 = vld [vmem:[%s1 + $0x58] sm:$0xf]
      %v265 = vld [vmem:[%s1 + $0x5c] sm:$0xf]
      %v266 = vld [vmem:[%s2] sm:$0x1]
      %v268 = vlaneseq
      %v269 = vshrl.u32 %v268, 7
      %v270 = vsub.s32 0, %v269
      %v271 = vrot.slane %v266, %v270
      %v337 = vunpack.c.l.b16 %v178
      %v338 = vunpack.c.h.b16 %v178
      %v339 = vunpack.c.l.b16 %v179
      %v340 = vunpack.c.h.b16 %v179
      %v341 = vunpack.c.l.b16 %v180
      %v342 = vunpack.c.h.b16 %v180
      %v343 = vunpack.c.l.b16 %v181
      %v344 = vunpack.c.h.b16 %v181
      %v345 = vunpack.c.l.b16 %v182
      %v346 = vunpack.c.h.b16 %v182
      %v347 = vunpack.c.l.b16 %v183
      %v348 = vunpack.c.h.b16 %v183
      %v349 = vunpack.c.l.b16 %v184
      %v350 = vunpack.c.h.b16 %v184
      %v351 = vunpack.c.l.b16 %v185
      %v352 = vunpack.c.h.b16 %v185
      %v353 = vunpack.c.l.b16 %v186
      %v354 = vunpack.c.h.b16 %v186
      %v355 = vunpack.c.l.b16 %v187
      %v356 = vunpack.c.h.b16 %v187
      %v357 = vunpack.c.l.b16 %v188
      %v358 = vunpack.c.h.b16 %v188
      %v359 = vunpack.c.l.b16 %v189
      %v360 = vunpack.c.h.b16 %v189
      %v361 = vunpack.c.l.b16 %v190
      %v362 = vunpack.c.h.b16 %v190
      %v363 = vunpack.c.l.b16 %v191
      %v364 = vunpack.c.h.b16 %v191
      %v365 = vunpack.c.l.b16 %v192
      %v366 = vunpack.c.h.b16 %v192
      %v367 = vunpack.c.l.b16 %v193
      %v368 = vunpack.c.h.b16 %v193
      %v369 = vunpack.c.l.b16 %v194
      %v370 = vunpack.c.h.b16 %v194
      %v371 = vunpack.c.l.b16 %v195
      %v372 = vunpack.c.h.b16 %v195
      %v373 = vunpack.c.l.b16 %v196
      %v374 = vunpack.c.h.b16 %v196
      %v375 = vunpack.c.l.b16 %v197
      %v376 = vunpack.c.h.b16 %v197
      %v377 = vunpack.c.l.b16 %v198
      %v378 = vunpack.c.h.b16 %v198
      %v379 = vunpack.c.l.b16 %v199
      %v380 = vunpack.c.h.b16 %v199
      %v381 = vunpack.c.l.b16 %v200
      %v382 = vunpack.c.h.b16 %v200
      %v383 = vunpack.c.l.b16 %v201
      %v384 = vunpack.c.h.b16 %v201
      %v385 = vunpack.c.l.b16 %v202
      %v386 = vunpack.c.h.b16 %v202
      %v387 = vunpack.c.l.b16 %v203
      %v388 = vunpack.c.h.b16 %v203
      %v389 = vunpack.c.l.b16 %v204
      %v390 = vunpack.c.h.b16 %v204
      %v391 = vunpack.c.l.b16 %v205
      %v392 = vunpack.c.h.b16 %v205
      %v393 = vunpack.c.l.b16 %v206
      %v394 = vunpack.c.h.b16 %v206
      %v395 = vunpack.c.l.b16 %v207
      %v396 = vunpack.c.h.b16 %v207
      %v397 = vunpack.c.l.b16 %v208
      %v398 = vunpack.c.h.b16 %v208
      %v399 = vunpack.c.l.b16 %v209
      %v400 = vunpack.c.h.b16 %v209
      %v401 = vunpack.c.l.b16 %v210
      %v402 = vunpack.c.h.b16 %v210
      %v403 = vunpack.c.l.b16 %v211
      %v404 = vunpack.c.h.b16 %v211
      %v405 = vunpack.c.l.b16 %v212
      %v406 = vunpack.c.h.b16 %v212
      %v407 = vunpack.c.l.b16 %v213
      %v408 = vunpack.c.h.b16 %v213
      %v409 = vunpack.c.l.b16 %v214
      %v410 = vunpack.c.h.b16 %v214
      %v411 = vunpack.c.l.b16 %v215
      %v412 = vunpack.c.h.b16 %v215
      %v413 = vunpack.c.l.b16 %v216
      %v414 = vunpack.c.h.b16 %v216
      %v415 = vunpack.c.l.b16 %v217
      %v416 = vunpack.c.h.b16 %v217
      %v417 = vunpack.c.l.b16 %v218
      %v418 = vunpack.c.h.b16 %v218
      %v419 = vunpack.c.l.b16 %v219
      %v420 = vunpack.c.h.b16 %v219
      %v421 = vunpack.c.l.b16 %v220
      %v422 = vunpack.c.h.b16 %v220
      %v423 = vunpack.c.l.b16 %v221
      %v424 = vunpack.c.h.b16 %v221
      %v425 = vunpack.c.l.b16 %v222
      %v426 = vunpack.c.h.b16 %v222
      %v427 = vunpack.c.l.b16 %v223
      %v428 = vunpack.c.h.b16 %v223
      %v429 = vunpack.c.l.b16 %v224
      %v430 = vunpack.c.h.b16 %v224
      %v431 = vunpack.c.l.b16 %v225
      %v432 = vunpack.c.h.b16 %v225
      %v433 = vunpack.c.l.b16 %v226
      %v434 = vunpack.c.h.b16 %v226
      %v435 = vunpack.c.l.b16 %v227
      %v436 = vunpack.c.h.b16 %v227
      %v437 = vunpack.c.l.b16 %v228
      %v438 = vunpack.c.h.b16 %v228
      %v439 = vunpack.c.l.b16 %v229
      %v440 = vunpack.c.h.b16 %v229
      %v441 = vunpack.c.l.b16 %v230
      %v442 = vunpack.c.h.b16 %v230
      %v443 = vunpack.c.l.b16 %v231
      %v444 = vunpack.c.h.b16 %v231
      %v445 = vunpack.c.l.b16 %v232
      %v446 = vunpack.c.h.b16 %v232
      %v447 = vunpack.c.l.b16 %v233
      %v448 = vunpack.c.h.b16 %v233
      %v449 = vunpack.c.l.b16 %v234
      %v450 = vunpack.c.h.b16 %v234
      %v451 = vunpack.c.l.b16 %v235
      %v452 = vunpack.c.h.b16 %v235
      %v453 = vunpack.c.l.b16 %v236
      %v454 = vunpack.c.h.b16 %v236
      %v455 = vunpack.c.l.b16 %v237
      %v456 = vunpack.c.h.b16 %v237
      %v457 = vunpack.c.l.b16 %v238
      %v458 = vunpack.c.h.b16 %v238
      %v459 = vunpack.c.l.b16 %v239
      %v460 = vunpack.c.h.b16 %v239
      %v461 = vunpack.c.l.b16 %v240
      %v462 = vunpack.c.h.b16 %v240
      %v463 = vunpack.c.l.b16 %v241
      %v464 = vunpack.c.h.b16 %v241
      %v465 = vpack.c.b16 %v339, %v337
      %v466 = vpack.c.b16 %v340, %v338
      %v467 = vpack.c.b16 %v343, %v341
      %v468 = vpack.c.b16 %v344, %v342
      %v469 = vpack.c.b16 %v347, %v345
      %v470 = vpack.c.b16 %v348, %v346
      %v471 = vpack.c.b16 %v351, %v349
      %v472 = vpack.c.b16 %v352, %v350
      %v473 = vpack.c.b16 %v355, %v353
      %v474 = vpack.c.b16 %v356, %v354
      %v475 = vpack.c.b16 %v359, %v357
      %v476 = vpack.c.b16 %v360, %v358
      %v477 = vpack.c.b16 %v363, %v361
      %v478 = vpack.c.b16 %v364, %v362
      %v479 = vpack.c.b16 %v367, %v365
      %v480 = vpack.c.b16 %v368, %v366
      %v481 = vpack.c.b16 %v371, %v369
      %v482 = vpack.c.b16 %v372, %v370
      %v483 = vpack.c.b16 %v375, %v373
      %v484 = vpack.c.b16 %v376, %v374
      %v485 = vpack.c.b16 %v379, %v377
      %v486 = vpack.c.b16 %v380, %v378
      %v487 = vpack.c.b16 %v383, %v381
      %v488 = vpack.c.b16 %v384, %v382
      %v489 = vpack.c.b16 %v387, %v385
      %v490 = vpack.c.b16 %v388, %v386
      %v491 = vpack.c.b16 %v391, %v389
      %v492 = vpack.c.b16 %v392, %v390
      %v493 = vpack.c.b16 %v395, %v393
      %v494 = vpack.c.b16 %v396, %v394
      %v495 = vpack.c.b16 %v399, %v397
      %v496 = vpack.c.b16 %v400, %v398
      %v497 = vpack.c.b16 %v403, %v401
      %v498 = vpack.c.b16 %v404, %v402
      %v499 = vpack.c.b16 %v407, %v405
      %v500 = vpack.c.b16 %v408, %v406
      %v501 = vpack.c.b16 %v411, %v409
      %v502 = vpack.c.b16 %v412, %v410
      %v503 = vpack.c.b16 %v415, %v413
      %v504 = vpack.c.b16 %v416, %v414
      %v505 = vpack.c.b16 %v419, %v417
      %v506 = vpack.c.b16 %v420, %v418
      %v507 = vpack.c.b16 %v423, %v421
      %v508 = vpack.c.b16 %v424, %v422
      %v509 = vpack.c.b16 %v427, %v425
      %v510 = vpack.c.b16 %v428, %v426
      %v511 = vpack.c.b16 %v431, %v429
      %v512 = vpack.c.b16 %v432, %v430
      %v513 = vpack.c.b16 %v435, %v433
      %v514 = vpack.c.b16 %v436, %v434
      %v515 = vpack.c.b16 %v439, %v437
      %v516 = vpack.c.b16 %v440, %v438
      %v517 = vpack.c.b16 %v443, %v441
      %v518 = vpack.c.b16 %v444, %v442
      %v519 = vpack.c.b16 %v447, %v445
      %v520 = vpack.c.b16 %v448, %v446
      %v521 = vpack.c.b16 %v451, %v449
      %v522 = vpack.c.b16 %v452, %v450
      %v523 = vpack.c.b16 %v455, %v453
      %v524 = vpack.c.b16 %v456, %v454
      %v525 = vpack.c.b16 %v459, %v457
      %v526 = vpack.c.b16 %v460, %v458
      %v527 = vpack.c.b16 %v463, %v461
      %v528 = vpack.c.b16 %v464, %v462
      %v585 = vunpack.c.l.b16 %v242
      %v586 = vunpack.c.l.b16 %v243
      %v587 = vunpack.c.l.b16 %v244
      %v588 = vunpack.c.l.b16 %v245
      %v589 = vunpack.c.l.b16 %v246
      %v590 = vunpack.c.l.b16 %v247
      %v591 = vunpack.c.l.b16 %v248
      %v592 = vunpack.c.l.b16 %v249
      %v593 = vunpack.c.l.b16 %v250
      %v594 = vunpack.c.l.b16 %v251
      %v595 = vunpack.c.l.b16 %v252
      %v596 = vunpack.c.l.b16 %v253
      %v597 = vunpack.c.l.b16 %v254
      %v598 = vunpack.c.l.b16 %v255
      %v599 = vunpack.c.l.b16 %v256
      %v600 = vunpack.c.l.b16 %v257
      %v601 = vunpack.c.l.b16 %v258
      %v602 = vunpack.c.l.b16 %v259
      %v603 = vunpack.c.l.b16 %v260
      %v604 = vunpack.c.l.b16 %v261
      %v605 = vunpack.c.l.b16 %v262
      %v606 = vunpack.c.l.b16 %v263
      %v607 = vunpack.c.l.b16 %v264
      %v608 = vunpack.c.l.b16 %v265
      %v609 = vpack.c.b16 %v586, %v585
      %v610 = vpack.c.b16 %v588, %v587
      %v611 = vpack.c.b16 %v590, %v589
      %v612 = vpack.c.b16 %v592, %v591
      %v613 = vpack.c.b16 %v594, %v593
      %v614 = vpack.c.b16 %v596, %v595
      %v615 = vpack.c.b16 %v598, %v597
      %v616 = vpack.c.b16 %v600, %v599
      %v617 = vpack.c.b16 %v602, %v601
      %v618 = vpack.c.b16 %v604, %v603
      %v619 = vpack.c.b16 %v606, %v605
      %v620 = vpack.c.b16 %v608, %v607
      %vm633 = vcmask 523264
      %v635 = vsel %vm633, %v466, 0
      %v638 = vsel %vm633, %v468, 0
      %v641 = vsel %vm633, %v470, 0
      %v644 = vsel %vm633, %v472, 0
      %v647 = vsel %vm633, %v474, 0
      %v650 = vsel %vm633, %v476, 0
      %v653 = vsel %vm633, %v478, 0
      %v656 = vsel %vm633, %v480, 0
      %v659 = vsel %vm633, %v482, 0
      %v662 = vsel %vm633, %v484, 0
      %v665 = vsel %vm633, %v486, 0
      %v668 = vsel %vm633, %v488, 0
      %v671 = vsel %vm633, %v490, 0
      %v674 = vsel %vm633, %v492, 0
      %v677 = vsel %vm633, %v494, 0
      %v680 = vsel %vm633, %v496, 0
      %v683 = vsel %vm633, %v498, 0
      %v686 = vsel %vm633, %v500, 0
      %v689 = vsel %vm633, %v502, 0
      %v692 = vsel %vm633, %v504, 0
      %v695 = vsel %vm633, %v506, 0
      %v698 = vsel %vm633, %v508, 0
      %v701 = vsel %vm633, %v510, 0
      %v704 = vsel %vm633, %v512, 0
      %v707 = vsel %vm633, %v514, 0
      %v710 = vsel %vm633, %v516, 0
      %v713 = vsel %vm633, %v518, 0
      %v716 = vsel %vm633, %v520, 0
      %v719 = vsel %vm633, %v522, 0
      %v722 = vsel %vm633, %v524, 0
      %v725 = vsel %vm633, %v526, 0
      %v728 = vsel %vm633, %v528, 0
      %730 = vmatprep.subr.bf16.mxu0 0
      %731 = vmatpush1.bf16.msra.mxu0 %v609
      %732 = vmatprep.subr.bf16.mxu0 0
      %733 = vmatpush1.bf16.msra.mxu0 %v610
      %734 = vmatprep.subr.bf16.mxu0 0
      %735 = vmatpush1.bf16.msra.mxu0 %v611
      %736 = vmatprep.subr.bf16.mxu0 0
      %737 = vmatpush1.bf16.msra.mxu0 %v612
      %738 = vmatprep.subr.bf16.mxu0 0
      %739 = vmatpush1.bf16.msra.mxu0 %v613
      %740 = vmatprep.subr.bf16.mxu0 0
      %741 = vmatpush1.bf16.msra.mxu0 %v614
      %742 = vmatprep.subr.bf16.mxu0 0
      %743 = vmatpush1.bf16.msra.mxu0 %v615
      %744 = vmatprep.subr.bf16.mxu0 0
      %745 = vmatpush1.bf16.msra.mxu0 %v616
      %746 = vmatprep.subr.bf16.mxu0 0
      %747 = vmatpush1.bf16.msra.mxu0 %v617
      %748 = vmatprep.subr.bf16.mxu0 0
      %749 = vmatpush1.bf16.msra.mxu0 %v618
      %750 = vmatprep.subr.bf16.mxu0 0
      %751 = vmatpush1.bf16.msra.mxu0 %v619
      %752 = vmatprep.subr.bf16.mxu0 0
      %753 = vmatpush1.bf16.msra.mxu0 %v620
      %754 = vmatprep.subr.bf16.mxu0 0
      %755 = vmatpush1.bf16.msra.mxu0 0
      %756 = vmatprep.subr.bf16.mxu0 0
      %757 = vmatpush1.bf16.msra.mxu0 0
      %758 = vmatprep.subr.bf16.mxu0 0
      %759 = vmatpush1.bf16.msra.mxu0 0
      %760 = vmatprep.subr.bf16.mxu0 0
      %761 = vmatpush1.bf16.msra.mxu0 0
      %762 = vmatprep.mubr.bf16.mxu0 %v635
      %763 = vmatmul.mubr.bf16.gmra.mrb[0].mxu0 %v465
      %v764 = vpop.f32.mrb[0].mxu0
      %v765 = vadd.f32 %v271, %v764
      %v766 = vpop.f32.mrb[0].mxu0
      %v767 = vpop.f32.mrb[0].mxu0
      %v768 = vadd.f32 %v271, %v767
      %v769 = vpop.f32.mrb[0].mxu0
      %770 = vmatprep.mubr.bf16.mxu0 %v638
      %771 = vmatmul.mubr.bf16.gmra.mrb[0].mxu0 %v467
      %v772 = vpop.f32.mrb[0].mxu0
      %v773 = vadd.f32 %v271, %v772
      %v774 = vpop.f32.mrb[0].mxu0
      %v775 = vpop.f32.mrb[0].mxu0
      %v776 = vadd.f32 %v271, %v775
      %v777 = vpop.f32.mrb[0].mxu0
      %778 = vmatprep.mubr.bf16.mxu0 %v641
      %779 = vmatmul.mubr.bf16.gmra.mrb[0].mxu0 %v469
      %v780 = vpop.f32.mrb[0].mxu0
      %v781 = vadd.f32 %v271, %v780
      %v782 = vpop.f32.mrb[0].mxu0
      %v783 = vpop.f32.mrb[0].mxu0
      %v784 = vadd.f32 %v271, %v783
      %v785 = vpop.f32.mrb[0].mxu0
      %786 = vmatprep.mubr.bf16.mxu0 %v644
      %787 = vmatmul.mubr.bf16.gmra.mrb[0].mxu0 %v471
      %v788 = vpop.f32.mrb[0].mxu0
      %v789 = vadd.f32 %v271, %v788
      %v790 = vpop.f32.mrb[0].mxu0
      %v791 = vpop.f32.mrb[0].mxu0
      %v792 = vadd.f32 %v271, %v791
      %v793 = vpop.f32.mrb[0].mxu0
      %794 = vmatprep.mubr.bf16.mxu0 %v647
      %795 = vmatmul.mubr.bf16.gmra.mrb[0].mxu0 %v473
      %v796 = vpop.f32.mrb[0].mxu0
      %v797 = vadd.f32 %v271, %v796
      %v798 = vpop.f32.mrb[0].mxu0
      %v799 = vpop.f32.mrb[0].mxu0
      %v800 = vadd.f32 %v271, %v799
      %v801 = vpop.f32.mrb[0].mxu0
      %802 = vmatprep.mubr.bf16.mxu0 %v650
      %803 = vmatmul.mubr.bf16.gmra.mrb[0].mxu0 %v475
      %v804 = vpop.f32.mrb[0].mxu0
      %v805 = vadd.f32 %v271, %v804
      %v806 = vpop.f32.mrb[0].mxu0
      %v807 = vpop.f32.mrb[0].mxu0
      %v808 = vadd.f32 %v271, %v807
      %v809 = vpop.f32.mrb[0].mxu0
      %810 = vmatprep.mubr.bf16.mxu0 %v653
      %811 = vmatmul.mubr.bf16.gmra.mrb[0].mxu0 %v477
      %v812 = vpop.f32.mrb[0].mxu0
      %v813 = vadd.f32 %v271, %v812
      %v814 = vpop.f32.mrb[0].mxu0
      %v815 = vpop.f32.mrb[0].mxu0
      %v816 = vadd.f32 %v271, %v815
      %v817 = vpop.f32.mrb[0].mxu0
      %818 = vmatprep.mubr.bf16.mxu0 %v656
      %819 = vmatmul.mubr.bf16.gmra.mrb[0].mxu0 %v479
      %v820 = vpop.f32.mrb[0].mxu0
      %v821 = vadd.f32 %v271, %v820
      %v822 = vpop.f32.mrb[0].mxu0
      %v823 = vpop.f32.mrb[0].mxu0
      %v824 = vadd.f32 %v271, %v823
      %v825 = vpop.f32.mrb[0].mxu0
      %826 = vmatprep.mubr.bf16.mxu0 %v659
      %827 = vmatmul.mubr.bf16.gmra.mrb[0].mxu0 %v481
      %v828 = vpop.f32.mrb[0].mxu0
      %v829 = vadd.f32 %v271, %v828
      %v830 = vpop.f32.mrb[0].mxu0
      %v831 = vpop.f32.mrb[0].mxu0
      %v832 = vadd.f32 %v271, %v831
      %v833 = vpop.f32.mrb[0].mxu0
      %834 = vmatprep.mubr.bf16.mxu0 %v662
      %835 = vmatmul.mubr.bf16.gmra.mrb[0].mxu0 %v483
      %v836 = vpop.f32.mrb[0].mxu0
      %v837 = vadd.f32 %v271, %v836
      %v838 = vpop.f32.mrb[0].mxu0
      %v839 = vpop.f32.mrb[0].mxu0
      %v840 = vadd.f32 %v271, %v839
      %v841 = vpop.f32.mrb[0].mxu0
      %842 = vmatprep.mubr.bf16.mxu0 %v665
      %843 = vmatmul.mubr.bf16.gmra.mrb[0].mxu0 %v485
      %v844 = vpop.f32.mrb[0].mxu0
      %v845 = vadd.f32 %v271, %v844
      %v846 = vpop.f32.mrb[0].mxu0
      %v847 = vpop.f32.mrb[0].mxu0
      %v848 = vadd.f32 %v271, %v847
      %v849 = vpop.f32.mrb[0].mxu0
      %850 = vmatprep.mubr.bf16.mxu0 %v668
      %851 = vmatmul.mubr.bf16.gmra.mrb[0].mxu0 %v487
      %v852 = vpop.f32.mrb[0].mxu0
      %v853 = vadd.f32 %v271, %v852
      %v854 = vpop.f32.mrb[0].mxu0
      %v855 = vpop.f32.mrb[0].mxu0
      %v856 = vadd.f32 %v271, %v855
      %v857 = vpop.f32.mrb[0].mxu0
      %858 = vmatprep.mubr.bf16.mxu0 %v671
      %859 = vmatmul.mubr.bf16.gmra.mrb[0].mxu0 %v489
      %v860 = vpop.f32.mrb[0].mxu0
      %v861 = vadd.f32 %v271, %v860
      %v862 = vpop.f32.mrb[0].mxu0
      %v863 = vpop.f32.mrb[0].mxu0
      %v864 = vadd.f32 %v271, %v863
      %v865 = vpop.f32.mrb[0].mxu0
      %866 = vmatprep.mubr.bf16.mxu0 %v674
      %867 = vmatmul.mubr.bf16.gmra.mrb[0].mxu0 %v491
      %v868 = vpop.f32.mrb[0].mxu0
      %v869 = vadd.f32 %v271, %v868
      %v870 = vpop.f32.mrb[0].mxu0
      %v871 = vpop.f32.mrb[0].mxu0
      %v872 = vadd.f32 %v271, %v871
      %v873 = vpop.f32.mrb[0].mxu0
      %874 = vmatprep.mubr.bf16.mxu0 %v677
      %875 = vmatmul.mubr.bf16.gmra.mrb[0].mxu0 %v493
      %v876 = vpop.f32.mrb[0].mxu0
      %v877 = vadd.f32 %v271, %v876
      %v878 = vpop.f32.mrb[0].mxu0
      %v879 = vpop.f32.mrb[0].mxu0
      %v880 = vadd.f32 %v271, %v879
      %v881 = vpop.f32.mrb[0].mxu0
      %882 = vmatprep.mubr.bf16.mxu0 %v680
      %883 = vmatmul.mubr.bf16.gmra.mrb[0].mxu0 %v495
      %v884 = vpop.f32.mrb[0].mxu0
      %v885 = vadd.f32 %v271, %v884
      %v886 = vpop.f32.mrb[0].mxu0
      %v887 = vpop.f32.mrb[0].mxu0
      %v888 = vadd.f32 %v271, %v887
      %v889 = vpop.f32.mrb[0].mxu0
      %890 = vmatprep.mubr.bf16.mxu0 %v683
      %891 = vmatmul.mubr.bf16.gmra.mrb[0].mxu0 %v497
      %v892 = vpop.f32.mrb[0].mxu0
      %v893 = vadd.f32 %v271, %v892
      %v894 = vpop.f32.mrb[0].mxu0
      %v895 = vpop.f32.mrb[0].mxu0
      %v896 = vadd.f32 %v271, %v895
      %v897 = vpop.f32.mrb[0].mxu0
      %898 = vmatprep.mubr.bf16.mxu0 %v686
      %899 = vmatmul.mubr.bf16.gmra.mrb[0].mxu0 %v499
      %v900 = vpop.f32.mrb[0].mxu0
      %v901 = vadd.f32 %v271, %v900
      %v902 = vpop.f32.mrb[0].mxu0
      %v903 = vpop.f32.mrb[0].mxu0
      %v904 = vadd.f32 %v271, %v903
      %v905 = vpop.f32.mrb[0].mxu0
      %906 = vmatprep.mubr.bf16.mxu0 %v689
      %907 = vmatmul.mubr.bf16.gmra.mrb[0].mxu0 %v501
      %v908 = vpop.f32.mrb[0].mxu0
      %v909 = vadd.f32 %v271, %v908
      %v910 = vpop.f32.mrb[0].mxu0
      %v911 = vpop.f32.mrb[0].mxu0
      %v912 = vadd.f32 %v271, %v911
      %v913 = vpop.f32.mrb[0].mxu0
      %914 = vmatprep.mubr.bf16.mxu0 %v692
      %915 = vmatmul.mubr.bf16.gmra.mrb[0].mxu0 %v503
      %v916 = vpop.f32.mrb[0].mxu0
      %v917 = vadd.f32 %v271, %v916
      %v918 = vpop.f32.mrb[0].mxu0
      %v919 = vpop.f32.mrb[0].mxu0
      %v920 = vadd.f32 %v271, %v919
      %v921 = vpop.f32.mrb[0].mxu0
      %922 = vmatprep.mubr.bf16.mxu0 %v695
      %923 = vmatmul.mubr.bf16.gmra.mrb[0].mxu0 %v505
      %v924 = vpop.f32.mrb[0].mxu0
      %v925 = vadd.f32 %v271, %v924
      %v926 = vpop.f32.mrb[0].mxu0
      %v927 = vpop.f32.mrb[0].mxu0
      %v928 = vadd.f32 %v271, %v927
      %v929 = vpop.f32.mrb[0].mxu0
      %930 = vmatprep.mubr.bf16.mxu0 %v698
      %931 = vmatmul.mubr.bf16.gmra.mrb[0].mxu0 %v507
      %v932 = vpop.f32.mrb[0].mxu0
      %v933 = vadd.f32 %v271, %v932
      %v934 = vpop.f32.mrb[0].mxu0
      %v935 = vpop.f32.mrb[0].mxu0
      %v936 = vadd.f32 %v271, %v935
      %v937 = vpop.f32.mrb[0].mxu0
      %938 = vmatprep.mubr.bf16.mxu0 %v701
      %939 = vmatmul.mubr.bf16.gmra.mrb[0].mxu0 %v509
      %v940 = vpop.f32.mrb[0].mxu0
      %v941 = vadd.f32 %v271, %v940
      %v942 = vpop.f32.mrb[0].mxu0
      %v943 = vpop.f32.mrb[0].mxu0
      %v944 = vadd.f32 %v271, %v943
      %v945 = vpop.f32.mrb[0].mxu0
      %946 = vmatprep.mubr.bf16.mxu0 %v704
      %947 = vmatmul.mubr.bf16.gmra.mrb[0].mxu0 %v511
      %v948 = vpop.f32.mrb[0].mxu0
      %v949 = vadd.f32 %v271, %v948
      %v950 = vpop.f32.mrb[0].mxu0
      %v951 = vpop.f32.mrb[0].mxu0
      %v952 = vadd.f32 %v271, %v951
      %v953 = vpop.f32.mrb[0].mxu0
      %954 = vmatprep.mubr.bf16.mxu0 %v707
      %955 = vmatmul.mubr.bf16.gmra.mrb[0].mxu0 %v513
      %v956 = vpop.f32.mrb[0].mxu0
      %v957 = vadd.f32 %v271, %v956
      %v958 = vpop.f32.mrb[0].mxu0
      %v959 = vpop.f32.mrb[0].mxu0
      %v960 = vadd.f32 %v271, %v959
      %v961 = vpop.f32.mrb[0].mxu0
      %962 = vmatprep.mubr.bf16.mxu0 %v710
      %963 = vmatmul.mubr.bf16.gmra.mrb[0].mxu0 %v515
      %v964 = vpop.f32.mrb[0].mxu0
      %v965 = vadd.f32 %v271, %v964
      %v966 = vpop.f32.mrb[0].mxu0
      %v967 = vpop.f32.mrb[0].mxu0
      %v968 = vadd.f32 %v271, %v967
      %v969 = vpop.f32.mrb[0].mxu0
      %970 = vmatprep.mubr.bf16.mxu0 %v713
      %971 = vmatmul.mubr.bf16.gmra.mrb[0].mxu0 %v517
      %v972 = vpop.f32.mrb[0].mxu0
      %v973 = vadd.f32 %v271, %v972
      %v974 = vpop.f32.mrb[0].mxu0
      %v975 = vpop.f32.mrb[0].mxu0
      %v976 = vadd.f32 %v271, %v975
      %v977 = vpop.f32.mrb[0].mxu0
      %978 = vmatprep.mubr.bf16.mxu0 %v716
      %979 = vmatmul.mubr.bf16.gmra.mrb[0].mxu0 %v519
      %v980 = vpop.f32.mrb[0].mxu0
      %v981 = vadd.f32 %v271, %v980
      %v982 = vpop.f32.mrb[0].mxu0
      %v983 = vpop.f32.mrb[0].mxu0
      %v984 = vadd.f32 %v271, %v983
      %v985 = vpop.f32.mrb[0].mxu0
      %986 = vmatprep.mubr.bf16.mxu0 %v719
      %987 = vmatmul.mubr.bf16.gmra.mrb[0].mxu0 %v521
      %v988 = vpop.f32.mrb[0].mxu0
      %v989 = vadd.f32 %v271, %v988
      %v990 = vpop.f32.mrb[0].mxu0
      %v991 = vpop.f32.mrb[0].mxu0
      %v992 = vadd.f32 %v271, %v991
      %v993 = vpop.f32.mrb[0].mxu0
      %994 = vmatprep.mubr.bf16.mxu0 %v722
      %995 = vmatmul.mubr.bf16.gmra.mrb[0].mxu0 %v523
      %v996 = vpop.f32.mrb[0].mxu0
      %v997 = vadd.f32 %v271, %v996
      %v998 = vpop.f32.mrb[0].mxu0
      %v999 = vpop.f32.mrb[0].mxu0
      %v1000 = vadd.f32 %v271, %v999
      %v1001 = vpop.f32.mrb[0].mxu0
      %1002 = vmatprep.mubr.bf16.mxu0 %v725
      %1003 = vmatmul.mubr.bf16.gmra.mrb[0].mxu0 %v525
      %v1004 = vpop.f32.mrb[0].mxu0
      %v1005 = vadd.f32 %v271, %v1004
      %v1006 = vpop.f32.mrb[0].mxu0
      %v1007 = vpop.f32.mrb[0].mxu0
      %v1008 = vadd.f32 %v271, %v1007
      %v1009 = vpop.f32.mrb[0].mxu0
      %1010 = vmatprep.mubr.bf16.mxu0 %v728
      %1011 = vmatmul.mubr.bf16.gmra.mrb[0].mxu0 %v527
      %v1012 = vpop.f32.mrb[0].mxu0
      %v1013 = vadd.f32 %v271, %v1012
      %v1014 = vpop.f32.mrb[0].mxu0
      %v1015 = vpop.f32.mrb[0].mxu0
      %v1016 = vadd.f32 %v271, %v1015
      %v1017 = vpop.f32.mrb[0].mxu0
      %1018 = vdwg.mxu0
      %vm1019 = vcmp.gt.f32.partialorder %v765, 0.0
      %vm1020 = vcmp.gt.f32.partialorder %v768, 0.0
      %vm1021 = vcmp.gt.f32.partialorder %v773, 0.0
      %vm1022 = vcmp.gt.f32.partialorder %v776, 0.0
      %vm1023 = vcmp.gt.f32.partialorder %v781, 0.0
      %vm1024 = vcmp.gt.f32.partialorder %v784, 0.0
      %vm1025 = vcmp.gt.f32.partialorder %v789, 0.0
      %vm1026 = vcmp.gt.f32.partialorder %v792, 0.0
      %vm1027 = vcmp.gt.f32.partialorder %v797, 0.0
      %vm1028 = vcmp.gt.f32.partialorder %v800, 0.0
      %vm1029 = vcmp.gt.f32.partialorder %v805, 0.0
      %vm1030 = vcmp.gt.f32.partialorder %v808, 0.0
      %vm1031 = vcmp.gt.f32.partialorder %v813, 0.0
      %vm1032 = vcmp.gt.f32.partialorder %v816, 0.0
      %vm1033 = vcmp.gt.f32.partialorder %v821, 0.0
      %vm1034 = vcmp.gt.f32.partialorder %v824, 0.0
      %vm1035 = vcmp.gt.f32.partialorder %v829, 0.0
      %vm1036 = vcmp.gt.f32.partialorder %v832, 0.0
      %vm1037 = vcmp.gt.f32.partialorder %v837, 0.0
      %vm1038 = vcmp.gt.f32.partialorder %v840, 0.0
      %vm1039 = vcmp.gt.f32.partialorder %v845, 0.0
      %vm1040 = vcmp.gt.f32.partialorder %v848, 0.0
      %vm1041 = vcmp.gt.f32.partialorder %v853, 0.0
      %vm1042 = vcmp.gt.f32.partialorder %v856, 0.0
      %vm1043 = vcmp.gt.f32.partialorder %v861, 0.0
      %vm1044 = vcmp.gt.f32.partialorder %v864, 0.0
      %vm1045 = vcmp.gt.f32.partialorder %v869, 0.0
      %vm1046 = vcmp.gt.f32.partialorder %v872, 0.0
      %vm1047 = vcmp.gt.f32.partialorder %v877, 0.0
      %vm1048 = vcmp.gt.f32.partialorder %v880, 0.0
      %vm1049 = vcmp.gt.f32.partialorder %v885, 0.0
      %vm1050 = vcmp.gt.f32.partialorder %v888, 0.0
      %vm1051 = vcmp.gt.f32.partialorder %v893, 0.0
      %vm1052 = vcmp.gt.f32.partialorder %v896, 0.0
      %vm1053 = vcmp.gt.f32.partialorder %v901, 0.0
      %vm1054 = vcmp.gt.f32.partialorder %v904, 0.0
      %vm1055 = vcmp.gt.f32.partialorder %v909, 0.0
      %vm1056 = vcmp.gt.f32.partialorder %v912, 0.0
      %vm1057 = vcmp.gt.f32.partialorder %v917, 0.0
      %vm1058 = vcmp.gt.f32.partialorder %v920, 0.0
      %vm1059 = vcmp.gt.f32.partialorder %v925, 0.0
      %vm1060 = vcmp.gt.f32.partialorder %v928, 0.0
      %vm1061 = vcmp.gt.f32.partialorder %v933, 0.0
      %vm1062 = vcmp.gt.f32.partialorder %v936, 0.0
      %vm1063 = vcmp.gt.f32.partialorder %v941, 0.0
      %vm1064 = vcmp.gt.f32.partialorder %v944, 0.0
      %vm1065 = vcmp.gt.f32.partialorder %v949, 0.0
      %vm1066 = vcmp.gt.f32.partialorder %v952, 0.0
      %vm1067 = vcmp.gt.f32.partialorder %v957, 0.0
      %vm1068 = vcmp.gt.f32.partialorder %v960, 0.0
      %vm1069 = vcmp.gt.f32.partialorder %v965, 0.0
      %vm1070 = vcmp.gt.f32.partialorder %v968, 0.0
      %vm1071 = vcmp.gt.f32.partialorder %v973, 0.0
      %vm1072 = vcmp.gt.f32.partialorder %v976, 0.0
      %vm1073 = vcmp.gt.f32.partialorder %v981, 0.0
      %vm1074 = vcmp.gt.f32.partialorder %v984, 0.0
      %vm1075 = vcmp.gt.f32.partialorder %v989, 0.0
      %vm1076 = vcmp.gt.f32.partialorder %v992, 0.0
      %vm1077 = vcmp.gt.f32.partialorder %v997, 0.0
      %vm1078 = vcmp.gt.f32.partialorder %v1000, 0.0
      %vm1079 = vcmp.gt.f32.partialorder %v1005, 0.0
      %vm1080 = vcmp.gt.f32.partialorder %v1008, 0.0
      %vm1081 = vcmp.gt.f32.partialorder %v1013, 0.0
      %vm1082 = vcmp.gt.f32.partialorder %v1016, 0.0
      %v1083 = vmul.f32 %v765, 1.442695
      %v1084 = vpow.pop %v1083
      %v1085 = vmul.f32 %v768, 1.442695
      %v1086 = vpow.pop %v1085
      %v1087 = vmul.f32 %v773, 1.442695
      %v1088 = vpow.pop %v1087
      %v1089 = vmul.f32 %v776, 1.442695
      %v1090 = vpow.pop %v1089
      %v1091 = vmul.f32 %v781, 1.442695
      %v1092 = vpow.pop %v1091
      %v1093 = vmul.f32 %v784, 1.442695
      %v1094 = vpow.pop %v1093
      %v1095 = vmul.f32 %v789, 1.442695
      %v1096 = vpow.pop %v1095
      %v1097 = vmul.f32 %v792, 1.442695
      %v1098 = vpow.pop %v1097
      %v1099 = vmul.f32 %v797, 1.442695
      %v1100 = vpow.pop %v1099
      %v1101 = vmul.f32 %v800, 1.442695
      %v1102 = vpow.pop %v1101
      %v1103 = vmul.f32 %v805, 1.442695
      %v1104 = vpow.pop %v1103
      %v1105 = vmul.f32 %v808, 1.442695
      %v1106 = vpow.pop %v1105
      %v1107 = vmul.f32 %v813, 1.442695
      %v1108 = vpow.pop %v1107
      %v1109 = vmul.f32 %v816, 1.442695
      %v1110 = vpow.pop %v1109
      %v1111 = vmul.f32 %v821, 1.442695
      %v1112 = vpow.pop %v1111
      %v1113 = vmul.f32 %v824, 1.442695
      %v1114 = vpow.pop %v1113
      %v1115 = vmul.f32 %v829, 1.442695
      %v1116 = vpow.pop %v1115
      %v1117 = vmul.f32 %v832, 1.442695
      %v1118 = vpow.pop %v1117
      %v1119 = vmul.f32 %v837, 1.442695
      %v1120 = vpow.pop %v1119
      %v1121 = vmul.f32 %v840, 1.442695
      %v1122 = vpow.pop %v1121
      %v1123 = vmul.f32 %v845, 1.442695
      %v1124 = vpow.pop %v1123
      %v1125 = vmul.f32 %v848, 1.442695
      %v1126 = vpow.pop %v1125
      %v1127 = vmul.f32 %v853, 1.442695
      %v1128 = vpow.pop %v1127
      %v1129 = vmul.f32 %v856, 1.442695
      %v1130 = vpow.pop %v1129
      %v1131 = vmul.f32 %v861, 1.442695
      %v1132 = vpow.pop %v1131
      %v1133 = vmul.f32 %v864, 1.442695
      %v1134 = vpow.pop %v1133
      %v1135 = vmul.f32 %v869, 1.442695
      %v1136 = vpow.pop %v1135
      %v1137 = vmul.f32 %v872, 1.442695
      %v1138 = vpow.pop %v1137
      %v1139 = vmul.f32 %v877, 1.442695
      %v1140 = vpow.pop %v1139
      %v1141 = vmul.f32 %v880, 1.442695
      %v1142 = vpow.pop %v1141
      %v1143 = vmul.f32 %v885, 1.442695
      %v1144 = vpow.pop %v1143
      %v1145 = vmul.f32 %v888, 1.442695
      %v1146 = vpow.pop %v1145
      %v1147 = vmul.f32 %v893, 1.442695
      %v1148 = vpow.pop %v1147
      %v1149 = vmul.f32 %v896, 1.442695
      %v1150 = vpow.pop %v1149
      %v1151 = vmul.f32 %v901, 1.442695
      %v1152 = vpow.pop %v1151
      %v1153 = vmul.f32 %v904, 1.442695
      %v1154 = vpow.pop %v1153
      %v1155 = vmul.f32 %v909, 1.442695
      %v1156 = vpow.pop %v1155
      %v1157 = vmul.f32 %v912, 1.442695
      %v1158 = vpow.pop %v1157
      %v1159 = vmul.f32 %v917, 1.442695
      %v1160 = vpow.pop %v1159
      %v1161 = vmul.f32 %v920, 1.442695
      %v1162 = vpow.pop %v1161
      %v1163 = vmul.f32 %v925, 1.442695
      %v1164 = vpow.pop %v1163
      %v1165 = vmul.f32 %v928, 1.442695
      %v1166 = vpow.pop %v1165
      %v1167 = vmul.f32 %v933, 1.442695
      %v1168 = vpow.pop %v1167
      %v1169 = vmul.f32 %v936, 1.442695
      %v1170 = vpow.pop %v1169
      %v1171 = vmul.f32 %v941, 1.442695
      %v1172 = vpow.pop %v1171
      %v1173 = vmul.f32 %v944, 1.442695
      %v1174 = vpow.pop %v1173
      %v1175 = vmul.f32 %v949, 1.442695
      %v1176 = vpow.pop %v1175
      %v1177 = vmul.f32 %v952, 1.442695
      %v1178 = vpow.pop %v1177
      %v1179 = vmul.f32 %v957, 1.442695
      %v1180 = vpow.pop %v1179
      %v1181 = vmul.f32 %v960, 1.442695
      %v1182 = vpow.pop %v1181
      %v1183 = vmul.f32 %v965, 1.442695
      %v1184 = vpow.pop %v1183
      %v1185 = vmul.f32 %v968, 1.442695
      %v1186 = vpow.pop %v1185
      %v1187 = vmul.f32 %v973, 1.442695
      %v1188 = vpow.pop %v1187
      %v1189 = vmul.f32 %v976, 1.442695
      %v1190 = vpow.pop %v1189
      %v1191 = vmul.f32 %v981, 1.442695
      %v1192 = vpow.pop %v1191
      %v1193 = vmul.f32 %v984, 1.442695
      %v1194 = vpow.pop %v1193
      %v1195 = vmul.f32 %v989, 1.442695
      %v1196 = vpow.pop %v1195
      %v1197 = vmul.f32 %v992, 1.442695
      %v1198 = vpow.pop %v1197
      %v1199 = vmul.f32 %v997, 1.442695
      %v1200 = vpow.pop %v1199
      %v1201 = vmul.f32 %v1000, 1.442695
      %v1202 = vpow.pop %v1201
      %v1203 = vmul.f32 %v1005, 1.442695
      %v1204 = vpow.pop %v1203
      %v1205 = vmul.f32 %v1008, 1.442695
      %v1206 = vpow.pop %v1205
      %v1207 = vmul.f32 %v1013, 1.442695
      %v1208 = vpow.pop %v1207
      %v1209 = vmul.f32 %v1016, 1.442695
      %v1210 = vpow.pop %v1209
      %v1211 = vsub.f32 %v1084, 1.0
      %v1212 = vsub.f32 %v1086, 1.0
      %v1213 = vsub.f32 %v1088, 1.0
      %v1214 = vsub.f32 %v1090, 1.0
      %v1215 = vsub.f32 %v1092, 1.0
      %v1216 = vsub.f32 %v1094, 1.0
      %v1217 = vsub.f32 %v1096, 1.0
      %v1218 = vsub.f32 %v1098, 1.0
      %v1219 = vsub.f32 %v1100, 1.0
      %v1220 = vsub.f32 %v1102, 1.0
      %v1221 = vsub.f32 %v1104, 1.0
      %v1222 = vsub.f32 %v1106, 1.0
      %v1223 = vsub.f32 %v1108, 1.0
      %v1224 = vsub.f32 %v1110, 1.0
      %v1225 = vsub.f32 %v1112, 1.0
      %v1226 = vsub.f32 %v1114, 1.0
      %v1227 = vsub.f32 %v1116, 1.0
      %v1228 = vsub.f32 %v1118, 1.0
      %v1229 = vsub.f32 %v1120, 1.0
      %v1230 = vsub.f32 %v1122, 1.0
      %v1231 = vsub.f32 %v1124, 1.0
      %v1232 = vsub.f32 %v1126, 1.0
      %v1233 = vsub.f32 %v1128, 1.0
      %v1234 = vsub.f32 %v1130, 1.0
      %v1235 = vsub.f32 %v1132, 1.0
      %v1236 = vsub.f32 %v1134, 1.0
      %v1237 = vsub.f32 %v1136, 1.0
      %v1238 = vsub.f32 %v1138, 1.0
      %v1239 = vsub.f32 %v1140, 1.0
      %v1240 = vsub.f32 %v1142, 1.0
      %v1241 = vsub.f32 %v1144, 1.0
      %v1242 = vsub.f32 %v1146, 1.0
      %v1243 = vsub.f32 %v1148, 1.0
      %v1244 = vsub.f32 %v1150, 1.0
      %v1245 = vsub.f32 %v1152, 1.0
      %v1246 = vsub.f32 %v1154, 1.0
      %v1247 = vsub.f32 %v1156, 1.0
      %v1248 = vsub.f32 %v1158, 1.0
      %v1249 = vsub.f32 %v1160, 1.0
      %v1250 = vsub.f32 %v1162, 1.0
      %v1251 = vsub.f32 %v1164, 1.0
      %v1252 = vsub.f32 %v1166, 1.0
      %v1253 = vsub.f32 %v1168, 1.0
      %v1254 = vsub.f32 %v1170, 1.0
      %v1255 = vsub.f32 %v1172, 1.0
      %v1256 = vsub.f32 %v1174, 1.0
      %v1257 = vsub.f32 %v1176, 1.0
      %v1258 = vsub.f32 %v1178, 1.0
      %v1259 = vsub.f32 %v1180, 1.0
      %v1260 = vsub.f32 %v1182, 1.0
      %v1261 = vsub.f32 %v1184, 1.0
      %v1262 = vsub.f32 %v1186, 1.0
      %v1263 = vsub.f32 %v1188, 1.0
      %v1264 = vsub.f32 %v1190, 1.0
      %v1265 = vsub.f32 %v1192, 1.0
      %v1266 = vsub.f32 %v1194, 1.0
      %v1267 = vsub.f32 %v1196, 1.0
      %v1268 = vsub.f32 %v1198, 1.0
      %v1269 = vsub.f32 %v1200, 1.0
      %v1270 = vsub.f32 %v1202, 1.0
      %v1271 = vsub.f32 %v1204, 1.0
      %v1272 = vsub.f32 %v1206, 1.0
      %v1273 = vsub.f32 %v1208, 1.0
      %v1274 = vsub.f32 %v1210, 1.0
      %v1275 = vsel %vm1019, %v765, %v1211
      %v1276 = vsel %vm1020, %v768, %v1212
      %v1277 = vsel %vm1021, %v773, %v1213
      %v1278 = vsel %vm1022, %v776, %v1214
      %v1279 = vsel %vm1023, %v781, %v1215
      %v1280 = vsel %vm1024, %v784, %v1216
      %v1281 = vsel %vm1025, %v789, %v1217
      %v1282 = vsel %vm1026, %v792, %v1218
      %v1283 = vsel %vm1027, %v797, %v1219
      %v1284 = vsel %vm1028, %v800, %v1220
      %v1285 = vsel %vm1029, %v805, %v1221
      %v1286 = vsel %vm1030, %v808, %v1222
      %v1287 = vsel %vm1031, %v813, %v1223
      %v1288 = vsel %vm1032, %v816, %v1224
      %v1289 = vsel %vm1033, %v821, %v1225
      %v1290 = vsel %vm1034, %v824, %v1226
      %v1291 = vsel %vm1035, %v829, %v1227
      %v1292 = vsel %vm1036, %v832, %v1228
      %v1293 = vsel %vm1037, %v837, %v1229
      %v1294 = vsel %vm1038, %v840, %v1230
      %v1295 = vsel %vm1039, %v845, %v1231
      %v1296 = vsel %vm1040, %v848, %v1232
      %v1297 = vsel %vm1041, %v853, %v1233
      %v1298 = vsel %vm1042, %v856, %v1234
      %v1299 = vsel %vm1043, %v861, %v1235
      %v1300 = vsel %vm1044, %v864, %v1236
      %v1301 = vsel %vm1045, %v869, %v1237
      %v1302 = vsel %vm1046, %v872, %v1238
      %v1303 = vsel %vm1047, %v877, %v1239
      %v1304 = vsel %vm1048, %v880, %v1240
      %v1305 = vsel %vm1049, %v885, %v1241
      %v1306 = vsel %vm1050, %v888, %v1242
      %v1307 = vsel %vm1051, %v893, %v1243
      %v1308 = vsel %vm1052, %v896, %v1244
      %v1309 = vsel %vm1053, %v901, %v1245
      %v1310 = vsel %vm1054, %v904, %v1246
      %v1311 = vsel %vm1055, %v909, %v1247
      %v1312 = vsel %vm1056, %v912, %v1248
      %v1313 = vsel %vm1057, %v917, %v1249
      %v1314 = vsel %vm1058, %v920, %v1250
      %v1315 = vsel %vm1059, %v925, %v1251
      %v1316 = vsel %vm1060, %v928, %v1252
      %v1317 = vsel %vm1061, %v933, %v1253
      %v1318 = vsel %vm1062, %v936, %v1254
      %v1319 = vsel %vm1063, %v941, %v1255
      %v1320 = vsel %vm1064, %v944, %v1256
      %v1321 = vsel %vm1065, %v949, %v1257
      %v1322 = vsel %vm1066, %v952, %v1258
      %v1323 = vsel %vm1067, %v957, %v1259
      %v1324 = vsel %vm1068, %v960, %v1260
      %v1325 = vsel %vm1069, %v965, %v1261
      %v1326 = vsel %vm1070, %v968, %v1262
      %v1327 = vsel %vm1071, %v973, %v1263
      %v1328 = vsel %vm1072, %v976, %v1264
      %v1329 = vsel %vm1073, %v981, %v1265
      %v1330 = vsel %vm1074, %v984, %v1266
      %v1331 = vsel %vm1075, %v989, %v1267
      %v1332 = vsel %vm1076, %v992, %v1268
      %v1333 = vsel %vm1077, %v997, %v1269
      %v1334 = vsel %vm1078, %v1000, %v1270
      %v1335 = vsel %vm1079, %v1005, %v1271
      %v1336 = vsel %vm1080, %v1008, %v1272
      %v1337 = vsel %vm1081, %v1013, %v1273
      %v1338 = vsel %vm1082, %v1016, %v1274
      %1339 = vst [vmem:[%s175] sm:$0xff] %v1275
      %1340 = vst [vmem:[%s175 + $0x8] sm:$0xff] %v1276
      %1341 = vst [vmem:[%s175 + $0x10] sm:$0xff] %v1277
      %1342 = vst [vmem:[%s175 + $0x18] sm:$0xff] %v1278
      %1343 = vst [vmem:[%s175 + $0x20] sm:$0xff] %v1279
      %1344 = vst [vmem:[%s175 + $0x28] sm:$0xff] %v1280
      %1345 = vst [vmem:[%s175 + $0x30] sm:$0xff] %v1281
      %1346 = vst [vmem:[%s175 + $0x38] sm:$0xff] %v1282
      %1347 = vst [vmem:[%s175 + $0x40] sm:$0xff] %v1283
      %1348 = vst [vmem:[%s175 + $0x48] sm:$0xff] %v1284
      %1349 = vst [vmem:[%s175 + $0x50] sm:$0xff] %v1285
      %1350 = vst [vmem:[%s175 + $0x58] sm:$0xff] %v1286
      %1351 = vst [vmem:[%s175 + $0x60] sm:$0xff] %v1287
      %1352 = vst [vmem:[%s175 + $0x68] sm:$0xff] %v1288
      %1353 = vst [vmem:[%s175 + $0x70] sm:$0xff] %v1289
      %1354 = vst [vmem:[%s175 + $0x78] sm:$0xff] %v1290
      %1355 = vst [vmem:[%s175 + $0x80] sm:$0xff] %v1291
      %1356 = vst [vmem:[%s175 + $0x88] sm:$0xff] %v1292
      %1357 = vst [vmem:[%s175 + $0x90] sm:$0xff] %v1293
      %1358 = vst [vmem:[%s175 + $0x98] sm:$0xff] %v1294
      %1359 = vst [vmem:[%s175 + $0xa0] sm:$0xff] %v1295
      %1360 = vst [vmem:[%s175 + $0xa8] sm:$0xff] %v1296
      %1361 = vst [vmem:[%s175 + $0xb0] sm:$0xff] %v1297
      %1362 = vst [vmem:[%s175 + $0xb8] sm:$0xff] %v1298
      %1363 = vst [vmem:[%s175 + $0xc0] sm:$0xff] %v1299
      %1364 = vst [vmem:[%s175 + $0xc8] sm:$0xff] %v1300
      %1365 = vst [vmem:[%s175 + $0xd0] sm:$0xff] %v1301
      %1366 = vst [vmem:[%s175 + $0xd8] sm:$0xff] %v1302
      %1367 = vst [vmem:[%s175 + $0xe0] sm:$0xff] %v1303
      %1368 = vst [vmem:[%s175 + $0xe8] sm:$0xff] %v1304
      %1369 = vst [vmem:[%s175 + $0xf0] sm:$0xff] %v1305
      %1370 = vst [vmem:[%s175 + $0xf8] sm:$0xff] %v1306
      %1371 = vst [vmem:[%s175 + $0x100] sm:$0xff] %v1307
      %1372 = vst [vmem:[%s175 + $0x108] sm:$0xff] %v1308
      %1373 = vst [vmem:[%s175 + $0x110] sm:$0xff] %v1309
      %1374 = vst [vmem:[%s175 + $0x118] sm:$0xff] %v1310
      %1375 = vst [vmem:[%s175 + $0x120] sm:$0xff] %v1311
      %1376 = vst [vmem:[%s175 + $0x128] sm:$0xff] %v1312
      %1377 = vst [vmem:[%s175 + $0x130] sm:$0xff] %v1313
      %1378 = vst [vmem:[%s175 + $0x138] sm:$0xff] %v1314
      %1379 = vst [vmem:[%s175 + $0x140] sm:$0xff] %v1315
      %1380 = vst [vmem:[%s175 + $0x148] sm:$0xff] %v1316
      %1381 = vst [vmem:[%s175 + $0x150] sm:$0xff] %v1317
      %1382 = vst [vmem:[%s175 + $0x158] sm:$0xff] %v1318
      %1383 = vst [vmem:[%s175 + $0x160] sm:$0xff] %v1319
      %1384 = vst [vmem:[%s175 + $0x168] sm:$0xff] %v1320
      %1385 = vst [vmem:[%s175 + $0x170] sm:$0xff] %v1321
      %1386 = vst [vmem:[%s175 + $0x178] sm:$0xff] %v1322
      %1387 = vst [vmem:[%s175 + $0x180] sm:$0xff] %v1323
      %1388 = vst [vmem:[%s175 + $0x188] sm:$0xff] %v1324
      %1389 = vst [vmem:[%s175 + $0x190] sm:$0xff] %v1325
      %1390 = vst [vmem:[%s175 + $0x198] sm:$0xff] %v1326
      %1391 = vst [vmem:[%s175 + $0x1a0] sm:$0xff] %v1327
      %1392 = vst [vmem:[%s175 + $0x1a8] sm:$0xff] %v1328
      %1393 = vst [vmem:[%s175 + $0x1b0] sm:$0xff] %v1329
      %1394 = vst [vmem:[%s175 + $0x1b8] sm:$0xff] %v1330
      %1395 = vst [vmem:[%s175 + $0x1c0] sm:$0xff] %v1331
      %1396 = vst [vmem:[%s175 + $0x1c8] sm:$0xff] %v1332
      %1397 = vst [vmem:[%s175 + $0x1d0] sm:$0xff] %v1333
      %1398 = vst [vmem:[%s175 + $0x1d8] sm:$0xff] %v1334
      %1399 = vst [vmem:[%s175 + $0x1e0] sm:$0xff] %v1335
      %1400 = vst [vmem:[%s175 + $0x1e8] sm:$0xff] %v1336
      %1401 = vst [vmem:[%s175 + $0x1f0] sm:$0xff] %v1337
      %1402 = vst [vmem:[%s175 + $0x1f8] sm:$0xff] %v1338
      %s1403 = smul.u32 64, %s14
      %p1404 = scmp.lt.s32.totalorder %s1403, 255
      %s1405 = scalar_select %p1404, %s1403, 255
      %s1406 = smul.addr %s1405, 8
      %s1407 = scalar_lea.vmem %s3, %s1406
      // Predicated region
      $region33: #{vae_forward.9} parent=31 // pred_check
        %p1408 = pneg %p100
      $region34: #{vae_forward.9} parent=31 // pred_check_branch
        %1410 = sbr.rel (%p1408) target = $region36
      $region35: #{vae_forward.9} parent=31 // pred_region
        %s1411 = smul.u32 64, %s14
      $region36: #{vae_forward.9} parent=31 // pred_fallthru
        _
    $region32: #{vae_forward.9} parent=5 // pred_fallthru
      _
    %p1412 = scmp.le.s32.totalorder 2, %s9
    // Predicated region
    $region37: #{vae_forward.9} parent=5 // pred_check
      %p1413 = pneg %p1412
    $region38: #{vae_forward.9} parent=5 // pred_check_branch
      %1415 = sbr.rel (%p1413) target = $region40
    $region39: #{vae_forward.9} parent=5 // pred_region
      %s1416 = ssub.s32 %s9, 2
      // Predicated region
      $region41: #{vae_forward.9} parent=39 // pred_check
        %p1417 = pneg %p106
      $region42: #{vae_forward.9} parent=39 // pred_check_branch
        %1419 = sbr.rel (%p1417) target = $region44
      $region43: #{vae_forward.9} parent=39 // pred_region
        %s1420 = smul.u32 64, %s15
        %p1421 = scmp.lt.s32.totalorder %s1420, 255
        %s1422 = scalar_select %p1421, %s1420, 255
        %s1423 = smul.addr %s1422, 8
        %s1424 = scalar_lea.vmem %s3, %s1423
      $region44: #{vae_forward.9} parent=39 // pred_fallthru
        _
    $region40: #{vae_forward.9} parent=5 // pred_fallthru
      _
  $region6: #{vae_forward.9} parent=0 // loop_footer
    %s13 = sadd.s32 1, %s9
  $region7: #{vae_forward.9} parent=0 // loop_footer_branch
    %8 = sbr.rel target = $region3
  $region8: #{vae_forward.9} parent=0 // loop_exit
    _

// kernel: vae_forward.10
$region0: #{vae_forward.10}
  #allocation0 [shape = 'u32[]', space=smem, size = 0x4, offset = 0x4, fixed_abs, tag = 'smem constant byte address 0x4 - core index']
  #allocation1 [shape = 'u32[144,128]{1,0:T(1,128)}', space=vmem, size = 0x12000, scoped, tag = 'internal scratch']
  %s0 = inlined_call_operand.vmem [shape: bf16[352,256], index: 0, kind: input, shape index: {}]
  %s1 = inlined_call_operand.vmem [shape: bf16[256,128], index: 1, kind: input, shape index: {}]
  %s2 = inlined_call_operand.vmem [shape: f32[1,128], index: 2, kind: input, shape index: {}]
  %s3 = inlined_call_operand.vmem [shape: f32[352,128], index: 3, kind: output, shape index: {}]
  %s4 = sld [smem:[#allocation0]]
  $region45: #{vae_forward.10} parent=0
    _
  %s6 = ssub.s32 1, %s4
  %s7 = scalar_select 0, %s6, %s4
  loop: start=0, step=1, limit=4
  $region2: #{vae_forward.10} parent=0 // loop_pre_header
    _
  $region3: #{vae_forward.10} parent=0 // loop_header
    %s9 = sphi 0, %s13
    %p10 = scmp.ge.s32.totalorder %s9, 4
    %s19 = sphi 0, %s21
    %s22 = sphi 0, %s19
    %s23 = sphi 0, %s22
    %s39 = sphi 0, %s23
    %s43 = sphi 0, %s43
    %s45 = sphi 0, %s43
    %s46 = sphi 0, %s45
    %s60 = sphi 0, %s46
    %s64 = sphi 0, %s64
    %s66 = sphi 0, %s64
    %s67 = sphi 0, %s66
    %s81 = sphi 0, %s67
    %s87 = sphi 0, %s89
    %s90 = sphi 0, %s87
    %s91 = sphi 0, %s90
    %s107 = sphi 0, %s91
  $region4: #{vae_forward.10} parent=0 // loop_header_branch
    %12 = sbr.rel (%p10) target = $region8
  $region5: #{vae_forward.10} parent=0 // loop_body
    %s14 = ssub.s32 %s9, 1
    %s15 = ssub.s32 %s9, 2
    %s16 = sadd.s32 %s9, 1
    %s17 = ssub.s32 %s9, %s16
    %p18 = scmp.eq.s32.totalorder %s17, 0
    %s20 = sadd.s32 %s19, 1
    %s21 = scalar_select %p18, %s19, %s20
    %p24 = pneg %p18
    %p25 = scmp.eq.s32.totalorder %s9, 1
    %p26 = por %p24, %p25
    %p27 = scmp.ne.s32.totalorder %s19, %s22
    %p28 = scmp.eq.s32.totalorder %s9, 0
    %p29 = por %p27, %p28
    %p30 = scmp.ne.s32.totalorder %s19, %s22
    %p31 = scmp.eq.s32.totalorder %s14, 1
    %p32 = por %p30, %p31
    %p33 = scmp.ne.s32.totalorder %s22, %s23
    %p34 = scmp.eq.s32.totalorder %s14, 0
    %p35 = por %p33, %p34
    %p36 = scmp.ne.s32.totalorder %s22, %s23
    %p37 = scmp.eq.s32.totalorder %s15, 1
    %p38 = por %p36, %p37
    %p40 = scmp.ne.s32.totalorder %s23, %s39
    %p41 = scmp.eq.s32.totalorder %s15, 0
    %p42 = por %p40, %p41
    %s44 = sadd.s32 %s43, 1
    %p47 = scmp.eq.s32.totalorder %s9, 1
    %p48 = scmp.ne.s32.totalorder %s43, %s45
    %p49 = scmp.eq.s32.totalorder %s9, 0
    %p50 = por %p48, %p49
    %p51 = scmp.ne.s32.totalorder %s43, %s45
    %p52 = scmp.eq.s32.totalorder %s14, 1
    %p53 = por %p51, %p52
    %p54 = scmp.ne.s32.totalorder %s45, %s46
    %p55 = scmp.eq.s32.totalorder %s14, 0
    %p56 = por %p54, %p55
    %p57 = scmp.ne.s32.totalorder %s45, %s46
    %p58 = scmp.eq.s32.totalorder %s15, 1
    %p59 = por %p57, %p58
    %p61 = scmp.ne.s32.totalorder %s46, %s60
    %p62 = scmp.eq.s32.totalorder %s15, 0
    %p63 = por %p61, %p62
    %s65 = sadd.s32 %s64, 1
    %p68 = scmp.eq.s32.totalorder %s9, 1
    %p69 = scmp.ne.s32.totalorder %s64, %s66
    %p70 = scmp.eq.s32.totalorder %s9, 0
    %p71 = por %p69, %p70
    %p72 = scmp.ne.s32.totalorder %s64, %s66
    %p73 = scmp.eq.s32.totalorder %s14, 1
    %p74 = por %p72, %p73
    %p75 = scmp.ne.s32.totalorder %s66, %s67
    %p76 = scmp.eq.s32.totalorder %s14, 0
    %p77 = por %p75, %p76
    %p78 = scmp.ne.s32.totalorder %s66, %s67
    %p79 = scmp.eq.s32.totalorder %s15, 1
    %p80 = por %p78, %p79
    %p82 = scmp.ne.s32.totalorder %s67, %s81
    %p83 = scmp.eq.s32.totalorder %s15, 0
    %p84 = por %p82, %p83
    %s85 = ssub.s32 %s9, %s16
    %p86 = scmp.eq.s32.totalorder %s85, 0
    %s88 = sadd.s32 %s87, 1
    %s89 = scalar_select %p86, %s87, %s88
    %p92 = pneg %p86
    %p93 = scmp.eq.s32.totalorder %s9, 1
    %p94 = por %p92, %p93
    %p95 = scmp.ne.s32.totalorder %s87, %s90
    %p96 = scmp.eq.s32.totalorder %s9, 0
    %p97 = por %p95, %p96
    %p98 = scmp.ne.s32.totalorder %s87, %s90
    %p99 = scmp.eq.s32.totalorder %s14, 1
    %p100 = por %p98, %p99
    %p101 = scmp.ne.s32.totalorder %s90, %s91
    %p102 = scmp.eq.s32.totalorder %s14, 0
    %p103 = por %p101, %p102
    %p104 = scmp.ne.s32.totalorder %s90, %s91
    %p105 = scmp.eq.s32.totalorder %s15, 1
    %p106 = por %p104, %p105
    %p108 = scmp.ne.s32.totalorder %s91, %s107
    %p109 = scmp.eq.s32.totalorder %s15, 0
    %p110 = por %p108, %p109
    %p111 = scmp.le.s32.totalorder 1, %s9
    %p112 = scmp.lt.s32.totalorder %s9, 3
    %p113 = pnand %p111, %p112
    %p114 = pneg %p113
    // Predicated region
    $region9: #{vae_forward.10} parent=5 // pred_check
      _
    $region10: #{vae_forward.10} parent=5 // pred_check_branch
      %116 = sbr.rel (%p113) target = $region12
    $region11: #{vae_forward.10} parent=5 // pred_region
      %s117 = ssub.s32 %s9, 1
      // Predicated region
      $region13: #{vae_forward.10} parent=11 // pred_check
        %p118 = pneg %p56
      $region14: #{vae_forward.10} parent=11 // pred_check_branch
        %120 = sbr.rel (%p118) target = $region16
      $region15: #{vae_forward.10} parent=11 // pred_region
        _
      $region16: #{vae_forward.10} parent=11 // pred_fallthru
        _
      // Predicated region
      $region17: #{vae_forward.10} parent=11 // pred_check
        %p121 = pneg %p77
      $region18: #{vae_forward.10} parent=11 // pred_check_branch
        %123 = sbr.rel (%p121) target = $region20
      $region19: #{vae_forward.10} parent=11 // pred_region
        _
      $region20: #{vae_forward.10} parent=11 // pred_fallthru
        _
    $region12: #{vae_forward.10} parent=5 // pred_fallthru
      _
    %p124 = scmp.lt.s32.totalorder %s9, 2
    // Predicated region
    $region21: #{vae_forward.10} parent=5 // pred_check
      %p125 = pneg %p124
    $region22: #{vae_forward.10} parent=5 // pred_check_branch
      %127 = sbr.rel (%p125) target = $region24
    $region23: #{vae_forward.10} parent=5 // pred_region
      // Predicated region
      $region25: #{vae_forward.10} parent=23 // pred_check
        %p128 = pneg %p29
      $region26: #{vae_forward.10} parent=23 // pred_check_branch
        %130 = sbr.rel (%p128) target = $region28
      $region27: #{vae_forward.10} parent=23 // pred_region
        %s131 = smul.u32 22, %s9
        %p132 = scmp.lt.s32.totalorder %s131, 43
        %s133 = scalar_select %p132, %s131, 43
        %s134 = smul.addr %s133, 2
        %s135 = smul.addr %s134, 4
        %s136 = scalar_lea.vmem %s0, %s135
        %s137 = smul.u32 22, %s9
      $region28: #{vae_forward.10} parent=23 // pred_fallthru
        _
    $region24: #{vae_forward.10} parent=5 // pred_fallthru
      _
    %p138 = scmp.le.s32.totalorder 1, %s9
    %p139 = scmp.lt.s32.totalorder %s9, 3
    %p140 = pnand %p138, %p139
    %p141 = pneg %p140
    // Predicated region
    $region29: #{vae_forward.10} parent=5 // pred_check
      _
    $region30: #{vae_forward.10} parent=5 // pred_check_branch
      %143 = sbr.rel (%p140) target = $region32
    $region31: #{vae_forward.10} parent=5 // pred_region
      %s144 = ssub.s32 %s9, 1
      %s145 = smul.u32 22, %s14
      %p146 = scmp.lt.s32.totalorder %s145, 43
      %s147 = scalar_select %p146, %s145, 43
      %s148 = smul.addr %s147, 2
      %s149 = smul.addr %s148, 4
      %s150 = scalar_lea.vmem %s0, %s149
      %p151 = pneg %p35
      %p152 = pneg %p32
      %p153 = pneg %p56
      %p154 = pneg %p53
      %p155 = pneg %p77
      %p156 = pneg %p74
      %p157 = pneg %p103
      %p158 = pneg %p100
      %s159 = smul.u32 22, %s14
      %p160 = scmp.lt.s32.totalorder %s159, 43
      %s161 = scalar_select %p160, %s159, 43
      %s162 = smul.addr %s161, 8
      %s163 = scalar_lea.vmem %s3, %s162
      %s164 = smul.u32 22, %s14
      %p165 = scmp.lt.s32.totalorder %s164, 43
      %s166 = scalar_select %p165, %s164, 43
      %s167 = smul.addr %s166, 2
      %s168 = smul.addr %s167, 4
      %s169 = scalar_lea.vmem %s0, %s168
      %s170 = smul.u32 22, %s14
      %s171 = smul.u32 22, %s14
      %p172 = scmp.lt.s32.totalorder %s171, 43
      %s173 = scalar_select %p172, %s171, 43
      %s174 = smul.addr %s173, 8
      %s175 = scalar_lea.vmem %s3, %s174
      %s176 = smul.u32 22, %s14
      %v178 = vld [vmem:[%s169] sm:$0xff]
      %v179 = vld [vmem:[%s169 + $0x8] sm:$0xff]
      %v180 = vld [vmem:[%s169 + $0x10] sm:$0xff]
      %v181 = vld [vmem:[%s169 + $0x18] sm:$0xff]
      %v182 = vld [vmem:[%s169 + $0x20] sm:$0xff]
      %v183 = vld [vmem:[%s169 + $0x28] sm:$0xff]
      %v184 = vld [vmem:[%s169 + $0x30] sm:$0xff]
      %v185 = vld [vmem:[%s169 + $0x38] sm:$0xff]
      %v186 = vld [vmem:[%s169 + $0x40] sm:$0xff]
      %v187 = vld [vmem:[%s169 + $0x48] sm:$0xff]
      %v188 = vld [vmem:[%s169 + $0x50] sm:$0xff]
      %v189 = vld [vmem:[%s169 + $0x58] sm:$0xff]
      %v190 = vld [vmem:[%s169 + $0x60] sm:$0xff]
      %v191 = vld [vmem:[%s169 + $0x68] sm:$0xff]
      %v192 = vld [vmem:[%s169 + $0x70] sm:$0xff]
      %v193 = vld [vmem:[%s169 + $0x78] sm:$0xff]
      %v194 = vld [vmem:[%s169 + $0x80] sm:$0xff]
      %v195 = vld [vmem:[%s169 + $0x88] sm:$0xff]
      %v196 = vld [vmem:[%s169 + $0x90] sm:$0xff]
      %v197 = vld [vmem:[%s169 + $0x98] sm:$0xff]
      %v198 = vld [vmem:[%s169 + $0xa0] sm:$0xff]
      %v199 = vld [vmem:[%s169 + $0xa8] sm:$0xff]
      %v200 = vld [vmem:[%s1] sm:$0xf]
      %v201 = vld [vmem:[%s1 + $0x4] sm:$0xf]
      %v202 = vld [vmem:[%s1 + $0x8] sm:$0xf]
      %v203 = vld [vmem:[%s1 + $0xc] sm:$0xf]
      %v204 = vld [vmem:[%s1 + $0x10] sm:$0xf]
      %v205 = vld [vmem:[%s1 + $0x14] sm:$0xf]
      %v206 = vld [vmem:[%s1 + $0x18] sm:$0xf]
      %v207 = vld [vmem:[%s1 + $0x1c] sm:$0xf]
      %v208 = vld [vmem:[%s1 + $0x20] sm:$0xf]
      %v209 = vld [vmem:[%s1 + $0x24] sm:$0xf]
      %v210 = vld [vmem:[%s1 + $0x28] sm:$0xf]
      %v211 = vld [vmem:[%s1 + $0x2c] sm:$0xf]
      %v212 = vld [vmem:[%s1 + $0x30] sm:$0xf]
      %v213 = vld [vmem:[%s1 + $0x34] sm:$0xf]
      %v214 = vld [vmem:[%s1 + $0x38] sm:$0xf]
      %v215 = vld [vmem:[%s1 + $0x3c] sm:$0xf]
      %v216 = vld [vmem:[%s1 + $0x40] sm:$0xf]
      %v217 = vld [vmem:[%s1 + $0x44] sm:$0xf]
      %v218 = vld [vmem:[%s1 + $0x48] sm:$0xf]
      %v219 = vld [vmem:[%s1 + $0x4c] sm:$0xf]
      %v220 = vld [vmem:[%s1 + $0x50] sm:$0xf]
      %v221 = vld [vmem:[%s1 + $0x54] sm:$0xf]
      %v222 = vld [vmem:[%s1 + $0x58] sm:$0xf]
      %v223 = vld [vmem:[%s1 + $0x5c] sm:$0xf]
      %v224 = vld [vmem:[%s1 + $0x60] sm:$0xf]
      %v225 = vld [vmem:[%s1 + $0x64] sm:$0xf]
      %v226 = vld [vmem:[%s1 + $0x68] sm:$0xf]
      %v227 = vld [vmem:[%s1 + $0x6c] sm:$0xf]
      %v228 = vld [vmem:[%s1 + $0x70] sm:$0xf]
      %v229 = vld [vmem:[%s1 + $0x74] sm:$0xf]
      %v230 = vld [vmem:[%s1 + $0x78] sm:$0xf]
      %v231 = vld [vmem:[%s1 + $0x7c] sm:$0xf]
      %v232 = vld [vmem:[%s2] sm:$0x1]
      %v234 = vlaneseq
      %v235 = vshrl.u32 %v234, 7
      %v236 = vsub.s32 0, %v235
      %v237 = vrot.slane %v232, %v236
      %v261 = vunpack.c.l.b16 %v178
      %v262 = vunpack.c.h.b16 %v178
      %v263 = vunpack.c.l.b16 %v179
      %v264 = vunpack.c.h.b16 %v179
      %v265 = vunpack.c.l.b16 %v180
      %v266 = vunpack.c.h.b16 %v180
      %v267 = vunpack.c.l.b16 %v181
      %v268 = vunpack.c.h.b16 %v181
      %v269 = vunpack.c.l.b16 %v182
      %v270 = vunpack.c.h.b16 %v182
      %v271 = vunpack.c.l.b16 %v183
      %v272 = vunpack.c.h.b16 %v183
      %v273 = vunpack.c.l.b16 %v184
      %v274 = vunpack.c.h.b16 %v184
      %v275 = vunpack.c.l.b16 %v185
      %v276 = vunpack.c.h.b16 %v185
      %v277 = vunpack.c.l.b16 %v186
      %v278 = vunpack.c.h.b16 %v186
      %v279 = vunpack.c.l.b16 %v187
      %v280 = vunpack.c.h.b16 %v187
      %v281 = vunpack.c.l.b16 %v188
      %v282 = vunpack.c.h.b16 %v188
      %v283 = vunpack.c.l.b16 %v189
      %v284 = vunpack.c.h.b16 %v189
      %v285 = vunpack.c.l.b16 %v190
      %v286 = vunpack.c.h.b16 %v190
      %v287 = vunpack.c.l.b16 %v191
      %v288 = vunpack.c.h.b16 %v191
      %v289 = vunpack.c.l.b16 %v192
      %v290 = vunpack.c.h.b16 %v192
      %v291 = vunpack.c.l.b16 %v193
      %v292 = vunpack.c.h.b16 %v193
      %v293 = vunpack.c.l.b16 %v194
      %v294 = vunpack.c.h.b16 %v194
      %v295 = vunpack.c.l.b16 %v195
      %v296 = vunpack.c.h.b16 %v195
      %v297 = vunpack.c.l.b16 %v196
      %v298 = vunpack.c.h.b16 %v196
      %v299 = vunpack.c.l.b16 %v197
      %v300 = vunpack.c.h.b16 %v197
      %v301 = vunpack.c.l.b16 %v198
      %v302 = vunpack.c.h.b16 %v198
      %v303 = vunpack.c.l.b16 %v199
      %v304 = vunpack.c.h.b16 %v199
      %v305 = vpack.c.b16 %v263, %v261
      %v306 = vpack.c.b16 %v264, %v262
      %v307 = vpack.c.b16 %v267, %v265
      %v308 = vpack.c.b16 %v268, %v266
      %v309 = vpack.c.b16 %v271, %v269
      %v310 = vpack.c.b16 %v272, %v270
      %v311 = vpack.c.b16 %v275, %v273
      %v312 = vpack.c.b16 %v276, %v274
      %v313 = vpack.c.b16 %v279, %v277
      %v314 = vpack.c.b16 %v280, %v278
      %v315 = vpack.c.b16 %v283, %v281
      %v316 = vpack.c.b16 %v284, %v282
      %v317 = vpack.c.b16 %v287, %v285
      %v318 = vpack.c.b16 %v288, %v286
      %v319 = vpack.c.b16 %v291, %v289
      %v320 = vpack.c.b16 %v292, %v290
      %v321 = vpack.c.b16 %v295, %v293
      %v322 = vpack.c.b16 %v296, %v294
      %v323 = vpack.c.b16 %v299, %v297
      %v324 = vpack.c.b16 %v300, %v298
      %v325 = vpack.c.b16 %v303, %v301
      %v326 = vpack.c.b16 %v304, %v302
      %v381 = vunpack.c.l.b16 %v200
      %v382 = vunpack.c.l.b16 %v201
      %v383 = vunpack.c.l.b16 %v202
      %v384 = vunpack.c.l.b16 %v203
      %v385 = vunpack.c.l.b16 %v204
      %v386 = vunpack.c.l.b16 %v205
      %v387 = vunpack.c.l.b16 %v206
      %v388 = vunpack.c.l.b16 %v207
      %v389 = vunpack.c.l.b16 %v208
      %v390 = vunpack.c.l.b16 %v209
      %v391 = vunpack.c.l.b16 %v210
      %v392 = vunpack.c.l.b16 %v211
      %v393 = vunpack.c.l.b16 %v212
      %v394 = vunpack.c.l.b16 %v213
      %v395 = vunpack.c.l.b16 %v214
      %v396 = vunpack.c.l.b16 %v215
      %v397 = vunpack.c.l.b16 %v216
      %v398 = vunpack.c.l.b16 %v217
      %v399 = vunpack.c.l.b16 %v218
      %v400 = vunpack.c.l.b16 %v219
      %v401 = vunpack.c.l.b16 %v220
      %v402 = vunpack.c.l.b16 %v221
      %v403 = vunpack.c.l.b16 %v222
      %v404 = vunpack.c.l.b16 %v223
      %v405 = vunpack.c.l.b16 %v224
      %v406 = vunpack.c.l.b16 %v225
      %v407 = vunpack.c.l.b16 %v226
      %v408 = vunpack.c.l.b16 %v227
      %v409 = vunpack.c.l.b16 %v228
      %v410 = vunpack.c.l.b16 %v229
      %v411 = vunpack.c.l.b16 %v230
      %v412 = vunpack.c.l.b16 %v231
      %v413 = vpack.c.b16 %v382, %v381
      %v414 = vpack.c.b16 %v384, %v383
      %v415 = vpack.c.b16 %v386, %v385
      %v416 = vpack.c.b16 %v388, %v387
      %v417 = vpack.c.b16 %v390, %v389
      %v418 = vpack.c.b16 %v392, %v391
      %v419 = vpack.c.b16 %v394, %v393
      %v420 = vpack.c.b16 %v396, %v395
      %v421 = vpack.c.b16 %v398, %v397
      %v422 = vpack.c.b16 %v400, %v399
      %v423 = vpack.c.b16 %v402, %v401
      %v424 = vpack.c.b16 %v404, %v403
      %v425 = vpack.c.b16 %v406, %v405
      %v426 = vpack.c.b16 %v408, %v407
      %v427 = vpack.c.b16 %v410, %v409
      %v428 = vpack.c.b16 %v412, %v411
      %445 = vmatprep.subr.bf16.mxu0 0
      %446 = vmatpush1.bf16.msra.mxu0 %v413
      %447 = vmatprep.subr.bf16.mxu0 0
      %448 = vmatpush1.bf16.msra.mxu0 %v414
      %449 = vmatprep.subr.bf16.mxu0 0
      %450 = vmatpush1.bf16.msra.mxu0 %v415
      %451 = vmatprep.subr.bf16.mxu0 0
      %452 = vmatpush1.bf16.msra.mxu0 %v416
      %453 = vmatprep.subr.bf16.mxu0 0
      %454 = vmatpush1.bf16.msra.mxu0 %v417
      %455 = vmatprep.subr.bf16.mxu0 0
      %456 = vmatpush1.bf16.msra.mxu0 %v418
      %457 = vmatprep.subr.bf16.mxu0 0
      %458 = vmatpush1.bf16.msra.mxu0 %v419
      %459 = vmatprep.subr.bf16.mxu0 0
      %460 = vmatpush1.bf16.msra.mxu0 %v420
      %461 = vmatprep.subr.bf16.mxu0 0
      %462 = vmatpush1.bf16.msra.mxu0 %v421
      %463 = vmatprep.subr.bf16.mxu0 0
      %464 = vmatpush1.bf16.msra.mxu0 %v422
      %465 = vmatprep.subr.bf16.mxu0 0
      %466 = vmatpush1.bf16.msra.mxu0 %v423
      %467 = vmatprep.subr.bf16.mxu0 0
      %468 = vmatpush1.bf16.msra.mxu0 %v424
      %469 = vmatprep.subr.bf16.mxu0 0
      %470 = vmatpush1.bf16.msra.mxu0 %v425
      %471 = vmatprep.subr.bf16.mxu0 0
      %472 = vmatpush1.bf16.msra.mxu0 %v426
      %473 = vmatprep.subr.bf16.mxu0 0
      %474 = vmatpush1.bf16.msra.mxu0 %v427
      %475 = vmatprep.subr.bf16.mxu0 0
      %476 = vmatpush1.bf16.msra.mxu0 %v428
      %477 = vmatprep.mubr.bf16.mxu0 %v306
      %478 = vmatmul.mubr.bf16.gmra.mrb[0].mxu0 %v305
      %v479 = vpop.f32.mrb[0].mxu0
      %v480 = vadd.f32 %v237, %v479
      %v481 = vpop.f32.mrb[0].mxu0
      %v482 = vpop.f32.mrb[0].mxu0
      %v483 = vadd.f32 %v237, %v482
      %v484 = vpop.f32.mrb[0].mxu0
      %485 = vmatprep.mubr.bf16.mxu0 %v308
      %486 = vmatmul.mubr.bf16.gmra.mrb[0].mxu0 %v307
      %v487 = vpop.f32.mrb[0].mxu0
      %v488 = vadd.f32 %v237, %v487
      %v489 = vpop.f32.mrb[0].mxu0
      %v490 = vpop.f32.mrb[0].mxu0
      %v491 = vadd.f32 %v237, %v490
      %v492 = vpop.f32.mrb[0].mxu0
      %493 = vmatprep.mubr.bf16.mxu0 %v310
      %494 = vmatmul.mubr.bf16.gmra.mrb[0].mxu0 %v309
      %v495 = vpop.f32.mrb[0].mxu0
      %v496 = vadd.f32 %v237, %v495
      %v497 = vpop.f32.mrb[0].mxu0
      %v498 = vpop.f32.mrb[0].mxu0
      %v499 = vadd.f32 %v237, %v498
      %v500 = vpop.f32.mrb[0].mxu0
      %501 = vmatprep.mubr.bf16.mxu0 %v312
      %502 = vmatmul.mubr.bf16.gmra.mrb[0].mxu0 %v311
      %v503 = vpop.f32.mrb[0].mxu0
      %v504 = vadd.f32 %v237, %v503
      %v505 = vpop.f32.mrb[0].mxu0
      %v506 = vpop.f32.mrb[0].mxu0
      %v507 = vadd.f32 %v237, %v506
      %v508 = vpop.f32.mrb[0].mxu0
      %509 = vmatprep.mubr.bf16.mxu0 %v314
      %510 = vmatmul.mubr.bf16.gmra.mrb[0].mxu0 %v313
      %v511 = vpop.f32.mrb[0].mxu0
      %v512 = vadd.f32 %v237, %v511
      %v513 = vpop.f32.mrb[0].mxu0
      %v514 = vpop.f32.mrb[0].mxu0
      %v515 = vadd.f32 %v237, %v514
      %v516 = vpop.f32.mrb[0].mxu0
      %517 = vmatprep.mubr.bf16.mxu0 %v316
      %518 = vmatmul.mubr.bf16.gmra.mrb[0].mxu0 %v315
      %v519 = vpop.f32.mrb[0].mxu0
      %v520 = vadd.f32 %v237, %v519
      %v521 = vpop.f32.mrb[0].mxu0
      %v522 = vpop.f32.mrb[0].mxu0
      %v523 = vadd.f32 %v237, %v522
      %v524 = vpop.f32.mrb[0].mxu0
      %525 = vmatprep.mubr.bf16.mxu0 %v318
      %526 = vmatmul.mubr.bf16.gmra.mrb[0].mxu0 %v317
      %v527 = vpop.f32.mrb[0].mxu0
      %v528 = vadd.f32 %v237, %v527
      %v529 = vpop.f32.mrb[0].mxu0
      %v530 = vpop.f32.mrb[0].mxu0
      %v531 = vadd.f32 %v237, %v530
      %v532 = vpop.f32.mrb[0].mxu0
      %533 = vmatprep.mubr.bf16.mxu0 %v320
      %534 = vmatmul.mubr.bf16.gmra.mrb[0].mxu0 %v319
      %v535 = vpop.f32.mrb[0].mxu0
      %v536 = vadd.f32 %v237, %v535
      %v537 = vpop.f32.mrb[0].mxu0
      %v538 = vpop.f32.mrb[0].mxu0
      %v539 = vadd.f32 %v237, %v538
      %v540 = vpop.f32.mrb[0].mxu0
      %541 = vmatprep.mubr.bf16.mxu0 %v322
      %542 = vmatmul.mubr.bf16.gmra.mrb[0].mxu0 %v321
      %v543 = vpop.f32.mrb[0].mxu0
      %v544 = vadd.f32 %v237, %v543
      %v545 = vpop.f32.mrb[0].mxu0
      %v546 = vpop.f32.mrb[0].mxu0
      %v547 = vadd.f32 %v237, %v546
      %v548 = vpop.f32.mrb[0].mxu0
      %549 = vmatprep.mubr.bf16.mxu0 %v324
      %550 = vmatmul.mubr.bf16.gmra.mrb[0].mxu0 %v323
      %v551 = vpop.f32.mrb[0].mxu0
      %v552 = vadd.f32 %v237, %v551
      %v553 = vpop.f32.mrb[0].mxu0
      %v554 = vpop.f32.mrb[0].mxu0
      %v555 = vadd.f32 %v237, %v554
      %v556 = vpop.f32.mrb[0].mxu0
      %557 = vmatprep.mubr.bf16.mxu0 %v326
      %558 = vmatmul.mubr.bf16.gmra.mrb[0].mxu0 %v325
      %v559 = vpop.f32.mrb[0].mxu0
      %v560 = vadd.f32 %v237, %v559
      %v561 = vpop.f32.mrb[0].mxu0
      %v562 = vpop.f32.mrb[0].mxu0
      %v563 = vadd.f32 %v237, %v562
      %v564 = vpop.f32.mrb[0].mxu0
      %565 = vdwg.mxu0
      %vm566 = vcmp.gt.f32.partialorder %v480, 0.0
      %vm567 = vcmp.gt.f32.partialorder %v483, 0.0
      %vm568 = vcmp.gt.f32.partialorder %v488, 0.0
      %vm569 = vcmp.gt.f32.partialorder %v491, 0.0
      %vm570 = vcmp.gt.f32.partialorder %v496, 0.0
      %vm571 = vcmp.gt.f32.partialorder %v499, 0.0
      %vm572 = vcmp.gt.f32.partialorder %v504, 0.0
      %vm573 = vcmp.gt.f32.partialorder %v507, 0.0
      %vm574 = vcmp.gt.f32.partialorder %v512, 0.0
      %vm575 = vcmp.gt.f32.partialorder %v515, 0.0
      %vm576 = vcmp.gt.f32.partialorder %v520, 0.0
      %vm577 = vcmp.gt.f32.partialorder %v523, 0.0
      %vm578 = vcmp.gt.f32.partialorder %v528, 0.0
      %vm579 = vcmp.gt.f32.partialorder %v531, 0.0
      %vm580 = vcmp.gt.f32.partialorder %v536, 0.0
      %vm581 = vcmp.gt.f32.partialorder %v539, 0.0
      %vm582 = vcmp.gt.f32.partialorder %v544, 0.0
      %vm583 = vcmp.gt.f32.partialorder %v547, 0.0
      %vm584 = vcmp.gt.f32.partialorder %v552, 0.0
      %vm585 = vcmp.gt.f32.partialorder %v555, 0.0
      %vm586 = vcmp.gt.f32.partialorder %v560, 0.0
      %vm587 = vcmp.gt.f32.partialorder %v563, 0.0
      %v588 = vmul.f32 %v480, 1.442695
      %v589 = vpow.pop %v588
      %v590 = vmul.f32 %v483, 1.442695
      %v591 = vpow.pop %v590
      %v592 = vmul.f32 %v488, 1.442695
      %v593 = vpow.pop %v592
      %v594 = vmul.f32 %v491, 1.442695
      %v595 = vpow.pop %v594
      %v596 = vmul.f32 %v496, 1.442695
      %v597 = vpow.pop %v596
      %v598 = vmul.f32 %v499, 1.442695
      %v599 = vpow.pop %v598
      %v600 = vmul.f32 %v504, 1.442695
      %v601 = vpow.pop %v600
      %v602 = vmul.f32 %v507, 1.442695
      %v603 = vpow.pop %v602
      %v604 = vmul.f32 %v512, 1.442695
      %v605 = vpow.pop %v604
      %v606 = vmul.f32 %v515, 1.442695
      %v607 = vpow.pop %v606
      %v608 = vmul.f32 %v520, 1.442695
      %v609 = vpow.pop %v608
      %v610 = vmul.f32 %v523, 1.442695
      %v611 = vpow.pop %v610
      %v612 = vmul.f32 %v528, 1.442695
      %v613 = vpow.pop %v612
      %v614 = vmul.f32 %v531, 1.442695
      %v615 = vpow.pop %v614
      %v616 = vmul.f32 %v536, 1.442695
      %v617 = vpow.pop %v616
      %v618 = vmul.f32 %v539, 1.442695
      %v619 = vpow.pop %v618
      %v620 = vmul.f32 %v544, 1.442695
      %v621 = vpow.pop %v620
      %v622 = vmul.f32 %v547, 1.442695
      %v623 = vpow.pop %v622
      %v624 = vmul.f32 %v552, 1.442695
      %v625 = vpow.pop %v624
      %v626 = vmul.f32 %v555, 1.442695
      %v627 = vpow.pop %v626
      %v628 = vmul.f32 %v560, 1.442695
      %v629 = vpow.pop %v628
      %v630 = vmul.f32 %v563, 1.442695
      %v631 = vpow.pop %v630
      %v632 = vsub.f32 %v589, 1.0
      %v633 = vsub.f32 %v591, 1.0
      %v634 = vsub.f32 %v593, 1.0
      %v635 = vsub.f32 %v595, 1.0
      %v636 = vsub.f32 %v597, 1.0
      %v637 = vsub.f32 %v599, 1.0
      %v638 = vsub.f32 %v601, 1.0
      %v639 = vsub.f32 %v603, 1.0
      %v640 = vsub.f32 %v605, 1.0
      %v641 = vsub.f32 %v607, 1.0
      %v642 = vsub.f32 %v609, 1.0
      %v643 = vsub.f32 %v611, 1.0
      %v644 = vsub.f32 %v613, 1.0
      %v645 = vsub.f32 %v615, 1.0
      %v646 = vsub.f32 %v617, 1.0
      %v647 = vsub.f32 %v619, 1.0
      %v648 = vsub.f32 %v621, 1.0
      %v649 = vsub.f32 %v623, 1.0
      %v650 = vsub.f32 %v625, 1.0
      %v651 = vsub.f32 %v627, 1.0
      %v652 = vsub.f32 %v629, 1.0
      %v653 = vsub.f32 %v631, 1.0
      %v654 = vsel %vm566, %v480, %v632
      %v655 = vsel %vm567, %v483, %v633
      %v656 = vsel %vm568, %v488, %v634
      %v657 = vsel %vm569, %v491, %v635
      %v658 = vsel %vm570, %v496, %v636
      %v659 = vsel %vm571, %v499, %v637
      %v660 = vsel %vm572, %v504, %v638
      %v661 = vsel %vm573, %v507, %v639
      %v662 = vsel %vm574, %v512, %v640
      %v663 = vsel %vm575, %v515, %v641
      %v664 = vsel %vm576, %v520, %v642
      %v665 = vsel %vm577, %v523, %v643
      %v666 = vsel %vm578, %v528, %v644
      %v667 = vsel %vm579, %v531, %v645
      %v668 = vsel %vm580, %v536, %v646
      %v669 = vsel %vm581, %v539, %v647
      %v670 = vsel %vm582, %v544, %v648
      %v671 = vsel %vm583, %v547, %v649
      %v672 = vsel %vm584, %v552, %v650
      %v673 = vsel %vm585, %v555, %v651
      %v674 = vsel %vm586, %v560, %v652
      %v675 = vsel %vm587, %v563, %v653
      %676 = vst [vmem:[%s175] sm:$0xff] %v654
      %677 = vst [vmem:[%s175 + $0x8] sm:$0xff] %v655
      %678 = vst [vmem:[%s175 + $0x10] sm:$0xff] %v656
      %679 = vst [vmem:[%s175 + $0x18] sm:$0xff] %v657
      %680 = vst [vmem:[%s175 + $0x20] sm:$0xff] %v658
      %681 = vst [vmem:[%s175 + $0x28] sm:$0xff] %v659
      %682 = vst [vmem:[%s175 + $0x30] sm:$0xff] %v660
      %683 = vst [vmem:[%s175 + $0x38] sm:$0xff] %v661
      %684 = vst [vmem:[%s175 + $0x40] sm:$0xff] %v662
      %685 = vst [vmem:[%s175 + $0x48] sm:$0xff] %v663
      %686 = vst [vmem:[%s175 + $0x50] sm:$0xff] %v664
      %687 = vst [vmem:[%s175 + $0x58] sm:$0xff] %v665
      %688 = vst [vmem:[%s175 + $0x60] sm:$0xff] %v666
      %689 = vst [vmem:[%s175 + $0x68] sm:$0xff] %v667
      %690 = vst [vmem:[%s175 + $0x70] sm:$0xff] %v668
      %691 = vst [vmem:[%s175 + $0x78] sm:$0xff] %v669
      %692 = vst [vmem:[%s175 + $0x80] sm:$0xff] %v670
      %693 = vst [vmem:[%s175 + $0x88] sm:$0xff] %v671
      %694 = vst [vmem:[%s175 + $0x90] sm:$0xff] %v672
      %695 = vst [vmem:[%s175 + $0x98] sm:$0xff] %v673
      %696 = vst [vmem:[%s175 + $0xa0] sm:$0xff] %v674
      %697 = vst [vmem:[%s175 + $0xa8] sm:$0xff] %v675
      %s698 = smul.u32 22, %s14
      %p699 = scmp.lt.s32.totalorder %s698, 43
      %s700 = scalar_select %p699, %s698, 43
      %s701 = smul.addr %s700, 8
      %s702 = scalar_lea.vmem %s3, %s701
      // Predicated region
      $region33: #{vae_forward.10} parent=31 // pred_check
        %p703 = pneg %p100
      $region34: #{vae_forward.10} parent=31 // pred_check_branch
        %705 = sbr.rel (%p703) target = $region36
      $region35: #{vae_forward.10} parent=31 // pred_region
        %s706 = smul.u32 22, %s14
      $region36: #{vae_forward.10} parent=31 // pred_fallthru
        _
    $region32: #{vae_forward.10} parent=5 // pred_fallthru
      _
    %p707 = scmp.le.s32.totalorder 2, %s9
    // Predicated region
    $region37: #{vae_forward.10} parent=5 // pred_check
      %p708 = pneg %p707
    $region38: #{vae_forward.10} parent=5 // pred_check_branch
      %710 = sbr.rel (%p708) target = $region40
    $region39: #{vae_forward.10} parent=5 // pred_region
      %s711 = ssub.s32 %s9, 2
      // Predicated region
      $region41: #{vae_forward.10} parent=39 // pred_check
        %p712 = pneg %p106
      $region42: #{vae_forward.10} parent=39 // pred_check_branch
        %714 = sbr.rel (%p712) target = $region44
      $region43: #{vae_forward.10} parent=39 // pred_region
        %s715 = smul.u32 22, %s15
        %p716 = scmp.lt.s32.totalorder %s715, 43
        %s717 = scalar_select %p716, %s715, 43
        %s718 = smul.addr %s717, 8
        %s719 = scalar_lea.vmem %s3, %s718
      $region44: #{vae_forward.10} parent=39 // pred_fallthru
        _
    $region40: #{vae_forward.10} parent=5 // pred_fallthru
      _
  $region6: #{vae_forward.10} parent=0 // loop_footer
    %s13 = sadd.s32 1, %s9
  $region7: #{vae_forward.10} parent=0 // loop_footer_branch
    %8 = sbr.rel target = $region3
  $region8: #{vae_forward.10} parent=0 // loop_exit
    _

// kernel: vae_forward.11
$region0: #{vae_forward.11}
  #allocation0 [shape = 'u32[]', space=smem, size = 0x4, offset = 0x4, fixed_abs, tag = 'smem constant byte address 0x4 - core index']
  #allocation1 [shape = 'u32[144,128]{1,0:T(1,128)}', space=vmem, size = 0x12000, scoped, tag = 'internal scratch']
  %s0 = inlined_call_operand.vmem [shape: bf16[64,512], index: 0, kind: input, shape index: {}]
  %s1 = inlined_call_operand.vmem [shape: bf16[512,128], index: 1, kind: input, shape index: {}]
  %s2 = inlined_call_operand.vmem [shape: f32[1,128], index: 2, kind: input, shape index: {}]
  %s3 = inlined_call_operand.vmem [shape: f32[64,128], index: 3, kind: output, shape index: {}]
  %s4 = sld [smem:[#allocation0]]
  $region45: #{vae_forward.11} parent=0
    _
  %s6 = ssub.s32 1, %s4
  %s7 = scalar_select 0, %s6, %s4
  loop: start=0, step=1, limit=4
  $region2: #{vae_forward.11} parent=0 // loop_pre_header
    _
  $region3: #{vae_forward.11} parent=0 // loop_header
    %s9 = sphi 0, %s13
    %p10 = scmp.ge.s32.totalorder %s9, 4
    %s19 = sphi 0, %s21
    %s22 = sphi 0, %s19
    %s23 = sphi 0, %s22
    %s39 = sphi 0, %s23
    %s43 = sphi 0, %s43
    %s45 = sphi 0, %s43
    %s46 = sphi 0, %s45
    %s60 = sphi 0, %s46
    %s64 = sphi 0, %s64
    %s66 = sphi 0, %s64
    %s67 = sphi 0, %s66
    %s81 = sphi 0, %s67
    %s87 = sphi 0, %s89
    %s90 = sphi 0, %s87
    %s91 = sphi 0, %s90
    %s107 = sphi 0, %s91
  $region4: #{vae_forward.11} parent=0 // loop_header_branch
    %12 = sbr.rel (%p10) target = $region8
  $region5: #{vae_forward.11} parent=0 // loop_body
    %s14 = ssub.s32 %s9, 1
    %s15 = ssub.s32 %s9, 2
    %s16 = sadd.s32 %s9, 1
    %s17 = ssub.s32 %s9, %s16
    %p18 = scmp.eq.s32.totalorder %s17, 0
    %s20 = sadd.s32 %s19, 1
    %s21 = scalar_select %p18, %s19, %s20
    %p24 = pneg %p18
    %p25 = scmp.eq.s32.totalorder %s9, 1
    %p26 = por %p24, %p25
    %p27 = scmp.ne.s32.totalorder %s19, %s22
    %p28 = scmp.eq.s32.totalorder %s9, 0
    %p29 = por %p27, %p28
    %p30 = scmp.ne.s32.totalorder %s19, %s22
    %p31 = scmp.eq.s32.totalorder %s14, 1
    %p32 = por %p30, %p31
    %p33 = scmp.ne.s32.totalorder %s22, %s23
    %p34 = scmp.eq.s32.totalorder %s14, 0
    %p35 = por %p33, %p34
    %p36 = scmp.ne.s32.totalorder %s22, %s23
    %p37 = scmp.eq.s32.totalorder %s15, 1
    %p38 = por %p36, %p37
    %p40 = scmp.ne.s32.totalorder %s23, %s39
    %p41 = scmp.eq.s32.totalorder %s15, 0
    %p42 = por %p40, %p41
    %s44 = sadd.s32 %s43, 1
    %p47 = scmp.eq.s32.totalorder %s9, 1
    %p48 = scmp.ne.s32.totalorder %s43, %s45
    %p49 = scmp.eq.s32.totalorder %s9, 0
    %p50 = por %p48, %p49
    %p51 = scmp.ne.s32.totalorder %s43, %s45
    %p52 = scmp.eq.s32.totalorder %s14, 1
    %p53 = por %p51, %p52
    %p54 = scmp.ne.s32.totalorder %s45, %s46
    %p55 = scmp.eq.s32.totalorder %s14, 0
    %p56 = por %p54, %p55
    %p57 = scmp.ne.s32.totalorder %s45, %s46
    %p58 = scmp.eq.s32.totalorder %s15, 1
    %p59 = por %p57, %p58
    %p61 = scmp.ne.s32.totalorder %s46, %s60
    %p62 = scmp.eq.s32.totalorder %s15, 0
    %p63 = por %p61, %p62
    %s65 = sadd.s32 %s64, 1
    %p68 = scmp.eq.s32.totalorder %s9, 1
    %p69 = scmp.ne.s32.totalorder %s64, %s66
    %p70 = scmp.eq.s32.totalorder %s9, 0
    %p71 = por %p69, %p70
    %p72 = scmp.ne.s32.totalorder %s64, %s66
    %p73 = scmp.eq.s32.totalorder %s14, 1
    %p74 = por %p72, %p73
    %p75 = scmp.ne.s32.totalorder %s66, %s67
    %p76 = scmp.eq.s32.totalorder %s14, 0
    %p77 = por %p75, %p76
    %p78 = scmp.ne.s32.totalorder %s66, %s67
    %p79 = scmp.eq.s32.totalorder %s15, 1
    %p80 = por %p78, %p79
    %p82 = scmp.ne.s32.totalorder %s67, %s81
    %p83 = scmp.eq.s32.totalorder %s15, 0
    %p84 = por %p82, %p83
    %s85 = ssub.s32 %s9, %s16
    %p86 = scmp.eq.s32.totalorder %s85, 0
    %s88 = sadd.s32 %s87, 1
    %s89 = scalar_select %p86, %s87, %s88
    %p92 = pneg %p86
    %p93 = scmp.eq.s32.totalorder %s9, 1
    %p94 = por %p92, %p93
    %p95 = scmp.ne.s32.totalorder %s87, %s90
    %p96 = scmp.eq.s32.totalorder %s9, 0
    %p97 = por %p95, %p96
    %p98 = scmp.ne.s32.totalorder %s87, %s90
    %p99 = scmp.eq.s32.totalorder %s14, 1
    %p100 = por %p98, %p99
    %p101 = scmp.ne.s32.totalorder %s90, %s91
    %p102 = scmp.eq.s32.totalorder %s14, 0
    %p103 = por %p101, %p102
    %p104 = scmp.ne.s32.totalorder %s90, %s91
    %p105 = scmp.eq.s32.totalorder %s15, 1
    %p106 = por %p104, %p105
    %p108 = scmp.ne.s32.totalorder %s91, %s107
    %p109 = scmp.eq.s32.totalorder %s15, 0
    %p110 = por %p108, %p109
    %p111 = scmp.le.s32.totalorder 1, %s9
    %p112 = scmp.lt.s32.totalorder %s9, 3
    %p113 = pnand %p111, %p112
    %p114 = pneg %p113
    // Predicated region
    $region9: #{vae_forward.11} parent=5 // pred_check
      _
    $region10: #{vae_forward.11} parent=5 // pred_check_branch
      %116 = sbr.rel (%p113) target = $region12
    $region11: #{vae_forward.11} parent=5 // pred_region
      %s117 = ssub.s32 %s9, 1
      // Predicated region
      $region13: #{vae_forward.11} parent=11 // pred_check
        %p118 = pneg %p56
      $region14: #{vae_forward.11} parent=11 // pred_check_branch
        %120 = sbr.rel (%p118) target = $region16
      $region15: #{vae_forward.11} parent=11 // pred_region
        _
      $region16: #{vae_forward.11} parent=11 // pred_fallthru
        _
      // Predicated region
      $region17: #{vae_forward.11} parent=11 // pred_check
        %p121 = pneg %p77
      $region18: #{vae_forward.11} parent=11 // pred_check_branch
        %123 = sbr.rel (%p121) target = $region20
      $region19: #{vae_forward.11} parent=11 // pred_region
        _
      $region20: #{vae_forward.11} parent=11 // pred_fallthru
        _
    $region12: #{vae_forward.11} parent=5 // pred_fallthru
      _
    %p124 = scmp.lt.s32.totalorder %s9, 2
    // Predicated region
    $region21: #{vae_forward.11} parent=5 // pred_check
      %p125 = pneg %p124
    $region22: #{vae_forward.11} parent=5 // pred_check_branch
      %127 = sbr.rel (%p125) target = $region24
    $region23: #{vae_forward.11} parent=5 // pred_region
      // Predicated region
      $region25: #{vae_forward.11} parent=23 // pred_check
        %p128 = pneg %p29
      $region26: #{vae_forward.11} parent=23 // pred_check_branch
        %130 = sbr.rel (%p128) target = $region28
      $region27: #{vae_forward.11} parent=23 // pred_region
        %s131 = smul.u32 4, %s9
        %p132 = scmp.lt.s32.totalorder %s131, 7
        %s133 = scalar_select %p132, %s131, 7
        %s134 = smul.addr %s133, 4
        %s135 = smul.addr %s134, 4
        %s136 = scalar_lea.vmem %s0, %s135
        %s137 = smul.u32 4, %s9
      $region28: #{vae_forward.11} parent=23 // pred_fallthru
        _
    $region24: #{vae_forward.11} parent=5 // pred_fallthru
      _
    %p138 = scmp.le.s32.totalorder 1, %s9
    %p139 = scmp.lt.s32.totalorder %s9, 3
    %p140 = pnand %p138, %p139
    %p141 = pneg %p140
    // Predicated region
    $region29: #{vae_forward.11} parent=5 // pred_check
      _
    $region30: #{vae_forward.11} parent=5 // pred_check_branch
      %143 = sbr.rel (%p140) target = $region32
    $region31: #{vae_forward.11} parent=5 // pred_region
      %s144 = ssub.s32 %s9, 1
      %s145 = smul.u32 4, %s14
      %p146 = scmp.lt.s32.totalorder %s145, 7
      %s147 = scalar_select %p146, %s145, 7
      %s148 = smul.addr %s147, 4
      %s149 = smul.addr %s148, 4
      %s150 = scalar_lea.vmem %s0, %s149
      %p151 = pneg %p35
      %p152 = pneg %p32
      %p153 = pneg %p56
      %p154 = pneg %p53
      %p155 = pneg %p77
      %p156 = pneg %p74
      %p157 = pneg %p103
      %p158 = pneg %p100
      %s159 = smul.u32 4, %s14
      %p160 = scmp.lt.s32.totalorder %s159, 7
      %s161 = scalar_select %p160, %s159, 7
      %s162 = smul.addr %s161, 8
      %s163 = scalar_lea.vmem %s3, %s162
      %s164 = smul.u32 4, %s14
      %p165 = scmp.lt.s32.totalorder %s164, 7
      %s166 = scalar_select %p165, %s164, 7
      %s167 = smul.addr %s166, 4
      %s168 = smul.addr %s167, 4
      %s169 = scalar_lea.vmem %s0, %s168
      %s170 = smul.u32 4, %s14
      %s171 = smul.u32 4, %s14
      %p172 = scmp.lt.s32.totalorder %s171, 7
      %s173 = scalar_select %p172, %s171, 7
      %s174 = smul.addr %s173, 8
      %s175 = scalar_lea.vmem %s3, %s174
      %s176 = smul.u32 4, %s14
      %v178 = vld [vmem:[%s169] sm:$0xff]
      %v179 = vld [vmem:[%s169 + $0x8] sm:$0xff]
      %v180 = vld [vmem:[%s169 + $0x10] sm:$0xff]
      %v181 = vld [vmem:[%s169 + $0x18] sm:$0xff]
      %v182 = vld [vmem:[%s169 + $0x20] sm:$0xff]
      %v183 = vld [vmem:[%s169 + $0x28] sm:$0xff]
      %v184 = vld [vmem:[%s169 + $0x30] sm:$0xff]
      %v185 = vld [vmem:[%s169 + $0x38] sm:$0xff]
      %v186 = vld [vmem:[%s1] sm:$0xf]
      %v187 = vld [vmem:[%s1 + $0x4] sm:$0xf]
      %v188 = vld [vmem:[%s1 + $0x8] sm:$0xf]
      %v189 = vld [vmem:[%s1 + $0xc] sm:$0xf]
      %v190 = vld [vmem:[%s1 + $0x10] sm:$0xf]
      %v191 = vld [vmem:[%s1 + $0x14] sm:$0xf]
      %v192 = vld [vmem:[%s1 + $0x18] sm:$0xf]
      %v193 = vld [vmem:[%s1 + $0x1c] sm:$0xf]
      %v194 = vld [vmem:[%s1 + $0x20] sm:$0xf]
      %v195 = vld [vmem:[%s1 + $0x24] sm:$0xf]
      %v196 = vld [vmem:[%s1 + $0x28] sm:$0xf]
      %v197 = vld [vmem:[%s1 + $0x2c] sm:$0xf]
      %v198 = vld [vmem:[%s1 + $0x30] sm:$0xf]
      %v199 = vld [vmem:[%s1 + $0x34] sm:$0xf]
      %v200 = vld [vmem:[%s1 + $0x38] sm:$0xf]
      %v201 = vld [vmem:[%s1 + $0x3c] sm:$0xf]
      %v202 = vld [vmem:[%s1 + $0x40] sm:$0xf]
      %v203 = vld [vmem:[%s1 + $0x44] sm:$0xf]
      %v204 = vld [vmem:[%s1 + $0x48] sm:$0xf]
      %v205 = vld [vmem:[%s1 + $0x4c] sm:$0xf]
      %v206 = vld [vmem:[%s1 + $0x50] sm:$0xf]
      %v207 = vld [vmem:[%s1 + $0x54] sm:$0xf]
      %v208 = vld [vmem:[%s1 + $0x58] sm:$0xf]
      %v209 = vld [vmem:[%s1 + $0x5c] sm:$0xf]
      %v210 = vld [vmem:[%s1 + $0x60] sm:$0xf]
      %v211 = vld [vmem:[%s1 + $0x64] sm:$0xf]
      %v212 = vld [vmem:[%s1 + $0x68] sm:$0xf]
      %v213 = vld [vmem:[%s1 + $0x6c] sm:$0xf]
      %v214 = vld [vmem:[%s1 + $0x70] sm:$0xf]
      %v215 = vld [vmem:[%s1 + $0x74] sm:$0xf]
      %v216 = vld [vmem:[%s1 + $0x78] sm:$0xf]
      %v217 = vld [vmem:[%s1 + $0x7c] sm:$0xf]
      %v218 = vld [vmem:[%s1 + $0x80] sm:$0xf]
      %v219 = vld [vmem:[%s1 + $0x84] sm:$0xf]
      %v220 = vld [vmem:[%s1 + $0x88] sm:$0xf]
      %v221 = vld [vmem:[%s1 + $0x8c] sm:$0xf]
      %v222 = vld [vmem:[%s1 + $0x90] sm:$0xf]
      %v223 = vld [vmem:[%s1 + $0x94] sm:$0xf]
      %v224 = vld [vmem:[%s1 + $0x98] sm:$0xf]
      %v225 = vld [vmem:[%s1 + $0x9c] sm:$0xf]
      %v226 = vld [vmem:[%s1 + $0xa0] sm:$0xf]
      %v227 = vld [vmem:[%s1 + $0xa4] sm:$0xf]
      %v228 = vld [vmem:[%s1 + $0xa8] sm:$0xf]
      %v229 = vld [vmem:[%s1 + $0xac] sm:$0xf]
      %v230 = vld [vmem:[%s1 + $0xb0] sm:$0xf]
      %v231 = vld [vmem:[%s1 + $0xb4] sm:$0xf]
      %v232 = vld [vmem:[%s1 + $0xb8] sm:$0xf]
      %v233 = vld [vmem:[%s1 + $0xbc] sm:$0xf]
      %v234 = vld [vmem:[%s1 + $0xc0] sm:$0xf]
      %v235 = vld [vmem:[%s1 + $0xc4] sm:$0xf]
      %v236 = vld [vmem:[%s1 + $0xc8] sm:$0xf]
      %v237 = vld [vmem:[%s1 + $0xcc] sm:$0xf]
      %v238 = vld [vmem:[%s1 + $0xd0] sm:$0xf]
      %v239 = vld [vmem:[%s1 + $0xd4] sm:$0xf]
      %v240 = vld [vmem:[%s1 + $0xd8] sm:$0xf]
      %v241 = vld [vmem:[%s1 + $0xdc] sm:$0xf]
      %v242 = vld [vmem:[%s1 + $0xe0] sm:$0xf]
      %v243 = vld [vmem:[%s1 + $0xe4] sm:$0xf]
      %v244 = vld [vmem:[%s1 + $0xe8] sm:$0xf]
      %v245 = vld [vmem:[%s1 + $0xec] sm:$0xf]
      %v246 = vld [vmem:[%s1 + $0xf0] sm:$0xf]
      %v247 = vld [vmem:[%s1 + $0xf4] sm:$0xf]
      %v248 = vld [vmem:[%s1 + $0xf8] sm:$0xf]
      %v249 = vld [vmem:[%s1 + $0xfc] sm:$0xf]
      %v250 = vld [vmem:[%s2] sm:$0x1]
      %v252 = vlaneseq
      %v253 = vshrl.u32 %v252, 7
      %v254 = vsub.s32 0, %v253
      %v255 = vrot.slane %v250, %v254
      %v265 = vunpack.c.l.b16 %v178
      %v266 = vunpack.c.h.b16 %v178
      %v267 = vunpack.c.l.b16 %v179
      %v268 = vunpack.c.h.b16 %v179
      %v269 = vunpack.c.l.b16 %v180
      %v270 = vunpack.c.h.b16 %v180
      %v271 = vunpack.c.l.b16 %v181
      %v272 = vunpack.c.h.b16 %v181
      %v273 = vunpack.c.l.b16 %v182
      %v274 = vunpack.c.h.b16 %v182
      %v275 = vunpack.c.l.b16 %v183
      %v276 = vunpack.c.h.b16 %v183
      %v277 = vunpack.c.l.b16 %v184
      %v278 = vunpack.c.h.b16 %v184
      %v279 = vunpack.c.l.b16 %v185
      %v280 = vunpack.c.h.b16 %v185
      %v281 = vpack.c.b16 %v269, %v265
      %v282 = vpack.c.b16 %v270, %v266
      %v283 = vpack.c.b16 %v271, %v267
      %v284 = vpack.c.b16 %v272, %v268
      %v285 = vpack.c.b16 %v277, %v273
      %v286 = vpack.c.b16 %v278, %v274
      %v287 = vpack.c.b16 %v279, %v275
      %v288 = vpack.c.b16 %v280, %v276
      %v361 = vunpack.c.l.b16 %v186
      %v362 = vunpack.c.l.b16 %v187
      %v363 = vunpack.c.l.b16 %v188
      %v364 = vunpack.c.l.b16 %v189
      %v365 = vunpack.c.l.b16 %v190
      %v366 = vunpack.c.l.b16 %v191
      %v367 = vunpack.c.l.b16 %v192
      %v368 = vunpack.c.l.b16 %v193
      %v369 = vunpack.c.l.b16 %v194
      %v370 = vunpack.c.l.b16 %v195
      %v371 = vunpack.c.l.b16 %v196
      %v372 = vunpack.c.l.b16 %v197
      %v373 = vunpack.c.l.b16 %v198
      %v374 = vunpack.c.l.b16 %v199
      %v375 = vunpack.c.l.b16 %v200
      %v376 = vunpack.c.l.b16 %v201
      %v377 = vunpack.c.l.b16 %v202
      %v378 = vunpack.c.l.b16 %v203
      %v379 = vunpack.c.l.b16 %v204
      %v380 = vunpack.c.l.b16 %v205
      %v381 = vunpack.c.l.b16 %v206
      %v382 = vunpack.c.l.b16 %v207
      %v383 = vunpack.c.l.b16 %v208
      %v384 = vunpack.c.l.b16 %v209
      %v385 = vunpack.c.l.b16 %v210
      %v386 = vunpack.c.l.b16 %v211
      %v387 = vunpack.c.l.b16 %v212
      %v388 = vunpack.c.l.b16 %v213
      %v389 = vunpack.c.l.b16 %v214
      %v390 = vunpack.c.l.b16 %v215
      %v391 = vunpack.c.l.b16 %v216
      %v392 = vunpack.c.l.b16 %v217
      %v393 = vunpack.c.l.b16 %v218
      %v394 = vunpack.c.l.b16 %v219
      %v395 = vunpack.c.l.b16 %v220
      %v396 = vunpack.c.l.b16 %v221
      %v397 = vunpack.c.l.b16 %v222
      %v398 = vunpack.c.l.b16 %v223
      %v399 = vunpack.c.l.b16 %v224
      %v400 = vunpack.c.l.b16 %v225
      %v401 = vunpack.c.l.b16 %v226
      %v402 = vunpack.c.l.b16 %v227
      %v403 = vunpack.c.l.b16 %v228
      %v404 = vunpack.c.l.b16 %v229
      %v405 = vunpack.c.l.b16 %v230
      %v406 = vunpack.c.l.b16 %v231
      %v407 = vunpack.c.l.b16 %v232
      %v408 = vunpack.c.l.b16 %v233
      %v409 = vunpack.c.l.b16 %v234
      %v410 = vunpack.c.l.b16 %v235
      %v411 = vunpack.c.l.b16 %v236
      %v412 = vunpack.c.l.b16 %v237
      %v413 = vunpack.c.l.b16 %v238
      %v414 = vunpack.c.l.b16 %v239
      %v415 = vunpack.c.l.b16 %v240
      %v416 = vunpack.c.l.b16 %v241
      %v417 = vunpack.c.l.b16 %v242
      %v418 = vunpack.c.l.b16 %v243
      %v419 = vunpack.c.l.b16 %v244
      %v420 = vunpack.c.l.b16 %v245
      %v421 = vunpack.c.l.b16 %v246
      %v422 = vunpack.c.l.b16 %v247
      %v423 = vunpack.c.l.b16 %v248
      %v424 = vunpack.c.l.b16 %v249
      %v425 = vpack.c.b16 %v362, %v361
      %v426 = vpack.c.b16 %v364, %v363
      %v427 = vpack.c.b16 %v366, %v365
      %v428 = vpack.c.b16 %v368, %v367
      %v429 = vpack.c.b16 %v370, %v369
      %v430 = vpack.c.b16 %v372, %v371
      %v431 = vpack.c.b16 %v374, %v373
      %v432 = vpack.c.b16 %v376, %v375
      %v433 = vpack.c.b16 %v378, %v377
      %v434 = vpack.c.b16 %v380, %v379
      %v435 = vpack.c.b16 %v382, %v381
      %v436 = vpack.c.b16 %v384, %v383
      %v437 = vpack.c.b16 %v386, %v385
      %v438 = vpack.c.b16 %v388, %v387
      %v439 = vpack.c.b16 %v390, %v389
      %v440 = vpack.c.b16 %v392, %v391
      %v441 = vpack.c.b16 %v394, %v393
      %v442 = vpack.c.b16 %v396, %v395
      %v443 = vpack.c.b16 %v398, %v397
      %v444 = vpack.c.b16 %v400, %v399
      %v445 = vpack.c.b16 %v402, %v401
      %v446 = vpack.c.b16 %v404, %v403
      %v447 = vpack.c.b16 %v406, %v405
      %v448 = vpack.c.b16 %v408, %v407
      %v449 = vpack.c.b16 %v410, %v409
      %v450 = vpack.c.b16 %v412, %v411
      %v451 = vpack.c.b16 %v414, %v413
      %v452 = vpack.c.b16 %v416, %v415
      %v453 = vpack.c.b16 %v418, %v417
      %v454 = vpack.c.b16 %v420, %v419
      %v455 = vpack.c.b16 %v422, %v421
      %v456 = vpack.c.b16 %v424, %v423
      %489 = vmatprep.subr.bf16.mxu0 0
      %490 = vmatpush1.bf16.msra.mxu0 %v425
      %491 = vmatprep.subr.bf16.mxu0 0
      %492 = vmatpush1.bf16.msra.mxu0 %v426
      %493 = vmatprep.subr.bf16.mxu0 0
      %494 = vmatpush1.bf16.msra.mxu0 %v427
      %495 = vmatprep.subr.bf16.mxu0 0
      %496 = vmatpush1.bf16.msra.mxu0 %v428
      %497 = vmatprep.subr.bf16.mxu0 0
      %498 = vmatpush1.bf16.msra.mxu0 %v429
      %499 = vmatprep.subr.bf16.mxu0 0
      %500 = vmatpush1.bf16.msra.mxu0 %v430
      %501 = vmatprep.subr.bf16.mxu0 0
      %502 = vmatpush1.bf16.msra.mxu0 %v431
      %503 = vmatprep.subr.bf16.mxu0 0
      %504 = vmatpush1.bf16.msra.mxu0 %v432
      %505 = vmatprep.subr.bf16.mxu0 0
      %506 = vmatpush1.bf16.msra.mxu0 %v433
      %507 = vmatprep.subr.bf16.mxu0 0
      %508 = vmatpush1.bf16.msra.mxu0 %v434
      %509 = vmatprep.subr.bf16.mxu0 0
      %510 = vmatpush1.bf16.msra.mxu0 %v435
      %511 = vmatprep.subr.bf16.mxu0 0
      %512 = vmatpush1.bf16.msra.mxu0 %v436
      %513 = vmatprep.subr.bf16.mxu0 0
      %514 = vmatpush1.bf16.msra.mxu0 %v437
      %515 = vmatprep.subr.bf16.mxu0 0
      %516 = vmatpush1.bf16.msra.mxu0 %v438
      %517 = vmatprep.subr.bf16.mxu0 0
      %518 = vmatpush1.bf16.msra.mxu0 %v439
      %519 = vmatprep.subr.bf16.mxu0 0
      %520 = vmatpush1.bf16.msra.mxu0 %v440
      %521 = vmatprep.mubr.bf16.mxu0 %v282
      %522 = vmatmul.mubr.bf16.gmra.mrb[0].mxu0 %v281
      %v523 = vpop.f32.mrb[0].mxu0
      %v524 = vadd.f32 %v255, %v523
      %v525 = vpop.f32.mrb[0].mxu0
      %v526 = vpop.f32.mrb[0].mxu0
      %v527 = vadd.f32 %v255, %v526
      %v528 = vpop.f32.mrb[0].mxu0
      %529 = vmatprep.mubr.bf16.mxu0 %v286
      %530 = vmatmul.mubr.bf16.gmra.mrb[0].mxu0 %v285
      %v531 = vpop.f32.mrb[0].mxu0
      %v532 = vadd.f32 %v255, %v531
      %v533 = vpop.f32.mrb[0].mxu0
      %v534 = vpop.f32.mrb[0].mxu0
      %v535 = vadd.f32 %v255, %v534
      %v536 = vpop.f32.mrb[0].mxu0
      %537 = vdwg.mxu0
      %538 = vmatprep.subr.bf16.mxu0 0
      %539 = vmatpush1.bf16.msra.mxu0 %v441
      %540 = vmatprep.subr.bf16.mxu0 0
      %541 = vmatpush1.bf16.msra.mxu0 %v442
      %542 = vmatprep.subr.bf16.mxu0 0
      %543 = vmatpush1.bf16.msra.mxu0 %v443
      %544 = vmatprep.subr.bf16.mxu0 0
      %545 = vmatpush1.bf16.msra.mxu0 %v444
      %546 = vmatprep.subr.bf16.mxu0 0
      %547 = vmatpush1.bf16.msra.mxu0 %v445
      %548 = vmatprep.subr.bf16.mxu0 0
      %549 = vmatpush1.bf16.msra.mxu0 %v446
      %550 = vmatprep.subr.bf16.mxu0 0
      %551 = vmatpush1.bf16.msra.mxu0 %v447
      %552 = vmatprep.subr.bf16.mxu0 0
      %553 = vmatpush1.bf16.msra.mxu0 %v448
      %554 = vmatprep.subr.bf16.mxu0 0
      %555 = vmatpush1.bf16.msra.mxu0 %v449
      %556 = vmatprep.subr.bf16.mxu0 0
      %557 = vmatpush1.bf16.msra.mxu0 %v450
      %558 = vmatprep.subr.bf16.mxu0 0
      %559 = vmatpush1.bf16.msra.mxu0 %v451
      %560 = vmatprep.subr.bf16.mxu0 0
      %561 = vmatpush1.bf16.msra.mxu0 %v452
      %562 = vmatprep.subr.bf16.mxu0 0
      %563 = vmatpush1.bf16.msra.mxu0 %v453
      %564 = vmatprep.subr.bf16.mxu0 0
      %565 = vmatpush1.bf16.msra.mxu0 %v454
      %566 = vmatprep.subr.bf16.mxu0 0
      %567 = vmatpush1.bf16.msra.mxu0 %v455
      %568 = vmatprep.subr.bf16.mxu0 0
      %569 = vmatpush1.bf16.msra.mxu0 %v456
      %570 = vmatprep.mubr.bf16.mxu0 %v284
      %571 = vmatmul.mubr.bf16.gmra.mrb[0].mxu0 %v283
      %v572 = vpop.f32.mrb[0].mxu0
      %v573 = vadd.f32 %v524, %v572
      %v574 = vpop.f32.mrb[0].mxu0
      %v575 = vpop.f32.mrb[0].mxu0
      %v576 = vadd.f32 %v527, %v575
      %v577 = vpop.f32.mrb[0].mxu0
      %578 = vmatprep.mubr.bf16.mxu0 %v288
      %579 = vmatmul.mubr.bf16.gmra.mrb[0].mxu0 %v287
      %v580 = vpop.f32.mrb[0].mxu0
      %v581 = vadd.f32 %v532, %v580
      %v582 = vpop.f32.mrb[0].mxu0
      %v583 = vpop.f32.mrb[0].mxu0
      %v584 = vadd.f32 %v535, %v583
      %v585 = vpop.f32.mrb[0].mxu0
      %586 = vdwg.mxu0
      %vm587 = vcmp.gt.f32.partialorder %v573, 0.0
      %vm588 = vcmp.gt.f32.partialorder %v576, 0.0
      %vm589 = vcmp.gt.f32.partialorder %v581, 0.0
      %vm590 = vcmp.gt.f32.partialorder %v584, 0.0
      %v591 = vmul.f32 %v573, 1.442695
      %v592 = vpow.pop %v591
      %v593 = vmul.f32 %v576, 1.442695
      %v594 = vpow.pop %v593
      %v595 = vmul.f32 %v581, 1.442695
      %v596 = vpow.pop %v595
      %v597 = vmul.f32 %v584, 1.442695
      %v598 = vpow.pop %v597
      %v599 = vsub.f32 %v592, 1.0
      %v600 = vsub.f32 %v594, 1.0
      %v601 = vsub.f32 %v596, 1.0
      %v602 = vsub.f32 %v598, 1.0
      %v603 = vsel %vm587, %v573, %v599
      %v604 = vsel %vm588, %v576, %v600
      %v605 = vsel %vm589, %v581, %v601
      %v606 = vsel %vm590, %v584, %v602
      %607 = vst [vmem:[%s175] sm:$0xff] %v603
      %608 = vst [vmem:[%s175 + $0x8] sm:$0xff] %v604
      %609 = vst [vmem:[%s175 + $0x10] sm:$0xff] %v605
      %610 = vst [vmem:[%s175 + $0x18] sm:$0xff] %v606
      %s611 = smul.u32 4, %s14
      %p612 = scmp.lt.s32.totalorder %s611, 7
      %s613 = scalar_select %p612, %s611, 7
      %s614 = smul.addr %s613, 8
      %s615 = scalar_lea.vmem %s3, %s614
      // Predicated region
      $region33: #{vae_forward.11} parent=31 // pred_check
        %p616 = pneg %p100
      $region34: #{vae_forward.11} parent=31 // pred_check_branch
        %618 = sbr.rel (%p616) target = $region36
      $region35: #{vae_forward.11} parent=31 // pred_region
        %s619 = smul.u32 4, %s14
      $region36: #{vae_forward.11} parent=31 // pred_fallthru
        _
    $region32: #{vae_forward.11} parent=5 // pred_fallthru
      _
    %p620 = scmp.le.s32.totalorder 2, %s9
    // Predicated region
    $region37: #{vae_forward.11} parent=5 // pred_check
      %p621 = pneg %p620
    $region38: #{vae_forward.11} parent=5 // pred_check_branch
      %623 = sbr.rel (%p621) target = $region40
    $region39: #{vae_forward.11} parent=5 // pred_region
      %s624 = ssub.s32 %s9, 2
      // Predicated region
      $region41: #{vae_forward.11} parent=39 // pred_check
        %p625 = pneg %p106
      $region42: #{vae_forward.11} parent=39 // pred_check_branch
        %627 = sbr.rel (%p625) target = $region44
      $region43: #{vae_forward.11} parent=39 // pred_region
        %s628 = smul.u32 4, %s15
        %p629 = scmp.lt.s32.totalorder %s628, 7
        %s630 = scalar_select %p629, %s628, 7
        %s631 = smul.addr %s630, 8
        %s632 = scalar_lea.vmem %s3, %s631
      $region44: #{vae_forward.11} parent=39 // pred_fallthru
        _
    $region40: #{vae_forward.11} parent=5 // pred_fallthru
      _
  $region6: #{vae_forward.11} parent=0 // loop_footer
    %s13 = sadd.s32 1, %s9
  $region7: #{vae_forward.11} parent=0 // loop_footer_branch
    %8 = sbr.rel target = $region3
  $region8: #{vae_forward.11} parent=0 // loop_exit
    _

// kernel: vae_forward.12
$region0: #{vae_forward.12}
  #allocation0 [shape = 'u32[]', space=smem, size = 0x4, offset = 0x4, fixed_abs, tag = 'smem constant byte address 0x4 - core index']
  #allocation1 [shape = 'u32[144,128]{1,0:T(1,128)}', space=vmem, size = 0x12000, scoped, tag = 'internal scratch']
  %s0 = inlined_call_operand.vmem [shape: bf16[16,1024], index: 0, kind: input, shape index: {}]
  %s1 = inlined_call_operand.vmem [shape: bf16[1024,128], index: 1, kind: input, shape index: {}]
  %s2 = inlined_call_operand.vmem [shape: f32[1,128], index: 2, kind: input, shape index: {}]
  %s3 = inlined_call_operand.vmem [shape: f32[16,128], index: 3, kind: output, shape index: {}]
  %s4 = sld [smem:[#allocation0]]
  $region22: #{vae_forward.12} parent=0
    _
  %s6 = ssub.s32 1, %s4
  %s7 = scalar_select 0, %s6, %s4
  // Predicated region
  $region2: #{vae_forward.12} parent=0 // pred_check
    _
  $region3: #{vae_forward.12} parent=0 // pred_check_branch
    %9 = sbr.rel (0) target = $region5
  $region4: #{vae_forward.12} parent=0 // pred_region
    _
  $region5: #{vae_forward.12} parent=0 // pred_fallthru
    _
  // Predicated region
  $region6: #{vae_forward.12} parent=0 // pred_check
    _
  $region7: #{vae_forward.12} parent=0 // pred_check_branch
    %11 = sbr.rel (0) target = $region9
  $region8: #{vae_forward.12} parent=0 // pred_region
    _
  $region9: #{vae_forward.12} parent=0 // pred_fallthru
    _
  // Predicated region
  $region10: #{vae_forward.12} parent=0 // pred_check
    _
  $region11: #{vae_forward.12} parent=0 // pred_check_branch
    %13 = sbr.rel (0) target = $region13
  $region12: #{vae_forward.12} parent=0 // pred_region
    _
  $region13: #{vae_forward.12} parent=0 // pred_fallthru
    _
  %v15 = vld [vmem:[%s0] sm:$0xff]
  %v16 = vld [vmem:[%s0 + $0x8] sm:$0xff]
  %v17 = vld [vmem:[%s0 + $0x10] sm:$0xff]
  %v18 = vld [vmem:[%s0 + $0x18] sm:$0xff]
  %v19 = vld [vmem:[%s0 + $0x20] sm:$0xff]
  %v20 = vld [vmem:[%s0 + $0x28] sm:$0xff]
  %v21 = vld [vmem:[%s0 + $0x30] sm:$0xff]
  %v22 = vld [vmem:[%s0 + $0x38] sm:$0xff]
  %v23 = vld [vmem:[%s1] sm:$0xf]
  %v24 = vld [vmem:[%s1 + $0x4] sm:$0xf]
  %v25 = vld [vmem:[%s1 + $0x8] sm:$0xf]
  %v26 = vld [vmem:[%s1 + $0xc] sm:$0xf]
  %v27 = vld [vmem:[%s1 + $0x10] sm:$0xf]
  %v28 = vld [vmem:[%s1 + $0x14] sm:$0xf]
  %v29 = vld [vmem:[%s1 + $0x18] sm:$0xf]
  %v30 = vld [vmem:[%s1 + $0x1c] sm:$0xf]
  %v31 = vld [vmem:[%s1 + $0x20] sm:$0xf]
  %v32 = vld [vmem:[%s1 + $0x24] sm:$0xf]
  %v33 = vld [vmem:[%s1 + $0x28] sm:$0xf]
  %v34 = vld [vmem:[%s1 + $0x2c] sm:$0xf]
  %v35 = vld [vmem:[%s1 + $0x30] sm:$0xf]
  %v36 = vld [vmem:[%s1 + $0x34] sm:$0xf]
  %v37 = vld [vmem:[%s1 + $0x38] sm:$0xf]
  %v38 = vld [vmem:[%s1 + $0x3c] sm:$0xf]
  %v39 = vld [vmem:[%s1 + $0x40] sm:$0xf]
  %v40 = vld [vmem:[%s1 + $0x44] sm:$0xf]
  %v41 = vld [vmem:[%s1 + $0x48] sm:$0xf]
  %v42 = vld [vmem:[%s1 + $0x4c] sm:$0xf]
  %v43 = vld [vmem:[%s1 + $0x50] sm:$0xf]
  %v44 = vld [vmem:[%s1 + $0x54] sm:$0xf]
  %v45 = vld [vmem:[%s1 + $0x58] sm:$0xf]
  %v46 = vld [vmem:[%s1 + $0x5c] sm:$0xf]
  %v47 = vld [vmem:[%s1 + $0x60] sm:$0xf]
  %v48 = vld [vmem:[%s1 + $0x64] sm:$0xf]
  %v49 = vld [vmem:[%s1 + $0x68] sm:$0xf]
  %v50 = vld [vmem:[%s1 + $0x6c] sm:$0xf]
  %v51 = vld [vmem:[%s1 + $0x70] sm:$0xf]
  %v52 = vld [vmem:[%s1 + $0x74] sm:$0xf]
  %v53 = vld [vmem:[%s1 + $0x78] sm:$0xf]
  %v54 = vld [vmem:[%s1 + $0x7c] sm:$0xf]
  %v55 = vld [vmem:[%s1 + $0x80] sm:$0xf]
  %v56 = vld [vmem:[%s1 + $0x84] sm:$0xf]
  %v57 = vld [vmem:[%s1 + $0x88] sm:$0xf]
  %v58 = vld [vmem:[%s1 + $0x8c] sm:$0xf]
  %v59 = vld [vmem:[%s1 + $0x90] sm:$0xf]
  %v60 = vld [vmem:[%s1 + $0x94] sm:$0xf]
  %v61 = vld [vmem:[%s1 + $0x98] sm:$0xf]
  %v62 = vld [vmem:[%s1 + $0x9c] sm:$0xf]
  %v63 = vld [vmem:[%s1 + $0xa0] sm:$0xf]
  %v64 = vld [vmem:[%s1 + $0xa4] sm:$0xf]
  %v65 = vld [vmem:[%s1 + $0xa8] sm:$0xf]
  %v66 = vld [vmem:[%s1 + $0xac] sm:$0xf]
  %v67 = vld [vmem:[%s1 + $0xb0] sm:$0xf]
  %v68 = vld [vmem:[%s1 + $0xb4] sm:$0xf]
  %v69 = vld [vmem:[%s1 + $0xb8] sm:$0xf]
  %v70 = vld [vmem:[%s1 + $0xbc] sm:$0xf]
  %v71 = vld [vmem:[%s1 + $0xc0] sm:$0xf]
  %v72 = vld [vmem:[%s1 + $0xc4] sm:$0xf]
  %v73 = vld [vmem:[%s1 + $0xc8] sm:$0xf]
  %v74 = vld [vmem:[%s1 + $0xcc] sm:$0xf]
  %v75 = vld [vmem:[%s1 + $0xd0] sm:$0xf]
  %v76 = vld [vmem:[%s1 + $0xd4] sm:$0xf]
  %v77 = vld [vmem:[%s1 + $0xd8] sm:$0xf]
  %v78 = vld [vmem:[%s1 + $0xdc] sm:$0xf]
  %v79 = vld [vmem:[%s1 + $0xe0] sm:$0xf]
  %v80 = vld [vmem:[%s1 + $0xe4] sm:$0xf]
  %v81 = vld [vmem:[%s1 + $0xe8] sm:$0xf]
  %v82 = vld [vmem:[%s1 + $0xec] sm:$0xf]
  %v83 = vld [vmem:[%s1 + $0xf0] sm:$0xf]
  %v84 = vld [vmem:[%s1 + $0xf4] sm:$0xf]
  %v85 = vld [vmem:[%s1 + $0xf8] sm:$0xf]
  %v86 = vld [vmem:[%s1 + $0xfc] sm:$0xf]
  %v87 = vld [vmem:[%s1 + $0x100] sm:$0xf]
  %v88 = vld [vmem:[%s1 + $0x104] sm:$0xf]
  %v89 = vld [vmem:[%s1 + $0x108] sm:$0xf]
  %v90 = vld [vmem:[%s1 + $0x10c] sm:$0xf]
  %v91 = vld [vmem:[%s1 + $0x110] sm:$0xf]
  %v92 = vld [vmem:[%s1 + $0x114] sm:$0xf]
  %v93 = vld [vmem:[%s1 + $0x118] sm:$0xf]
  %v94 = vld [vmem:[%s1 + $0x11c] sm:$0xf]
  %v95 = vld [vmem:[%s1 + $0x120] sm:$0xf]
  %v96 = vld [vmem:[%s1 + $0x124] sm:$0xf]
  %v97 = vld [vmem:[%s1 + $0x128] sm:$0xf]
  %v98 = vld [vmem:[%s1 + $0x12c] sm:$0xf]
  %v99 = vld [vmem:[%s1 + $0x130] sm:$0xf]
  %v100 = vld [vmem:[%s1 + $0x134] sm:$0xf]
  %v101 = vld [vmem:[%s1 + $0x138] sm:$0xf]
  %v102 = vld [vmem:[%s1 + $0x13c] sm:$0xf]
  %v103 = vld [vmem:[%s1 + $0x140] sm:$0xf]
  %v104 = vld [vmem:[%s1 + $0x144] sm:$0xf]
  %v105 = vld [vmem:[%s1 + $0x148] sm:$0xf]
  %v106 = vld [vmem:[%s1 + $0x14c] sm:$0xf]
  %v107 = vld [vmem:[%s1 + $0x150] sm:$0xf]
  %v108 = vld [vmem:[%s1 + $0x154] sm:$0xf]
  %v109 = vld [vmem:[%s1 + $0x158] sm:$0xf]
  %v110 = vld [vmem:[%s1 + $0x15c] sm:$0xf]
  %v111 = vld [vmem:[%s1 + $0x160] sm:$0xf]
  %v112 = vld [vmem:[%s1 + $0x164] sm:$0xf]
  %v113 = vld [vmem:[%s1 + $0x168] sm:$0xf]
  %v114 = vld [vmem:[%s1 + $0x16c] sm:$0xf]
  %v115 = vld [vmem:[%s1 + $0x170] sm:$0xf]
  %v116 = vld [vmem:[%s1 + $0x174] sm:$0xf]
  %v117 = vld [vmem:[%s1 + $0x178] sm:$0xf]
  %v118 = vld [vmem:[%s1 + $0x17c] sm:$0xf]
  %v119 = vld [vmem:[%s1 + $0x180] sm:$0xf]
  %v120 = vld [vmem:[%s1 + $0x184] sm:$0xf]
  %v121 = vld [vmem:[%s1 + $0x188] sm:$0xf]
  %v122 = vld [vmem:[%s1 + $0x18c] sm:$0xf]
  %v123 = vld [vmem:[%s1 + $0x190] sm:$0xf]
  %v124 = vld [vmem:[%s1 + $0x194] sm:$0xf]
  %v125 = vld [vmem:[%s1 + $0x198] sm:$0xf]
  %v126 = vld [vmem:[%s1 + $0x19c] sm:$0xf]
  %v127 = vld [vmem:[%s1 + $0x1a0] sm:$0xf]
  %v128 = vld [vmem:[%s1 + $0x1a4] sm:$0xf]
  %v129 = vld [vmem:[%s1 + $0x1a8] sm:$0xf]
  %v130 = vld [vmem:[%s1 + $0x1ac] sm:$0xf]
  %v131 = vld [vmem:[%s1 + $0x1b0] sm:$0xf]
  %v132 = vld [vmem:[%s1 + $0x1b4] sm:$0xf]
  %v133 = vld [vmem:[%s1 + $0x1b8] sm:$0xf]
  %v134 = vld [vmem:[%s1 + $0x1bc] sm:$0xf]
  %v135 = vld [vmem:[%s1 + $0x1c0] sm:$0xf]
  %v136 = vld [vmem:[%s1 + $0x1c4] sm:$0xf]
  %v137 = vld [vmem:[%s1 + $0x1c8] sm:$0xf]
  %v138 = vld [vmem:[%s1 + $0x1cc] sm:$0xf]
  %v139 = vld [vmem:[%s1 + $0x1d0] sm:$0xf]
  %v140 = vld [vmem:[%s1 + $0x1d4] sm:$0xf]
  %v141 = vld [vmem:[%s1 + $0x1d8] sm:$0xf]
  %v142 = vld [vmem:[%s1 + $0x1dc] sm:$0xf]
  %v143 = vld [vmem:[%s1 + $0x1e0] sm:$0xf]
  %v144 = vld [vmem:[%s1 + $0x1e4] sm:$0xf]
  %v145 = vld [vmem:[%s1 + $0x1e8] sm:$0xf]
  %v146 = vld [vmem:[%s1 + $0x1ec] sm:$0xf]
  %v147 = vld [vmem:[%s1 + $0x1f0] sm:$0xf]
  %v148 = vld [vmem:[%s1 + $0x1f4] sm:$0xf]
  %v149 = vld [vmem:[%s1 + $0x1f8] sm:$0xf]
  %v150 = vld [vmem:[%s1 + $0x1fc] sm:$0xf]
  %v151 = vld [vmem:[%s2] sm:$0x1]
  %v153 = vlaneseq
  %v154 = vshrl.u32 %v153, 7
  %v155 = vsub.s32 0, %v154
  %v156 = vrot.slane %v151, %v155
  %v166 = vunpack.c.l.b16 %v15
  %v167 = vunpack.c.h.b16 %v15
  %v168 = vunpack.c.l.b16 %v16
  %v169 = vunpack.c.h.b16 %v16
  %v170 = vunpack.c.l.b16 %v17
  %v171 = vunpack.c.h.b16 %v17
  %v172 = vunpack.c.l.b16 %v18
  %v173 = vunpack.c.h.b16 %v18
  %v174 = vunpack.c.l.b16 %v19
  %v175 = vunpack.c.h.b16 %v19
  %v176 = vunpack.c.l.b16 %v20
  %v177 = vunpack.c.h.b16 %v20
  %v178 = vunpack.c.l.b16 %v21
  %v179 = vunpack.c.h.b16 %v21
  %v180 = vunpack.c.l.b16 %v22
  %v181 = vunpack.c.h.b16 %v22
  %v182 = vpack.c.b16 %v174, %v166
  %v183 = vpack.c.b16 %v175, %v167
  %v184 = vpack.c.b16 %v176, %v168
  %v185 = vpack.c.b16 %v177, %v169
  %v186 = vpack.c.b16 %v178, %v170
  %v187 = vpack.c.b16 %v179, %v171
  %v188 = vpack.c.b16 %v180, %v172
  %v189 = vpack.c.b16 %v181, %v173
  %v326 = vunpack.c.l.b16 %v23
  %v327 = vunpack.c.l.b16 %v24
  %v328 = vunpack.c.l.b16 %v25
  %v329 = vunpack.c.l.b16 %v26
  %v330 = vunpack.c.l.b16 %v27
  %v331 = vunpack.c.l.b16 %v28
  %v332 = vunpack.c.l.b16 %v29
  %v333 = vunpack.c.l.b16 %v30
  %v334 = vunpack.c.l.b16 %v31
  %v335 = vunpack.c.l.b16 %v32
  %v336 = vunpack.c.l.b16 %v33
  %v337 = vunpack.c.l.b16 %v34
  %v338 = vunpack.c.l.b16 %v35
  %v339 = vunpack.c.l.b16 %v36
  %v340 = vunpack.c.l.b16 %v37
  %v341 = vunpack.c.l.b16 %v38
  %v342 = vunpack.c.l.b16 %v39
  %v343 = vunpack.c.l.b16 %v40
  %v344 = vunpack.c.l.b16 %v41
  %v345 = vunpack.c.l.b16 %v42
  %v346 = vunpack.c.l.b16 %v43
  %v347 = vunpack.c.l.b16 %v44
  %v348 = vunpack.c.l.b16 %v45
  %v349 = vunpack.c.l.b16 %v46
  %v350 = vunpack.c.l.b16 %v47
  %v351 = vunpack.c.l.b16 %v48
  %v352 = vunpack.c.l.b16 %v49
  %v353 = vunpack.c.l.b16 %v50
  %v354 = vunpack.c.l.b16 %v51
  %v355 = vunpack.c.l.b16 %v52
  %v356 = vunpack.c.l.b16 %v53
  %v357 = vunpack.c.l.b16 %v54
  %v358 = vunpack.c.l.b16 %v55
  %v359 = vunpack.c.l.b16 %v56
  %v360 = vunpack.c.l.b16 %v57
  %v361 = vunpack.c.l.b16 %v58
  %v362 = vunpack.c.l.b16 %v59
  %v363 = vunpack.c.l.b16 %v60
  %v364 = vunpack.c.l.b16 %v61
  %v365 = vunpack.c.l.b16 %v62
  %v366 = vunpack.c.l.b16 %v63
  %v367 = vunpack.c.l.b16 %v64
  %v368 = vunpack.c.l.b16 %v65
  %v369 = vunpack.c.l.b16 %v66
  %v370 = vunpack.c.l.b16 %v67
  %v371 = vunpack.c.l.b16 %v68
  %v372 = vunpack.c.l.b16 %v69
  %v373 = vunpack.c.l.b16 %v70
  %v374 = vunpack.c.l.b16 %v71
  %v375 = vunpack.c.l.b16 %v72
  %v376 = vunpack.c.l.b16 %v73
  %v377 = vunpack.c.l.b16 %v74
  %v378 = vunpack.c.l.b16 %v75
  %v379 = vunpack.c.l.b16 %v76
  %v380 = vunpack.c.l.b16 %v77
  %v381 = vunpack.c.l.b16 %v78
  %v382 = vunpack.c.l.b16 %v79
  %v383 = vunpack.c.l.b16 %v80
  %v384 = vunpack.c.l.b16 %v81
  %v385 = vunpack.c.l.b16 %v82
  %v386 = vunpack.c.l.b16 %v83
  %v387 = vunpack.c.l.b16 %v84
  %v388 = vunpack.c.l.b16 %v85
  %v389 = vunpack.c.l.b16 %v86
  %v390 = vunpack.c.l.b16 %v87
  %v391 = vunpack.c.l.b16 %v88
  %v392 = vunpack.c.l.b16 %v89
  %v393 = vunpack.c.l.b16 %v90
  %v394 = vunpack.c.l.b16 %v91
  %v395 = vunpack.c.l.b16 %v92
  %v396 = vunpack.c.l.b16 %v93
  %v397 = vunpack.c.l.b16 %v94
  %v398 = vunpack.c.l.b16 %v95
  %v399 = vunpack.c.l.b16 %v96
  %v400 = vunpack.c.l.b16 %v97
  %v401 = vunpack.c.l.b16 %v98
  %v402 = vunpack.c.l.b16 %v99
  %v403 = vunpack.c.l.b16 %v100
  %v404 = vunpack.c.l.b16 %v101
  %v405 = vunpack.c.l.b16 %v102
  %v406 = vunpack.c.l.b16 %v103
  %v407 = vunpack.c.l.b16 %v104
  %v408 = vunpack.c.l.b16 %v105
  %v409 = vunpack.c.l.b16 %v106
  %v410 = vunpack.c.l.b16 %v107
  %v411 = vunpack.c.l.b16 %v108
  %v412 = vunpack.c.l.b16 %v109
  %v413 = vunpack.c.l.b16 %v110
  %v414 = vunpack.c.l.b16 %v111
  %v415 = vunpack.c.l.b16 %v112
  %v416 = vunpack.c.l.b16 %v113
  %v417 = vunpack.c.l.b16 %v114
  %v418 = vunpack.c.l.b16 %v115
  %v419 = vunpack.c.l.b16 %v116
  %v420 = vunpack.c.l.b16 %v117
  %v421 = vunpack.c.l.b16 %v118
  %v422 = vunpack.c.l.b16 %v119
  %v423 = vunpack.c.l.b16 %v120
  %v424 = vunpack.c.l.b16 %v121
  %v425 = vunpack.c.l.b16 %v122
  %v426 = vunpack.c.l.b16 %v123
  %v427 = vunpack.c.l.b16 %v124
  %v428 = vunpack.c.l.b16 %v125
  %v429 = vunpack.c.l.b16 %v126
  %v430 = vunpack.c.l.b16 %v127
  %v431 = vunpack.c.l.b16 %v128
  %v432 = vunpack.c.l.b16 %v129
  %v433 = vunpack.c.l.b16 %v130
  %v434 = vunpack.c.l.b16 %v131
  %v435 = vunpack.c.l.b16 %v132
  %v436 = vunpack.c.l.b16 %v133
  %v437 = vunpack.c.l.b16 %v134
  %v438 = vunpack.c.l.b16 %v135
  %v439 = vunpack.c.l.b16 %v136
  %v440 = vunpack.c.l.b16 %v137
  %v441 = vunpack.c.l.b16 %v138
  %v442 = vunpack.c.l.b16 %v139
  %v443 = vunpack.c.l.b16 %v140
  %v444 = vunpack.c.l.b16 %v141
  %v445 = vunpack.c.l.b16 %v142
  %v446 = vunpack.c.l.b16 %v143
  %v447 = vunpack.c.l.b16 %v144
  %v448 = vunpack.c.l.b16 %v145
  %v449 = vunpack.c.l.b16 %v146
  %v450 = vunpack.c.l.b16 %v147
  %v451 = vunpack.c.l.b16 %v148
  %v452 = vunpack.c.l.b16 %v149
  %v453 = vunpack.c.l.b16 %v150
  %v454 = vpack.c.b16 %v327, %v326
  %v455 = vpack.c.b16 %v329, %v328
  %v456 = vpack.c.b16 %v331, %v330
  %v457 = vpack.c.b16 %v333, %v332
  %v458 = vpack.c.b16 %v335, %v334
  %v459 = vpack.c.b16 %v337, %v336
  %v460 = vpack.c.b16 %v339, %v338
  %v461 = vpack.c.b16 %v341, %v340
  %v462 = vpack.c.b16 %v343, %v342
  %v463 = vpack.c.b16 %v345, %v344
  %v464 = vpack.c.b16 %v347, %v346
  %v465 = vpack.c.b16 %v349, %v348
  %v466 = vpack.c.b16 %v351, %v350
  %v467 = vpack.c.b16 %v353, %v352
  %v468 = vpack.c.b16 %v355, %v354
  %v469 = vpack.c.b16 %v357, %v356
  %v470 = vpack.c.b16 %v359, %v358
  %v471 = vpack.c.b16 %v361, %v360
  %v472 = vpack.c.b16 %v363, %v362
  %v473 = vpack.c.b16 %v365, %v364
  %v474 = vpack.c.b16 %v367, %v366
  %v475 = vpack.c.b16 %v369, %v368
  %v476 = vpack.c.b16 %v371, %v370
  %v477 = vpack.c.b16 %v373, %v372
  %v478 = vpack.c.b16 %v375, %v374
  %v479 = vpack.c.b16 %v377, %v376
  %v480 = vpack.c.b16 %v379, %v378
  %v481 = vpack.c.b16 %v381, %v380
  %v482 = vpack.c.b16 %v383, %v382
  %v483 = vpack.c.b16 %v385, %v384
  %v484 = vpack.c.b16 %v387, %v386
  %v485 = vpack.c.b16 %v389, %v388
  %v486 = vpack.c.b16 %v391, %v390
  %v487 = vpack.c.b16 %v393, %v392
  %v488 = vpack.c.b16 %v395, %v394
  %v489 = vpack.c.b16 %v397, %v396
  %v490 = vpack.c.b16 %v399, %v398
  %v491 = vpack.c.b16 %v401, %v400
  %v492 = vpack.c.b16 %v403, %v402
  %v493 = vpack.c.b16 %v405, %v404
  %v494 = vpack.c.b16 %v407, %v406
  %v495 = vpack.c.b16 %v409, %v408
  %v496 = vpack.c.b16 %v411, %v410
  %v497 = vpack.c.b16 %v413, %v412
  %v498 = vpack.c.b16 %v415, %v414
  %v499 = vpack.c.b16 %v417, %v416
  %v500 = vpack.c.b16 %v419, %v418
  %v501 = vpack.c.b16 %v421, %v420
  %v502 = vpack.c.b16 %v423, %v422
  %v503 = vpack.c.b16 %v425, %v424
  %v504 = vpack.c.b16 %v427, %v426
  %v505 = vpack.c.b16 %v429, %v428
  %v506 = vpack.c.b16 %v431, %v430
  %v507 = vpack.c.b16 %v433, %v432
  %v508 = vpack.c.b16 %v435, %v434
  %v509 = vpack.c.b16 %v437, %v436
  %v510 = vpack.c.b16 %v439, %v438
  %v511 = vpack.c.b16 %v441, %v440
  %v512 = vpack.c.b16 %v443, %v442
  %v513 = vpack.c.b16 %v445, %v444
  %v514 = vpack.c.b16 %v447, %v446
  %v515 = vpack.c.b16 %v449, %v448
  %v516 = vpack.c.b16 %v451, %v450
  %v517 = vpack.c.b16 %v453, %v452
  %582 = vmatprep.subr.bf16.mxu0 0
  %583 = vmatpush1.bf16.msra.mxu0 %v454
  %584 = vmatprep.subr.bf16.mxu0 0
  %585 = vmatpush1.bf16.msra.mxu0 %v455
  %586 = vmatprep.subr.bf16.mxu0 0
  %587 = vmatpush1.bf16.msra.mxu0 %v456
  %588 = vmatprep.subr.bf16.mxu0 0
  %589 = vmatpush1.bf16.msra.mxu0 %v457
  %590 = vmatprep.subr.bf16.mxu0 0
  %591 = vmatpush1.bf16.msra.mxu0 %v458
  %592 = vmatprep.subr.bf16.mxu0 0
  %593 = vmatpush1.bf16.msra.mxu0 %v459
  %594 = vmatprep.subr.bf16.mxu0 0
  %595 = vmatpush1.bf16.msra.mxu0 %v460
  %596 = vmatprep.subr.bf16.mxu0 0
  %597 = vmatpush1.bf16.msra.mxu0 %v461
  %598 = vmatprep.subr.bf16.mxu0 0
  %599 = vmatpush1.bf16.msra.mxu0 %v462
  %600 = vmatprep.subr.bf16.mxu0 0
  %601 = vmatpush1.bf16.msra.mxu0 %v463
  %602 = vmatprep.subr.bf16.mxu0 0
  %603 = vmatpush1.bf16.msra.mxu0 %v464
  %604 = vmatprep.subr.bf16.mxu0 0
  %605 = vmatpush1.bf16.msra.mxu0 %v465
  %606 = vmatprep.subr.bf16.mxu0 0
  %607 = vmatpush1.bf16.msra.mxu0 %v466
  %608 = vmatprep.subr.bf16.mxu0 0
  %609 = vmatpush1.bf16.msra.mxu0 %v467
  %610 = vmatprep.subr.bf16.mxu0 0
  %611 = vmatpush1.bf16.msra.mxu0 %v468
  %612 = vmatprep.subr.bf16.mxu0 0
  %613 = vmatpush1.bf16.msra.mxu0 %v469
  %614 = vmatprep.mubr.bf16.mxu0 %v183
  %615 = vmatmul.mubr.bf16.gmra.mrb[0].mxu0 %v182
  %v616 = vpop.f32.mrb[0].mxu0
  %v617 = vadd.f32 %v156, %v616
  %v618 = vpop.f32.mrb[0].mxu0
  %v619 = vpop.f32.mrb[0].mxu0
  %v620 = vadd.f32 %v156, %v619
  %v621 = vpop.f32.mrb[0].mxu0
  %622 = vdwg.mxu0
  %623 = vmatprep.subr.bf16.mxu0 0
  %624 = vmatpush1.bf16.msra.mxu0 %v470
  %625 = vmatprep.subr.bf16.mxu0 0
  %626 = vmatpush1.bf16.msra.mxu0 %v471
  %627 = vmatprep.subr.bf16.mxu0 0
  %628 = vmatpush1.bf16.msra.mxu0 %v472
  %629 = vmatprep.subr.bf16.mxu0 0
  %630 = vmatpush1.bf16.msra.mxu0 %v473
  %631 = vmatprep.subr.bf16.mxu0 0
  %632 = vmatpush1.bf16.msra.mxu0 %v474
  %633 = vmatprep.subr.bf16.mxu0 0
  %634 = vmatpush1.bf16.msra.mxu0 %v475
  %635 = vmatprep.subr.bf16.mxu0 0
  %636 = vmatpush1.bf16.msra.mxu0 %v476
  %637 = vmatprep.subr.bf16.mxu0 0
  %638 = vmatpush1.bf16.msra.mxu0 %v477
  %639 = vmatprep.subr.bf16.mxu0 0
  %640 = vmatpush1.bf16.msra.mxu0 %v478
  %641 = vmatprep.subr.bf16.mxu0 0
  %642 = vmatpush1.bf16.msra.mxu0 %v479
  %643 = vmatprep.subr.bf16.mxu0 0
  %644 = vmatpush1.bf16.msra.mxu0 %v480
  %645 = vmatprep.subr.bf16.mxu0 0
  %646 = vmatpush1.bf16.msra.mxu0 %v481
  %647 = vmatprep.subr.bf16.mxu0 0
  %648 = vmatpush1.bf16.msra.mxu0 %v482
  %649 = vmatprep.subr.bf16.mxu0 0
  %650 = vmatpush1.bf16.msra.mxu0 %v483
  %651 = vmatprep.subr.bf16.mxu0 0
  %652 = vmatpush1.bf16.msra.mxu0 %v484
  %653 = vmatprep.subr.bf16.mxu0 0
  %654 = vmatpush1.bf16.msra.mxu0 %v485
  %655 = vmatprep.mubr.bf16.mxu0 %v185
  %656 = vmatmul.mubr.bf16.gmra.mrb[0].mxu0 %v184
  %v657 = vpop.f32.mrb[0].mxu0
  %v658 = vadd.f32 %v617, %v657
  %v659 = vpop.f32.mrb[0].mxu0
  %v660 = vpop.f32.mrb[0].mxu0
  %v661 = vadd.f32 %v620, %v660
  %v662 = vpop.f32.mrb[0].mxu0
  %663 = vdwg.mxu0
  %664 = vmatprep.subr.bf16.mxu0 0
  %665 = vmatpush1.bf16.msra.mxu0 %v486
  %666 = vmatprep.subr.bf16.mxu0 0
  %667 = vmatpush1.bf16.msra.mxu0 %v487
  %668 = vmatprep.subr.bf16.mxu0 0
  %669 = vmatpush1.bf16.msra.mxu0 %v488
  %670 = vmatprep.subr.bf16.mxu0 0
  %671 = vmatpush1.bf16.msra.mxu0 %v489
  %672 = vmatprep.subr.bf16.mxu0 0
  %673 = vmatpush1.bf16.msra.mxu0 %v490
  %674 = vmatprep.subr.bf16.mxu0 0
  %675 = vmatpush1.bf16.msra.mxu0 %v491
  %676 = vmatprep.subr.bf16.mxu0 0
  %677 = vmatpush1.bf16.msra.mxu0 %v492
  %678 = vmatprep.subr.bf16.mxu0 0
  %679 = vmatpush1.bf16.msra.mxu0 %v493
  %680 = vmatprep.subr.bf16.mxu0 0
  %681 = vmatpush1.bf16.msra.mxu0 %v494
  %682 = vmatprep.subr.bf16.mxu0 0
  %683 = vmatpush1.bf16.msra.mxu0 %v495
  %684 = vmatprep.subr.bf16.mxu0 0
  %685 = vmatpush1.bf16.msra.mxu0 %v496
  %686 = vmatprep.subr.bf16.mxu0 0
  %687 = vmatpush1.bf16.msra.mxu0 %v497
  %688 = vmatprep.subr.bf16.mxu0 0
  %689 = vmatpush1.bf16.msra.mxu0 %v498
  %690 = vmatprep.subr.bf16.mxu0 0
  %691 = vmatpush1.bf16.msra.mxu0 %v499
  %692 = vmatprep.subr.bf16.mxu0 0
  %693 = vmatpush1.bf16.msra.mxu0 %v500
  %694 = vmatprep.subr.bf16.mxu0 0
  %695 = vmatpush1.bf16.msra.mxu0 %v501
  %696 = vmatprep.mubr.bf16.mxu0 %v187
  %697 = vmatmul.mubr.bf16.gmra.mrb[0].mxu0 %v186
  %v698 = vpop.f32.mrb[0].mxu0
  %v699 = vadd.f32 %v658, %v698
  %v700 = vpop.f32.mrb[0].mxu0
  %v701 = vpop.f32.mrb[0].mxu0
  %v702 = vadd.f32 %v661, %v701
  %v703 = vpop.f32.mrb[0].mxu0
  %704 = vdwg.mxu0
  %705 = vmatprep.subr.bf16.mxu0 0
  %706 = vmatpush1.bf16.msra.mxu0 %v502
  %707 = vmatprep.subr.bf16.mxu0 0
  %708 = vmatpush1.bf16.msra.mxu0 %v503
  %709 = vmatprep.subr.bf16.mxu0 0
  %710 = vmatpush1.bf16.msra.mxu0 %v504
  %711 = vmatprep.subr.bf16.mxu0 0
  %712 = vmatpush1.bf16.msra.mxu0 %v505
  %713 = vmatprep.subr.bf16.mxu0 0
  %714 = vmatpush1.bf16.msra.mxu0 %v506
  %715 = vmatprep.subr.bf16.mxu0 0
  %716 = vmatpush1.bf16.msra.mxu0 %v507
  %717 = vmatprep.subr.bf16.mxu0 0
  %718 = vmatpush1.bf16.msra.mxu0 %v508
  %719 = vmatprep.subr.bf16.mxu0 0
  %720 = vmatpush1.bf16.msra.mxu0 %v509
  %721 = vmatprep.subr.bf16.mxu0 0
  %722 = vmatpush1.bf16.msra.mxu0 %v510
  %723 = vmatprep.subr.bf16.mxu0 0
  %724 = vmatpush1.bf16.msra.mxu0 %v511
  %725 = vmatprep.subr.bf16.mxu0 0
  %726 = vmatpush1.bf16.msra.mxu0 %v512
  %727 = vmatprep.subr.bf16.mxu0 0
  %728 = vmatpush1.bf16.msra.mxu0 %v513
  %729 = vmatprep.subr.bf16.mxu0 0
  %730 = vmatpush1.bf16.msra.mxu0 %v514
  %731 = vmatprep.subr.bf16.mxu0 0
  %732 = vmatpush1.bf16.msra.mxu0 %v515
  %733 = vmatprep.subr.bf16.mxu0 0
  %734 = vmatpush1.bf16.msra.mxu0 %v516
  %735 = vmatprep.subr.bf16.mxu0 0
  %736 = vmatpush1.bf16.msra.mxu0 %v517
  %737 = vmatprep.mubr.bf16.mxu0 %v189
  %738 = vmatmul.mubr.bf16.gmra.mrb[0].mxu0 %v188
  %v739 = vpop.f32.mrb[0].mxu0
  %v740 = vadd.f32 %v699, %v739
  %v741 = vpop.f32.mrb[0].mxu0
  %v742 = vpop.f32.mrb[0].mxu0
  %v743 = vadd.f32 %v702, %v742
  %v744 = vpop.f32.mrb[0].mxu0
  %745 = vdwg.mxu0
  %vm746 = vcmp.gt.f32.partialorder %v740, 0.0
  %vm747 = vcmp.gt.f32.partialorder %v743, 0.0
  %v748 = vmul.f32 %v740, 1.442695
  %v749 = vpow.pop %v748
  %v750 = vmul.f32 %v743, 1.442695
  %v751 = vpow.pop %v750
  %v752 = vsub.f32 %v749, 1.0
  %v753 = vsub.f32 %v751, 1.0
  %v754 = vsel %vm746, %v740, %v752
  %v755 = vsel %vm747, %v743, %v753
  %756 = vst [vmem:[%s3] sm:$0xff] %v754
  %757 = vst [vmem:[%s3 + $0x8] sm:$0xff] %v755
  // Predicated region
  $region14: #{vae_forward.12} parent=0 // pred_check
    _
  $region15: #{vae_forward.12} parent=0 // pred_check_branch
    %759 = sbr.rel (0) target = $region17
  $region16: #{vae_forward.12} parent=0 // pred_region
    _
  $region17: #{vae_forward.12} parent=0 // pred_fallthru
    _
  // Predicated region
  $region18: #{vae_forward.12} parent=0 // pred_check
    _
  $region19: #{vae_forward.12} parent=0 // pred_check_branch
    %761 = sbr.rel (0) target = $region21
  $region20: #{vae_forward.12} parent=0 // pred_region
    _
  $region21: #{vae_forward.12} parent=0 // pred_fallthru
    _

// kernel: vae_forward.13
$region0: #{vae_forward.13}
  #allocation0 [shape = 'u32[]', space=smem, size = 0x4, offset = 0x4, fixed_abs, tag = 'smem constant byte address 0x4 - core index']
  #allocation1 [shape = 'u32[144,128]{1,0:T(1,128)}', space=vmem, size = 0x12000, scoped, tag = 'internal scratch']
  %s0 = inlined_call_operand.vmem [shape: f32[2,128], index: 0, kind: input, shape index: {}]
  %s1 = inlined_call_operand.vmem [shape: f32[128,32], index: 1, kind: input, shape index: {}]
  %s2 = inlined_call_operand.vmem [shape: f32[1,32], index: 2, kind: input, shape index: {}]
  %s3 = inlined_call_operand.vmem [shape: f32[128,32], index: 3, kind: input, shape index: {}]
  %s4 = inlined_call_operand.vmem [shape: f32[1,32], index: 4, kind: input, shape index: {}]
  %s5 = inlined_call_operand.vmem [shape: f32[2,32], index: 5, kind: input, shape index: {}]
  %s6 = inlined_call_operand.hbm [shape: f32[2,32], index: 6, kind: output, shape index: {0}]
  %s7 = inlined_call_operand.hbm [shape: f32[2,32], index: 7, kind: output, shape index: {1}]
  %s8 = inlined_call_operand.vmem [shape: f32[2,32], index: 8, kind: output, shape index: {2}]
  %9 = xla_tuple %s6, %s7, %s8
  %s10 = sld [smem:[#allocation0]]
  $region50: #{vae_forward.13} parent=0
    _
  %s12 = ssub.s32 1, %s10
  %s13 = scalar_select 0, %s12, %s10
  $region1: #{vae_forward.13} parent=0
    #allocation2 [shape = 'u8[1024]{0}', space=vmem, size = 0x400, scoped, tag = 'output window, operand 0, single buffered']
    #allocation3 [shape = 's32[1]{0}', space=sflag, size = 0x4, scoped, tag = 'scoped memory for vae_forward.13']
    #allocation4 [shape = 'u8[1024]{0}', space=vmem, size = 0x400, scoped, tag = 'output window, operand 1, single buffered']
    #allocation5 [shape = 's32[1]{0}', space=sflag, size = 0x4, scoped, tag = 'scoped memory for vae_forward.13']
    %14 = vsyncpa [#allocation3], 0
    %15 = vsyncpa [#allocation5], 0
    // Predicated region
    $region2: #{vae_forward.13} parent=1 // pred_check
      _
    $region3: #{vae_forward.13} parent=1 // pred_check_branch
      %17 = sbr.rel (0) target = $region5
    $region4: #{vae_forward.13} parent=1 // pred_region
      _
    $region5: #{vae_forward.13} parent=1 // pred_fallthru
      _
    // Predicated region
    $region6: #{vae_forward.13} parent=1 // pred_check
      _
    $region7: #{vae_forward.13} parent=1 // pred_check_branch
      %19 = sbr.rel (0) target = $region9
    $region8: #{vae_forward.13} parent=1 // pred_region
      _
    $region9: #{vae_forward.13} parent=1 // pred_fallthru
      _
    // Predicated region
    $region10: #{vae_forward.13} parent=1 // pred_check
      _
    $region11: #{vae_forward.13} parent=1 // pred_check_branch
      %21 = sbr.rel (0) target = $region13
    $region12: #{vae_forward.13} parent=1 // pred_region
      _
    $region13: #{vae_forward.13} parent=1 // pred_fallthru
      _
    // Predicated region
    $region14: #{vae_forward.13} parent=1 // pred_check
      _
    $region15: #{vae_forward.13} parent=1 // pred_check_branch
      %23 = sbr.rel (0) target = $region17
    $region16: #{vae_forward.13} parent=1 // pred_region
      _
    $region17: #{vae_forward.13} parent=1 // pred_fallthru
      _
    // Predicated region
    $region18: #{vae_forward.13} parent=1 // pred_check
      _
    $region19: #{vae_forward.13} parent=1 // pred_check_branch
      %25 = sbr.rel (0) target = $region21
    $region20: #{vae_forward.13} parent=1 // pred_region
      _
    $region21: #{vae_forward.13} parent=1 // pred_fallthru
      _
    // Predicated region
    $region22: #{vae_forward.13} parent=1 // pred_check
      _
    $region23: #{vae_forward.13} parent=1 // pred_check_branch
      %27 = sbr.rel (0) target = $region25
    $region24: #{vae_forward.13} parent=1 // pred_region
      _
    $region25: #{vae_forward.13} parent=1 // pred_fallthru
      _
    %v28 = vld [vmem:[%s0] sm:$0x3]
    %v29 = vld [vmem:[%s1] sm:$0xff]
    %v30 = vld [vmem:[%s1 + $0x8] sm:$0xff]
    %v31 = vld [vmem:[%s1 + $0x10] sm:$0xff]
    %v32 = vld [vmem:[%s1 + $0x18] sm:$0xff]
    %v33 = vld [vmem:[%s1 + $0x20] sm:$0xff]
    %v34 = vld [vmem:[%s1 + $0x28] sm:$0xff]
    %v35 = vld [vmem:[%s1 + $0x30] sm:$0xff]
    %v36 = vld [vmem:[%s1 + $0x38] sm:$0xff]
    %v37 = vld [vmem:[%s1 + $0x40] sm:$0xff]
    %v38 = vld [vmem:[%s1 + $0x48] sm:$0xff]
    %v39 = vld [vmem:[%s1 + $0x50] sm:$0xff]
    %v40 = vld [vmem:[%s1 + $0x58] sm:$0xff]
    %v41 = vld [vmem:[%s1 + $0x60] sm:$0xff]
    %v42 = vld [vmem:[%s1 + $0x68] sm:$0xff]
    %v43 = vld [vmem:[%s1 + $0x70] sm:$0xff]
    %v44 = vld [vmem:[%s1 + $0x78] sm:$0xff]
    %v45 = vld [vmem:[%s2] sm:$0x1]
    %v47 = vlaneseq
    %v48 = vshrl.u32 %v47, 7
    %v49 = vsub.s32 0, %v48
    %v50 = vrot.slane %v45, %v49
    %52 = vmatprep.subr.mxu0 0.0
    %53 = vmatpush1.msra.mxu0 %v29
    %54 = vmatprep.subr.mxu0 0.0
    %55 = vmatpush1.msra.mxu0 %v30
    %56 = vmatprep.subr.mxu0 0.0
    %57 = vmatpush1.msra.mxu0 %v31
    %58 = vmatprep.subr.mxu0 0.0
    %59 = vmatpush1.msra.mxu0 %v32
    %60 = vmatprep.subr.mxu0 0.0
    %61 = vmatpush1.msra.mxu0 %v33
    %62 = vmatprep.subr.mxu0 0.0
    %63 = vmatpush1.msra.mxu0 %v34
    %64 = vmatprep.subr.mxu0 0.0
    %65 = vmatpush1.msra.mxu0 %v35
    %66 = vmatprep.subr.mxu0 0.0
    %67 = vmatpush1.msra.mxu0 %v36
    %68 = vmatprep.subr.mxu0 0.0
    %69 = vmatpush1.msra.mxu0 %v37
    %70 = vmatprep.subr.mxu0 0.0
    %71 = vmatpush1.msra.mxu0 %v38
    %72 = vmatprep.subr.mxu0 0.0
    %73 = vmatpush1.msra.mxu0 %v39
    %74 = vmatprep.subr.mxu0 0.0
    %75 = vmatpush1.msra.mxu0 %v40
    %76 = vmatprep.subr.mxu0 0.0
    %77 = vmatpush1.msra.mxu0 %v41
    %78 = vmatprep.subr.mxu0 0.0
    %79 = vmatpush1.msra.mxu0 %v42
    %80 = vmatprep.subr.mxu0 0.0
    %81 = vmatpush1.msra.mxu0 %v43
    %82 = vmatprep.subr.mxu0 0.0
    %83 = vmatpush1.msra.mxu0 %v44
    %84 = vmatprep.subr.mxu0 0.0
    %85 = vmatpush1.msra.mxu0 0.0
    %86 = vmatprep.subr.mxu0 0.0
    %87 = vmatpush1.msra.mxu0 0.0
    %88 = vmatprep.subr.mxu0 0.0
    %89 = vmatpush1.msra.mxu0 0.0
    %90 = vmatprep.subr.mxu0 0.0
    %91 = vmatpush1.msra.mxu0 0.0
    %92 = vmatprep.subr.mxu0 0.0
    %93 = vmatpush1.msra.mxu0 0.0
    %94 = vmatprep.subr.mxu0 0.0
    %95 = vmatpush1.msra.mxu0 0.0
    %96 = vmatprep.subr.mxu0 0.0
    %97 = vmatpush1.msra.mxu0 0.0
    %98 = vmatprep.subr.mxu0 0.0
    %99 = vmatpush1.msra.mxu0 0.0
    %100 = vmatprep.subr.mxu0 0.0
    %101 = vmatpush1.msra.mxu0 0.0
    %102 = vmatprep.subr.mxu0 0.0
    %103 = vmatpush1.msra.mxu0 0.0
    %104 = vmatprep.subr.mxu0 0.0
    %105 = vmatpush1.msra.mxu0 0.0
    %106 = vmatprep.subr.mxu0 0.0
    %107 = vmatpush1.msra.mxu0 0.0
    %108 = vmatprep.subr.mxu0 0.0
    %109 = vmatpush1.msra.mxu0 0.0
    %110 = vmatprep.subr.mxu0 0.0
    %111 = vmatpush1.msra.mxu0 0.0
    %112 = vmatprep.subr.mxu0 0.0
    %113 = vmatpush1.msra.mxu0 0.0
    %114 = vmatprep.subr.mxu0 0.0
    %115 = vmatpush1.msra.mxu0 0.0
    %116 = vmatprep.mubr.f32.mxu0 0.0
    %117 = vmatmul.mubr.f32.gmra.mrb[0].mxu0 %v28
    %v118 = vpop.f32.mrb[0].mxu0
    %v119 = vadd.f32 %v50, %v118
    %v120 = vpop.f32.mrb[0].mxu0
    %121 = vdwg.mxu0
    %v122 = vld [vmem:[%s3] sm:$0xff]
    %v123 = vld [vmem:[%s3 + $0x8] sm:$0xff]
    %v124 = vld [vmem:[%s3 + $0x10] sm:$0xff]
    %v125 = vld [vmem:[%s3 + $0x18] sm:$0xff]
    %v126 = vld [vmem:[%s3 + $0x20] sm:$0xff]
    %v127 = vld [vmem:[%s3 + $0x28] sm:$0xff]
    %v128 = vld [vmem:[%s3 + $0x30] sm:$0xff]
    %v129 = vld [vmem:[%s3 + $0x38] sm:$0xff]
    %v130 = vld [vmem:[%s3 + $0x40] sm:$0xff]
    %v131 = vld [vmem:[%s3 + $0x48] sm:$0xff]
    %v132 = vld [vmem:[%s3 + $0x50] sm:$0xff]
    %v133 = vld [vmem:[%s3 + $0x58] sm:$0xff]
    %v134 = vld [vmem:[%s3 + $0x60] sm:$0xff]
    %v135 = vld [vmem:[%s3 + $0x68] sm:$0xff]
    %v136 = vld [vmem:[%s3 + $0x70] sm:$0xff]
    %v137 = vld [vmem:[%s3 + $0x78] sm:$0xff]
    %v138 = vld [vmem:[%s4] sm:$0x1]
    %v140 = vlaneseq
    %v141 = vshrl.u32 %v140, 7
    %v142 = vsub.s32 0, %v141
    %v143 = vrot.slane %v138, %v142
    %145 = vmatprep.subr.mxu0 0.0
    %146 = vmatpush1.msra.mxu0 %v122
    %147 = vmatprep.subr.mxu0 0.0
    %148 = vmatpush1.msra.mxu0 %v123
    %149 = vmatprep.subr.mxu0 0.0
    %150 = vmatpush1.msra.mxu0 %v124
    %151 = vmatprep.subr.mxu0 0.0
    %152 = vmatpush1.msra.mxu0 %v125
    %153 = vmatprep.subr.mxu0 0.0
    %154 = vmatpush1.msra.mxu0 %v126
    %155 = vmatprep.subr.mxu0 0.0
    %156 = vmatpush1.msra.mxu0 %v127
    %157 = vmatprep.subr.mxu0 0.0
    %158 = vmatpush1.msra.mxu0 %v128
    %159 = vmatprep.subr.mxu0 0.0
    %160 = vmatpush1.msra.mxu0 %v129
    %161 = vmatprep.subr.mxu0 0.0
    %162 = vmatpush1.msra.mxu0 %v130
    %163 = vmatprep.subr.mxu0 0.0
    %164 = vmatpush1.msra.mxu0 %v131
    %165 = vmatprep.subr.mxu0 0.0
    %166 = vmatpush1.msra.mxu0 %v132
    %167 = vmatprep.subr.mxu0 0.0
    %168 = vmatpush1.msra.mxu0 %v133
    %169 = vmatprep.subr.mxu0 0.0
    %170 = vmatpush1.msra.mxu0 %v134
    %171 = vmatprep.subr.mxu0 0.0
    %172 = vmatpush1.msra.mxu0 %v135
    %173 = vmatprep.subr.mxu0 0.0
    %174 = vmatpush1.msra.mxu0 %v136
    %175 = vmatprep.subr.mxu0 0.0
    %176 = vmatpush1.msra.mxu0 %v137
    %177 = vmatprep.subr.mxu0 0.0
    %178 = vmatpush1.msra.mxu0 0.0
    %179 = vmatprep.subr.mxu0 0.0
    %180 = vmatpush1.msra.mxu0 0.0
    %181 = vmatprep.subr.mxu0 0.0
    %182 = vmatpush1.msra.mxu0 0.0
    %183 = vmatprep.subr.mxu0 0.0
    %184 = vmatpush1.msra.mxu0 0.0
    %185 = vmatprep.subr.mxu0 0.0
    %186 = vmatpush1.msra.mxu0 0.0
    %187 = vmatprep.subr.mxu0 0.0
    %188 = vmatpush1.msra.mxu0 0.0
    %189 = vmatprep.subr.mxu0 0.0
    %190 = vmatpush1.msra.mxu0 0.0
    %191 = vmatprep.subr.mxu0 0.0
    %192 = vmatpush1.msra.mxu0 0.0
    %193 = vmatprep.subr.mxu0 0.0
    %194 = vmatpush1.msra.mxu0 0.0
    %195 = vmatprep.subr.mxu0 0.0
    %196 = vmatpush1.msra.mxu0 0.0
    %197 = vmatprep.subr.mxu0 0.0
    %198 = vmatpush1.msra.mxu0 0.0
    %199 = vmatprep.subr.mxu0 0.0
    %200 = vmatpush1.msra.mxu0 0.0
    %201 = vmatprep.subr.mxu0 0.0
    %202 = vmatpush1.msra.mxu0 0.0
    %203 = vmatprep.subr.mxu0 0.0
    %204 = vmatpush1.msra.mxu0 0.0
    %205 = vmatprep.subr.mxu0 0.0
    %206 = vmatpush1.msra.mxu0 0.0
    %207 = vmatprep.subr.mxu0 0.0
    %208 = vmatpush1.msra.mxu0 0.0
    %209 = vmatprep.mubr.f32.mxu0 0.0
    %210 = vmatmul.mubr.f32.gmra.mrb[0].mxu0 %v28
    %v211 = vpop.f32.mrb[0].mxu0
    %v212 = vadd.f32 %v143, %v211
    %v213 = vpop.f32.mrb[0].mxu0
    %214 = vdwg.mxu0
    %vm215 = vcmp.gt.f32.partialorder %v212, 0.0
    %v216 = vmul.f32 %v212, 1.442695
    %v217 = vpow.pop %v216
    %v218 = vsub.f32 %v217, 1.0
    %v219 = vsel %vm215, %v212, %v218
    %v220 = vld [vmem:[%s5] sm:$0x3]
    %v221 = vmul.f32 %v219, 0.5
    %v222 = vmul.f32 %v221, 1.442695
    %v223 = vpow.pop %v222
    %v224 = vmul.f32 %v220, %v223
    %v225 = vadd.f32 %v119, %v224
    %vm226 = vcmask 254976
    %227 = vst.msk [vmem:[#allocation2] sm:$0x3] %vm226, %v119
    %228 = vst.msk [vmem:[#allocation4] sm:$0x3] %vm226, %v219
    %229 = vst.msk [vmem:[%s8] sm:$0x3] %vm226, %v225
    // Predicated region
    $region26: #{vae_forward.13} parent=1 // pred_check
      _
    $region27: #{vae_forward.13} parent=1 // pred_check_branch
      %231 = sbr.rel (0) target = $region29
    $region28: #{vae_forward.13} parent=1 // pred_region
      %s233 = ssub.s32 32, 32
      %234 = vsyncadd [#allocation3], %s233
      %s236 = sshll.u32 [#allocation2], 4
      %s237 = int_to_ptr.vmem [resolvable:$true] %s236
      %239 = dma.vmem_to_hbm [thread:$0]  %s237, 32, %s6, [#allocation3]
    $region29: #{vae_forward.13} parent=1 // pred_fallthru
      _
    // Predicated region
    $region30: #{vae_forward.13} parent=1 // pred_check
      _
    $region31: #{vae_forward.13} parent=1 // pred_check_branch
      %241 = sbr.rel (0) target = $region33
    $region32: #{vae_forward.13} parent=1 // pred_region
      %s243 = ssub.s32 32, 32
      %244 = vsyncadd [#allocation5], %s243
      %s246 = sshll.u32 [#allocation4], 4
      %s247 = int_to_ptr.vmem [resolvable:$true] %s246
      %249 = dma.vmem_to_hbm [thread:$0]  %s247, 32, %s7, [#allocation5]
    $region33: #{vae_forward.13} parent=1 // pred_fallthru
      _
    // Predicated region
    $region34: #{vae_forward.13} parent=1 // pred_check
      _
    $region35: #{vae_forward.13} parent=1 // pred_check_branch
      %251 = sbr.rel (0) target = $region37
    $region36: #{vae_forward.13} parent=1 // pred_region
      _
    $region37: #{vae_forward.13} parent=1 // pred_fallthru
      _
    // Predicated region
    $region38: #{vae_forward.13} parent=1 // pred_check
      _
    $region39: #{vae_forward.13} parent=1 // pred_check_branch
      %253 = sbr.rel (0) target = $region41
    $region40: #{vae_forward.13} parent=1 // pred_region
      %254 = dma.done [#allocation3], 32
    $region41: #{vae_forward.13} parent=1 // pred_fallthru
      _
    // Predicated region
    $region42: #{vae_forward.13} parent=1 // pred_check
      _
    $region43: #{vae_forward.13} parent=1 // pred_check_branch
      %256 = sbr.rel (0) target = $region45
    $region44: #{vae_forward.13} parent=1 // pred_region
      %257 = dma.done [#allocation5], 32
    $region45: #{vae_forward.13} parent=1 // pred_fallthru
      _
    // Predicated region
    $region46: #{vae_forward.13} parent=1 // pred_check
      _
    $region47: #{vae_forward.13} parent=1 // pred_check_branch
      %259 = sbr.rel (0) target = $region49
    $region48: #{vae_forward.13} parent=1 // pred_region
      _
    $region49: #{vae_forward.13} parent=1 // pred_fallthru
      _
    %260 = vsyncpa [#allocation3], 1
    %261 = vsyncpa [#allocation5], 1

// kernel: vae_forward.14
$region0: #{vae_forward.14}
  #allocation0 [shape = 'u32[]', space=smem, size = 0x4, offset = 0x4, fixed_abs, tag = 'smem constant byte address 0x4 - core index']
  #allocation1 [shape = 'u32[144,128]{1,0:T(1,128)}', space=vmem, size = 0x12000, scoped, tag = 'internal scratch']
  %s0 = inlined_call_operand.vmem [shape: bf16[16,32], index: 0, kind: input, shape index: {}]
  %s1 = inlined_call_operand.vmem [shape: bf16[32,4608], index: 1, kind: input, shape index: {}]
  %s2 = inlined_call_operand.vmem [shape: f32[1,4608], index: 2, kind: input, shape index: {}]
  %s3 = inlined_call_operand.vmem [shape: f32[16,4608], index: 3, kind: output, shape index: {}]
  %s4 = sld [smem:[#allocation0]]
  $region22: #{vae_forward.14} parent=0
    _
  %s6 = ssub.s32 1, %s4
  %s7 = scalar_select 0, %s6, %s4
  // Predicated region
  $region2: #{vae_forward.14} parent=0 // pred_check
    _
  $region3: #{vae_forward.14} parent=0 // pred_check_branch
    %9 = sbr.rel (0) target = $region5
  $region4: #{vae_forward.14} parent=0 // pred_region
    _
  $region5: #{vae_forward.14} parent=0 // pred_fallthru
    _
  // Predicated region
  $region6: #{vae_forward.14} parent=0 // pred_check
    _
  $region7: #{vae_forward.14} parent=0 // pred_check_branch
    %11 = sbr.rel (0) target = $region9
  $region8: #{vae_forward.14} parent=0 // pred_region
    _
  $region9: #{vae_forward.14} parent=0 // pred_fallthru
    _
  // Predicated region
  $region10: #{vae_forward.14} parent=0 // pred_check
    _
  $region11: #{vae_forward.14} parent=0 // pred_check_branch
    %13 = sbr.rel (0) target = $region13
  $region12: #{vae_forward.14} parent=0 // pred_region
    _
  $region13: #{vae_forward.14} parent=0 // pred_fallthru
    _
  %v15 = vld [vmem:[%s0] sm:$0xf]
  %v16 = vld [vmem:[%s0 + $0x4] sm:$0xf]
  %v17 = vld [vmem:[%s1] sm:$0xff]
  %v18 = vld [vmem:[%s1 + $0x8] sm:$0xff]
  %v19 = vld [vmem:[%s1 + $0x10] sm:$0xff]
  %v20 = vld [vmem:[%s1 + $0x18] sm:$0xff]
  %v21 = vld [vmem:[%s1 + $0x20] sm:$0xff]
  %v22 = vld [vmem:[%s1 + $0x28] sm:$0xff]
  %v23 = vld [vmem:[%s1 + $0x30] sm:$0xff]
  %v24 = vld [vmem:[%s1 + $0x38] sm:$0xff]
  %v25 = vld [vmem:[%s1 + $0x40] sm:$0xff]
  %v26 = vld [vmem:[%s1 + $0x48] sm:$0xff]
  %v27 = vld [vmem:[%s1 + $0x50] sm:$0xff]
  %v28 = vld [vmem:[%s1 + $0x58] sm:$0xff]
  %v29 = vld [vmem:[%s1 + $0x60] sm:$0xff]
  %v30 = vld [vmem:[%s1 + $0x68] sm:$0xff]
  %v31 = vld [vmem:[%s1 + $0x70] sm:$0xff]
  %v32 = vld [vmem:[%s1 + $0x78] sm:$0xff]
  %v33 = vld [vmem:[%s1 + $0x80] sm:$0xff]
  %v34 = vld [vmem:[%s1 + $0x88] sm:$0xff]
  %v35 = vld [vmem:[%s1 + $0x90] sm:$0xff]
  %v36 = vld [vmem:[%s1 + $0x98] sm:$0xff]
  %v37 = vld [vmem:[%s1 + $0xa0] sm:$0xff]
  %v38 = vld [vmem:[%s1 + $0xa8] sm:$0xff]
  %v39 = vld [vmem:[%s1 + $0xb0] sm:$0xff]
  %v40 = vld [vmem:[%s1 + $0xb8] sm:$0xff]
  %v41 = vld [vmem:[%s1 + $0xc0] sm:$0xff]
  %v42 = vld [vmem:[%s1 + $0xc8] sm:$0xff]
  %v43 = vld [vmem:[%s1 + $0xd0] sm:$0xff]
  %v44 = vld [vmem:[%s1 + $0xd8] sm:$0xff]
  %v45 = vld [vmem:[%s1 + $0xe0] sm:$0xff]
  %v46 = vld [vmem:[%s1 + $0xe8] sm:$0xff]
  %v47 = vld [vmem:[%s1 + $0xf0] sm:$0xff]
  %v48 = vld [vmem:[%s1 + $0xf8] sm:$0xff]
  %v49 = vld [vmem:[%s1 + $0x100] sm:$0xff]
  %v50 = vld [vmem:[%s1 + $0x108] sm:$0xff]
  %v51 = vld [vmem:[%s1 + $0x110] sm:$0xff]
  %v52 = vld [vmem:[%s1 + $0x118] sm:$0xff]
  %v53 = vld [vmem:[%s1 + $0x120] sm:$0xff]
  %v54 = vld [vmem:[%s1 + $0x128] sm:$0xff]
  %v55 = vld [vmem:[%s1 + $0x130] sm:$0xff]
  %v56 = vld [vmem:[%s1 + $0x138] sm:$0xff]
  %v57 = vld [vmem:[%s1 + $0x140] sm:$0xff]
  %v58 = vld [vmem:[%s1 + $0x148] sm:$0xff]
  %v59 = vld [vmem:[%s1 + $0x150] sm:$0xff]
  %v60 = vld [vmem:[%s1 + $0x158] sm:$0xff]
  %v61 = vld [vmem:[%s1 + $0x160] sm:$0xff]
  %v62 = vld [vmem:[%s1 + $0x168] sm:$0xff]
  %v63 = vld [vmem:[%s1 + $0x170] sm:$0xff]
  %v64 = vld [vmem:[%s1 + $0x178] sm:$0xff]
  %v65 = vld [vmem:[%s1 + $0x180] sm:$0xff]
  %v66 = vld [vmem:[%s1 + $0x188] sm:$0xff]
  %v67 = vld [vmem:[%s1 + $0x190] sm:$0xff]
  %v68 = vld [vmem:[%s1 + $0x198] sm:$0xff]
  %v69 = vld [vmem:[%s1 + $0x1a0] sm:$0xff]
  %v70 = vld [vmem:[%s1 + $0x1a8] sm:$0xff]
  %v71 = vld [vmem:[%s1 + $0x1b0] sm:$0xff]
  %v72 = vld [vmem:[%s1 + $0x1b8] sm:$0xff]
  %v73 = vld [vmem:[%s1 + $0x1c0] sm:$0xff]
  %v74 = vld [vmem:[%s1 + $0x1c8] sm:$0xff]
  %v75 = vld [vmem:[%s1 + $0x1d0] sm:$0xff]
  %v76 = vld [vmem:[%s1 + $0x1d8] sm:$0xff]
  %v77 = vld [vmem:[%s1 + $0x1e0] sm:$0xff]
  %v78 = vld [vmem:[%s1 + $0x1e8] sm:$0xff]
  %v79 = vld [vmem:[%s1 + $0x1f0] sm:$0xff]
  %v80 = vld [vmem:[%s1 + $0x1f8] sm:$0xff]
  %v81 = vld [vmem:[%s1 + $0x200] sm:$0xff]
  %v82 = vld [vmem:[%s1 + $0x208] sm:$0xff]
  %v83 = vld [vmem:[%s1 + $0x210] sm:$0xff]
  %v84 = vld [vmem:[%s1 + $0x218] sm:$0xff]
  %v85 = vld [vmem:[%s1 + $0x220] sm:$0xff]
  %v86 = vld [vmem:[%s1 + $0x228] sm:$0xff]
  %v87 = vld [vmem:[%s1 + $0x230] sm:$0xff]
  %v88 = vld [vmem:[%s1 + $0x238] sm:$0xff]
  %v89 = vld [vmem:[%s2] sm:$0xff]
  %v90 = vld [vmem:[%s2 + $0x8] sm:$0xff]
  %v91 = vld [vmem:[%s2 + $0x10] sm:$0xff]
  %v92 = vld [vmem:[%s2 + $0x18] sm:$0xff]
  %v93 = vld [vmem:[%s2 + $0x20] sm:$0xf]
  %v99 = vlaneseq
  %v100 = vshrl.u32 %v99, 7
  %v101 = vsub.s32 0, %v100
  %v102 = vrot.slane %v89, %v101
  %v103 = vlaneseq
  %v104 = vshrl.u32 %v103, 7
  %v105 = vsub.s32 1, %v104
  %v106 = vrot.slane %v89, %v105
  %v107 = vlaneseq
  %v108 = vshrl.u32 %v107, 7
  %v109 = vsub.s32 2, %v108
  %v110 = vrot.slane %v89, %v109
  %v111 = vlaneseq
  %v112 = vshrl.u32 %v111, 7
  %v113 = vsub.s32 3, %v112
  %v114 = vrot.slane %v89, %v113
  %v115 = vlaneseq
  %v116 = vshrl.u32 %v115, 7
  %v117 = vsub.s32 4, %v116
  %v118 = vrot.slane %v89, %v117
  %v119 = vlaneseq
  %v120 = vshrl.u32 %v119, 7
  %v121 = vsub.s32 5, %v120
  %v122 = vrot.slane %v89, %v121
  %v123 = vlaneseq
  %v124 = vshrl.u32 %v123, 7
  %v125 = vsub.s32 6, %v124
  %v126 = vrot.slane %v89, %v125
  %v127 = vlaneseq
  %v128 = vshrl.u32 %v127, 7
  %v129 = vsub.s32 7, %v128
  %v130 = vrot.slane %v89, %v129
  %v131 = vlaneseq
  %v132 = vshrl.u32 %v131, 7
  %v133 = vsub.s32 0, %v132
  %v134 = vrot.slane %v90, %v133
  %v135 = vlaneseq
  %v136 = vshrl.u32 %v135, 7
  %v137 = vsub.s32 1, %v136
  %v138 = vrot.slane %v90, %v137
  %v139 = vlaneseq
  %v140 = vshrl.u32 %v139, 7
  %v141 = vsub.s32 2, %v140
  %v142 = vrot.slane %v90, %v141
  %v143 = vlaneseq
  %v144 = vshrl.u32 %v143, 7
  %v145 = vsub.s32 3, %v144
  %v146 = vrot.slane %v90, %v145
  %v147 = vlaneseq
  %v148 = vshrl.u32 %v147, 7
  %v149 = vsub.s32 4, %v148
  %v150 = vrot.slane %v90, %v149
  %v151 = vlaneseq
  %v152 = vshrl.u32 %v151, 7
  %v153 = vsub.s32 5, %v152
  %v154 = vrot.slane %v90, %v153
  %v155 = vlaneseq
  %v156 = vshrl.u32 %v155, 7
  %v157 = vsub.s32 6, %v156
  %v158 = vrot.slane %v90, %v157
  %v159 = vlaneseq
  %v160 = vshrl.u32 %v159, 7
  %v161 = vsub.s32 7, %v160
  %v162 = vrot.slane %v90, %v161
  %v163 = vlaneseq
  %v164 = vshrl.u32 %v163, 7
  %v165 = vsub.s32 0, %v164
  %v166 = vrot.slane %v91, %v165
  %v167 = vlaneseq
  %v168 = vshrl.u32 %v167, 7
  %v169 = vsub.s32 1, %v168
  %v170 = vrot.slane %v91, %v169
  %v171 = vlaneseq
  %v172 = vshrl.u32 %v171, 7
  %v173 = vsub.s32 2, %v172
  %v174 = vrot.slane %v91, %v173
  %v175 = vlaneseq
  %v176 = vshrl.u32 %v175, 7
  %v177 = vsub.s32 3, %v176
  %v178 = vrot.slane %v91, %v177
  %v179 = vlaneseq
  %v180 = vshrl.u32 %v179, 7
  %v181 = vsub.s32 4, %v180
  %v182 = vrot.slane %v91, %v181
  %v183 = vlaneseq
  %v184 = vshrl.u32 %v183, 7
  %v185 = vsub.s32 5, %v184
  %v186 = vrot.slane %v91, %v185
  %v187 = vlaneseq
  %v188 = vshrl.u32 %v187, 7
  %v189 = vsub.s32 6, %v188
  %v190 = vrot.slane %v91, %v189
  %v191 = vlaneseq
  %v192 = vshrl.u32 %v191, 7
  %v193 = vsub.s32 7, %v192
  %v194 = vrot.slane %v91, %v193
  %v195 = vlaneseq
  %v196 = vshrl.u32 %v195, 7
  %v197 = vsub.s32 0, %v196
  %v198 = vrot.slane %v92, %v197
  %v199 = vlaneseq
  %v200 = vshrl.u32 %v199, 7
  %v201 = vsub.s32 1, %v200
  %v202 = vrot.slane %v92, %v201
  %v203 = vlaneseq
  %v204 = vshrl.u32 %v203, 7
  %v205 = vsub.s32 2, %v204
  %v206 = vrot.slane %v92, %v205
  %v207 = vlaneseq
  %v208 = vshrl.u32 %v207, 7
  %v209 = vsub.s32 3, %v208
  %v210 = vrot.slane %v92, %v209
  %v211 = vlaneseq
  %v212 = vshrl.u32 %v211, 7
  %v213 = vsub.s32 4, %v212
  %v214 = vrot.slane %v92, %v213
  %v215 = vlaneseq
  %v216 = vshrl.u32 %v215, 7
  %v217 = vsub.s32 5, %v216
  %v218 = vrot.slane %v92, %v217
  %v219 = vlaneseq
  %v220 = vshrl.u32 %v219, 7
  %v221 = vsub.s32 6, %v220
  %v222 = vrot.slane %v92, %v221
  %v223 = vlaneseq
  %v224 = vshrl.u32 %v223, 7
  %v225 = vsub.s32 7, %v224
  %v226 = vrot.slane %v92, %v225
  %v227 = vlaneseq
  %v228 = vshrl.u32 %v227, 7
  %v229 = vsub.s32 0, %v228
  %v230 = vrot.slane %v93, %v229
  %v231 = vlaneseq
  %v232 = vshrl.u32 %v231, 7
  %v233 = vsub.s32 1, %v232
  %v234 = vrot.slane %v93, %v233
  %v235 = vlaneseq
  %v236 = vshrl.u32 %v235, 7
  %v237 = vsub.s32 2, %v236
  %v238 = vrot.slane %v93, %v237
  %v239 = vlaneseq
  %v240 = vshrl.u32 %v239, 7
  %v241 = vsub.s32 3, %v240
  %v242 = vrot.slane %v93, %v241
  %v281 = vunpack.c.l.b16 %v15
  %v282 = vunpack.c.l.b16 %v16
  %v283 = vpack.c.b16 %v282, %v281
  %v356 = vunpack.c.l.b16 %v17
  %v357 = vunpack.c.h.b16 %v17
  %v358 = vunpack.c.l.b16 %v18
  %v359 = vunpack.c.h.b16 %v18
  %v360 = vunpack.c.l.b16 %v19
  %v361 = vunpack.c.h.b16 %v19
  %v362 = vunpack.c.l.b16 %v20
  %v363 = vunpack.c.h.b16 %v20
  %v364 = vunpack.c.l.b16 %v21
  %v365 = vunpack.c.h.b16 %v21
  %v366 = vunpack.c.l.b16 %v22
  %v367 = vunpack.c.h.b16 %v22
  %v368 = vunpack.c.l.b16 %v23
  %v369 = vunpack.c.h.b16 %v23
  %v370 = vunpack.c.l.b16 %v24
  %v371 = vunpack.c.h.b16 %v24
  %v372 = vunpack.c.l.b16 %v25
  %v373 = vunpack.c.h.b16 %v25
  %v374 = vunpack.c.l.b16 %v26
  %v375 = vunpack.c.h.b16 %v26
  %v376 = vunpack.c.l.b16 %v27
  %v377 = vunpack.c.h.b16 %v27
  %v378 = vunpack.c.l.b16 %v28
  %v379 = vunpack.c.h.b16 %v28
  %v380 = vunpack.c.l.b16 %v29
  %v381 = vunpack.c.h.b16 %v29
  %v382 = vunpack.c.l.b16 %v30
  %v383 = vunpack.c.h.b16 %v30
  %v384 = vunpack.c.l.b16 %v31
  %v385 = vunpack.c.h.b16 %v31
  %v386 = vunpack.c.l.b16 %v32
  %v387 = vunpack.c.h.b16 %v32
  %v388 = vunpack.c.l.b16 %v33
  %v389 = vunpack.c.h.b16 %v33
  %v390 = vunpack.c.l.b16 %v34
  %v391 = vunpack.c.h.b16 %v34
  %v392 = vunpack.c.l.b16 %v35
  %v393 = vunpack.c.h.b16 %v35
  %v394 = vunpack.c.l.b16 %v36
  %v395 = vunpack.c.h.b16 %v36
  %v396 = vunpack.c.l.b16 %v37
  %v397 = vunpack.c.h.b16 %v37
  %v398 = vunpack.c.l.b16 %v38
  %v399 = vunpack.c.h.b16 %v38
  %v400 = vunpack.c.l.b16 %v39
  %v401 = vunpack.c.h.b16 %v39
  %v402 = vunpack.c.l.b16 %v40
  %v403 = vunpack.c.h.b16 %v40
  %v404 = vunpack.c.l.b16 %v41
  %v405 = vunpack.c.h.b16 %v41
  %v406 = vunpack.c.l.b16 %v42
  %v407 = vunpack.c.h.b16 %v42
  %v408 = vunpack.c.l.b16 %v43
  %v409 = vunpack.c.h.b16 %v43
  %v410 = vunpack.c.l.b16 %v44
  %v411 = vunpack.c.h.b16 %v44
  %v412 = vunpack.c.l.b16 %v45
  %v413 = vunpack.c.h.b16 %v45
  %v414 = vunpack.c.l.b16 %v46
  %v415 = vunpack.c.h.b16 %v46
  %v416 = vunpack.c.l.b16 %v47
  %v417 = vunpack.c.h.b16 %v47
  %v418 = vunpack.c.l.b16 %v48
  %v419 = vunpack.c.h.b16 %v48
  %v420 = vunpack.c.l.b16 %v49
  %v421 = vunpack.c.h.b16 %v49
  %v422 = vunpack.c.l.b16 %v50
  %v423 = vunpack.c.h.b16 %v50
  %v424 = vunpack.c.l.b16 %v51
  %v425 = vunpack.c.h.b16 %v51
  %v426 = vunpack.c.l.b16 %v52
  %v427 = vunpack.c.h.b16 %v52
  %v428 = vunpack.c.l.b16 %v53
  %v429 = vunpack.c.h.b16 %v53
  %v430 = vunpack.c.l.b16 %v54
  %v431 = vunpack.c.h.b16 %v54
  %v432 = vunpack.c.l.b16 %v55
  %v433 = vunpack.c.h.b16 %v55
  %v434 = vunpack.c.l.b16 %v56
  %v435 = vunpack.c.h.b16 %v56
  %v436 = vunpack.c.l.b16 %v57
  %v437 = vunpack.c.h.b16 %v57
  %v438 = vunpack.c.l.b16 %v58
  %v439 = vunpack.c.h.b16 %v58
  %v440 = vunpack.c.l.b16 %v59
  %v441 = vunpack.c.h.b16 %v59
  %v442 = vunpack.c.l.b16 %v60
  %v443 = vunpack.c.h.b16 %v60
  %v444 = vunpack.c.l.b16 %v61
  %v445 = vunpack.c.h.b16 %v61
  %v446 = vunpack.c.l.b16 %v62
  %v447 = vunpack.c.h.b16 %v62
  %v448 = vunpack.c.l.b16 %v63
  %v449 = vunpack.c.h.b16 %v63
  %v450 = vunpack.c.l.b16 %v64
  %v451 = vunpack.c.h.b16 %v64
  %v452 = vunpack.c.l.b16 %v65
  %v453 = vunpack.c.h.b16 %v65
  %v454 = vunpack.c.l.b16 %v66
  %v455 = vunpack.c.h.b16 %v66
  %v456 = vunpack.c.l.b16 %v67
  %v457 = vunpack.c.h.b16 %v67
  %v458 = vunpack.c.l.b16 %v68
  %v459 = vunpack.c.h.b16 %v68
  %v460 = vunpack.c.l.b16 %v69
  %v461 = vunpack.c.h.b16 %v69
  %v462 = vunpack.c.l.b16 %v70
  %v463 = vunpack.c.h.b16 %v70
  %v464 = vunpack.c.l.b16 %v71
  %v465 = vunpack.c.h.b16 %v71
  %v466 = vunpack.c.l.b16 %v72
  %v467 = vunpack.c.h.b16 %v72
  %v468 = vunpack.c.l.b16 %v73
  %v469 = vunpack.c.h.b16 %v73
  %v470 = vunpack.c.l.b16 %v74
  %v471 = vunpack.c.h.b16 %v74
  %v472 = vunpack.c.l.b16 %v75
  %v473 = vunpack.c.h.b16 %v75
  %v474 = vunpack.c.l.b16 %v76
  %v475 = vunpack.c.h.b16 %v76
  %v476 = vunpack.c.l.b16 %v77
  %v477 = vunpack.c.h.b16 %v77
  %v478 = vunpack.c.l.b16 %v78
  %v479 = vunpack.c.h.b16 %v78
  %v480 = vunpack.c.l.b16 %v79
  %v481 = vunpack.c.h.b16 %v79
  %v482 = vunpack.c.l.b16 %v80
  %v483 = vunpack.c.h.b16 %v80
  %v484 = vunpack.c.l.b16 %v81
  %v485 = vunpack.c.h.b16 %v81
  %v486 = vunpack.c.l.b16 %v82
  %v487 = vunpack.c.h.b16 %v82
  %v488 = vunpack.c.l.b16 %v83
  %v489 = vunpack.c.h.b16 %v83
  %v490 = vunpack.c.l.b16 %v84
  %v491 = vunpack.c.h.b16 %v84
  %v492 = vunpack.c.l.b16 %v85
  %v493 = vunpack.c.h.b16 %v85
  %v494 = vunpack.c.l.b16 %v86
  %v495 = vunpack.c.h.b16 %v86
  %v496 = vunpack.c.l.b16 %v87
  %v497 = vunpack.c.h.b16 %v87
  %v498 = vunpack.c.l.b16 %v88
  %v499 = vunpack.c.h.b16 %v88
  %v500 = vpack.c.b16 %v392, %v356
  %v501 = vpack.c.b16 %v393, %v357
  %v502 = vpack.c.b16 %v394, %v358
  %v503 = vpack.c.b16 %v395, %v359
  %v504 = vpack.c.b16 %v396, %v360
  %v505 = vpack.c.b16 %v397, %v361
  %v506 = vpack.c.b16 %v398, %v362
  %v507 = vpack.c.b16 %v399, %v363
  %v508 = vpack.c.b16 %v400, %v364
  %v509 = vpack.c.b16 %v401, %v365
  %v510 = vpack.c.b16 %v402, %v366
  %v511 = vpack.c.b16 %v403, %v367
  %v512 = vpack.c.b16 %v404, %v368
  %v513 = vpack.c.b16 %v405, %v369
  %v514 = vpack.c.b16 %v406, %v370
  %v515 = vpack.c.b16 %v407, %v371
  %v516 = vpack.c.b16 %v408, %v372
  %v517 = vpack.c.b16 %v409, %v373
  %v518 = vpack.c.b16 %v410, %v374
  %v519 = vpack.c.b16 %v411, %v375
  %v520 = vpack.c.b16 %v412, %v376
  %v521 = vpack.c.b16 %v413, %v377
  %v522 = vpack.c.b16 %v414, %v378
  %v523 = vpack.c.b16 %v415, %v379
  %v524 = vpack.c.b16 %v416, %v380
  %v525 = vpack.c.b16 %v417, %v381
  %v526 = vpack.c.b16 %v418, %v382
  %v527 = vpack.c.b16 %v419, %v383
  %v528 = vpack.c.b16 %v420, %v384
  %v529 = vpack.c.b16 %v421, %v385
  %v530 = vpack.c.b16 %v422, %v386
  %v531 = vpack.c.b16 %v423, %v387
  %v532 = vpack.c.b16 %v424, %v388
  %v533 = vpack.c.b16 %v425, %v389
  %v534 = vpack.c.b16 %v426, %v390
  %v535 = vpack.c.b16 %v427, %v391
  %v536 = vpack.c.b16 %v464, %v428
  %v537 = vpack.c.b16 %v465, %v429
  %v538 = vpack.c.b16 %v466, %v430
  %v539 = vpack.c.b16 %v467, %v431
  %v540 = vpack.c.b16 %v468, %v432
  %v541 = vpack.c.b16 %v469, %v433
  %v542 = vpack.c.b16 %v470, %v434
  %v543 = vpack.c.b16 %v471, %v435
  %v544 = vpack.c.b16 %v472, %v436
  %v545 = vpack.c.b16 %v473, %v437
  %v546 = vpack.c.b16 %v474, %v438
  %v547 = vpack.c.b16 %v475, %v439
  %v548 = vpack.c.b16 %v476, %v440
  %v549 = vpack.c.b16 %v477, %v441
  %v550 = vpack.c.b16 %v478, %v442
  %v551 = vpack.c.b16 %v479, %v443
  %v552 = vpack.c.b16 %v480, %v444
  %v553 = vpack.c.b16 %v481, %v445
  %v554 = vpack.c.b16 %v482, %v446
  %v555 = vpack.c.b16 %v483, %v447
  %v556 = vpack.c.b16 %v484, %v448
  %v557 = vpack.c.b16 %v485, %v449
  %v558 = vpack.c.b16 %v486, %v450
  %v559 = vpack.c.b16 %v487, %v451
  %v560 = vpack.c.b16 %v488, %v452
  %v561 = vpack.c.b16 %v489, %v453
  %v562 = vpack.c.b16 %v490, %v454
  %v563 = vpack.c.b16 %v491, %v455
  %v564 = vpack.c.b16 %v492, %v456
  %v565 = vpack.c.b16 %v493, %v457
  %v566 = vpack.c.b16 %v494, %v458
  %v567 = vpack.c.b16 %v495, %v459
  %v568 = vpack.c.b16 %v496, %v460
  %v569 = vpack.c.b16 %v497, %v461
  %v570 = vpack.c.b16 %v498, %v462
  %v571 = vpack.c.b16 %v499, %v463
  %vm644 = vcmask 261120
  %v646 = vsel %vm644, %v283, 0
  %648 = vmatprep.subr.bf16.mxu0 %v501
  %649 = vmatpush1.bf16.msra.mxu0 %v500
  %650 = vmatprep.subr.bf16.mxu0 %v537
  %651 = vmatpush1.bf16.msra.mxu0 %v536
  %652 = vmatprep.subr.bf16.mxu0 0
  %653 = vmatpush1.bf16.msra.mxu0 0
  %654 = vmatprep.subr.bf16.mxu0 0
  %655 = vmatpush1.bf16.msra.mxu0 0
  %656 = vmatprep.subr.bf16.mxu0 0
  %657 = vmatpush1.bf16.msra.mxu0 0
  %658 = vmatprep.subr.bf16.mxu0 0
  %659 = vmatpush1.bf16.msra.mxu0 0
  %660 = vmatprep.subr.bf16.mxu0 0
  %661 = vmatpush1.bf16.msra.mxu0 0
  %662 = vmatprep.subr.bf16.mxu0 0
  %663 = vmatpush1.bf16.msra.mxu0 0
  %664 = vmatprep.subr.bf16.mxu0 0
  %665 = vmatpush1.bf16.msra.mxu0 0
  %666 = vmatprep.subr.bf16.mxu0 0
  %667 = vmatpush1.bf16.msra.mxu0 0
  %668 = vmatprep.subr.bf16.mxu0 0
  %669 = vmatpush1.bf16.msra.mxu0 0
  %670 = vmatprep.subr.bf16.mxu0 0
  %671 = vmatpush1.bf16.msra.mxu0 0
  %672 = vmatprep.subr.bf16.mxu0 0
  %673 = vmatpush1.bf16.msra.mxu0 0
  %674 = vmatprep.subr.bf16.mxu0 0
  %675 = vmatpush1.bf16.msra.mxu0 0
  %676 = vmatprep.subr.bf16.mxu0 0
  %677 = vmatpush1.bf16.msra.mxu0 0
  %678 = vmatprep.subr.bf16.mxu0 0
  %679 = vmatpush1.bf16.msra.mxu0 0
  %680 = vmatprep.mubr.bf16.mxu0 0
  %681 = vmatmul.mubr.bf16.gmra.mrb[0].mxu0 %v646
  %v682 = vpop.f32.mrb[0].mxu0
  %v683 = vadd.f32 %v102, %v682
  %v684 = vpop.f32.mrb[0].mxu0
  %v685 = vadd.f32 %v106, %v684
  %v686 = vpop.f32.mrb[0].mxu0
  %v687 = vadd.f32 %v102, %v686
  %v688 = vpop.f32.mrb[0].mxu0
  %v689 = vadd.f32 %v106, %v688
  %690 = vdwg.mxu0
  %691 = vmatprep.subr.bf16.mxu0 %v503
  %692 = vmatpush1.bf16.msra.mxu0 %v502
  %693 = vmatprep.subr.bf16.mxu0 %v539
  %694 = vmatpush1.bf16.msra.mxu0 %v538
  %695 = vmatprep.subr.bf16.mxu0 0
  %696 = vmatpush1.bf16.msra.mxu0 0
  %697 = vmatprep.subr.bf16.mxu0 0
  %698 = vmatpush1.bf16.msra.mxu0 0
  %699 = vmatprep.subr.bf16.mxu0 0
  %700 = vmatpush1.bf16.msra.mxu0 0
  %701 = vmatprep.subr.bf16.mxu0 0
  %702 = vmatpush1.bf16.msra.mxu0 0
  %703 = vmatprep.subr.bf16.mxu0 0
  %704 = vmatpush1.bf16.msra.mxu0 0
  %705 = vmatprep.subr.bf16.mxu0 0
  %706 = vmatpush1.bf16.msra.mxu0 0
  %707 = vmatprep.subr.bf16.mxu0 0
  %708 = vmatpush1.bf16.msra.mxu0 0
  %709 = vmatprep.subr.bf16.mxu0 0
  %710 = vmatpush1.bf16.msra.mxu0 0
  %711 = vmatprep.subr.bf16.mxu0 0
  %712 = vmatpush1.bf16.msra.mxu0 0
  %713 = vmatprep.subr.bf16.mxu0 0
  %714 = vmatpush1.bf16.msra.mxu0 0
  %715 = vmatprep.subr.bf16.mxu0 0
  %716 = vmatpush1.bf16.msra.mxu0 0
  %717 = vmatprep.subr.bf16.mxu0 0
  %718 = vmatpush1.bf16.msra.mxu0 0
  %719 = vmatprep.subr.bf16.mxu0 0
  %720 = vmatpush1.bf16.msra.mxu0 0
  %721 = vmatprep.subr.bf16.mxu0 0
  %722 = vmatpush1.bf16.msra.mxu0 0
  %723 = vmatprep.mubr.bf16.mxu0 0
  %724 = vmatmul.mubr.bf16.gmra.mrb[0].mxu0 %v646
  %v725 = vpop.f32.mrb[0].mxu0
  %v726 = vadd.f32 %v110, %v725
  %v727 = vpop.f32.mrb[0].mxu0
  %v728 = vadd.f32 %v114, %v727
  %v729 = vpop.f32.mrb[0].mxu0
  %v730 = vadd.f32 %v110, %v729
  %v731 = vpop.f32.mrb[0].mxu0
  %v732 = vadd.f32 %v114, %v731
  %733 = vdwg.mxu0
  %734 = vmatprep.subr.bf16.mxu0 %v505
  %735 = vmatpush1.bf16.msra.mxu0 %v504
  %736 = vmatprep.subr.bf16.mxu0 %v541
  %737 = vmatpush1.bf16.msra.mxu0 %v540
  %738 = vmatprep.subr.bf16.mxu0 0
  %739 = vmatpush1.bf16.msra.mxu0 0
  %740 = vmatprep.subr.bf16.mxu0 0
  %741 = vmatpush1.bf16.msra.mxu0 0
  %742 = vmatprep.subr.bf16.mxu0 0
  %743 = vmatpush1.bf16.msra.mxu0 0
  %744 = vmatprep.subr.bf16.mxu0 0
  %745 = vmatpush1.bf16.msra.mxu0 0
  %746 = vmatprep.subr.bf16.mxu0 0
  %747 = vmatpush1.bf16.msra.mxu0 0
  %748 = vmatprep.subr.bf16.mxu0 0
  %749 = vmatpush1.bf16.msra.mxu0 0
  %750 = vmatprep.subr.bf16.mxu0 0
  %751 = vmatpush1.bf16.msra.mxu0 0
  %752 = vmatprep.subr.bf16.mxu0 0
  %753 = vmatpush1.bf16.msra.mxu0 0
  %754 = vmatprep.subr.bf16.mxu0 0
  %755 = vmatpush1.bf16.msra.mxu0 0
  %756 = vmatprep.subr.bf16.mxu0 0
  %757 = vmatpush1.bf16.msra.mxu0 0
  %758 = vmatprep.subr.bf16.mxu0 0
  %759 = vmatpush1.bf16.msra.mxu0 0
  %760 = vmatprep.subr.bf16.mxu0 0
  %761 = vmatpush1.bf16.msra.mxu0 0
  %762 = vmatprep.subr.bf16.mxu0 0
  %763 = vmatpush1.bf16.msra.mxu0 0
  %764 = vmatprep.subr.bf16.mxu0 0
  %765 = vmatpush1.bf16.msra.mxu0 0
  %766 = vmatprep.mubr.bf16.mxu0 0
  %767 = vmatmul.mubr.bf16.gmra.mrb[0].mxu0 %v646
  %v768 = vpop.f32.mrb[0].mxu0
  %v769 = vadd.f32 %v118, %v768
  %v770 = vpop.f32.mrb[0].mxu0
  %v771 = vadd.f32 %v122, %v770
  %v772 = vpop.f32.mrb[0].mxu0
  %v773 = vadd.f32 %v118, %v772
  %v774 = vpop.f32.mrb[0].mxu0
  %v775 = vadd.f32 %v122, %v774
  %776 = vdwg.mxu0
  %777 = vmatprep.subr.bf16.mxu0 %v507
  %778 = vmatpush1.bf16.msra.mxu0 %v506
  %779 = vmatprep.subr.bf16.mxu0 %v543
  %780 = vmatpush1.bf16.msra.mxu0 %v542
  %781 = vmatprep.subr.bf16.mxu0 0
  %782 = vmatpush1.bf16.msra.mxu0 0
  %783 = vmatprep.subr.bf16.mxu0 0
  %784 = vmatpush1.bf16.msra.mxu0 0
  %785 = vmatprep.subr.bf16.mxu0 0
  %786 = vmatpush1.bf16.msra.mxu0 0
  %787 = vmatprep.subr.bf16.mxu0 0
  %788 = vmatpush1.bf16.msra.mxu0 0
  %789 = vmatprep.subr.bf16.mxu0 0
  %790 = vmatpush1.bf16.msra.mxu0 0
  %791 = vmatprep.subr.bf16.mxu0 0
  %792 = vmatpush1.bf16.msra.mxu0 0
  %793 = vmatprep.subr.bf16.mxu0 0
  %794 = vmatpush1.bf16.msra.mxu0 0
  %795 = vmatprep.subr.bf16.mxu0 0
  %796 = vmatpush1.bf16.msra.mxu0 0
  %797 = vmatprep.subr.bf16.mxu0 0
  %798 = vmatpush1.bf16.msra.mxu0 0
  %799 = vmatprep.subr.bf16.mxu0 0
  %800 = vmatpush1.bf16.msra.mxu0 0
  %801 = vmatprep.subr.bf16.mxu0 0
  %802 = vmatpush1.bf16.msra.mxu0 0
  %803 = vmatprep.subr.bf16.mxu0 0
  %804 = vmatpush1.bf16.msra.mxu0 0
  %805 = vmatprep.subr.bf16.mxu0 0
  %806 = vmatpush1.bf16.msra.mxu0 0
  %807 = vmatprep.subr.bf16.mxu0 0
  %808 = vmatpush1.bf16.msra.mxu0 0
  %809 = vmatprep.mubr.bf16.mxu0 0
  %810 = vmatmul.mubr.bf16.gmra.mrb[0].mxu0 %v646
  %v811 = vpop.f32.mrb[0].mxu0
  %v812 = vadd.f32 %v126, %v811
  %v813 = vpop.f32.mrb[0].mxu0
  %v814 = vadd.f32 %v130, %v813
  %v815 = vpop.f32.mrb[0].mxu0
  %v816 = vadd.f32 %v126, %v815
  %v817 = vpop.f32.mrb[0].mxu0
  %v818 = vadd.f32 %v130, %v817
  %819 = vdwg.mxu0
  %820 = vmatprep.subr.bf16.mxu0 %v509
  %821 = vmatpush1.bf16.msra.mxu0 %v508
  %822 = vmatprep.subr.bf16.mxu0 %v545
  %823 = vmatpush1.bf16.msra.mxu0 %v544
  %824 = vmatprep.subr.bf16.mxu0 0
  %825 = vmatpush1.bf16.msra.mxu0 0
  %826 = vmatprep.subr.bf16.mxu0 0
  %827 = vmatpush1.bf16.msra.mxu0 0
  %828 = vmatprep.subr.bf16.mxu0 0
  %829 = vmatpush1.bf16.msra.mxu0 0
  %830 = vmatprep.subr.bf16.mxu0 0
  %831 = vmatpush1.bf16.msra.mxu0 0
  %832 = vmatprep.subr.bf16.mxu0 0
  %833 = vmatpush1.bf16.msra.mxu0 0
  %834 = vmatprep.subr.bf16.mxu0 0
  %835 = vmatpush1.bf16.msra.mxu0 0
  %836 = vmatprep.subr.bf16.mxu0 0
  %837 = vmatpush1.bf16.msra.mxu0 0
  %838 = vmatprep.subr.bf16.mxu0 0
  %839 = vmatpush1.bf16.msra.mxu0 0
  %840 = vmatprep.subr.bf16.mxu0 0
  %841 = vmatpush1.bf16.msra.mxu0 0
  %842 = vmatprep.subr.bf16.mxu0 0
  %843 = vmatpush1.bf16.msra.mxu0 0
  %844 = vmatprep.subr.bf16.mxu0 0
  %845 = vmatpush1.bf16.msra.mxu0 0
  %846 = vmatprep.subr.bf16.mxu0 0
  %847 = vmatpush1.bf16.msra.mxu0 0
  %848 = vmatprep.subr.bf16.mxu0 0
  %849 = vmatpush1.bf16.msra.mxu0 0
  %850 = vmatprep.subr.bf16.mxu0 0
  %851 = vmatpush1.bf16.msra.mxu0 0
  %852 = vmatprep.mubr.bf16.mxu0 0
  %853 = vmatmul.mubr.bf16.gmra.mrb[0].mxu0 %v646
  %v854 = vpop.f32.mrb[0].mxu0
  %v855 = vadd.f32 %v134, %v854
  %v856 = vpop.f32.mrb[0].mxu0
  %v857 = vadd.f32 %v138, %v856
  %v858 = vpop.f32.mrb[0].mxu0
  %v859 = vadd.f32 %v134, %v858
  %v860 = vpop.f32.mrb[0].mxu0
  %v861 = vadd.f32 %v138, %v860
  %862 = vdwg.mxu0
  %863 = vmatprep.subr.bf16.mxu0 %v511
  %864 = vmatpush1.bf16.msra.mxu0 %v510
  %865 = vmatprep.subr.bf16.mxu0 %v547
  %866 = vmatpush1.bf16.msra.mxu0 %v546
  %867 = vmatprep.subr.bf16.mxu0 0
  %868 = vmatpush1.bf16.msra.mxu0 0
  %869 = vmatprep.subr.bf16.mxu0 0
  %870 = vmatpush1.bf16.msra.mxu0 0
  %871 = vmatprep.subr.bf16.mxu0 0
  %872 = vmatpush1.bf16.msra.mxu0 0
  %873 = vmatprep.subr.bf16.mxu0 0
  %874 = vmatpush1.bf16.msra.mxu0 0
  %875 = vmatprep.subr.bf16.mxu0 0
  %876 = vmatpush1.bf16.msra.mxu0 0
  %877 = vmatprep.subr.bf16.mxu0 0
  %878 = vmatpush1.bf16.msra.mxu0 0
  %879 = vmatprep.subr.bf16.mxu0 0
  %880 = vmatpush1.bf16.msra.mxu0 0
  %881 = vmatprep.subr.bf16.mxu0 0
  %882 = vmatpush1.bf16.msra.mxu0 0
  %883 = vmatprep.subr.bf16.mxu0 0
  %884 = vmatpush1.bf16.msra.mxu0 0
  %885 = vmatprep.subr.bf16.mxu0 0
  %886 = vmatpush1.bf16.msra.mxu0 0
  %887 = vmatprep.subr.bf16.mxu0 0
  %888 = vmatpush1.bf16.msra.mxu0 0
  %889 = vmatprep.subr.bf16.mxu0 0
  %890 = vmatpush1.bf16.msra.mxu0 0
  %891 = vmatprep.subr.bf16.mxu0 0
  %892 = vmatpush1.bf16.msra.mxu0 0
  %893 = vmatprep.subr.bf16.mxu0 0
  %894 = vmatpush1.bf16.msra.mxu0 0
  %895 = vmatprep.mubr.bf16.mxu0 0
  %896 = vmatmul.mubr.bf16.gmra.mrb[0].mxu0 %v646
  %v897 = vpop.f32.mrb[0].mxu0
  %v898 = vadd.f32 %v142, %v897
  %v899 = vpop.f32.mrb[0].mxu0
  %v900 = vadd.f32 %v146, %v899
  %v901 = vpop.f32.mrb[0].mxu0
  %v902 = vadd.f32 %v142, %v901
  %v903 = vpop.f32.mrb[0].mxu0
  %v904 = vadd.f32 %v146, %v903
  %905 = vdwg.mxu0
  %906 = vmatprep.subr.bf16.mxu0 %v513
  %907 = vmatpush1.bf16.msra.mxu0 %v512
  %908 = vmatprep.subr.bf16.mxu0 %v549
  %909 = vmatpush1.bf16.msra.mxu0 %v548
  %910 = vmatprep.subr.bf16.mxu0 0
  %911 = vmatpush1.bf16.msra.mxu0 0
  %912 = vmatprep.subr.bf16.mxu0 0
  %913 = vmatpush1.bf16.msra.mxu0 0
  %914 = vmatprep.subr.bf16.mxu0 0
  %915 = vmatpush1.bf16.msra.mxu0 0
  %916 = vmatprep.subr.bf16.mxu0 0
  %917 = vmatpush1.bf16.msra.mxu0 0
  %918 = vmatprep.subr.bf16.mxu0 0
  %919 = vmatpush1.bf16.msra.mxu0 0
  %920 = vmatprep.subr.bf16.mxu0 0
  %921 = vmatpush1.bf16.msra.mxu0 0
  %922 = vmatprep.subr.bf16.mxu0 0
  %923 = vmatpush1.bf16.msra.mxu0 0
  %924 = vmatprep.subr.bf16.mxu0 0
  %925 = vmatpush1.bf16.msra.mxu0 0
  %926 = vmatprep.subr.bf16.mxu0 0
  %927 = vmatpush1.bf16.msra.mxu0 0
  %928 = vmatprep.subr.bf16.mxu0 0
  %929 = vmatpush1.bf16.msra.mxu0 0
  %930 = vmatprep.subr.bf16.mxu0 0
  %931 = vmatpush1.bf16.msra.mxu0 0
  %932 = vmatprep.subr.bf16.mxu0 0
  %933 = vmatpush1.bf16.msra.mxu0 0
  %934 = vmatprep.subr.bf16.mxu0 0
  %935 = vmatpush1.bf16.msra.mxu0 0
  %936 = vmatprep.subr.bf16.mxu0 0
  %937 = vmatpush1.bf16.msra.mxu0 0
  %938 = vmatprep.mubr.bf16.mxu0 0
  %939 = vmatmul.mubr.bf16.gmra.mrb[0].mxu0 %v646
  %v940 = vpop.f32.mrb[0].mxu0
  %v941 = vadd.f32 %v150, %v940
  %v942 = vpop.f32.mrb[0].mxu0
  %v943 = vadd.f32 %v154, %v942
  %v944 = vpop.f32.mrb[0].mxu0
  %v945 = vadd.f32 %v150, %v944
  %v946 = vpop.f32.mrb[0].mxu0
  %v947 = vadd.f32 %v154, %v946
  %948 = vdwg.mxu0
  %949 = vmatprep.subr.bf16.mxu0 %v515
  %950 = vmatpush1.bf16.msra.mxu0 %v514
  %951 = vmatprep.subr.bf16.mxu0 %v551
  %952 = vmatpush1.bf16.msra.mxu0 %v550
  %953 = vmatprep.subr.bf16.mxu0 0
  %954 = vmatpush1.bf16.msra.mxu0 0
  %955 = vmatprep.subr.bf16.mxu0 0
  %956 = vmatpush1.bf16.msra.mxu0 0
  %957 = vmatprep.subr.bf16.mxu0 0
  %958 = vmatpush1.bf16.msra.mxu0 0
  %959 = vmatprep.subr.bf16.mxu0 0
  %960 = vmatpush1.bf16.msra.mxu0 0
  %961 = vmatprep.subr.bf16.mxu0 0
  %962 = vmatpush1.bf16.msra.mxu0 0
  %963 = vmatprep.subr.bf16.mxu0 0
  %964 = vmatpush1.bf16.msra.mxu0 0
  %965 = vmatprep.subr.bf16.mxu0 0
  %966 = vmatpush1.bf16.msra.mxu0 0
  %967 = vmatprep.subr.bf16.mxu0 0
  %968 = vmatpush1.bf16.msra.mxu0 0
  %969 = vmatprep.subr.bf16.mxu0 0
  %970 = vmatpush1.bf16.msra.mxu0 0
  %971 = vmatprep.subr.bf16.mxu0 0
  %972 = vmatpush1.bf16.msra.mxu0 0
  %973 = vmatprep.subr.bf16.mxu0 0
  %974 = vmatpush1.bf16.msra.mxu0 0
  %975 = vmatprep.subr.bf16.mxu0 0
  %976 = vmatpush1.bf16.msra.mxu0 0
  %977 = vmatprep.subr.bf16.mxu0 0
  %978 = vmatpush1.bf16.msra.mxu0 0
  %979 = vmatprep.subr.bf16.mxu0 0
  %980 = vmatpush1.bf16.msra.mxu0 0
  %981 = vmatprep.mubr.bf16.mxu0 0
  %982 = vmatmul.mubr.bf16.gmra.mrb[0].mxu0 %v646
  %v983 = vpop.f32.mrb[0].mxu0
  %v984 = vadd.f32 %v158, %v983
  %v985 = vpop.f32.mrb[0].mxu0
  %v986 = vadd.f32 %v162, %v985
  %v987 = vpop.f32.mrb[0].mxu0
  %v988 = vadd.f32 %v158, %v987
  %v989 = vpop.f32.mrb[0].mxu0
  %v990 = vadd.f32 %v162, %v989
  %991 = vdwg.mxu0
  %992 = vmatprep.subr.bf16.mxu0 %v517
  %993 = vmatpush1.bf16.msra.mxu0 %v516
  %994 = vmatprep.subr.bf16.mxu0 %v553
  %995 = vmatpush1.bf16.msra.mxu0 %v552
  %996 = vmatprep.subr.bf16.mxu0 0
  %997 = vmatpush1.bf16.msra.mxu0 0
  %998 = vmatprep.subr.bf16.mxu0 0
  %999 = vmatpush1.bf16.msra.mxu0 0
  %1000 = vmatprep.subr.bf16.mxu0 0
  %1001 = vmatpush1.bf16.msra.mxu0 0
  %1002 = vmatprep.subr.bf16.mxu0 0
  %1003 = vmatpush1.bf16.msra.mxu0 0
  %1004 = vmatprep.subr.bf16.mxu0 0
  %1005 = vmatpush1.bf16.msra.mxu0 0
  %1006 = vmatprep.subr.bf16.mxu0 0
  %1007 = vmatpush1.bf16.msra.mxu0 0
  %1008 = vmatprep.subr.bf16.mxu0 0
  %1009 = vmatpush1.bf16.msra.mxu0 0
  %1010 = vmatprep.subr.bf16.mxu0 0
  %1011 = vmatpush1.bf16.msra.mxu0 0
  %1012 = vmatprep.subr.bf16.mxu0 0
  %1013 = vmatpush1.bf16.msra.mxu0 0
  %1014 = vmatprep.subr.bf16.mxu0 0
  %1015 = vmatpush1.bf16.msra.mxu0 0
  %1016 = vmatprep.subr.bf16.mxu0 0
  %1017 = vmatpush1.bf16.msra.mxu0 0
  %1018 = vmatprep.subr.bf16.mxu0 0
  %1019 = vmatpush1.bf16.msra.mxu0 0
  %1020 = vmatprep.subr.bf16.mxu0 0
  %1021 = vmatpush1.bf16.msra.mxu0 0
  %1022 = vmatprep.subr.bf16.mxu0 0
  %1023 = vmatpush1.bf16.msra.mxu0 0
  %1024 = vmatprep.mubr.bf16.mxu0 0
  %1025 = vmatmul.mubr.bf16.gmra.mrb[0].mxu0 %v646
  %v1026 = vpop.f32.mrb[0].mxu0
  %v1027 = vadd.f32 %v166, %v1026
  %v1028 = vpop.f32.mrb[0].mxu0
  %v1029 = vadd.f32 %v170, %v1028
  %v1030 = vpop.f32.mrb[0].mxu0
  %v1031 = vadd.f32 %v166, %v1030
  %v1032 = vpop.f32.mrb[0].mxu0
  %v1033 = vadd.f32 %v170, %v1032
  %1034 = vdwg.mxu0
  %1035 = vmatprep.subr.bf16.mxu0 %v519
  %1036 = vmatpush1.bf16.msra.mxu0 %v518
  %1037 = vmatprep.subr.bf16.mxu0 %v555
  %1038 = vmatpush1.bf16.msra.mxu0 %v554
  %1039 = vmatprep.subr.bf16.mxu0 0
  %1040 = vmatpush1.bf16.msra.mxu0 0
  %1041 = vmatprep.subr.bf16.mxu0 0
  %1042 = vmatpush1.bf16.msra.mxu0 0
  %1043 = vmatprep.subr.bf16.mxu0 0
  %1044 = vmatpush1.bf16.msra.mxu0 0
  %1045 = vmatprep.subr.bf16.mxu0 0
  %1046 = vmatpush1.bf16.msra.mxu0 0
  %1047 = vmatprep.subr.bf16.mxu0 0
  %1048 = vmatpush1.bf16.msra.mxu0 0
  %1049 = vmatprep.subr.bf16.mxu0 0
  %1050 = vmatpush1.bf16.msra.mxu0 0
  %1051 = vmatprep.subr.bf16.mxu0 0
  %1052 = vmatpush1.bf16.msra.mxu0 0
  %1053 = vmatprep.subr.bf16.mxu0 0
  %1054 = vmatpush1.bf16.msra.mxu0 0
  %1055 = vmatprep.subr.bf16.mxu0 0
  %1056 = vmatpush1.bf16.msra.mxu0 0
  %1057 = vmatprep.subr.bf16.mxu0 0
  %1058 = vmatpush1.bf16.msra.mxu0 0
  %1059 = vmatprep.subr.bf16.mxu0 0
  %1060 = vmatpush1.bf16.msra.mxu0 0
  %1061 = vmatprep.subr.bf16.mxu0 0
  %1062 = vmatpush1.bf16.msra.mxu0 0
  %1063 = vmatprep.subr.bf16.mxu0 0
  %1064 = vmatpush1.bf16.msra.mxu0 0
  %1065 = vmatprep.subr.bf16.mxu0 0
  %1066 = vmatpush1.bf16.msra.mxu0 0
  %1067 = vmatprep.mubr.bf16.mxu0 0
  %1068 = vmatmul.mubr.bf16.gmra.mrb[0].mxu0 %v646
  %v1069 = vpop.f32.mrb[0].mxu0
  %v1070 = vadd.f32 %v174, %v1069
  %v1071 = vpop.f32.mrb[0].mxu0
  %v1072 = vadd.f32 %v178, %v1071
  %v1073 = vpop.f32.mrb[0].mxu0
  %v1074 = vadd.f32 %v174, %v1073
  %v1075 = vpop.f32.mrb[0].mxu0
  %v1076 = vadd.f32 %v178, %v1075
  %1077 = vdwg.mxu0
  %1078 = vmatprep.subr.bf16.mxu0 %v521
  %1079 = vmatpush1.bf16.msra.mxu0 %v520
  %1080 = vmatprep.subr.bf16.mxu0 %v557
  %1081 = vmatpush1.bf16.msra.mxu0 %v556
  %1082 = vmatprep.subr.bf16.mxu0 0
  %1083 = vmatpush1.bf16.msra.mxu0 0
  %1084 = vmatprep.subr.bf16.mxu0 0
  %1085 = vmatpush1.bf16.msra.mxu0 0
  %1086 = vmatprep.subr.bf16.mxu0 0
  %1087 = vmatpush1.bf16.msra.mxu0 0
  %1088 = vmatprep.subr.bf16.mxu0 0
  %1089 = vmatpush1.bf16.msra.mxu0 0
  %1090 = vmatprep.subr.bf16.mxu0 0
  %1091 = vmatpush1.bf16.msra.mxu0 0
  %1092 = vmatprep.subr.bf16.mxu0 0
  %1093 = vmatpush1.bf16.msra.mxu0 0
  %1094 = vmatprep.subr.bf16.mxu0 0
  %1095 = vmatpush1.bf16.msra.mxu0 0
  %1096 = vmatprep.subr.bf16.mxu0 0
  %1097 = vmatpush1.bf16.msra.mxu0 0
  %1098 = vmatprep.subr.bf16.mxu0 0
  %1099 = vmatpush1.bf16.msra.mxu0 0
  %1100 = vmatprep.subr.bf16.mxu0 0
  %1101 = vmatpush1.bf16.msra.mxu0 0
  %1102 = vmatprep.subr.bf16.mxu0 0
  %1103 = vmatpush1.bf16.msra.mxu0 0
  %1104 = vmatprep.subr.bf16.mxu0 0
  %1105 = vmatpush1.bf16.msra.mxu0 0
  %1106 = vmatprep.subr.bf16.mxu0 0
  %1107 = vmatpush1.bf16.msra.mxu0 0
  %1108 = vmatprep.subr.bf16.mxu0 0
  %1109 = vmatpush1.bf16.msra.mxu0 0
  %1110 = vmatprep.mubr.bf16.mxu0 0
  %1111 = vmatmul.mubr.bf16.gmra.mrb[0].mxu0 %v646
  %v1112 = vpop.f32.mrb[0].mxu0
  %v1113 = vadd.f32 %v182, %v1112
  %v1114 = vpop.f32.mrb[0].mxu0
  %v1115 = vadd.f32 %v186, %v1114
  %v1116 = vpop.f32.mrb[0].mxu0
  %v1117 = vadd.f32 %v182, %v1116
  %v1118 = vpop.f32.mrb[0].mxu0
  %v1119 = vadd.f32 %v186, %v1118
  %1120 = vdwg.mxu0
  %1121 = vmatprep.subr.bf16.mxu0 %v523
  %1122 = vmatpush1.bf16.msra.mxu0 %v522
  %1123 = vmatprep.subr.bf16.mxu0 %v559
  %1124 = vmatpush1.bf16.msra.mxu0 %v558
  %1125 = vmatprep.subr.bf16.mxu0 0
  %1126 = vmatpush1.bf16.msra.mxu0 0
  %1127 = vmatprep.subr.bf16.mxu0 0
  %1128 = vmatpush1.bf16.msra.mxu0 0
  %1129 = vmatprep.subr.bf16.mxu0 0
  %1130 = vmatpush1.bf16.msra.mxu0 0
  %1131 = vmatprep.subr.bf16.mxu0 0
  %1132 = vmatpush1.bf16.msra.mxu0 0
  %1133 = vmatprep.subr.bf16.mxu0 0
  %1134 = vmatpush1.bf16.msra.mxu0 0
  %1135 = vmatprep.subr.bf16.mxu0 0
  %1136 = vmatpush1.bf16.msra.mxu0 0
  %1137 = vmatprep.subr.bf16.mxu0 0
  %1138 = vmatpush1.bf16.msra.mxu0 0
  %1139 = vmatprep.subr.bf16.mxu0 0
  %1140 = vmatpush1.bf16.msra.mxu0 0
  %1141 = vmatprep.subr.bf16.mxu0 0
  %1142 = vmatpush1.bf16.msra.mxu0 0
  %1143 = vmatprep.subr.bf16.mxu0 0
  %1144 = vmatpush1.bf16.msra.mxu0 0
  %1145 = vmatprep.subr.bf16.mxu0 0
  %1146 = vmatpush1.bf16.msra.mxu0 0
  %1147 = vmatprep.subr.bf16.mxu0 0
  %1148 = vmatpush1.bf16.msra.mxu0 0
  %1149 = vmatprep.subr.bf16.mxu0 0
  %1150 = vmatpush1.bf16.msra.mxu0 0
  %1151 = vmatprep.subr.bf16.mxu0 0
  %1152 = vmatpush1.bf16.msra.mxu0 0
  %1153 = vmatprep.mubr.bf16.mxu0 0
  %1154 = vmatmul.mubr.bf16.gmra.mrb[0].mxu0 %v646
  %v1155 = vpop.f32.mrb[0].mxu0
  %v1156 = vadd.f32 %v190, %v1155
  %v1157 = vpop.f32.mrb[0].mxu0
  %v1158 = vadd.f32 %v194, %v1157
  %v1159 = vpop.f32.mrb[0].mxu0
  %v1160 = vadd.f32 %v190, %v1159
  %v1161 = vpop.f32.mrb[0].mxu0
  %v1162 = vadd.f32 %v194, %v1161
  %1163 = vdwg.mxu0
  %1164 = vmatprep.subr.bf16.mxu0 %v525
  %1165 = vmatpush1.bf16.msra.mxu0 %v524
  %1166 = vmatprep.subr.bf16.mxu0 %v561
  %1167 = vmatpush1.bf16.msra.mxu0 %v560
  %1168 = vmatprep.subr.bf16.mxu0 0
  %1169 = vmatpush1.bf16.msra.mxu0 0
  %1170 = vmatprep.subr.bf16.mxu0 0
  %1171 = vmatpush1.bf16.msra.mxu0 0
  %1172 = vmatprep.subr.bf16.mxu0 0
  %1173 = vmatpush1.bf16.msra.mxu0 0
  %1174 = vmatprep.subr.bf16.mxu0 0
  %1175 = vmatpush1.bf16.msra.mxu0 0
  %1176 = vmatprep.subr.bf16.mxu0 0
  %1177 = vmatpush1.bf16.msra.mxu0 0
  %1178 = vmatprep.subr.bf16.mxu0 0
  %1179 = vmatpush1.bf16.msra.mxu0 0
  %1180 = vmatprep.subr.bf16.mxu0 0
  %1181 = vmatpush1.bf16.msra.mxu0 0
  %1182 = vmatprep.subr.bf16.mxu0 0
  %1183 = vmatpush1.bf16.msra.mxu0 0
  %1184 = vmatprep.subr.bf16.mxu0 0
  %1185 = vmatpush1.bf16.msra.mxu0 0
  %1186 = vmatprep.subr.bf16.mxu0 0
  %1187 = vmatpush1.bf16.msra.mxu0 0
  %1188 = vmatprep.subr.bf16.mxu0 0
  %1189 = vmatpush1.bf16.msra.mxu0 0
  %1190 = vmatprep.subr.bf16.mxu0 0
  %1191 = vmatpush1.bf16.msra.mxu0 0
  %1192 = vmatprep.subr.bf16.mxu0 0
  %1193 = vmatpush1.bf16.msra.mxu0 0
  %1194 = vmatprep.subr.bf16.mxu0 0
  %1195 = vmatpush1.bf16.msra.mxu0 0
  %1196 = vmatprep.mubr.bf16.mxu0 0
  %1197 = vmatmul.mubr.bf16.gmra.mrb[0].mxu0 %v646
  %v1198 = vpop.f32.mrb[0].mxu0
  %v1199 = vadd.f32 %v198, %v1198
  %v1200 = vpop.f32.mrb[0].mxu0
  %v1201 = vadd.f32 %v202, %v1200
  %v1202 = vpop.f32.mrb[0].mxu0
  %v1203 = vadd.f32 %v198, %v1202
  %v1204 = vpop.f32.mrb[0].mxu0
  %v1205 = vadd.f32 %v202, %v1204
  %1206 = vdwg.mxu0
  %1207 = vmatprep.subr.bf16.mxu0 %v527
  %1208 = vmatpush1.bf16.msra.mxu0 %v526
  %1209 = vmatprep.subr.bf16.mxu0 %v563
  %1210 = vmatpush1.bf16.msra.mxu0 %v562
  %1211 = vmatprep.subr.bf16.mxu0 0
  %1212 = vmatpush1.bf16.msra.mxu0 0
  %1213 = vmatprep.subr.bf16.mxu0 0
  %1214 = vmatpush1.bf16.msra.mxu0 0
  %1215 = vmatprep.subr.bf16.mxu0 0
  %1216 = vmatpush1.bf16.msra.mxu0 0
  %1217 = vmatprep.subr.bf16.mxu0 0
  %1218 = vmatpush1.bf16.msra.mxu0 0
  %1219 = vmatprep.subr.bf16.mxu0 0
  %1220 = vmatpush1.bf16.msra.mxu0 0
  %1221 = vmatprep.subr.bf16.mxu0 0
  %1222 = vmatpush1.bf16.msra.mxu0 0
  %1223 = vmatprep.subr.bf16.mxu0 0
  %1224 = vmatpush1.bf16.msra.mxu0 0
  %1225 = vmatprep.subr.bf16.mxu0 0
  %1226 = vmatpush1.bf16.msra.mxu0 0
  %1227 = vmatprep.subr.bf16.mxu0 0
  %1228 = vmatpush1.bf16.msra.mxu0 0
  %1229 = vmatprep.subr.bf16.mxu0 0
  %1230 = vmatpush1.bf16.msra.mxu0 0
  %1231 = vmatprep.subr.bf16.mxu0 0
  %1232 = vmatpush1.bf16.msra.mxu0 0
  %1233 = vmatprep.subr.bf16.mxu0 0
  %1234 = vmatpush1.bf16.msra.mxu0 0
  %1235 = vmatprep.subr.bf16.mxu0 0
  %1236 = vmatpush1.bf16.msra.mxu0 0
  %1237 = vmatprep.subr.bf16.mxu0 0
  %1238 = vmatpush1.bf16.msra.mxu0 0
  %1239 = vmatprep.mubr.bf16.mxu0 0
  %1240 = vmatmul.mubr.bf16.gmra.mrb[0].mxu0 %v646
  %v1241 = vpop.f32.mrb[0].mxu0
  %v1242 = vadd.f32 %v206, %v1241
  %v1243 = vpop.f32.mrb[0].mxu0
  %v1244 = vadd.f32 %v210, %v1243
  %v1245 = vpop.f32.mrb[0].mxu0
  %v1246 = vadd.f32 %v206, %v1245
  %v1247 = vpop.f32.mrb[0].mxu0
  %v1248 = vadd.f32 %v210, %v1247
  %1249 = vdwg.mxu0
  %1250 = vmatprep.subr.bf16.mxu0 %v529
  %1251 = vmatpush1.bf16.msra.mxu0 %v528
  %1252 = vmatprep.subr.bf16.mxu0 %v565
  %1253 = vmatpush1.bf16.msra.mxu0 %v564
  %1254 = vmatprep.subr.bf16.mxu0 0
  %1255 = vmatpush1.bf16.msra.mxu0 0
  %1256 = vmatprep.subr.bf16.mxu0 0
  %1257 = vmatpush1.bf16.msra.mxu0 0
  %1258 = vmatprep.subr.bf16.mxu0 0
  %1259 = vmatpush1.bf16.msra.mxu0 0
  %1260 = vmatprep.subr.bf16.mxu0 0
  %1261 = vmatpush1.bf16.msra.mxu0 0
  %1262 = vmatprep.subr.bf16.mxu0 0
  %1263 = vmatpush1.bf16.msra.mxu0 0
  %1264 = vmatprep.subr.bf16.mxu0 0
  %1265 = vmatpush1.bf16.msra.mxu0 0
  %1266 = vmatprep.subr.bf16.mxu0 0
  %1267 = vmatpush1.bf16.msra.mxu0 0
  %1268 = vmatprep.subr.bf16.mxu0 0
  %1269 = vmatpush1.bf16.msra.mxu0 0
  %1270 = vmatprep.subr.bf16.mxu0 0
  %1271 = vmatpush1.bf16.msra.mxu0 0
  %1272 = vmatprep.subr.bf16.mxu0 0
  %1273 = vmatpush1.bf16.msra.mxu0 0
  %1274 = vmatprep.subr.bf16.mxu0 0
  %1275 = vmatpush1.bf16.msra.mxu0 0
  %1276 = vmatprep.subr.bf16.mxu0 0
  %1277 = vmatpush1.bf16.msra.mxu0 0
  %1278 = vmatprep.subr.bf16.mxu0 0
  %1279 = vmatpush1.bf16.msra.mxu0 0
  %1280 = vmatprep.subr.bf16.mxu0 0
  %1281 = vmatpush1.bf16.msra.mxu0 0
  %1282 = vmatprep.mubr.bf16.mxu0 0
  %1283 = vmatmul.mubr.bf16.gmra.mrb[0].mxu0 %v646
  %v1284 = vpop.f32.mrb[0].mxu0
  %v1285 = vadd.f32 %v214, %v1284
  %v1286 = vpop.f32.mrb[0].mxu0
  %v1287 = vadd.f32 %v218, %v1286
  %v1288 = vpop.f32.mrb[0].mxu0
  %v1289 = vadd.f32 %v214, %v1288
  %v1290 = vpop.f32.mrb[0].mxu0
  %v1291 = vadd.f32 %v218, %v1290
  %1292 = vdwg.mxu0
  %1293 = vmatprep.subr.bf16.mxu0 %v531
  %1294 = vmatpush1.bf16.msra.mxu0 %v530
  %1295 = vmatprep.subr.bf16.mxu0 %v567
  %1296 = vmatpush1.bf16.msra.mxu0 %v566
  %1297 = vmatprep.subr.bf16.mxu0 0
  %1298 = vmatpush1.bf16.msra.mxu0 0
  %1299 = vmatprep.subr.bf16.mxu0 0
  %1300 = vmatpush1.bf16.msra.mxu0 0
  %1301 = vmatprep.subr.bf16.mxu0 0
  %1302 = vmatpush1.bf16.msra.mxu0 0
  %1303 = vmatprep.subr.bf16.mxu0 0
  %1304 = vmatpush1.bf16.msra.mxu0 0
  %1305 = vmatprep.subr.bf16.mxu0 0
  %1306 = vmatpush1.bf16.msra.mxu0 0
  %1307 = vmatprep.subr.bf16.mxu0 0
  %1308 = vmatpush1.bf16.msra.mxu0 0
  %1309 = vmatprep.subr.bf16.mxu0 0
  %1310 = vmatpush1.bf16.msra.mxu0 0
  %1311 = vmatprep.subr.bf16.mxu0 0
  %1312 = vmatpush1.bf16.msra.mxu0 0
  %1313 = vmatprep.subr.bf16.mxu0 0
  %1314 = vmatpush1.bf16.msra.mxu0 0
  %1315 = vmatprep.subr.bf16.mxu0 0
  %1316 = vmatpush1.bf16.msra.mxu0 0
  %1317 = vmatprep.subr.bf16.mxu0 0
  %1318 = vmatpush1.bf16.msra.mxu0 0
  %1319 = vmatprep.subr.bf16.mxu0 0
  %1320 = vmatpush1.bf16.msra.mxu0 0
  %1321 = vmatprep.subr.bf16.mxu0 0
  %1322 = vmatpush1.bf16.msra.mxu0 0
  %1323 = vmatprep.subr.bf16.mxu0 0
  %1324 = vmatpush1.bf16.msra.mxu0 0
  %1325 = vmatprep.mubr.bf16.mxu0 0
  %1326 = vmatmul.mubr.bf16.gmra.mrb[0].mxu0 %v646
  %v1327 = vpop.f32.mrb[0].mxu0
  %v1328 = vadd.f32 %v222, %v1327
  %v1329 = vpop.f32.mrb[0].mxu0
  %v1330 = vadd.f32 %v226, %v1329
  %v1331 = vpop.f32.mrb[0].mxu0
  %v1332 = vadd.f32 %v222, %v1331
  %v1333 = vpop.f32.mrb[0].mxu0
  %v1334 = vadd.f32 %v226, %v1333
  %1335 = vdwg.mxu0
  %1336 = vmatprep.subr.bf16.mxu0 %v533
  %1337 = vmatpush1.bf16.msra.mxu0 %v532
  %1338 = vmatprep.subr.bf16.mxu0 %v569
  %1339 = vmatpush1.bf16.msra.mxu0 %v568
  %1340 = vmatprep.subr.bf16.mxu0 0
  %1341 = vmatpush1.bf16.msra.mxu0 0
  %1342 = vmatprep.subr.bf16.mxu0 0
  %1343 = vmatpush1.bf16.msra.mxu0 0
  %1344 = vmatprep.subr.bf16.mxu0 0
  %1345 = vmatpush1.bf16.msra.mxu0 0
  %1346 = vmatprep.subr.bf16.mxu0 0
  %1347 = vmatpush1.bf16.msra.mxu0 0
  %1348 = vmatprep.subr.bf16.mxu0 0
  %1349 = vmatpush1.bf16.msra.mxu0 0
  %1350 = vmatprep.subr.bf16.mxu0 0
  %1351 = vmatpush1.bf16.msra.mxu0 0
  %1352 = vmatprep.subr.bf16.mxu0 0
  %1353 = vmatpush1.bf16.msra.mxu0 0
  %1354 = vmatprep.subr.bf16.mxu0 0
  %1355 = vmatpush1.bf16.msra.mxu0 0
  %1356 = vmatprep.subr.bf16.mxu0 0
  %1357 = vmatpush1.bf16.msra.mxu0 0
  %1358 = vmatprep.subr.bf16.mxu0 0
  %1359 = vmatpush1.bf16.msra.mxu0 0
  %1360 = vmatprep.subr.bf16.mxu0 0
  %1361 = vmatpush1.bf16.msra.mxu0 0
  %1362 = vmatprep.subr.bf16.mxu0 0
  %1363 = vmatpush1.bf16.msra.mxu0 0
  %1364 = vmatprep.subr.bf16.mxu0 0
  %1365 = vmatpush1.bf16.msra.mxu0 0
  %1366 = vmatprep.subr.bf16.mxu0 0
  %1367 = vmatpush1.bf16.msra.mxu0 0
  %1368 = vmatprep.mubr.bf16.mxu0 0
  %1369 = vmatmul.mubr.bf16.gmra.mrb[0].mxu0 %v646
  %v1370 = vpop.f32.mrb[0].mxu0
  %v1371 = vadd.f32 %v230, %v1370
  %v1372 = vpop.f32.mrb[0].mxu0
  %v1373 = vadd.f32 %v234, %v1372
  %v1374 = vpop.f32.mrb[0].mxu0
  %v1375 = vadd.f32 %v230, %v1374
  %v1376 = vpop.f32.mrb[0].mxu0
  %v1377 = vadd.f32 %v234, %v1376
  %1378 = vdwg.mxu0
  %1379 = vmatprep.subr.bf16.mxu0 %v535
  %1380 = vmatpush1.bf16.msra.mxu0 %v534
  %1381 = vmatprep.subr.bf16.mxu0 %v571
  %1382 = vmatpush1.bf16.msra.mxu0 %v570
  %1383 = vmatprep.subr.bf16.mxu0 0
  %1384 = vmatpush1.bf16.msra.mxu0 0
  %1385 = vmatprep.subr.bf16.mxu0 0
  %1386 = vmatpush1.bf16.msra.mxu0 0
  %1387 = vmatprep.subr.bf16.mxu0 0
  %1388 = vmatpush1.bf16.msra.mxu0 0
  %1389 = vmatprep.subr.bf16.mxu0 0
  %1390 = vmatpush1.bf16.msra.mxu0 0
  %1391 = vmatprep.subr.bf16.mxu0 0
  %1392 = vmatpush1.bf16.msra.mxu0 0
  %1393 = vmatprep.subr.bf16.mxu0 0
  %1394 = vmatpush1.bf16.msra.mxu0 0
  %1395 = vmatprep.subr.bf16.mxu0 0
  %1396 = vmatpush1.bf16.msra.mxu0 0
  %1397 = vmatprep.subr.bf16.mxu0 0
  %1398 = vmatpush1.bf16.msra.mxu0 0
  %1399 = vmatprep.subr.bf16.mxu0 0
  %1400 = vmatpush1.bf16.msra.mxu0 0
  %1401 = vmatprep.subr.bf16.mxu0 0
  %1402 = vmatpush1.bf16.msra.mxu0 0
  %1403 = vmatprep.subr.bf16.mxu0 0
  %1404 = vmatpush1.bf16.msra.mxu0 0
  %1405 = vmatprep.subr.bf16.mxu0 0
  %1406 = vmatpush1.bf16.msra.mxu0 0
  %1407 = vmatprep.subr.bf16.mxu0 0
  %1408 = vmatpush1.bf16.msra.mxu0 0
  %1409 = vmatprep.subr.bf16.mxu0 0
  %1410 = vmatpush1.bf16.msra.mxu0 0
  %1411 = vmatprep.mubr.bf16.mxu0 0
  %1412 = vmatmul.mubr.bf16.gmra.mrb[0].mxu0 %v646
  %v1413 = vpop.f32.mrb[0].mxu0
  %v1414 = vadd.f32 %v238, %v1413
  %v1415 = vpop.f32.mrb[0].mxu0
  %v1416 = vadd.f32 %v242, %v1415
  %v1417 = vpop.f32.mrb[0].mxu0
  %v1418 = vadd.f32 %v238, %v1417
  %v1419 = vpop.f32.mrb[0].mxu0
  %v1420 = vadd.f32 %v242, %v1419
  %1421 = vdwg.mxu0
  %vm1422 = vcmp.gt.f32.partialorder %v683, 0.0
  %vm1423 = vcmp.gt.f32.partialorder %v685, 0.0
  %vm1424 = vcmp.gt.f32.partialorder %v726, 0.0
  %vm1425 = vcmp.gt.f32.partialorder %v728, 0.0
  %vm1426 = vcmp.gt.f32.partialorder %v769, 0.0
  %vm1427 = vcmp.gt.f32.partialorder %v771, 0.0
  %vm1428 = vcmp.gt.f32.partialorder %v812, 0.0
  %vm1429 = vcmp.gt.f32.partialorder %v814, 0.0
  %vm1430 = vcmp.gt.f32.partialorder %v855, 0.0
  %vm1431 = vcmp.gt.f32.partialorder %v857, 0.0
  %vm1432 = vcmp.gt.f32.partialorder %v898, 0.0
  %vm1433 = vcmp.gt.f32.partialorder %v900, 0.0
  %vm1434 = vcmp.gt.f32.partialorder %v941, 0.0
  %vm1435 = vcmp.gt.f32.partialorder %v943, 0.0
  %vm1436 = vcmp.gt.f32.partialorder %v984, 0.0
  %vm1437 = vcmp.gt.f32.partialorder %v986, 0.0
  %vm1438 = vcmp.gt.f32.partialorder %v1027, 0.0
  %vm1439 = vcmp.gt.f32.partialorder %v1029, 0.0
  %vm1440 = vcmp.gt.f32.partialorder %v1070, 0.0
  %vm1441 = vcmp.gt.f32.partialorder %v1072, 0.0
  %vm1442 = vcmp.gt.f32.partialorder %v1113, 0.0
  %vm1443 = vcmp.gt.f32.partialorder %v1115, 0.0
  %vm1444 = vcmp.gt.f32.partialorder %v1156, 0.0
  %vm1445 = vcmp.gt.f32.partialorder %v1158, 0.0
  %vm1446 = vcmp.gt.f32.partialorder %v1199, 0.0
  %vm1447 = vcmp.gt.f32.partialorder %v1201, 0.0
  %vm1448 = vcmp.gt.f32.partialorder %v1242, 0.0
  %vm1449 = vcmp.gt.f32.partialorder %v1244, 0.0
  %vm1450 = vcmp.gt.f32.partialorder %v1285, 0.0
  %vm1451 = vcmp.gt.f32.partialorder %v1287, 0.0
  %vm1452 = vcmp.gt.f32.partialorder %v1328, 0.0
  %vm1453 = vcmp.gt.f32.partialorder %v1330, 0.0
  %vm1454 = vcmp.gt.f32.partialorder %v1371, 0.0
  %vm1455 = vcmp.gt.f32.partialorder %v1373, 0.0
  %vm1456 = vcmp.gt.f32.partialorder %v1414, 0.0
  %vm1457 = vcmp.gt.f32.partialorder %v1416, 0.0
  %vm1458 = vcmp.gt.f32.partialorder %v687, 0.0
  %vm1459 = vcmp.gt.f32.partialorder %v689, 0.0
  %vm1460 = vcmp.gt.f32.partialorder %v730, 0.0
  %vm1461 = vcmp.gt.f32.partialorder %v732, 0.0
  %vm1462 = vcmp.gt.f32.partialorder %v773, 0.0
  %vm1463 = vcmp.gt.f32.partialorder %v775, 0.0
  %vm1464 = vcmp.gt.f32.partialorder %v816, 0.0
  %vm1465 = vcmp.gt.f32.partialorder %v818, 0.0
  %vm1466 = vcmp.gt.f32.partialorder %v859, 0.0
  %vm1467 = vcmp.gt.f32.partialorder %v861, 0.0
  %vm1468 = vcmp.gt.f32.partialorder %v902, 0.0
  %vm1469 = vcmp.gt.f32.partialorder %v904, 0.0
  %vm1470 = vcmp.gt.f32.partialorder %v945, 0.0
  %vm1471 = vcmp.gt.f32.partialorder %v947, 0.0
  %vm1472 = vcmp.gt.f32.partialorder %v988, 0.0
  %vm1473 = vcmp.gt.f32.partialorder %v990, 0.0
  %vm1474 = vcmp.gt.f32.partialorder %v1031, 0.0
  %vm1475 = vcmp.gt.f32.partialorder %v1033, 0.0
  %vm1476 = vcmp.gt.f32.partialorder %v1074, 0.0
  %vm1477 = vcmp.gt.f32.partialorder %v1076, 0.0
  %vm1478 = vcmp.gt.f32.partialorder %v1117, 0.0
  %vm1479 = vcmp.gt.f32.partialorder %v1119, 0.0
  %vm1480 = vcmp.gt.f32.partialorder %v1160, 0.0
  %vm1481 = vcmp.gt.f32.partialorder %v1162, 0.0
  %vm1482 = vcmp.gt.f32.partialorder %v1203, 0.0
  %vm1483 = vcmp.gt.f32.partialorder %v1205, 0.0
  %vm1484 = vcmp.gt.f32.partialorder %v1246, 0.0
  %vm1485 = vcmp.gt.f32.partialorder %v1248, 0.0
  %vm1486 = vcmp.gt.f32.partialorder %v1289, 0.0
  %vm1487 = vcmp.gt.f32.partialorder %v1291, 0.0
  %vm1488 = vcmp.gt.f32.partialorder %v1332, 0.0
  %vm1489 = vcmp.gt.f32.partialorder %v1334, 0.0
  %vm1490 = vcmp.gt.f32.partialorder %v1375, 0.0
  %vm1491 = vcmp.gt.f32.partialorder %v1377, 0.0
  %vm1492 = vcmp.gt.f32.partialorder %v1418, 0.0
  %vm1493 = vcmp.gt.f32.partialorder %v1420, 0.0
  %v1494 = vmul.f32 %v683, 1.442695
  %v1495 = vpow.pop %v1494
  %v1496 = vmul.f32 %v685, 1.442695
  %v1497 = vpow.pop %v1496
  %v1498 = vmul.f32 %v726, 1.442695
  %v1499 = vpow.pop %v1498
  %v1500 = vmul.f32 %v728, 1.442695
  %v1501 = vpow.pop %v1500
  %v1502 = vmul.f32 %v769, 1.442695
  %v1503 = vpow.pop %v1502
  %v1504 = vmul.f32 %v771, 1.442695
  %v1505 = vpow.pop %v1504
  %v1506 = vmul.f32 %v812, 1.442695
  %v1507 = vpow.pop %v1506
  %v1508 = vmul.f32 %v814, 1.442695
  %v1509 = vpow.pop %v1508
  %v1510 = vmul.f32 %v855, 1.442695
  %v1511 = vpow.pop %v1510
  %v1512 = vmul.f32 %v857, 1.442695
  %v1513 = vpow.pop %v1512
  %v1514 = vmul.f32 %v898, 1.442695
  %v1515 = vpow.pop %v1514
  %v1516 = vmul.f32 %v900, 1.442695
  %v1517 = vpow.pop %v1516
  %v1518 = vmul.f32 %v941, 1.442695
  %v1519 = vpow.pop %v1518
  %v1520 = vmul.f32 %v943, 1.442695
  %v1521 = vpow.pop %v1520
  %v1522 = vmul.f32 %v984, 1.442695
  %v1523 = vpow.pop %v1522
  %v1524 = vmul.f32 %v986, 1.442695
  %v1525 = vpow.pop %v1524
  %v1526 = vmul.f32 %v1027, 1.442695
  %v1527 = vpow.pop %v1526
  %v1528 = vmul.f32 %v1029, 1.442695
  %v1529 = vpow.pop %v1528
  %v1530 = vmul.f32 %v1070, 1.442695
  %v1531 = vpow.pop %v1530
  %v1532 = vmul.f32 %v1072, 1.442695
  %v1533 = vpow.pop %v1532
  %v1534 = vmul.f32 %v1113, 1.442695
  %v1535 = vpow.pop %v1534
  %v1536 = vmul.f32 %v1115, 1.442695
  %v1537 = vpow.pop %v1536
  %v1538 = vmul.f32 %v1156, 1.442695
  %v1539 = vpow.pop %v1538
  %v1540 = vmul.f32 %v1158, 1.442695
  %v1541 = vpow.pop %v1540
  %v1542 = vmul.f32 %v1199, 1.442695
  %v1543 = vpow.pop %v1542
  %v1544 = vmul.f32 %v1201, 1.442695
  %v1545 = vpow.pop %v1544
  %v1546 = vmul.f32 %v1242, 1.442695
  %v1547 = vpow.pop %v1546
  %v1548 = vmul.f32 %v1244, 1.442695
  %v1549 = vpow.pop %v1548
  %v1550 = vmul.f32 %v1285, 1.442695
  %v1551 = vpow.pop %v1550
  %v1552 = vmul.f32 %v1287, 1.442695
  %v1553 = vpow.pop %v1552
  %v1554 = vmul.f32 %v1328, 1.442695
  %v1555 = vpow.pop %v1554
  %v1556 = vmul.f32 %v1330, 1.442695
  %v1557 = vpow.pop %v1556
  %v1558 = vmul.f32 %v1371, 1.442695
  %v1559 = vpow.pop %v1558
  %v1560 = vmul.f32 %v1373, 1.442695
  %v1561 = vpow.pop %v1560
  %v1562 = vmul.f32 %v1414, 1.442695
  %v1563 = vpow.pop %v1562
  %v1564 = vmul.f32 %v1416, 1.442695
  %v1565 = vpow.pop %v1564
  %v1566 = vmul.f32 %v687, 1.442695
  %v1567 = vpow.pop %v1566
  %v1568 = vmul.f32 %v689, 1.442695
  %v1569 = vpow.pop %v1568
  %v1570 = vmul.f32 %v730, 1.442695
  %v1571 = vpow.pop %v1570
  %v1572 = vmul.f32 %v732, 1.442695
  %v1573 = vpow.pop %v1572
  %v1574 = vmul.f32 %v773, 1.442695
  %v1575 = vpow.pop %v1574
  %v1576 = vmul.f32 %v775, 1.442695
  %v1577 = vpow.pop %v1576
  %v1578 = vmul.f32 %v816, 1.442695
  %v1579 = vpow.pop %v1578
  %v1580 = vmul.f32 %v818, 1.442695
  %v1581 = vpow.pop %v1580
  %v1582 = vmul.f32 %v859, 1.442695
  %v1583 = vpow.pop %v1582
  %v1584 = vmul.f32 %v861, 1.442695
  %v1585 = vpow.pop %v1584
  %v1586 = vmul.f32 %v902, 1.442695
  %v1587 = vpow.pop %v1586
  %v1588 = vmul.f32 %v904, 1.442695
  %v1589 = vpow.pop %v1588
  %v1590 = vmul.f32 %v945, 1.442695
  %v1591 = vpow.pop %v1590
  %v1592 = vmul.f32 %v947, 1.442695
  %v1593 = vpow.pop %v1592
  %v1594 = vmul.f32 %v988, 1.442695
  %v1595 = vpow.pop %v1594
  %v1596 = vmul.f32 %v990, 1.442695
  %v1597 = vpow.pop %v1596
  %v1598 = vmul.f32 %v1031, 1.442695
  %v1599 = vpow.pop %v1598
  %v1600 = vmul.f32 %v1033, 1.442695
  %v1601 = vpow.pop %v1600
  %v1602 = vmul.f32 %v1074, 1.442695
  %v1603 = vpow.pop %v1602
  %v1604 = vmul.f32 %v1076, 1.442695
  %v1605 = vpow.pop %v1604
  %v1606 = vmul.f32 %v1117, 1.442695
  %v1607 = vpow.pop %v1606
  %v1608 = vmul.f32 %v1119, 1.442695
  %v1609 = vpow.pop %v1608
  %v1610 = vmul.f32 %v1160, 1.442695
  %v1611 = vpow.pop %v1610
  %v1612 = vmul.f32 %v1162, 1.442695
  %v1613 = vpow.pop %v1612
  %v1614 = vmul.f32 %v1203, 1.442695
  %v1615 = vpow.pop %v1614
  %v1616 = vmul.f32 %v1205, 1.442695
  %v1617 = vpow.pop %v1616
  %v1618 = vmul.f32 %v1246, 1.442695
  %v1619 = vpow.pop %v1618
  %v1620 = vmul.f32 %v1248, 1.442695
  %v1621 = vpow.pop %v1620
  %v1622 = vmul.f32 %v1289, 1.442695
  %v1623 = vpow.pop %v1622
  %v1624 = vmul.f32 %v1291, 1.442695
  %v1625 = vpow.pop %v1624
  %v1626 = vmul.f32 %v1332, 1.442695
  %v1627 = vpow.pop %v1626
  %v1628 = vmul.f32 %v1334, 1.442695
  %v1629 = vpow.pop %v1628
  %v1630 = vmul.f32 %v1375, 1.442695
  %v1631 = vpow.pop %v1630
  %v1632 = vmul.f32 %v1377, 1.442695
  %v1633 = vpow.pop %v1632
  %v1634 = vmul.f32 %v1418, 1.442695
  %v1635 = vpow.pop %v1634
  %v1636 = vmul.f32 %v1420, 1.442695
  %v1637 = vpow.pop %v1636
  %v1638 = vsub.f32 %v1495, 1.0
  %v1639 = vsub.f32 %v1497, 1.0
  %v1640 = vsub.f32 %v1499, 1.0
  %v1641 = vsub.f32 %v1501, 1.0
  %v1642 = vsub.f32 %v1503, 1.0
  %v1643 = vsub.f32 %v1505, 1.0
  %v1644 = vsub.f32 %v1507, 1.0
  %v1645 = vsub.f32 %v1509, 1.0
  %v1646 = vsub.f32 %v1511, 1.0
  %v1647 = vsub.f32 %v1513, 1.0
  %v1648 = vsub.f32 %v1515, 1.0
  %v1649 = vsub.f32 %v1517, 1.0
  %v1650 = vsub.f32 %v1519, 1.0
  %v1651 = vsub.f32 %v1521, 1.0
  %v1652 = vsub.f32 %v1523, 1.0
  %v1653 = vsub.f32 %v1525, 1.0
  %v1654 = vsub.f32 %v1527, 1.0
  %v1655 = vsub.f32 %v1529, 1.0
  %v1656 = vsub.f32 %v1531, 1.0
  %v1657 = vsub.f32 %v1533, 1.0
  %v1658 = vsub.f32 %v1535, 1.0
  %v1659 = vsub.f32 %v1537, 1.0
  %v1660 = vsub.f32 %v1539, 1.0
  %v1661 = vsub.f32 %v1541, 1.0
  %v1662 = vsub.f32 %v1543, 1.0
  %v1663 = vsub.f32 %v1545, 1.0
  %v1664 = vsub.f32 %v1547, 1.0
  %v1665 = vsub.f32 %v1549, 1.0
  %v1666 = vsub.f32 %v1551, 1.0
  %v1667 = vsub.f32 %v1553, 1.0
  %v1668 = vsub.f32 %v1555, 1.0
  %v1669 = vsub.f32 %v1557, 1.0
  %v1670 = vsub.f32 %v1559, 1.0
  %v1671 = vsub.f32 %v1561, 1.0
  %v1672 = vsub.f32 %v1563, 1.0
  %v1673 = vsub.f32 %v1565, 1.0
  %v1674 = vsub.f32 %v1567, 1.0
  %v1675 = vsub.f32 %v1569, 1.0
  %v1676 = vsub.f32 %v1571, 1.0
  %v1677 = vsub.f32 %v1573, 1.0
  %v1678 = vsub.f32 %v1575, 1.0
  %v1679 = vsub.f32 %v1577, 1.0
  %v1680 = vsub.f32 %v1579, 1.0
  %v1681 = vsub.f32 %v1581, 1.0
  %v1682 = vsub.f32 %v1583, 1.0
  %v1683 = vsub.f32 %v1585, 1.0
  %v1684 = vsub.f32 %v1587, 1.0
  %v1685 = vsub.f32 %v1589, 1.0
  %v1686 = vsub.f32 %v1591, 1.0
  %v1687 = vsub.f32 %v1593, 1.0
  %v1688 = vsub.f32 %v1595, 1.0
  %v1689 = vsub.f32 %v1597, 1.0
  %v1690 = vsub.f32 %v1599, 1.0
  %v1691 = vsub.f32 %v1601, 1.0
  %v1692 = vsub.f32 %v1603, 1.0
  %v1693 = vsub.f32 %v1605, 1.0
  %v1694 = vsub.f32 %v1607, 1.0
  %v1695 = vsub.f32 %v1609, 1.0
  %v1696 = vsub.f32 %v1611, 1.0
  %v1697 = vsub.f32 %v1613, 1.0
  %v1698 = vsub.f32 %v1615, 1.0
  %v1699 = vsub.f32 %v1617, 1.0
  %v1700 = vsub.f32 %v1619, 1.0
  %v1701 = vsub.f32 %v1621, 1.0
  %v1702 = vsub.f32 %v1623, 1.0
  %v1703 = vsub.f32 %v1625, 1.0
  %v1704 = vsub.f32 %v1627, 1.0
  %v1705 = vsub.f32 %v1629, 1.0
  %v1706 = vsub.f32 %v1631, 1.0
  %v1707 = vsub.f32 %v1633, 1.0
  %v1708 = vsub.f32 %v1635, 1.0
  %v1709 = vsub.f32 %v1637, 1.0
  %v1710 = vsel %vm1422, %v683, %v1638
  %v1711 = vsel %vm1423, %v685, %v1639
  %v1712 = vsel %vm1424, %v726, %v1640
  %v1713 = vsel %vm1425, %v728, %v1641
  %v1714 = vsel %vm1426, %v769, %v1642
  %v1715 = vsel %vm1427, %v771, %v1643
  %v1716 = vsel %vm1428, %v812, %v1644
  %v1717 = vsel %vm1429, %v814, %v1645
  %v1718 = vsel %vm1430, %v855, %v1646
  %v1719 = vsel %vm1431, %v857, %v1647
  %v1720 = vsel %vm1432, %v898, %v1648
  %v1721 = vsel %vm1433, %v900, %v1649
  %v1722 = vsel %vm1434, %v941, %v1650
  %v1723 = vsel %vm1435, %v943, %v1651
  %v1724 = vsel %vm1436, %v984, %v1652
  %v1725 = vsel %vm1437, %v986, %v1653
  %v1726 = vsel %vm1438, %v1027, %v1654
  %v1727 = vsel %vm1439, %v1029, %v1655
  %v1728 = vsel %vm1440, %v1070, %v1656
  %v1729 = vsel %vm1441, %v1072, %v1657
  %v1730 = vsel %vm1442, %v1113, %v1658
  %v1731 = vsel %vm1443, %v1115, %v1659
  %v1732 = vsel %vm1444, %v1156, %v1660
  %v1733 = vsel %vm1445, %v1158, %v1661
  %v1734 = vsel %vm1446, %v1199, %v1662
  %v1735 = vsel %vm1447, %v1201, %v1663
  %v1736 = vsel %vm1448, %v1242, %v1664
  %v1737 = vsel %vm1449, %v1244, %v1665
  %v1738 = vsel %vm1450, %v1285, %v1666
  %v1739 = vsel %vm1451, %v1287, %v1667
  %v1740 = vsel %vm1452, %v1328, %v1668
  %v1741 = vsel %vm1453, %v1330, %v1669
  %v1742 = vsel %vm1454, %v1371, %v1670
  %v1743 = vsel %vm1455, %v1373, %v1671
  %v1744 = vsel %vm1456, %v1414, %v1672
  %v1745 = vsel %vm1457, %v1416, %v1673
  %v1746 = vsel %vm1458, %v687, %v1674
  %v1747 = vsel %vm1459, %v689, %v1675
  %v1748 = vsel %vm1460, %v730, %v1676
  %v1749 = vsel %vm1461, %v732, %v1677
  %v1750 = vsel %vm1462, %v773, %v1678
  %v1751 = vsel %vm1463, %v775, %v1679
  %v1752 = vsel %vm1464, %v816, %v1680
  %v1753 = vsel %vm1465, %v818, %v1681
  %v1754 = vsel %vm1466, %v859, %v1682
  %v1755 = vsel %vm1467, %v861, %v1683
  %v1756 = vsel %vm1468, %v902, %v1684
  %v1757 = vsel %vm1469, %v904, %v1685
  %v1758 = vsel %vm1470, %v945, %v1686
  %v1759 = vsel %vm1471, %v947, %v1687
  %v1760 = vsel %vm1472, %v988, %v1688
  %v1761 = vsel %vm1473, %v990, %v1689
  %v1762 = vsel %vm1474, %v1031, %v1690
  %v1763 = vsel %vm1475, %v1033, %v1691
  %v1764 = vsel %vm1476, %v1074, %v1692
  %v1765 = vsel %vm1477, %v1076, %v1693
  %v1766 = vsel %vm1478, %v1117, %v1694
  %v1767 = vsel %vm1479, %v1119, %v1695
  %v1768 = vsel %vm1480, %v1160, %v1696
  %v1769 = vsel %vm1481, %v1162, %v1697
  %v1770 = vsel %vm1482, %v1203, %v1698
  %v1771 = vsel %vm1483, %v1205, %v1699
  %v1772 = vsel %vm1484, %v1246, %v1700
  %v1773 = vsel %vm1485, %v1248, %v1701
  %v1774 = vsel %vm1486, %v1289, %v1702
  %v1775 = vsel %vm1487, %v1291, %v1703
  %v1776 = vsel %vm1488, %v1332, %v1704
  %v1777 = vsel %vm1489, %v1334, %v1705
  %v1778 = vsel %vm1490, %v1375, %v1706
  %v1779 = vsel %vm1491, %v1377, %v1707
  %v1780 = vsel %vm1492, %v1418, %v1708
  %v1781 = vsel %vm1493, %v1420, %v1709
  %1782 = vst [vmem:[%s3] sm:$0xff] %v1710
  %1783 = vst [vmem:[%s3 + $0x8] sm:$0xff] %v1711
  %1784 = vst [vmem:[%s3 + $0x10] sm:$0xff] %v1712
  %1785 = vst [vmem:[%s3 + $0x18] sm:$0xff] %v1713
  %1786 = vst [vmem:[%s3 + $0x20] sm:$0xff] %v1714
  %1787 = vst [vmem:[%s3 + $0x28] sm:$0xff] %v1715
  %1788 = vst [vmem:[%s3 + $0x30] sm:$0xff] %v1716
  %1789 = vst [vmem:[%s3 + $0x38] sm:$0xff] %v1717
  %1790 = vst [vmem:[%s3 + $0x40] sm:$0xff] %v1718
  %1791 = vst [vmem:[%s3 + $0x48] sm:$0xff] %v1719
  %1792 = vst [vmem:[%s3 + $0x50] sm:$0xff] %v1720
  %1793 = vst [vmem:[%s3 + $0x58] sm:$0xff] %v1721
  %1794 = vst [vmem:[%s3 + $0x60] sm:$0xff] %v1722
  %1795 = vst [vmem:[%s3 + $0x68] sm:$0xff] %v1723
  %1796 = vst [vmem:[%s3 + $0x70] sm:$0xff] %v1724
  %1797 = vst [vmem:[%s3 + $0x78] sm:$0xff] %v1725
  %1798 = vst [vmem:[%s3 + $0x80] sm:$0xff] %v1726
  %1799 = vst [vmem:[%s3 + $0x88] sm:$0xff] %v1727
  %1800 = vst [vmem:[%s3 + $0x90] sm:$0xff] %v1728
  %1801 = vst [vmem:[%s3 + $0x98] sm:$0xff] %v1729
  %1802 = vst [vmem:[%s3 + $0xa0] sm:$0xff] %v1730
  %1803 = vst [vmem:[%s3 + $0xa8] sm:$0xff] %v1731
  %1804 = vst [vmem:[%s3 + $0xb0] sm:$0xff] %v1732
  %1805 = vst [vmem:[%s3 + $0xb8] sm:$0xff] %v1733
  %1806 = vst [vmem:[%s3 + $0xc0] sm:$0xff] %v1734
  %1807 = vst [vmem:[%s3 + $0xc8] sm:$0xff] %v1735
  %1808 = vst [vmem:[%s3 + $0xd0] sm:$0xff] %v1736
  %1809 = vst [vmem:[%s3 + $0xd8] sm:$0xff] %v1737
  %1810 = vst [vmem:[%s3 + $0xe0] sm:$0xff] %v1738
  %1811 = vst [vmem:[%s3 + $0xe8] sm:$0xff] %v1739
  %1812 = vst [vmem:[%s3 + $0xf0] sm:$0xff] %v1740
  %1813 = vst [vmem:[%s3 + $0xf8] sm:$0xff] %v1741
  %1814 = vst [vmem:[%s3 + $0x100] sm:$0xff] %v1742
  %1815 = vst [vmem:[%s3 + $0x108] sm:$0xff] %v1743
  %1816 = vst [vmem:[%s3 + $0x110] sm:$0xff] %v1744
  %1817 = vst [vmem:[%s3 + $0x118] sm:$0xff] %v1745
  %1818 = vst [vmem:[%s3 + $0x120] sm:$0xff] %v1746
  %1819 = vst [vmem:[%s3 + $0x128] sm:$0xff] %v1747
  %1820 = vst [vmem:[%s3 + $0x130] sm:$0xff] %v1748
  %1821 = vst [vmem:[%s3 + $0x138] sm:$0xff] %v1749
  %1822 = vst [vmem:[%s3 + $0x140] sm:$0xff] %v1750
  %1823 = vst [vmem:[%s3 + $0x148] sm:$0xff] %v1751
  %1824 = vst [vmem:[%s3 + $0x150] sm:$0xff] %v1752
  %1825 = vst [vmem:[%s3 + $0x158] sm:$0xff] %v1753
  %1826 = vst [vmem:[%s3 + $0x160] sm:$0xff] %v1754
  %1827 = vst [vmem:[%s3 + $0x168] sm:$0xff] %v1755
  %1828 = vst [vmem:[%s3 + $0x170] sm:$0xff] %v1756
  %1829 = vst [vmem:[%s3 + $0x178] sm:$0xff] %v1757
  %1830 = vst [vmem:[%s3 + $0x180] sm:$0xff] %v1758
  %1831 = vst [vmem:[%s3 + $0x188] sm:$0xff] %v1759
  %1832 = vst [vmem:[%s3 + $0x190] sm:$0xff] %v1760
  %1833 = vst [vmem:[%s3 + $0x198] sm:$0xff] %v1761
  %1834 = vst [vmem:[%s3 + $0x1a0] sm:$0xff] %v1762
  %1835 = vst [vmem:[%s3 + $0x1a8] sm:$0xff] %v1763
  %1836 = vst [vmem:[%s3 + $0x1b0] sm:$0xff] %v1764
  %1837 = vst [vmem:[%s3 + $0x1b8] sm:$0xff] %v1765
  %1838 = vst [vmem:[%s3 + $0x1c0] sm:$0xff] %v1766
  %1839 = vst [vmem:[%s3 + $0x1c8] sm:$0xff] %v1767
  %1840 = vst [vmem:[%s3 + $0x1d0] sm:$0xff] %v1768
  %1841 = vst [vmem:[%s3 + $0x1d8] sm:$0xff] %v1769
  %1842 = vst [vmem:[%s3 + $0x1e0] sm:$0xff] %v1770
  %1843 = vst [vmem:[%s3 + $0x1e8] sm:$0xff] %v1771
  %1844 = vst [vmem:[%s3 + $0x1f0] sm:$0xff] %v1772
  %1845 = vst [vmem:[%s3 + $0x1f8] sm:$0xff] %v1773
  %1846 = vst [vmem:[%s3 + $0x200] sm:$0xff] %v1774
  %1847 = vst [vmem:[%s3 + $0x208] sm:$0xff] %v1775
  %1848 = vst [vmem:[%s3 + $0x210] sm:$0xff] %v1776
  %1849 = vst [vmem:[%s3 + $0x218] sm:$0xff] %v1777
  %1850 = vst [vmem:[%s3 + $0x220] sm:$0xff] %v1778
  %1851 = vst [vmem:[%s3 + $0x228] sm:$0xff] %v1779
  %1852 = vst [vmem:[%s3 + $0x230] sm:$0xff] %v1780
  %1853 = vst [vmem:[%s3 + $0x238] sm:$0xff] %v1781
  // Predicated region
  $region14: #{vae_forward.14} parent=0 // pred_check
    _
  $region15: #{vae_forward.14} parent=0 // pred_check_branch
    %1855 = sbr.rel (0) target = $region17
  $region16: #{vae_forward.14} parent=0 // pred_region
    _
  $region17: #{vae_forward.14} parent=0 // pred_fallthru
    _
  // Predicated region
  $region18: #{vae_forward.14} parent=0 // pred_check
    _
  $region19: #{vae_forward.14} parent=0 // pred_check_branch
    %1857 = sbr.rel (0) target = $region21
  $region20: #{vae_forward.14} parent=0 // pred_region
    _
  $region21: #{vae_forward.14} parent=0 // pred_fallthru
    _

// kernel: tile.28
$region0: #{tile.28}
  #allocation0 [shape = 's32[1]{0}', space=sflag, size = 0x4, scoped, tag = 'scoped memory for tile.28']
  %s0 = inlined_call_operand.vmem [shape: f32[64], index: 0, kind: input, shape index: {}]
  %s1 = inlined_call_operand.vmem [shape: f32[4,64], index: 1, kind: output, shape index: {}]
  // Predicated region
  $region2: #{tile.28} parent=0 // pred_check
    _
  $region3: #{tile.28} parent=0 // pred_check_branch
    %3 = sbr.rel (0) target = $region5
  $region4: #{tile.28} parent=0 // pred_region
    _
  $region5: #{tile.28} parent=0 // pred_fallthru
    _
  %v4 = vld [vmem:[%s0] ss:$0 sm:$0xff]
  %5 = vst [vmem:[%s1] sm:$0xf] %v4

// kernel: tile.29
$region0: #{tile.29}
  %s0 = inlined_call_operand.vmem [shape: f32[4,64], index: 0, kind: input, shape index: {}]
  %s1 = inlined_call_operand.vmem [shape: f32[1,256], index: 1, kind: output, shape index: {}]
  $region1: #{tile.29} parent=0
    #allocation0 [shape = 'u8[8192]{0}', space=vmem, size = 0x2000, scoped, tag = 'scoped mem for output reshape']
    #allocation1 [shape = 'u8[4096]{0}', space=vmem, size = 0x1000, scoped, tag = 'scoped mem for input reshape']
    %s3 = sshllo.u32 0, 4
    %v4 = vld [vmem:[%s0] sm:%s3]
    %5 = vst [vmem:[#allocation1] sm:%s3] %v4
    %s6 = smov 3
    %v7 = vld [vmem:[#allocation1] ss:$2 sm:%s6]
    %vm8 = vcmask 523264
    %9 = vst.msk [vmem:[#allocation0] ss:$8 sm:$0x3] %vm8, %v7
    %s10 = scalar_lea.vmem [#allocation1], 1
    %s11 = smov 3
    %v12 = vld [vmem:[%s10] ss:$2 sm:%s11]
    %13 = vrot.lane.b32.xlu0 %v12, 64
    %v14 = vpop.permute.xlu0 %13
    %vm15 = vcmask 1048064
    %16 = vst.msk [vmem:[#allocation0] ss:$8 sm:$0x3] %vm15, %v14
    %s18 = sshllo.u32 0, 1
    %v20 = vld [vmem:[#allocation0] sm:%s18]
    %s21 = sshllo.u32 0, 1
    %22 = vst [vmem:[%s1] sm:%s21] %v20
    %s23 = scalar_lea.vmem [#allocation0], 8
    %v24 = vld [vmem:[%s23] sm:%s18]
    %s25 = sshllo.u32 0, 1
    %s26 = scalar_lea.vmem %s1, 1
    %27 = vst [vmem:[%s26] sm:%s25] %v24

// kernel: vae_forward.15
$region0: #{vae_forward.15}
  #allocation0 [shape = 'u32[]', space=smem, size = 0x4, offset = 0x4, fixed_abs, tag = 'smem constant byte address 0x4 - core index']
  #allocation1 [shape = 'u32[144,128]{1,0:T(1,128)}', space=vmem, size = 0x12000, scoped, tag = 'internal scratch']
  %s0 = inlined_call_operand.vmem [shape: bf16[128,1152], index: 0, kind: input, shape index: {}]
  %s1 = inlined_call_operand.vmem [shape: bf16[1152,256], index: 1, kind: input, shape index: {}]
  %s2 = inlined_call_operand.vmem [shape: f32[1,256], index: 2, kind: input, shape index: {}]
  %s3 = inlined_call_operand.vmem [shape: f32[128,256], index: 3, kind: output, shape index: {}]
  %s4 = sld [smem:[#allocation0]]
  $region45: #{vae_forward.15} parent=0
    _
  %s6 = ssub.s32 1, %s4
  %s7 = scalar_select 0, %s6, %s4
  loop: start=0, step=1, limit=4
  $region2: #{vae_forward.15} parent=0 // loop_pre_header
    _
  $region3: #{vae_forward.15} parent=0 // loop_header
    %s9 = sphi 0, %s13
    %p10 = scmp.ge.s32.totalorder %s9, 4
    %s19 = sphi 0, %s21
    %s22 = sphi 0, %s19
    %s23 = sphi 0, %s22
    %s39 = sphi 0, %s23
    %s43 = sphi 0, %s43
    %s45 = sphi 0, %s43
    %s46 = sphi 0, %s45
    %s60 = sphi 0, %s46
    %s64 = sphi 0, %s64
    %s66 = sphi 0, %s64
    %s67 = sphi 0, %s66
    %s81 = sphi 0, %s67
    %s87 = sphi 0, %s89
    %s90 = sphi 0, %s87
    %s91 = sphi 0, %s90
    %s107 = sphi 0, %s91
  $region4: #{vae_forward.15} parent=0 // loop_header_branch
    %12 = sbr.rel (%p10) target = $region8
  $region5: #{vae_forward.15} parent=0 // loop_body
    %s14 = ssub.s32 %s9, 1
    %s15 = ssub.s32 %s9, 2
    %s16 = sadd.s32 %s9, 1
    %s17 = ssub.s32 %s9, %s16
    %p18 = scmp.eq.s32.totalorder %s17, 0
    %s20 = sadd.s32 %s19, 1
    %s21 = scalar_select %p18, %s19, %s20
    %p24 = pneg %p18
    %p25 = scmp.eq.s32.totalorder %s9, 1
    %p26 = por %p24, %p25
    %p27 = scmp.ne.s32.totalorder %s19, %s22
    %p28 = scmp.eq.s32.totalorder %s9, 0
    %p29 = por %p27, %p28
    %p30 = scmp.ne.s32.totalorder %s19, %s22
    %p31 = scmp.eq.s32.totalorder %s14, 1
    %p32 = por %p30, %p31
    %p33 = scmp.ne.s32.totalorder %s22, %s23
    %p34 = scmp.eq.s32.totalorder %s14, 0
    %p35 = por %p33, %p34
    %p36 = scmp.ne.s32.totalorder %s22, %s23
    %p37 = scmp.eq.s32.totalorder %s15, 1
    %p38 = por %p36, %p37
    %p40 = scmp.ne.s32.totalorder %s23, %s39
    %p41 = scmp.eq.s32.totalorder %s15, 0
    %p42 = por %p40, %p41
    %s44 = sadd.s32 %s43, 1
    %p47 = scmp.eq.s32.totalorder %s9, 1
    %p48 = scmp.ne.s32.totalorder %s43, %s45
    %p49 = scmp.eq.s32.totalorder %s9, 0
    %p50 = por %p48, %p49
    %p51 = scmp.ne.s32.totalorder %s43, %s45
    %p52 = scmp.eq.s32.totalorder %s14, 1
    %p53 = por %p51, %p52
    %p54 = scmp.ne.s32.totalorder %s45, %s46
    %p55 = scmp.eq.s32.totalorder %s14, 0
    %p56 = por %p54, %p55
    %p57 = scmp.ne.s32.totalorder %s45, %s46
    %p58 = scmp.eq.s32.totalorder %s15, 1
    %p59 = por %p57, %p58
    %p61 = scmp.ne.s32.totalorder %s46, %s60
    %p62 = scmp.eq.s32.totalorder %s15, 0
    %p63 = por %p61, %p62
    %s65 = sadd.s32 %s64, 1
    %p68 = scmp.eq.s32.totalorder %s9, 1
    %p69 = scmp.ne.s32.totalorder %s64, %s66
    %p70 = scmp.eq.s32.totalorder %s9, 0
    %p71 = por %p69, %p70
    %p72 = scmp.ne.s32.totalorder %s64, %s66
    %p73 = scmp.eq.s32.totalorder %s14, 1
    %p74 = por %p72, %p73
    %p75 = scmp.ne.s32.totalorder %s66, %s67
    %p76 = scmp.eq.s32.totalorder %s14, 0
    %p77 = por %p75, %p76
    %p78 = scmp.ne.s32.totalorder %s66, %s67
    %p79 = scmp.eq.s32.totalorder %s15, 1
    %p80 = por %p78, %p79
    %p82 = scmp.ne.s32.totalorder %s67, %s81
    %p83 = scmp.eq.s32.totalorder %s15, 0
    %p84 = por %p82, %p83
    %s85 = ssub.s32 %s9, %s16
    %p86 = scmp.eq.s32.totalorder %s85, 0
    %s88 = sadd.s32 %s87, 1
    %s89 = scalar_select %p86, %s87, %s88
    %p92 = pneg %p86
    %p93 = scmp.eq.s32.totalorder %s9, 1
    %p94 = por %p92, %p93
    %p95 = scmp.ne.s32.totalorder %s87, %s90
    %p96 = scmp.eq.s32.totalorder %s9, 0
    %p97 = por %p95, %p96
    %p98 = scmp.ne.s32.totalorder %s87, %s90
    %p99 = scmp.eq.s32.totalorder %s14, 1
    %p100 = por %p98, %p99
    %p101 = scmp.ne.s32.totalorder %s90, %s91
    %p102 = scmp.eq.s32.totalorder %s14, 0
    %p103 = por %p101, %p102
    %p104 = scmp.ne.s32.totalorder %s90, %s91
    %p105 = scmp.eq.s32.totalorder %s15, 1
    %p106 = por %p104, %p105
    %p108 = scmp.ne.s32.totalorder %s91, %s107
    %p109 = scmp.eq.s32.totalorder %s15, 0
    %p110 = por %p108, %p109
    %p111 = scmp.le.s32.totalorder 1, %s9
    %p112 = scmp.lt.s32.totalorder %s9, 3
    %p113 = pnand %p111, %p112
    %p114 = pneg %p113
    // Predicated region
    $region9: #{vae_forward.15} parent=5 // pred_check
      _
    $region10: #{vae_forward.15} parent=5 // pred_check_branch
      %116 = sbr.rel (%p113) target = $region12
    $region11: #{vae_forward.15} parent=5 // pred_region
      %s117 = ssub.s32 %s9, 1
      // Predicated region
      $region13: #{vae_forward.15} parent=11 // pred_check
        %p118 = pneg %p56
      $region14: #{vae_forward.15} parent=11 // pred_check_branch
        %120 = sbr.rel (%p118) target = $region16
      $region15: #{vae_forward.15} parent=11 // pred_region
        _
      $region16: #{vae_forward.15} parent=11 // pred_fallthru
        _
      // Predicated region
      $region17: #{vae_forward.15} parent=11 // pred_check
        %p121 = pneg %p77
      $region18: #{vae_forward.15} parent=11 // pred_check_branch
        %123 = sbr.rel (%p121) target = $region20
      $region19: #{vae_forward.15} parent=11 // pred_region
        _
      $region20: #{vae_forward.15} parent=11 // pred_fallthru
        _
    $region12: #{vae_forward.15} parent=5 // pred_fallthru
      _
    %p124 = scmp.lt.s32.totalorder %s9, 2
    // Predicated region
    $region21: #{vae_forward.15} parent=5 // pred_check
      %p125 = pneg %p124
    $region22: #{vae_forward.15} parent=5 // pred_check_branch
      %127 = sbr.rel (%p125) target = $region24
    $region23: #{vae_forward.15} parent=5 // pred_region
      // Predicated region
      $region25: #{vae_forward.15} parent=23 // pred_check
        %p128 = pneg %p29
      $region26: #{vae_forward.15} parent=23 // pred_check_branch
        %130 = sbr.rel (%p128) target = $region28
      $region27: #{vae_forward.15} parent=23 // pred_region
        %s131 = smul.u32 8, %s9
        %p132 = scmp.lt.s32.totalorder %s131, 15
        %s133 = scalar_select %p132, %s131, 15
        %s134 = smul.addr %s133, 9
        %s135 = smul.addr %s134, 4
        %s136 = scalar_lea.vmem %s0, %s135
        %s137 = smul.u32 8, %s9
      $region28: #{vae_forward.15} parent=23 // pred_fallthru
        _
    $region24: #{vae_forward.15} parent=5 // pred_fallthru
      _
    %p138 = scmp.le.s32.totalorder 1, %s9
    %p139 = scmp.lt.s32.totalorder %s9, 3
    %p140 = pnand %p138, %p139
    %p141 = pneg %p140
    // Predicated region
    $region29: #{vae_forward.15} parent=5 // pred_check
      _
    $region30: #{vae_forward.15} parent=5 // pred_check_branch
      %143 = sbr.rel (%p140) target = $region32
    $region31: #{vae_forward.15} parent=5 // pred_region
      %s144 = ssub.s32 %s9, 1
      %s145 = smul.u32 8, %s14
      %p146 = scmp.lt.s32.totalorder %s145, 15
      %s147 = scalar_select %p146, %s145, 15
      %s148 = smul.addr %s147, 9
      %s149 = smul.addr %s148, 4
      %s150 = scalar_lea.vmem %s0, %s149
      %p151 = pneg %p35
      %p152 = pneg %p32
      %p153 = pneg %p56
      %p154 = pneg %p53
      %p155 = pneg %p77
      %p156 = pneg %p74
      %p157 = pneg %p103
      %p158 = pneg %p100
      %s159 = smul.u32 8, %s14
      %p160 = scmp.lt.s32.totalorder %s159, 15
      %s161 = scalar_select %p160, %s159, 15
      %s162 = smul.addr %s161, 2
      %s163 = smul.addr %s162, 8
      %s164 = scalar_lea.vmem %s3, %s163
      %s165 = smul.u32 8, %s14
      %p166 = scmp.lt.s32.totalorder %s165, 15
      %s167 = scalar_select %p166, %s165, 15
      %s168 = smul.addr %s167, 9
      %s169 = smul.addr %s168, 4
      %s170 = scalar_lea.vmem %s0, %s169
      %s171 = smul.u32 8, %s14
      %s172 = smul.u32 8, %s14
      %p173 = scmp.lt.s32.totalorder %s172, 15
      %s174 = scalar_select %p173, %s172, 15
      %s175 = smul.addr %s174, 2
      %s176 = smul.addr %s175, 8
      %s177 = scalar_lea.vmem %s3, %s176
      %s178 = smul.u32 8, %s14
      %v180 = vld [vmem:[%s170] sm:$0xff]
      %v181 = vld [vmem:[%s170 + $0x8] sm:$0xff]
      %v182 = vld [vmem:[%s170 + $0x10] sm:$0xff]
      %v183 = vld [vmem:[%s170 + $0x18] sm:$0xff]
      %v184 = vld [vmem:[%s170 + $0x20] sm:$0xf]
      %v185 = vld [vmem:[%s170 + $0x24] sm:$0xff]
      %v186 = vld [vmem:[%s170 + $0x2c] sm:$0xff]
      %v187 = vld [vmem:[%s170 + $0x34] sm:$0xff]
      %v188 = vld [vmem:[%s170 + $0x3c] sm:$0xff]
      %v189 = vld [vmem:[%s170 + $0x44] sm:$0xf]
      %v190 = vld [vmem:[%s170 + $0x48] sm:$0xff]
      %v191 = vld [vmem:[%s170 + $0x50] sm:$0xff]
      %v192 = vld [vmem:[%s170 + $0x58] sm:$0xff]
      %v193 = vld [vmem:[%s170 + $0x60] sm:$0xff]
      %v194 = vld [vmem:[%s170 + $0x68] sm:$0xf]
      %v195 = vld [vmem:[%s170 + $0x6c] sm:$0xff]
      %v196 = vld [vmem:[%s170 + $0x74] sm:$0xff]
      %v197 = vld [vmem:[%s170 + $0x7c] sm:$0xff]
      %v198 = vld [vmem:[%s170 + $0x84] sm:$0xff]
      %v199 = vld [vmem:[%s170 + $0x8c] sm:$0xf]
      %v200 = vld [vmem:[%s170 + $0x90] sm:$0xff]
      %v201 = vld [vmem:[%s170 + $0x98] sm:$0xff]
      %v202 = vld [vmem:[%s170 + $0xa0] sm:$0xff]
      %v203 = vld [vmem:[%s170 + $0xa8] sm:$0xff]
      %v204 = vld [vmem:[%s170 + $0xb0] sm:$0xf]
      %v205 = vld [vmem:[%s170 + $0xb4] sm:$0xff]
      %v206 = vld [vmem:[%s170 + $0xbc] sm:$0xff]
      %v207 = vld [vmem:[%s170 + $0xc4] sm:$0xff]
      %v208 = vld [vmem:[%s170 + $0xcc] sm:$0xff]
      %v209 = vld [vmem:[%s170 + $0xd4] sm:$0xf]
      %v210 = vld [vmem:[%s170 + $0xd8] sm:$0xff]
      %v211 = vld [vmem:[%s170 + $0xe0] sm:$0xff]
      %v212 = vld [vmem:[%s170 + $0xe8] sm:$0xff]
      %v213 = vld [vmem:[%s170 + $0xf0] sm:$0xff]
      %v214 = vld [vmem:[%s170 + $0xf8] sm:$0xf]
      %v215 = vld [vmem:[%s170 + $0xfc] sm:$0xff]
      %v216 = vld [vmem:[%s170 + $0x104] sm:$0xff]
      %v217 = vld [vmem:[%s170 + $0x10c] sm:$0xff]
      %v218 = vld [vmem:[%s170 + $0x114] sm:$0xff]
      %v219 = vld [vmem:[%s170 + $0x11c] sm:$0xf]
      %v220 = vld [vmem:[%s1] sm:$0xff]
      %v221 = vld [vmem:[%s1 + $0x8] sm:$0xff]
      %v222 = vld [vmem:[%s1 + $0x10] sm:$0xff]
      %v223 = vld [vmem:[%s1 + $0x18] sm:$0xff]
      %v224 = vld [vmem:[%s1 + $0x20] sm:$0xff]
      %v225 = vld [vmem:[%s1 + $0x28] sm:$0xff]
      %v226 = vld [vmem:[%s1 + $0x30] sm:$0xff]
      %v227 = vld [vmem:[%s1 + $0x38] sm:$0xff]
      %v228 = vld [vmem:[%s1 + $0x40] sm:$0xff]
      %v229 = vld [vmem:[%s1 + $0x48] sm:$0xff]
      %v230 = vld [vmem:[%s1 + $0x50] sm:$0xff]
      %v231 = vld [vmem:[%s1 + $0x58] sm:$0xff]
      %v232 = vld [vmem:[%s1 + $0x60] sm:$0xff]
      %v233 = vld [vmem:[%s1 + $0x68] sm:$0xff]
      %v234 = vld [vmem:[%s1 + $0x70] sm:$0xff]
      %v235 = vld [vmem:[%s1 + $0x78] sm:$0xff]
      %v236 = vld [vmem:[%s1 + $0x80] sm:$0xff]
      %v237 = vld [vmem:[%s1 + $0x88] sm:$0xff]
      %v238 = vld [vmem:[%s1 + $0x90] sm:$0xff]
      %v239 = vld [vmem:[%s1 + $0x98] sm:$0xff]
      %v240 = vld [vmem:[%s1 + $0xa0] sm:$0xff]
      %v241 = vld [vmem:[%s1 + $0xa8] sm:$0xff]
      %v242 = vld [vmem:[%s1 + $0xb0] sm:$0xff]
      %v243 = vld [vmem:[%s1 + $0xb8] sm:$0xff]
      %v244 = vld [vmem:[%s1 + $0xc0] sm:$0xff]
      %v245 = vld [vmem:[%s1 + $0xc8] sm:$0xff]
      %v246 = vld [vmem:[%s1 + $0xd0] sm:$0xff]
      %v247 = vld [vmem:[%s1 + $0xd8] sm:$0xff]
      %v248 = vld [vmem:[%s1 + $0xe0] sm:$0xff]
      %v249 = vld [vmem:[%s1 + $0xe8] sm:$0xff]
      %v250 = vld [vmem:[%s1 + $0xf0] sm:$0xff]
      %v251 = vld [vmem:[%s1 + $0xf8] sm:$0xff]
      %v252 = vld [vmem:[%s1 + $0x100] sm:$0xff]
      %v253 = vld [vmem:[%s1 + $0x108] sm:$0xff]
      %v254 = vld [vmem:[%s1 + $0x110] sm:$0xff]
      %v255 = vld [vmem:[%s1 + $0x118] sm:$0xff]
      %v256 = vld [vmem:[%s1 + $0x120] sm:$0xff]
      %v257 = vld [vmem:[%s1 + $0x128] sm:$0xff]
      %v258 = vld [vmem:[%s1 + $0x130] sm:$0xff]
      %v259 = vld [vmem:[%s1 + $0x138] sm:$0xff]
      %v260 = vld [vmem:[%s1 + $0x140] sm:$0xff]
      %v261 = vld [vmem:[%s1 + $0x148] sm:$0xff]
      %v262 = vld [vmem:[%s1 + $0x150] sm:$0xff]
      %v263 = vld [vmem:[%s1 + $0x158] sm:$0xff]
      %v264 = vld [vmem:[%s1 + $0x160] sm:$0xff]
      %v265 = vld [vmem:[%s1 + $0x168] sm:$0xff]
      %v266 = vld [vmem:[%s1 + $0x170] sm:$0xff]
      %v267 = vld [vmem:[%s1 + $0x178] sm:$0xff]
      %v268 = vld [vmem:[%s1 + $0x180] sm:$0xff]
      %v269 = vld [vmem:[%s1 + $0x188] sm:$0xff]
      %v270 = vld [vmem:[%s1 + $0x190] sm:$0xff]
      %v271 = vld [vmem:[%s1 + $0x198] sm:$0xff]
      %v272 = vld [vmem:[%s1 + $0x1a0] sm:$0xff]
      %v273 = vld [vmem:[%s1 + $0x1a8] sm:$0xff]
      %v274 = vld [vmem:[%s1 + $0x1b0] sm:$0xff]
      %v275 = vld [vmem:[%s1 + $0x1b8] sm:$0xff]
      %v276 = vld [vmem:[%s1 + $0x1c0] sm:$0xff]
      %v277 = vld [vmem:[%s1 + $0x1c8] sm:$0xff]
      %v278 = vld [vmem:[%s1 + $0x1d0] sm:$0xff]
      %v279 = vld [vmem:[%s1 + $0x1d8] sm:$0xff]
      %v280 = vld [vmem:[%s1 + $0x1e0] sm:$0xff]
      %v281 = vld [vmem:[%s1 + $0x1e8] sm:$0xff]
      %v282 = vld [vmem:[%s1 + $0x1f0] sm:$0xff]
      %v283 = vld [vmem:[%s1 + $0x1f8] sm:$0xff]
      %v284 = vld [vmem:[%s1 + $0x200] sm:$0xff]
      %v285 = vld [vmem:[%s1 + $0x208] sm:$0xff]
      %v286 = vld [vmem:[%s1 + $0x210] sm:$0xff]
      %v287 = vld [vmem:[%s1 + $0x218] sm:$0xff]
      %v288 = vld [vmem:[%s1 + $0x220] sm:$0xff]
      %v289 = vld [vmem:[%s1 + $0x228] sm:$0xff]
      %v290 = vld [vmem:[%s1 + $0x230] sm:$0xff]
      %v291 = vld [vmem:[%s1 + $0x238] sm:$0xff]
      %v292 = vld [vmem:[%s1 + $0x240] sm:$0xff]
      %v293 = vld [vmem:[%s1 + $0x248] sm:$0xff]
      %v294 = vld [vmem:[%s1 + $0x250] sm:$0xff]
      %v295 = vld [vmem:[%s1 + $0x258] sm:$0xff]
      %v296 = vld [vmem:[%s1 + $0x260] sm:$0xff]
      %v297 = vld [vmem:[%s1 + $0x268] sm:$0xff]
      %v298 = vld [vmem:[%s1 + $0x270] sm:$0xff]
      %v299 = vld [vmem:[%s1 + $0x278] sm:$0xff]
      %v300 = vld [vmem:[%s1 + $0x280] sm:$0xff]
      %v301 = vld [vmem:[%s1 + $0x288] sm:$0xff]
      %v302 = vld [vmem:[%s1 + $0x290] sm:$0xff]
      %v303 = vld [vmem:[%s1 + $0x298] sm:$0xff]
      %v304 = vld [vmem:[%s1 + $0x2a0] sm:$0xff]
      %v305 = vld [vmem:[%s1 + $0x2a8] sm:$0xff]
      %v306 = vld [vmem:[%s1 + $0x2b0] sm:$0xff]
      %v307 = vld [vmem:[%s1 + $0x2b8] sm:$0xff]
      %v308 = vld [vmem:[%s1 + $0x2c0] sm:$0xff]
      %v309 = vld [vmem:[%s1 + $0x2c8] sm:$0xff]
      %v310 = vld [vmem:[%s1 + $0x2d0] sm:$0xff]
      %v311 = vld [vmem:[%s1 + $0x2d8] sm:$0xff]
      %v312 = vld [vmem:[%s1 + $0x2e0] sm:$0xff]
      %v313 = vld [vmem:[%s1 + $0x2e8] sm:$0xff]
      %v314 = vld [vmem:[%s1 + $0x2f0] sm:$0xff]
      %v315 = vld [vmem:[%s1 + $0x2f8] sm:$0xff]
      %v316 = vld [vmem:[%s1 + $0x300] sm:$0xff]
      %v317 = vld [vmem:[%s1 + $0x308] sm:$0xff]
      %v318 = vld [vmem:[%s1 + $0x310] sm:$0xff]
      %v319 = vld [vmem:[%s1 + $0x318] sm:$0xff]
      %v320 = vld [vmem:[%s1 + $0x320] sm:$0xff]
      %v321 = vld [vmem:[%s1 + $0x328] sm:$0xff]
      %v322 = vld [vmem:[%s1 + $0x330] sm:$0xff]
      %v323 = vld [vmem:[%s1 + $0x338] sm:$0xff]
      %v324 = vld [vmem:[%s1 + $0x340] sm:$0xff]
      %v325 = vld [vmem:[%s1 + $0x348] sm:$0xff]
      %v326 = vld [vmem:[%s1 + $0x350] sm:$0xff]
      %v327 = vld [vmem:[%s1 + $0x358] sm:$0xff]
      %v328 = vld [vmem:[%s1 + $0x360] sm:$0xff]
      %v329 = vld [vmem:[%s1 + $0x368] sm:$0xff]
      %v330 = vld [vmem:[%s1 + $0x370] sm:$0xff]
      %v331 = vld [vmem:[%s1 + $0x378] sm:$0xff]
      %v332 = vld [vmem:[%s1 + $0x380] sm:$0xff]
      %v333 = vld [vmem:[%s1 + $0x388] sm:$0xff]
      %v334 = vld [vmem:[%s1 + $0x390] sm:$0xff]
      %v335 = vld [vmem:[%s1 + $0x398] sm:$0xff]
      %v336 = vld [vmem:[%s1 + $0x3a0] sm:$0xff]
      %v337 = vld [vmem:[%s1 + $0x3a8] sm:$0xff]
      %v338 = vld [vmem:[%s1 + $0x3b0] sm:$0xff]
      %v339 = vld [vmem:[%s1 + $0x3b8] sm:$0xff]
      %v340 = vld [vmem:[%s1 + $0x3c0] sm:$0xff]
      %v341 = vld [vmem:[%s1 + $0x3c8] sm:$0xff]
      %v342 = vld [vmem:[%s1 + $0x3d0] sm:$0xff]
      %v343 = vld [vmem:[%s1 + $0x3d8] sm:$0xff]
      %v344 = vld [vmem:[%s1 + $0x3e0] sm:$0xff]
      %v345 = vld [vmem:[%s1 + $0x3e8] sm:$0xff]
      %v346 = vld [vmem:[%s1 + $0x3f0] sm:$0xff]
      %v347 = vld [vmem:[%s1 + $0x3f8] sm:$0xff]
      %v348 = vld [vmem:[%s1 + $0x400] sm:$0xff]
      %v349 = vld [vmem:[%s1 + $0x408] sm:$0xff]
      %v350 = vld [vmem:[%s1 + $0x410] sm:$0xff]
      %v351 = vld [vmem:[%s1 + $0x418] sm:$0xff]
      %v352 = vld [vmem:[%s1 + $0x420] sm:$0xff]
      %v353 = vld [vmem:[%s1 + $0x428] sm:$0xff]
      %v354 = vld [vmem:[%s1 + $0x430] sm:$0xff]
      %v355 = vld [vmem:[%s1 + $0x438] sm:$0xff]
      %v356 = vld [vmem:[%s1 + $0x440] sm:$0xff]
      %v357 = vld [vmem:[%s1 + $0x448] sm:$0xff]
      %v358 = vld [vmem:[%s1 + $0x450] sm:$0xff]
      %v359 = vld [vmem:[%s1 + $0x458] sm:$0xff]
      %v360 = vld [vmem:[%s1 + $0x460] sm:$0xff]
      %v361 = vld [vmem:[%s1 + $0x468] sm:$0xff]
      %v362 = vld [vmem:[%s1 + $0x470] sm:$0xff]
      %v363 = vld [vmem:[%s1 + $0x478] sm:$0xff]
      %v364 = vld [vmem:[%s2] sm:$0x3]
      %v366 = vlaneseq
      %v367 = vshrl.u32 %v366, 7
      %v368 = vsub.s32 0, %v367
      %v369 = vrot.slane %v364, %v368
      %v370 = vlaneseq
      %v371 = vshrl.u32 %v370, 7
      %v372 = vsub.s32 1, %v371
      %v373 = vrot.slane %v364, %v372
      %v416 = vunpack.c.l.b16 %v180
      %v417 = vunpack.c.h.b16 %v180
      %v418 = vunpack.c.l.b16 %v181
      %v419 = vunpack.c.h.b16 %v181
      %v420 = vunpack.c.l.b16 %v182
      %v421 = vunpack.c.h.b16 %v182
      %v422 = vunpack.c.l.b16 %v183
      %v423 = vunpack.c.h.b16 %v183
      %v424 = vunpack.c.l.b16 %v184
      %v425 = vunpack.c.l.b16 %v185
      %v426 = vunpack.c.h.b16 %v185
      %v427 = vunpack.c.l.b16 %v186
      %v428 = vunpack.c.h.b16 %v186
      %v429 = vunpack.c.l.b16 %v187
      %v430 = vunpack.c.h.b16 %v187
      %v431 = vunpack.c.l.b16 %v188
      %v432 = vunpack.c.h.b16 %v188
      %v433 = vunpack.c.l.b16 %v189
      %v434 = vunpack.c.l.b16 %v190
      %v435 = vunpack.c.h.b16 %v190
      %v436 = vunpack.c.l.b16 %v191
      %v437 = vunpack.c.h.b16 %v191
      %v438 = vunpack.c.l.b16 %v192
      %v439 = vunpack.c.h.b16 %v192
      %v440 = vunpack.c.l.b16 %v193
      %v441 = vunpack.c.h.b16 %v193
      %v442 = vunpack.c.l.b16 %v194
      %v443 = vunpack.c.l.b16 %v195
      %v444 = vunpack.c.h.b16 %v195
      %v445 = vunpack.c.l.b16 %v196
      %v446 = vunpack.c.h.b16 %v196
      %v447 = vunpack.c.l.b16 %v197
      %v448 = vunpack.c.h.b16 %v197
      %v449 = vunpack.c.l.b16 %v198
      %v450 = vunpack.c.h.b16 %v198
      %v451 = vunpack.c.l.b16 %v199
      %v452 = vunpack.c.l.b16 %v200
      %v453 = vunpack.c.h.b16 %v200
      %v454 = vunpack.c.l.b16 %v201
      %v455 = vunpack.c.h.b16 %v201
      %v456 = vunpack.c.l.b16 %v202
      %v457 = vunpack.c.h.b16 %v202
      %v458 = vunpack.c.l.b16 %v203
      %v459 = vunpack.c.h.b16 %v203
      %v460 = vunpack.c.l.b16 %v204
      %v461 = vunpack.c.l.b16 %v205
      %v462 = vunpack.c.h.b16 %v205
      %v463 = vunpack.c.l.b16 %v206
      %v464 = vunpack.c.h.b16 %v206
      %v465 = vunpack.c.l.b16 %v207
      %v466 = vunpack.c.h.b16 %v207
      %v467 = vunpack.c.l.b16 %v208
      %v468 = vunpack.c.h.b16 %v208
      %v469 = vunpack.c.l.b16 %v209
      %v470 = vunpack.c.l.b16 %v210
      %v471 = vunpack.c.h.b16 %v210
      %v472 = vunpack.c.l.b16 %v211
      %v473 = vunpack.c.h.b16 %v211
      %v474 = vunpack.c.l.b16 %v212
      %v475 = vunpack.c.h.b16 %v212
      %v476 = vunpack.c.l.b16 %v213
      %v477 = vunpack.c.h.b16 %v213
      %v478 = vunpack.c.l.b16 %v214
      %v479 = vunpack.c.l.b16 %v215
      %v480 = vunpack.c.h.b16 %v215
      %v481 = vunpack.c.l.b16 %v216
      %v482 = vunpack.c.h.b16 %v216
      %v483 = vunpack.c.l.b16 %v217
      %v484 = vunpack.c.h.b16 %v217
      %v485 = vunpack.c.l.b16 %v218
      %v486 = vunpack.c.h.b16 %v218
      %v487 = vunpack.c.l.b16 %v219
      %v488 = vpack.c.b16 %v425, %v416
      %v489 = vpack.c.b16 %v426, %v417
      %v490 = vpack.c.b16 %v427, %v418
      %v491 = vpack.c.b16 %v428, %v419
      %v492 = vpack.c.b16 %v429, %v420
      %v493 = vpack.c.b16 %v430, %v421
      %v494 = vpack.c.b16 %v431, %v422
      %v495 = vpack.c.b16 %v432, %v423
      %v496 = vpack.c.b16 %v433, %v424
      %v497 = vpack.c.b16 %v443, %v434
      %v498 = vpack.c.b16 %v444, %v435
      %v499 = vpack.c.b16 %v445, %v436
      %v500 = vpack.c.b16 %v446, %v437
      %v501 = vpack.c.b16 %v447, %v438
      %v502 = vpack.c.b16 %v448, %v439
      %v503 = vpack.c.b16 %v449, %v440
      %v504 = vpack.c.b16 %v450, %v441
      %v505 = vpack.c.b16 %v451, %v442
      %v506 = vpack.c.b16 %v461, %v452
      %v507 = vpack.c.b16 %v462, %v453
      %v508 = vpack.c.b16 %v463, %v454
      %v509 = vpack.c.b16 %v464, %v455
      %v510 = vpack.c.b16 %v465, %v456
      %v511 = vpack.c.b16 %v466, %v457
      %v512 = vpack.c.b16 %v467, %v458
      %v513 = vpack.c.b16 %v468, %v459
      %v514 = vpack.c.b16 %v469, %v460
      %v515 = vpack.c.b16 %v479, %v470
      %v516 = vpack.c.b16 %v480, %v471
      %v517 = vpack.c.b16 %v481, %v472
      %v518 = vpack.c.b16 %v482, %v473
      %v519 = vpack.c.b16 %v483, %v474
      %v520 = vpack.c.b16 %v484, %v475
      %v521 = vpack.c.b16 %v485, %v476
      %v522 = vpack.c.b16 %v486, %v477
      %v523 = vpack.c.b16 %v487, %v478
      %v704 = vunpack.c.l.b16 %v220
      %v705 = vunpack.c.h.b16 %v220
      %v706 = vunpack.c.l.b16 %v221
      %v707 = vunpack.c.h.b16 %v221
      %v708 = vunpack.c.l.b16 %v222
      %v709 = vunpack.c.h.b16 %v222
      %v710 = vunpack.c.l.b16 %v223
      %v711 = vunpack.c.h.b16 %v223
      %v712 = vunpack.c.l.b16 %v224
      %v713 = vunpack.c.h.b16 %v224
      %v714 = vunpack.c.l.b16 %v225
      %v715 = vunpack.c.h.b16 %v225
      %v716 = vunpack.c.l.b16 %v226
      %v717 = vunpack.c.h.b16 %v226
      %v718 = vunpack.c.l.b16 %v227
      %v719 = vunpack.c.h.b16 %v227
      %v720 = vunpack.c.l.b16 %v228
      %v721 = vunpack.c.h.b16 %v228
      %v722 = vunpack.c.l.b16 %v229
      %v723 = vunpack.c.h.b16 %v229
      %v724 = vunpack.c.l.b16 %v230
      %v725 = vunpack.c.h.b16 %v230
      %v726 = vunpack.c.l.b16 %v231
      %v727 = vunpack.c.h.b16 %v231
      %v728 = vunpack.c.l.b16 %v232
      %v729 = vunpack.c.h.b16 %v232
      %v730 = vunpack.c.l.b16 %v233
      %v731 = vunpack.c.h.b16 %v233
      %v732 = vunpack.c.l.b16 %v234
      %v733 = vunpack.c.h.b16 %v234
      %v734 = vunpack.c.l.b16 %v235
      %v735 = vunpack.c.h.b16 %v235
      %v736 = vunpack.c.l.b16 %v236
      %v737 = vunpack.c.h.b16 %v236
      %v738 = vunpack.c.l.b16 %v237
      %v739 = vunpack.c.h.b16 %v237
      %v740 = vunpack.c.l.b16 %v238
      %v741 = vunpack.c.h.b16 %v238
      %v742 = vunpack.c.l.b16 %v239
      %v743 = vunpack.c.h.b16 %v239
      %v744 = vunpack.c.l.b16 %v240
      %v745 = vunpack.c.h.b16 %v240
      %v746 = vunpack.c.l.b16 %v241
      %v747 = vunpack.c.h.b16 %v241
      %v748 = vunpack.c.l.b16 %v242
      %v749 = vunpack.c.h.b16 %v242
      %v750 = vunpack.c.l.b16 %v243
      %v751 = vunpack.c.h.b16 %v243
      %v752 = vunpack.c.l.b16 %v244
      %v753 = vunpack.c.h.b16 %v244
      %v754 = vunpack.c.l.b16 %v245
      %v755 = vunpack.c.h.b16 %v245
      %v756 = vunpack.c.l.b16 %v246
      %v757 = vunpack.c.h.b16 %v246
      %v758 = vunpack.c.l.b16 %v247
      %v759 = vunpack.c.h.b16 %v247
      %v760 = vunpack.c.l.b16 %v248
      %v761 = vunpack.c.h.b16 %v248
      %v762 = vunpack.c.l.b16 %v249
      %v763 = vunpack.c.h.b16 %v249
      %v764 = vunpack.c.l.b16 %v250
      %v765 = vunpack.c.h.b16 %v250
      %v766 = vunpack.c.l.b16 %v251
      %v767 = vunpack.c.h.b16 %v251
      %v768 = vunpack.c.l.b16 %v252
      %v769 = vunpack.c.h.b16 %v252
      %v770 = vunpack.c.l.b16 %v253
      %v771 = vunpack.c.h.b16 %v253
      %v772 = vunpack.c.l.b16 %v254
      %v773 = vunpack.c.h.b16 %v254
      %v774 = vunpack.c.l.b16 %v255
      %v775 = vunpack.c.h.b16 %v255
      %v776 = vunpack.c.l.b16 %v256
      %v777 = vunpack.c.h.b16 %v256
      %v778 = vunpack.c.l.b16 %v257
      %v779 = vunpack.c.h.b16 %v257
      %v780 = vunpack.c.l.b16 %v258
      %v781 = vunpack.c.h.b16 %v258
      %v782 = vunpack.c.l.b16 %v259
      %v783 = vunpack.c.h.b16 %v259
      %v784 = vunpack.c.l.b16 %v260
      %v785 = vunpack.c.h.b16 %v260
      %v786 = vunpack.c.l.b16 %v261
      %v787 = vunpack.c.h.b16 %v261
      %v788 = vunpack.c.l.b16 %v262
      %v789 = vunpack.c.h.b16 %v262
      %v790 = vunpack.c.l.b16 %v263
      %v791 = vunpack.c.h.b16 %v263
      %v792 = vunpack.c.l.b16 %v264
      %v793 = vunpack.c.h.b16 %v264
      %v794 = vunpack.c.l.b16 %v265
      %v795 = vunpack.c.h.b16 %v265
      %v796 = vunpack.c.l.b16 %v266
      %v797 = vunpack.c.h.b16 %v266
      %v798 = vunpack.c.l.b16 %v267
      %v799 = vunpack.c.h.b16 %v267
      %v800 = vunpack.c.l.b16 %v268
      %v801 = vunpack.c.h.b16 %v268
      %v802 = vunpack.c.l.b16 %v269
      %v803 = vunpack.c.h.b16 %v269
      %v804 = vunpack.c.l.b16 %v270
      %v805 = vunpack.c.h.b16 %v270
      %v806 = vunpack.c.l.b16 %v271
      %v807 = vunpack.c.h.b16 %v271
      %v808 = vunpack.c.l.b16 %v272
      %v809 = vunpack.c.h.b16 %v272
      %v810 = vunpack.c.l.b16 %v273
      %v811 = vunpack.c.h.b16 %v273
      %v812 = vunpack.c.l.b16 %v274
      %v813 = vunpack.c.h.b16 %v274
      %v814 = vunpack.c.l.b16 %v275
      %v815 = vunpack.c.h.b16 %v275
      %v816 = vunpack.c.l.b16 %v276
      %v817 = vunpack.c.h.b16 %v276
      %v818 = vunpack.c.l.b16 %v277
      %v819 = vunpack.c.h.b16 %v277
      %v820 = vunpack.c.l.b16 %v278
      %v821 = vunpack.c.h.b16 %v278
      %v822 = vunpack.c.l.b16 %v279
      %v823 = vunpack.c.h.b16 %v279
      %v824 = vunpack.c.l.b16 %v280
      %v825 = vunpack.c.h.b16 %v280
      %v826 = vunpack.c.l.b16 %v281
      %v827 = vunpack.c.h.b16 %v281
      %v828 = vunpack.c.l.b16 %v282
      %v829 = vunpack.c.h.b16 %v282
      %v830 = vunpack.c.l.b16 %v283
      %v831 = vunpack.c.h.b16 %v283
      %v832 = vunpack.c.l.b16 %v284
      %v833 = vunpack.c.h.b16 %v284
      %v834 = vunpack.c.l.b16 %v285
      %v835 = vunpack.c.h.b16 %v285
      %v836 = vunpack.c.l.b16 %v286
      %v837 = vunpack.c.h.b16 %v286
      %v838 = vunpack.c.l.b16 %v287
      %v839 = vunpack.c.h.b16 %v287
      %v840 = vunpack.c.l.b16 %v288
      %v841 = vunpack.c.h.b16 %v288
      %v842 = vunpack.c.l.b16 %v289
      %v843 = vunpack.c.h.b16 %v289
      %v844 = vunpack.c.l.b16 %v290
      %v845 = vunpack.c.h.b16 %v290
      %v846 = vunpack.c.l.b16 %v291
      %v847 = vunpack.c.h.b16 %v291
      %v848 = vunpack.c.l.b16 %v292
      %v849 = vunpack.c.h.b16 %v292
      %v850 = vunpack.c.l.b16 %v293
      %v851 = vunpack.c.h.b16 %v293
      %v852 = vunpack.c.l.b16 %v294
      %v853 = vunpack.c.h.b16 %v294
      %v854 = vunpack.c.l.b16 %v295
      %v855 = vunpack.c.h.b16 %v295
      %v856 = vunpack.c.l.b16 %v296
      %v857 = vunpack.c.h.b16 %v296
      %v858 = vunpack.c.l.b16 %v297
      %v859 = vunpack.c.h.b16 %v297
      %v860 = vunpack.c.l.b16 %v298
      %v861 = vunpack.c.h.b16 %v298
      %v862 = vunpack.c.l.b16 %v299
      %v863 = vunpack.c.h.b16 %v299
      %v864 = vunpack.c.l.b16 %v300
      %v865 = vunpack.c.h.b16 %v300
      %v866 = vunpack.c.l.b16 %v301
      %v867 = vunpack.c.h.b16 %v301
      %v868 = vunpack.c.l.b16 %v302
      %v869 = vunpack.c.h.b16 %v302
      %v870 = vunpack.c.l.b16 %v303
      %v871 = vunpack.c.h.b16 %v303
      %v872 = vunpack.c.l.b16 %v304
      %v873 = vunpack.c.h.b16 %v304
      %v874 = vunpack.c.l.b16 %v305
      %v875 = vunpack.c.h.b16 %v305
      %v876 = vunpack.c.l.b16 %v306
      %v877 = vunpack.c.h.b16 %v306
      %v878 = vunpack.c.l.b16 %v307
      %v879 = vunpack.c.h.b16 %v307
      %v880 = vunpack.c.l.b16 %v308
      %v881 = vunpack.c.h.b16 %v308
      %v882 = vunpack.c.l.b16 %v309
      %v883 = vunpack.c.h.b16 %v309
      %v884 = vunpack.c.l.b16 %v310
      %v885 = vunpack.c.h.b16 %v310
      %v886 = vunpack.c.l.b16 %v311
      %v887 = vunpack.c.h.b16 %v311
      %v888 = vunpack.c.l.b16 %v312
      %v889 = vunpack.c.h.b16 %v312
      %v890 = vunpack.c.l.b16 %v313
      %v891 = vunpack.c.h.b16 %v313
      %v892 = vunpack.c.l.b16 %v314
      %v893 = vunpack.c.h.b16 %v314
      %v894 = vunpack.c.l.b16 %v315
      %v895 = vunpack.c.h.b16 %v315
      %v896 = vunpack.c.l.b16 %v316
      %v897 = vunpack.c.h.b16 %v316
      %v898 = vunpack.c.l.b16 %v317
      %v899 = vunpack.c.h.b16 %v317
      %v900 = vunpack.c.l.b16 %v318
      %v901 = vunpack.c.h.b16 %v318
      %v902 = vunpack.c.l.b16 %v319
      %v903 = vunpack.c.h.b16 %v319
      %v904 = vunpack.c.l.b16 %v320
      %v905 = vunpack.c.h.b16 %v320
      %v906 = vunpack.c.l.b16 %v321
      %v907 = vunpack.c.h.b16 %v321
      %v908 = vunpack.c.l.b16 %v322
      %v909 = vunpack.c.h.b16 %v322
      %v910 = vunpack.c.l.b16 %v323
      %v911 = vunpack.c.h.b16 %v323
      %v912 = vunpack.c.l.b16 %v324
      %v913 = vunpack.c.h.b16 %v324
      %v914 = vunpack.c.l.b16 %v325
      %v915 = vunpack.c.h.b16 %v325
      %v916 = vunpack.c.l.b16 %v326
      %v917 = vunpack.c.h.b16 %v326
      %v918 = vunpack.c.l.b16 %v327
      %v919 = vunpack.c.h.b16 %v327
      %v920 = vunpack.c.l.b16 %v328
      %v921 = vunpack.c.h.b16 %v328
      %v922 = vunpack.c.l.b16 %v329
      %v923 = vunpack.c.h.b16 %v329
      %v924 = vunpack.c.l.b16 %v330
      %v925 = vunpack.c.h.b16 %v330
      %v926 = vunpack.c.l.b16 %v331
      %v927 = vunpack.c.h.b16 %v331
      %v928 = vunpack.c.l.b16 %v332
      %v929 = vunpack.c.h.b16 %v332
      %v930 = vunpack.c.l.b16 %v333
      %v931 = vunpack.c.h.b16 %v333
      %v932 = vunpack.c.l.b16 %v334
      %v933 = vunpack.c.h.b16 %v334
      %v934 = vunpack.c.l.b16 %v335
      %v935 = vunpack.c.h.b16 %v335
      %v936 = vunpack.c.l.b16 %v336
      %v937 = vunpack.c.h.b16 %v336
      %v938 = vunpack.c.l.b16 %v337
      %v939 = vunpack.c.h.b16 %v337
      %v940 = vunpack.c.l.b16 %v338
      %v941 = vunpack.c.h.b16 %v338
      %v942 = vunpack.c.l.b16 %v339
      %v943 = vunpack.c.h.b16 %v339
      %v944 = vunpack.c.l.b16 %v340
      %v945 = vunpack.c.h.b16 %v340
      %v946 = vunpack.c.l.b16 %v341
      %v947 = vunpack.c.h.b16 %v341
      %v948 = vunpack.c.l.b16 %v342
      %v949 = vunpack.c.h.b16 %v342
      %v950 = vunpack.c.l.b16 %v343
      %v951 = vunpack.c.h.b16 %v343
      %v952 = vunpack.c.l.b16 %v344
      %v953 = vunpack.c.h.b16 %v344
      %v954 = vunpack.c.l.b16 %v345
      %v955 = vunpack.c.h.b16 %v345
      %v956 = vunpack.c.l.b16 %v346
      %v957 = vunpack.c.h.b16 %v346
      %v958 = vunpack.c.l.b16 %v347
      %v959 = vunpack.c.h.b16 %v347
      %v960 = vunpack.c.l.b16 %v348
      %v961 = vunpack.c.h.b16 %v348
      %v962 = vunpack.c.l.b16 %v349
      %v963 = vunpack.c.h.b16 %v349
      %v964 = vunpack.c.l.b16 %v350
      %v965 = vunpack.c.h.b16 %v350
      %v966 = vunpack.c.l.b16 %v351
      %v967 = vunpack.c.h.b16 %v351
      %v968 = vunpack.c.l.b16 %v352
      %v969 = vunpack.c.h.b16 %v352
      %v970 = vunpack.c.l.b16 %v353
      %v971 = vunpack.c.h.b16 %v353
      %v972 = vunpack.c.l.b16 %v354
      %v973 = vunpack.c.h.b16 %v354
      %v974 = vunpack.c.l.b16 %v355
      %v975 = vunpack.c.h.b16 %v355
      %v976 = vunpack.c.l.b16 %v356
      %v977 = vunpack.c.h.b16 %v356
      %v978 = vunpack.c.l.b16 %v357
      %v979 = vunpack.c.h.b16 %v357
      %v980 = vunpack.c.l.b16 %v358
      %v981 = vunpack.c.h.b16 %v358
      %v982 = vunpack.c.l.b16 %v359
      %v983 = vunpack.c.h.b16 %v359
      %v984 = vunpack.c.l.b16 %v360
      %v985 = vunpack.c.h.b16 %v360
      %v986 = vunpack.c.l.b16 %v361
      %v987 = vunpack.c.h.b16 %v361
      %v988 = vunpack.c.l.b16 %v362
      %v989 = vunpack.c.h.b16 %v362
      %v990 = vunpack.c.l.b16 %v363
      %v991 = vunpack.c.h.b16 %v363
      %v992 = vpack.c.b16 %v706, %v704
      %v993 = vpack.c.b16 %v707, %v705
      %v994 = vpack.c.b16 %v710, %v708
      %v995 = vpack.c.b16 %v711, %v709
      %v996 = vpack.c.b16 %v714, %v712
      %v997 = vpack.c.b16 %v715, %v713
      %v998 = vpack.c.b16 %v718, %v716
      %v999 = vpack.c.b16 %v719, %v717
      %v1000 = vpack.c.b16 %v722, %v720
      %v1001 = vpack.c.b16 %v723, %v721
      %v1002 = vpack.c.b16 %v726, %v724
      %v1003 = vpack.c.b16 %v727, %v725
      %v1004 = vpack.c.b16 %v730, %v728
      %v1005 = vpack.c.b16 %v731, %v729
      %v1006 = vpack.c.b16 %v734, %v732
      %v1007 = vpack.c.b16 %v735, %v733
      %v1008 = vpack.c.b16 %v738, %v736
      %v1009 = vpack.c.b16 %v739, %v737
      %v1010 = vpack.c.b16 %v742, %v740
      %v1011 = vpack.c.b16 %v743, %v741
      %v1012 = vpack.c.b16 %v746, %v744
      %v1013 = vpack.c.b16 %v747, %v745
      %v1014 = vpack.c.b16 %v750, %v748
      %v1015 = vpack.c.b16 %v751, %v749
      %v1016 = vpack.c.b16 %v754, %v752
      %v1017 = vpack.c.b16 %v755, %v753
      %v1018 = vpack.c.b16 %v758, %v756
      %v1019 = vpack.c.b16 %v759, %v757
      %v1020 = vpack.c.b16 %v762, %v760
      %v1021 = vpack.c.b16 %v763, %v761
      %v1022 = vpack.c.b16 %v766, %v764
      %v1023 = vpack.c.b16 %v767, %v765
      %v1024 = vpack.c.b16 %v770, %v768
      %v1025 = vpack.c.b16 %v771, %v769
      %v1026 = vpack.c.b16 %v774, %v772
      %v1027 = vpack.c.b16 %v775, %v773
      %v1028 = vpack.c.b16 %v778, %v776
      %v1029 = vpack.c.b16 %v779, %v777
      %v1030 = vpack.c.b16 %v782, %v780
      %v1031 = vpack.c.b16 %v783, %v781
      %v1032 = vpack.c.b16 %v786, %v784
      %v1033 = vpack.c.b16 %v787, %v785
      %v1034 = vpack.c.b16 %v790, %v788
      %v1035 = vpack.c.b16 %v791, %v789
      %v1036 = vpack.c.b16 %v794, %v792
      %v1037 = vpack.c.b16 %v795, %v793
      %v1038 = vpack.c.b16 %v798, %v796
      %v1039 = vpack.c.b16 %v799, %v797
      %v1040 = vpack.c.b16 %v802, %v800
      %v1041 = vpack.c.b16 %v803, %v801
      %v1042 = vpack.c.b16 %v806, %v804
      %v1043 = vpack.c.b16 %v807, %v805
      %v1044 = vpack.c.b16 %v810, %v808
      %v1045 = vpack.c.b16 %v811, %v809
      %v1046 = vpack.c.b16 %v814, %v812
      %v1047 = vpack.c.b16 %v815, %v813
      %v1048 = vpack.c.b16 %v818, %v816
      %v1049 = vpack.c.b16 %v819, %v817
      %v1050 = vpack.c.b16 %v822, %v820
      %v1051 = vpack.c.b16 %v823, %v821
      %v1052 = vpack.c.b16 %v826, %v824
      %v1053 = vpack.c.b16 %v827, %v825
      %v1054 = vpack.c.b16 %v830, %v828
      %v1055 = vpack.c.b16 %v831, %v829
      %v1056 = vpack.c.b16 %v834, %v832
      %v1057 = vpack.c.b16 %v835, %v833
      %v1058 = vpack.c.b16 %v838, %v836
      %v1059 = vpack.c.b16 %v839, %v837
      %v1060 = vpack.c.b16 %v842, %v840
      %v1061 = vpack.c.b16 %v843, %v841
      %v1062 = vpack.c.b16 %v846, %v844
      %v1063 = vpack.c.b16 %v847, %v845
      %v1064 = vpack.c.b16 %v850, %v848
      %v1065 = vpack.c.b16 %v851, %v849
      %v1066 = vpack.c.b16 %v854, %v852
      %v1067 = vpack.c.b16 %v855, %v853
      %v1068 = vpack.c.b16 %v858, %v856
      %v1069 = vpack.c.b16 %v859, %v857
      %v1070 = vpack.c.b16 %v862, %v860
      %v1071 = vpack.c.b16 %v863, %v861
      %v1072 = vpack.c.b16 %v866, %v864
      %v1073 = vpack.c.b16 %v867, %v865
      %v1074 = vpack.c.b16 %v870, %v868
      %v1075 = vpack.c.b16 %v871, %v869
      %v1076 = vpack.c.b16 %v874, %v872
      %v1077 = vpack.c.b16 %v875, %v873
      %v1078 = vpack.c.b16 %v878, %v876
      %v1079 = vpack.c.b16 %v879, %v877
      %v1080 = vpack.c.b16 %v882, %v880
      %v1081 = vpack.c.b16 %v883, %v881
      %v1082 = vpack.c.b16 %v886, %v884
      %v1083 = vpack.c.b16 %v887, %v885
      %v1084 = vpack.c.b16 %v890, %v888
      %v1085 = vpack.c.b16 %v891, %v889
      %v1086 = vpack.c.b16 %v894, %v892
      %v1087 = vpack.c.b16 %v895, %v893
      %v1088 = vpack.c.b16 %v898, %v896
      %v1089 = vpack.c.b16 %v899, %v897
      %v1090 = vpack.c.b16 %v902, %v900
      %v1091 = vpack.c.b16 %v903, %v901
      %v1092 = vpack.c.b16 %v906, %v904
      %v1093 = vpack.c.b16 %v907, %v905
      %v1094 = vpack.c.b16 %v910, %v908
      %v1095 = vpack.c.b16 %v911, %v909
      %v1096 = vpack.c.b16 %v914, %v912
      %v1097 = vpack.c.b16 %v915, %v913
      %v1098 = vpack.c.b16 %v918, %v916
      %v1099 = vpack.c.b16 %v919, %v917
      %v1100 = vpack.c.b16 %v922, %v920
      %v1101 = vpack.c.b16 %v923, %v921
      %v1102 = vpack.c.b16 %v926, %v924
      %v1103 = vpack.c.b16 %v927, %v925
      %v1104 = vpack.c.b16 %v930, %v928
      %v1105 = vpack.c.b16 %v931, %v929
      %v1106 = vpack.c.b16 %v934, %v932
      %v1107 = vpack.c.b16 %v935, %v933
      %v1108 = vpack.c.b16 %v938, %v936
      %v1109 = vpack.c.b16 %v939, %v937
      %v1110 = vpack.c.b16 %v942, %v940
      %v1111 = vpack.c.b16 %v943, %v941
      %v1112 = vpack.c.b16 %v946, %v944
      %v1113 = vpack.c.b16 %v947, %v945
      %v1114 = vpack.c.b16 %v950, %v948
      %v1115 = vpack.c.b16 %v951, %v949
      %v1116 = vpack.c.b16 %v954, %v952
      %v1117 = vpack.c.b16 %v955, %v953
      %v1118 = vpack.c.b16 %v958, %v956
      %v1119 = vpack.c.b16 %v959, %v957
      %v1120 = vpack.c.b16 %v962, %v960
      %v1121 = vpack.c.b16 %v963, %v961
      %v1122 = vpack.c.b16 %v966, %v964
      %v1123 = vpack.c.b16 %v967, %v965
      %v1124 = vpack.c.b16 %v970, %v968
      %v1125 = vpack.c.b16 %v971, %v969
      %v1126 = vpack.c.b16 %v974, %v972
      %v1127 = vpack.c.b16 %v975, %v973
      %v1128 = vpack.c.b16 %v978, %v976
      %v1129 = vpack.c.b16 %v979, %v977
      %v1130 = vpack.c.b16 %v982, %v980
      %v1131 = vpack.c.b16 %v983, %v981
      %v1132 = vpack.c.b16 %v986, %v984
      %v1133 = vpack.c.b16 %v987, %v985
      %v1134 = vpack.c.b16 %v990, %v988
      %v1135 = vpack.c.b16 %v991, %v989
      %1280 = vmatprep.subr.bf16.mxu0 %v993
      %1281 = vmatpush1.bf16.msra.mxu0 %v992
      %1282 = vmatprep.subr.bf16.mxu0 %v995
      %1283 = vmatpush1.bf16.msra.mxu0 %v994
      %1284 = vmatprep.subr.bf16.mxu0 %v997
      %1285 = vmatpush1.bf16.msra.mxu0 %v996
      %1286 = vmatprep.subr.bf16.mxu0 %v999
      %1287 = vmatpush1.bf16.msra.mxu0 %v998
      %1288 = vmatprep.subr.bf16.mxu0 %v1001
      %1289 = vmatpush1.bf16.msra.mxu0 %v1000
      %1290 = vmatprep.subr.bf16.mxu0 %v1003
      %1291 = vmatpush1.bf16.msra.mxu0 %v1002
      %1292 = vmatprep.subr.bf16.mxu0 %v1005
      %1293 = vmatpush1.bf16.msra.mxu0 %v1004
      %1294 = vmatprep.subr.bf16.mxu0 %v1007
      %1295 = vmatpush1.bf16.msra.mxu0 %v1006
      %1296 = vmatprep.subr.bf16.mxu0 %v1009
      %1297 = vmatpush1.bf16.msra.mxu0 %v1008
      %1298 = vmatprep.subr.bf16.mxu0 %v1011
      %1299 = vmatpush1.bf16.msra.mxu0 %v1010
      %1300 = vmatprep.subr.bf16.mxu0 %v1013
      %1301 = vmatpush1.bf16.msra.mxu0 %v1012
      %1302 = vmatprep.subr.bf16.mxu0 %v1015
      %1303 = vmatpush1.bf16.msra.mxu0 %v1014
      %1304 = vmatprep.subr.bf16.mxu0 %v1017
      %1305 = vmatpush1.bf16.msra.mxu0 %v1016
      %1306 = vmatprep.subr.bf16.mxu0 %v1019
      %1307 = vmatpush1.bf16.msra.mxu0 %v1018
      %1308 = vmatprep.subr.bf16.mxu0 %v1021
      %1309 = vmatpush1.bf16.msra.mxu0 %v1020
      %1310 = vmatprep.subr.bf16.mxu0 %v1023
      %1311 = vmatpush1.bf16.msra.mxu0 %v1022
      %1312 = vmatprep.mubr.bf16.mxu0 %v489
      %1313 = vmatmul.mubr.bf16.gmra.mrb[0].mxu0 %v488
      %v1314 = vpop.f32.mrb[0].mxu0
      %v1315 = vadd.f32 %v369, %v1314
      %v1316 = vpop.f32.mrb[0].mxu0
      %v1317 = vadd.f32 %v373, %v1316
      %v1318 = vpop.f32.mrb[0].mxu0
      %v1319 = vadd.f32 %v369, %v1318
      %v1320 = vpop.f32.mrb[0].mxu0
      %v1321 = vadd.f32 %v373, %v1320
      %1322 = vmatprep.mubr.bf16.mxu0 %v498
      %1323 = vmatmul.mubr.bf16.gmra.mrb[0].mxu0 %v497
      %v1324 = vpop.f32.mrb[0].mxu0
      %v1325 = vadd.f32 %v369, %v1324
      %v1326 = vpop.f32.mrb[0].mxu0
      %v1327 = vadd.f32 %v373, %v1326
      %v1328 = vpop.f32.mrb[0].mxu0
      %v1329 = vadd.f32 %v369, %v1328
      %v1330 = vpop.f32.mrb[0].mxu0
      %v1331 = vadd.f32 %v373, %v1330
      %1332 = vmatprep.mubr.bf16.mxu0 %v507
      %1333 = vmatmul.mubr.bf16.gmra.mrb[0].mxu0 %v506
      %v1334 = vpop.f32.mrb[0].mxu0
      %v1335 = vadd.f32 %v369, %v1334
      %v1336 = vpop.f32.mrb[0].mxu0
      %v1337 = vadd.f32 %v373, %v1336
      %v1338 = vpop.f32.mrb[0].mxu0
      %v1339 = vadd.f32 %v369, %v1338
      %v1340 = vpop.f32.mrb[0].mxu0
      %v1341 = vadd.f32 %v373, %v1340
      %1342 = vmatprep.mubr.bf16.mxu0 %v516
      %1343 = vmatmul.mubr.bf16.gmra.mrb[0].mxu0 %v515
      %v1344 = vpop.f32.mrb[0].mxu0
      %v1345 = vadd.f32 %v369, %v1344
      %v1346 = vpop.f32.mrb[0].mxu0
      %v1347 = vadd.f32 %v373, %v1346
      %v1348 = vpop.f32.mrb[0].mxu0
      %v1349 = vadd.f32 %v369, %v1348
      %v1350 = vpop.f32.mrb[0].mxu0
      %v1351 = vadd.f32 %v373, %v1350
      %1352 = vdwg.mxu0
      %1353 = vmatprep.subr.bf16.mxu0 %v1025
      %1354 = vmatpush1.bf16.msra.mxu0 %v1024
      %1355 = vmatprep.subr.bf16.mxu0 %v1027
      %1356 = vmatpush1.bf16.msra.mxu0 %v1026
      %1357 = vmatprep.subr.bf16.mxu0 %v1029
      %1358 = vmatpush1.bf16.msra.mxu0 %v1028
      %1359 = vmatprep.subr.bf16.mxu0 %v1031
      %1360 = vmatpush1.bf16.msra.mxu0 %v1030
      %1361 = vmatprep.subr.bf16.mxu0 %v1033
      %1362 = vmatpush1.bf16.msra.mxu0 %v1032
      %1363 = vmatprep.subr.bf16.mxu0 %v1035
      %1364 = vmatpush1.bf16.msra.mxu0 %v1034
      %1365 = vmatprep.subr.bf16.mxu0 %v1037
      %1366 = vmatpush1.bf16.msra.mxu0 %v1036
      %1367 = vmatprep.subr.bf16.mxu0 %v1039
      %1368 = vmatpush1.bf16.msra.mxu0 %v1038
      %1369 = vmatprep.subr.bf16.mxu0 %v1041
      %1370 = vmatpush1.bf16.msra.mxu0 %v1040
      %1371 = vmatprep.subr.bf16.mxu0 %v1043
      %1372 = vmatpush1.bf16.msra.mxu0 %v1042
      %1373 = vmatprep.subr.bf16.mxu0 %v1045
      %1374 = vmatpush1.bf16.msra.mxu0 %v1044
      %1375 = vmatprep.subr.bf16.mxu0 %v1047
      %1376 = vmatpush1.bf16.msra.mxu0 %v1046
      %1377 = vmatprep.subr.bf16.mxu0 %v1049
      %1378 = vmatpush1.bf16.msra.mxu0 %v1048
      %1379 = vmatprep.subr.bf16.mxu0 %v1051
      %1380 = vmatpush1.bf16.msra.mxu0 %v1050
      %1381 = vmatprep.subr.bf16.mxu0 %v1053
      %1382 = vmatpush1.bf16.msra.mxu0 %v1052
      %1383 = vmatprep.subr.bf16.mxu0 %v1055
      %1384 = vmatpush1.bf16.msra.mxu0 %v1054
      %1385 = vmatprep.mubr.bf16.mxu0 %v491
      %1386 = vmatmul.mubr.bf16.gmra.mrb[0].mxu0 %v490
      %v1387 = vpop.f32.mrb[0].mxu0
      %v1388 = vadd.f32 %v1315, %v1387
      %v1389 = vpop.f32.mrb[0].mxu0
      %v1390 = vadd.f32 %v1317, %v1389
      %v1391 = vpop.f32.mrb[0].mxu0
      %v1392 = vadd.f32 %v1319, %v1391
      %v1393 = vpop.f32.mrb[0].mxu0
      %v1394 = vadd.f32 %v1321, %v1393
      %1395 = vmatprep.mubr.bf16.mxu0 %v500
      %1396 = vmatmul.mubr.bf16.gmra.mrb[0].mxu0 %v499
      %v1397 = vpop.f32.mrb[0].mxu0
      %v1398 = vadd.f32 %v1325, %v1397
      %v1399 = vpop.f32.mrb[0].mxu0
      %v1400 = vadd.f32 %v1327, %v1399
      %v1401 = vpop.f32.mrb[0].mxu0
      %v1402 = vadd.f32 %v1329, %v1401
      %v1403 = vpop.f32.mrb[0].mxu0
      %v1404 = vadd.f32 %v1331, %v1403
      %1405 = vmatprep.mubr.bf16.mxu0 %v509
      %1406 = vmatmul.mubr.bf16.gmra.mrb[0].mxu0 %v508
      %v1407 = vpop.f32.mrb[0].mxu0
      %v1408 = vadd.f32 %v1335, %v1407
      %v1409 = vpop.f32.mrb[0].mxu0
      %v1410 = vadd.f32 %v1337, %v1409
      %v1411 = vpop.f32.mrb[0].mxu0
      %v1412 = vadd.f32 %v1339, %v1411
      %v1413 = vpop.f32.mrb[0].mxu0
      %v1414 = vadd.f32 %v1341, %v1413
      %1415 = vmatprep.mubr.bf16.mxu0 %v518
      %1416 = vmatmul.mubr.bf16.gmra.mrb[0].mxu0 %v517
      %v1417 = vpop.f32.mrb[0].mxu0
      %v1418 = vadd.f32 %v1345, %v1417
      %v1419 = vpop.f32.mrb[0].mxu0
      %v1420 = vadd.f32 %v1347, %v1419
      %v1421 = vpop.f32.mrb[0].mxu0
      %v1422 = vadd.f32 %v1349, %v1421
      %v1423 = vpop.f32.mrb[0].mxu0
      %v1424 = vadd.f32 %v1351, %v1423
      %1425 = vdwg.mxu0
      %1426 = vmatprep.subr.bf16.mxu0 %v1057
      %1427 = vmatpush1.bf16.msra.mxu0 %v1056
      %1428 = vmatprep.subr.bf16.mxu0 %v1059
      %1429 = vmatpush1.bf16.msra.mxu0 %v1058
      %1430 = vmatprep.subr.bf16.mxu0 %v1061
      %1431 = vmatpush1.bf16.msra.mxu0 %v1060
      %1432 = vmatprep.subr.bf16.mxu0 %v1063
      %1433 = vmatpush1.bf16.msra.mxu0 %v1062
      %1434 = vmatprep.subr.bf16.mxu0 %v1065
      %1435 = vmatpush1.bf16.msra.mxu0 %v1064
      %1436 = vmatprep.subr.bf16.mxu0 %v1067
      %1437 = vmatpush1.bf16.msra.mxu0 %v1066
      %1438 = vmatprep.subr.bf16.mxu0 %v1069
      %1439 = vmatpush1.bf16.msra.mxu0 %v1068
      %1440 = vmatprep.subr.bf16.mxu0 %v1071
      %1441 = vmatpush1.bf16.msra.mxu0 %v1070
      %1442 = vmatprep.subr.bf16.mxu0 %v1073
      %1443 = vmatpush1.bf16.msra.mxu0 %v1072
      %1444 = vmatprep.subr.bf16.mxu0 %v1075
      %1445 = vmatpush1.bf16.msra.mxu0 %v1074
      %1446 = vmatprep.subr.bf16.mxu0 %v1077
      %1447 = vmatpush1.bf16.msra.mxu0 %v1076
      %1448 = vmatprep.subr.bf16.mxu0 %v1079
      %1449 = vmatpush1.bf16.msra.mxu0 %v1078
      %1450 = vmatprep.subr.bf16.mxu0 %v1081
      %1451 = vmatpush1.bf16.msra.mxu0 %v1080
      %1452 = vmatprep.subr.bf16.mxu0 %v1083
      %1453 = vmatpush1.bf16.msra.mxu0 %v1082
      %1454 = vmatprep.subr.bf16.mxu0 %v1085
      %1455 = vmatpush1.bf16.msra.mxu0 %v1084
      %1456 = vmatprep.subr.bf16.mxu0 %v1087
      %1457 = vmatpush1.bf16.msra.mxu0 %v1086
      %1458 = vmatprep.mubr.bf16.mxu0 %v493
      %1459 = vmatmul.mubr.bf16.gmra.mrb[0].mxu0 %v492
      %v1460 = vpop.f32.mrb[0].mxu0
      %v1461 = vadd.f32 %v1388, %v1460
      %v1462 = vpop.f32.mrb[0].mxu0
      %v1463 = vadd.f32 %v1390, %v1462
      %v1464 = vpop.f32.mrb[0].mxu0
      %v1465 = vadd.f32 %v1392, %v1464
      %v1466 = vpop.f32.mrb[0].mxu0
      %v1467 = vadd.f32 %v1394, %v1466
      %1468 = vmatprep.mubr.bf16.mxu0 %v502
      %1469 = vmatmul.mubr.bf16.gmra.mrb[0].mxu0 %v501
      %v1470 = vpop.f32.mrb[0].mxu0
      %v1471 = vadd.f32 %v1398, %v1470
      %v1472 = vpop.f32.mrb[0].mxu0
      %v1473 = vadd.f32 %v1400, %v1472
      %v1474 = vpop.f32.mrb[0].mxu0
      %v1475 = vadd.f32 %v1402, %v1474
      %v1476 = vpop.f32.mrb[0].mxu0
      %v1477 = vadd.f32 %v1404, %v1476
      %1478 = vmatprep.mubr.bf16.mxu0 %v511
      %1479 = vmatmul.mubr.bf16.gmra.mrb[0].mxu0 %v510
      %v1480 = vpop.f32.mrb[0].mxu0
      %v1481 = vadd.f32 %v1408, %v1480
      %v1482 = vpop.f32.mrb[0].mxu0
      %v1483 = vadd.f32 %v1410, %v1482
      %v1484 = vpop.f32.mrb[0].mxu0
      %v1485 = vadd.f32 %v1412, %v1484
      %v1486 = vpop.f32.mrb[0].mxu0
      %v1487 = vadd.f32 %v1414, %v1486
      %1488 = vmatprep.mubr.bf16.mxu0 %v520
      %1489 = vmatmul.mubr.bf16.gmra.mrb[0].mxu0 %v519
      %v1490 = vpop.f32.mrb[0].mxu0
      %v1491 = vadd.f32 %v1418, %v1490
      %v1492 = vpop.f32.mrb[0].mxu0
      %v1493 = vadd.f32 %v1420, %v1492
      %v1494 = vpop.f32.mrb[0].mxu0
      %v1495 = vadd.f32 %v1422, %v1494
      %v1496 = vpop.f32.mrb[0].mxu0
      %v1497 = vadd.f32 %v1424, %v1496
      %1498 = vdwg.mxu0
      %1499 = vmatprep.subr.bf16.mxu0 %v1089
      %1500 = vmatpush1.bf16.msra.mxu0 %v1088
      %1501 = vmatprep.subr.bf16.mxu0 %v1091
      %1502 = vmatpush1.bf16.msra.mxu0 %v1090
      %1503 = vmatprep.subr.bf16.mxu0 %v1093
      %1504 = vmatpush1.bf16.msra.mxu0 %v1092
      %1505 = vmatprep.subr.bf16.mxu0 %v1095
      %1506 = vmatpush1.bf16.msra.mxu0 %v1094
      %1507 = vmatprep.subr.bf16.mxu0 %v1097
      %1508 = vmatpush1.bf16.msra.mxu0 %v1096
      %1509 = vmatprep.subr.bf16.mxu0 %v1099
      %1510 = vmatpush1.bf16.msra.mxu0 %v1098
      %1511 = vmatprep.subr.bf16.mxu0 %v1101
      %1512 = vmatpush1.bf16.msra.mxu0 %v1100
      %1513 = vmatprep.subr.bf16.mxu0 %v1103
      %1514 = vmatpush1.bf16.msra.mxu0 %v1102
      %1515 = vmatprep.subr.bf16.mxu0 %v1105
      %1516 = vmatpush1.bf16.msra.mxu0 %v1104
      %1517 = vmatprep.subr.bf16.mxu0 %v1107
      %1518 = vmatpush1.bf16.msra.mxu0 %v1106
      %1519 = vmatprep.subr.bf16.mxu0 %v1109
      %1520 = vmatpush1.bf16.msra.mxu0 %v1108
      %1521 = vmatprep.subr.bf16.mxu0 %v1111
      %1522 = vmatpush1.bf16.msra.mxu0 %v1110
      %1523 = vmatprep.subr.bf16.mxu0 %v1113
      %1524 = vmatpush1.bf16.msra.mxu0 %v1112
      %1525 = vmatprep.subr.bf16.mxu0 %v1115
      %1526 = vmatpush1.bf16.msra.mxu0 %v1114
      %1527 = vmatprep.subr.bf16.mxu0 %v1117
      %1528 = vmatpush1.bf16.msra.mxu0 %v1116
      %1529 = vmatprep.subr.bf16.mxu0 %v1119
      %1530 = vmatpush1.bf16.msra.mxu0 %v1118
      %1531 = vmatprep.mubr.bf16.mxu0 %v495
      %1532 = vmatmul.mubr.bf16.gmra.mrb[0].mxu0 %v494
      %v1533 = vpop.f32.mrb[0].mxu0
      %v1534 = vadd.f32 %v1461, %v1533
      %v1535 = vpop.f32.mrb[0].mxu0
      %v1536 = vadd.f32 %v1463, %v1535
      %v1537 = vpop.f32.mrb[0].mxu0
      %v1538 = vadd.f32 %v1465, %v1537
      %v1539 = vpop.f32.mrb[0].mxu0
      %v1540 = vadd.f32 %v1467, %v1539
      %1541 = vmatprep.mubr.bf16.mxu0 %v504
      %1542 = vmatmul.mubr.bf16.gmra.mrb[0].mxu0 %v503
      %v1543 = vpop.f32.mrb[0].mxu0
      %v1544 = vadd.f32 %v1471, %v1543
      %v1545 = vpop.f32.mrb[0].mxu0
      %v1546 = vadd.f32 %v1473, %v1545
      %v1547 = vpop.f32.mrb[0].mxu0
      %v1548 = vadd.f32 %v1475, %v1547
      %v1549 = vpop.f32.mrb[0].mxu0
      %v1550 = vadd.f32 %v1477, %v1549
      %1551 = vmatprep.mubr.bf16.mxu0 %v513
      %1552 = vmatmul.mubr.bf16.gmra.mrb[0].mxu0 %v512
      %v1553 = vpop.f32.mrb[0].mxu0
      %v1554 = vadd.f32 %v1481, %v1553
      %v1555 = vpop.f32.mrb[0].mxu0
      %v1556 = vadd.f32 %v1483, %v1555
      %v1557 = vpop.f32.mrb[0].mxu0
      %v1558 = vadd.f32 %v1485, %v1557
      %v1559 = vpop.f32.mrb[0].mxu0
      %v1560 = vadd.f32 %v1487, %v1559
      %1561 = vmatprep.mubr.bf16.mxu0 %v522
      %1562 = vmatmul.mubr.bf16.gmra.mrb[0].mxu0 %v521
      %v1563 = vpop.f32.mrb[0].mxu0
      %v1564 = vadd.f32 %v1491, %v1563
      %v1565 = vpop.f32.mrb[0].mxu0
      %v1566 = vadd.f32 %v1493, %v1565
      %v1567 = vpop.f32.mrb[0].mxu0
      %v1568 = vadd.f32 %v1495, %v1567
      %v1569 = vpop.f32.mrb[0].mxu0
      %v1570 = vadd.f32 %v1497, %v1569
      %1571 = vdwg.mxu0
      %1572 = vmatprep.subr.bf16.mxu0 %v1121
      %1573 = vmatpush1.bf16.msra.mxu0 %v1120
      %1574 = vmatprep.subr.bf16.mxu0 %v1123
      %1575 = vmatpush1.bf16.msra.mxu0 %v1122
      %1576 = vmatprep.subr.bf16.mxu0 %v1125
      %1577 = vmatpush1.bf16.msra.mxu0 %v1124
      %1578 = vmatprep.subr.bf16.mxu0 %v1127
      %1579 = vmatpush1.bf16.msra.mxu0 %v1126
      %1580 = vmatprep.subr.bf16.mxu0 %v1129
      %1581 = vmatpush1.bf16.msra.mxu0 %v1128
      %1582 = vmatprep.subr.bf16.mxu0 %v1131
      %1583 = vmatpush1.bf16.msra.mxu0 %v1130
      %1584 = vmatprep.subr.bf16.mxu0 %v1133
      %1585 = vmatpush1.bf16.msra.mxu0 %v1132
      %1586 = vmatprep.subr.bf16.mxu0 %v1135
      %1587 = vmatpush1.bf16.msra.mxu0 %v1134
      %1588 = vmatprep.subr.bf16.mxu0 0
      %1589 = vmatpush1.bf16.msra.mxu0 0
      %1590 = vmatprep.subr.bf16.mxu0 0
      %1591 = vmatpush1.bf16.msra.mxu0 0
      %1592 = vmatprep.subr.bf16.mxu0 0
      %1593 = vmatpush1.bf16.msra.mxu0 0
      %1594 = vmatprep.subr.bf16.mxu0 0
      %1595 = vmatpush1.bf16.msra.mxu0 0
      %1596 = vmatprep.subr.bf16.mxu0 0
      %1597 = vmatpush1.bf16.msra.mxu0 0
      %1598 = vmatprep.subr.bf16.mxu0 0
      %1599 = vmatpush1.bf16.msra.mxu0 0
      %1600 = vmatprep.subr.bf16.mxu0 0
      %1601 = vmatpush1.bf16.msra.mxu0 0
      %1602 = vmatprep.subr.bf16.mxu0 0
      %1603 = vmatpush1.bf16.msra.mxu0 0
      %1604 = vmatprep.mubr.bf16.mxu0 0
      %1605 = vmatmul.mubr.bf16.gmra.mrb[0].mxu0 %v496
      %v1606 = vpop.f32.mrb[0].mxu0
      %v1607 = vadd.f32 %v1534, %v1606
      %v1608 = vpop.f32.mrb[0].mxu0
      %v1609 = vadd.f32 %v1536, %v1608
      %v1610 = vpop.f32.mrb[0].mxu0
      %v1611 = vadd.f32 %v1538, %v1610
      %v1612 = vpop.f32.mrb[0].mxu0
      %v1613 = vadd.f32 %v1540, %v1612
      %1614 = vmatprep.mubr.bf16.mxu0 0
      %1615 = vmatmul.mubr.bf16.gmra.mrb[0].mxu0 %v505
      %v1616 = vpop.f32.mrb[0].mxu0
      %v1617 = vadd.f32 %v1544, %v1616
      %v1618 = vpop.f32.mrb[0].mxu0
      %v1619 = vadd.f32 %v1546, %v1618
      %v1620 = vpop.f32.mrb[0].mxu0
      %v1621 = vadd.f32 %v1548, %v1620
      %v1622 = vpop.f32.mrb[0].mxu0
      %v1623 = vadd.f32 %v1550, %v1622
      %1624 = vmatprep.mubr.bf16.mxu0 0
      %1625 = vmatmul.mubr.bf16.gmra.mrb[0].mxu0 %v514
      %v1626 = vpop.f32.mrb[0].mxu0
      %v1627 = vadd.f32 %v1554, %v1626
      %v1628 = vpop.f32.mrb[0].mxu0
      %v1629 = vadd.f32 %v1556, %v1628
      %v1630 = vpop.f32.mrb[0].mxu0
      %v1631 = vadd.f32 %v1558, %v1630
      %v1632 = vpop.f32.mrb[0].mxu0
      %v1633 = vadd.f32 %v1560, %v1632
      %1634 = vmatprep.mubr.bf16.mxu0 0
      %1635 = vmatmul.mubr.bf16.gmra.mrb[0].mxu0 %v523
      %v1636 = vpop.f32.mrb[0].mxu0
      %v1637 = vadd.f32 %v1564, %v1636
      %v1638 = vpop.f32.mrb[0].mxu0
      %v1639 = vadd.f32 %v1566, %v1638
      %v1640 = vpop.f32.mrb[0].mxu0
      %v1641 = vadd.f32 %v1568, %v1640
      %v1642 = vpop.f32.mrb[0].mxu0
      %v1643 = vadd.f32 %v1570, %v1642
      %1644 = vdwg.mxu0
      %vm1645 = vcmp.gt.f32.partialorder %v1607, 0.0
      %vm1646 = vcmp.gt.f32.partialorder %v1609, 0.0
      %vm1647 = vcmp.gt.f32.partialorder %v1611, 0.0
      %vm1648 = vcmp.gt.f32.partialorder %v1613, 0.0
      %vm1649 = vcmp.gt.f32.partialorder %v1617, 0.0
      %vm1650 = vcmp.gt.f32.partialorder %v1619, 0.0
      %vm1651 = vcmp.gt.f32.partialorder %v1621, 0.0
      %vm1652 = vcmp.gt.f32.partialorder %v1623, 0.0
      %vm1653 = vcmp.gt.f32.partialorder %v1627, 0.0
      %vm1654 = vcmp.gt.f32.partialorder %v1629, 0.0
      %vm1655 = vcmp.gt.f32.partialorder %v1631, 0.0
      %vm1656 = vcmp.gt.f32.partialorder %v1633, 0.0
      %vm1657 = vcmp.gt.f32.partialorder %v1637, 0.0
      %vm1658 = vcmp.gt.f32.partialorder %v1639, 0.0
      %vm1659 = vcmp.gt.f32.partialorder %v1641, 0.0
      %vm1660 = vcmp.gt.f32.partialorder %v1643, 0.0
      %v1661 = vmul.f32 %v1607, 1.442695
      %v1662 = vpow.pop %v1661
      %v1663 = vmul.f32 %v1609, 1.442695
      %v1664 = vpow.pop %v1663
      %v1665 = vmul.f32 %v1611, 1.442695
      %v1666 = vpow.pop %v1665
      %v1667 = vmul.f32 %v1613, 1.442695
      %v1668 = vpow.pop %v1667
      %v1669 = vmul.f32 %v1617, 1.442695
      %v1670 = vpow.pop %v1669
      %v1671 = vmul.f32 %v1619, 1.442695
      %v1672 = vpow.pop %v1671
      %v1673 = vmul.f32 %v1621, 1.442695
      %v1674 = vpow.pop %v1673
      %v1675 = vmul.f32 %v1623, 1.442695
      %v1676 = vpow.pop %v1675
      %v1677 = vmul.f32 %v1627, 1.442695
      %v1678 = vpow.pop %v1677
      %v1679 = vmul.f32 %v1629, 1.442695
      %v1680 = vpow.pop %v1679
      %v1681 = vmul.f32 %v1631, 1.442695
      %v1682 = vpow.pop %v1681
      %v1683 = vmul.f32 %v1633, 1.442695
      %v1684 = vpow.pop %v1683
      %v1685 = vmul.f32 %v1637, 1.442695
      %v1686 = vpow.pop %v1685
      %v1687 = vmul.f32 %v1639, 1.442695
      %v1688 = vpow.pop %v1687
      %v1689 = vmul.f32 %v1641, 1.442695
      %v1690 = vpow.pop %v1689
      %v1691 = vmul.f32 %v1643, 1.442695
      %v1692 = vpow.pop %v1691
      %v1693 = vsub.f32 %v1662, 1.0
      %v1694 = vsub.f32 %v1664, 1.0
      %v1695 = vsub.f32 %v1666, 1.0
      %v1696 = vsub.f32 %v1668, 1.0
      %v1697 = vsub.f32 %v1670, 1.0
      %v1698 = vsub.f32 %v1672, 1.0
      %v1699 = vsub.f32 %v1674, 1.0
      %v1700 = vsub.f32 %v1676, 1.0
      %v1701 = vsub.f32 %v1678, 1.0
      %v1702 = vsub.f32 %v1680, 1.0
      %v1703 = vsub.f32 %v1682, 1.0
      %v1704 = vsub.f32 %v1684, 1.0
      %v1705 = vsub.f32 %v1686, 1.0
      %v1706 = vsub.f32 %v1688, 1.0
      %v1707 = vsub.f32 %v1690, 1.0
      %v1708 = vsub.f32 %v1692, 1.0
      %v1709 = vsel %vm1645, %v1607, %v1693
      %v1710 = vsel %vm1646, %v1609, %v1694
      %v1711 = vsel %vm1647, %v1611, %v1695
      %v1712 = vsel %vm1648, %v1613, %v1696
      %v1713 = vsel %vm1649, %v1617, %v1697
      %v1714 = vsel %vm1650, %v1619, %v1698
      %v1715 = vsel %vm1651, %v1621, %v1699
      %v1716 = vsel %vm1652, %v1623, %v1700
      %v1717 = vsel %vm1653, %v1627, %v1701
      %v1718 = vsel %vm1654, %v1629, %v1702
      %v1719 = vsel %vm1655, %v1631, %v1703
      %v1720 = vsel %vm1656, %v1633, %v1704
      %v1721 = vsel %vm1657, %v1637, %v1705
      %v1722 = vsel %vm1658, %v1639, %v1706
      %v1723 = vsel %vm1659, %v1641, %v1707
      %v1724 = vsel %vm1660, %v1643, %v1708
      %1725 = vst [vmem:[%s177] sm:$0xff] %v1709
      %1726 = vst [vmem:[%s177 + $0x8] sm:$0xff] %v1710
      %1727 = vst [vmem:[%s177 + $0x10] sm:$0xff] %v1711
      %1728 = vst [vmem:[%s177 + $0x18] sm:$0xff] %v1712
      %1729 = vst [vmem:[%s177 + $0x20] sm:$0xff] %v1713
      %1730 = vst [vmem:[%s177 + $0x28] sm:$0xff] %v1714
      %1731 = vst [vmem:[%s177 + $0x30] sm:$0xff] %v1715
      %1732 = vst [vmem:[%s177 + $0x38] sm:$0xff] %v1716
      %1733 = vst [vmem:[%s177 + $0x40] sm:$0xff] %v1717
      %1734 = vst [vmem:[%s177 + $0x48] sm:$0xff] %v1718
      %1735 = vst [vmem:[%s177 + $0x50] sm:$0xff] %v1719
      %1736 = vst [vmem:[%s177 + $0x58] sm:$0xff] %v1720
      %1737 = vst [vmem:[%s177 + $0x60] sm:$0xff] %v1721
      %1738 = vst [vmem:[%s177 + $0x68] sm:$0xff] %v1722
      %1739 = vst [vmem:[%s177 + $0x70] sm:$0xff] %v1723
      %1740 = vst [vmem:[%s177 + $0x78] sm:$0xff] %v1724
      %s1741 = smul.u32 8, %s14
      %p1742 = scmp.lt.s32.totalorder %s1741, 15
      %s1743 = scalar_select %p1742, %s1741, 15
      %s1744 = smul.addr %s1743, 2
      %s1745 = smul.addr %s1744, 8
      %s1746 = scalar_lea.vmem %s3, %s1745
      // Predicated region
      $region33: #{vae_forward.15} parent=31 // pred_check
        %p1747 = pneg %p100
      $region34: #{vae_forward.15} parent=31 // pred_check_branch
        %1749 = sbr.rel (%p1747) target = $region36
      $region35: #{vae_forward.15} parent=31 // pred_region
        %s1750 = smul.u32 8, %s14
      $region36: #{vae_forward.15} parent=31 // pred_fallthru
        _
    $region32: #{vae_forward.15} parent=5 // pred_fallthru
      _
    %p1751 = scmp.le.s32.totalorder 2, %s9
    // Predicated region
    $region37: #{vae_forward.15} parent=5 // pred_check
      %p1752 = pneg %p1751
    $region38: #{vae_forward.15} parent=5 // pred_check_branch
      %1754 = sbr.rel (%p1752) target = $region40
    $region39: #{vae_forward.15} parent=5 // pred_region
      %s1755 = ssub.s32 %s9, 2
      // Predicated region
      $region41: #{vae_forward.15} parent=39 // pred_check
        %p1756 = pneg %p106
      $region42: #{vae_forward.15} parent=39 // pred_check_branch
        %1758 = sbr.rel (%p1756) target = $region44
      $region43: #{vae_forward.15} parent=39 // pred_region
        %s1759 = smul.u32 8, %s15
        %p1760 = scmp.lt.s32.totalorder %s1759, 15
        %s1761 = scalar_select %p1760, %s1759, 15
        %s1762 = smul.addr %s1761, 2
        %s1763 = smul.addr %s1762, 8
        %s1764 = scalar_lea.vmem %s3, %s1763
      $region44: #{vae_forward.15} parent=39 // pred_fallthru
        _
    $region40: #{vae_forward.15} parent=5 // pred_fallthru
      _
  $region6: #{vae_forward.15} parent=0 // loop_footer
    %s13 = sadd.s32 1, %s9
  $region7: #{vae_forward.15} parent=0 // loop_footer_branch
    %8 = sbr.rel target = $region3
  $region8: #{vae_forward.15} parent=0 // loop_exit
    _

// kernel: tile.33
$region0: #{tile.33}
  #allocation0 [shape = 's32[1]{0}', space=sflag, size = 0x4, scoped, tag = 'scoped memory for tile.33']
  %s0 = inlined_call_operand.vmem [shape: f32[32], index: 0, kind: input, shape index: {}]
  %s1 = inlined_call_operand.vmem [shape: f32[4,32], index: 1, kind: output, shape index: {}]
  // Predicated region
  $region2: #{tile.33} parent=0 // pred_check
    _
  $region3: #{tile.33} parent=0 // pred_check_branch
    %3 = sbr.rel (0) target = $region5
  $region4: #{tile.33} parent=0 // pred_region
    _
  $region5: #{tile.33} parent=0 // pred_fallthru
    _
  %v4 = vld [vmem:[%s0] ss:$0 sm:$0xff]
  %5 = vst [vmem:[%s1] sm:$0xf] %v4

// kernel: tile.34
$region0: #{tile.34}
  %s0 = inlined_call_operand.vmem [shape: f32[4,32], index: 0, kind: input, shape index: {}]
  %s1 = inlined_call_operand.vmem [shape: f32[1,128], index: 1, kind: output, shape index: {}]
  $region1: #{tile.34} parent=0
    #allocation0 [shape = 'u8[4096]{0}', space=vmem, size = 0x1000, scoped, tag = 'scoped mem for output reshape']
    #allocation1 [shape = 'u8[4096]{0}', space=vmem, size = 0x1000, scoped, tag = 'scoped mem for input reshape']
    %s3 = sshllo.u32 0, 4
    %v4 = vld [vmem:[%s0] sm:%s3]
    %5 = vst [vmem:[#allocation1] sm:%s3] %v4
    %v6 = vld [vmem:[#allocation1] sm:$0x1]
    %vm7 = vcmask 261120
    %8 = vst.msk [vmem:[#allocation0] sm:$0x1] %vm7, %v6
    %s9 = scalar_lea.vmem [#allocation1], 3
    %v10 = vld [vmem:[%s9] sm:$0x1]
    %11 = vrot.lane.b32.xlu0 %v10, 96
    %v12 = vpop.permute.xlu0 %11
    %vm13 = vcmask 1048320
    %14 = vst.msk [vmem:[#allocation0] sm:$0x1] %vm13, %v12
    %s15 = scalar_lea.vmem [#allocation1], 2
    %v16 = vld [vmem:[%s15] sm:$0x1]
    %17 = vrot.lane.b32.xlu0 %v16, 64
    %v18 = vpop.permute.xlu0 %17
    %vm19 = vcmask 785920
    %20 = vst.msk [vmem:[#allocation0] sm:$0x1] %vm19, %v18
    %s21 = scalar_lea.vmem [#allocation1], 1
    %v22 = vld [vmem:[%s21] sm:$0x1]
    %23 = vrot.lane.b32.xlu0 %v22, 32
    %v24 = vpop.permute.xlu0 %23
    %vm25 = vcmask 523520
    %26 = vst.msk [vmem:[#allocation0] sm:$0x1] %vm25, %v24
    %s28 = sshllo.u32 0, 1
    %v30 = vld [vmem:[#allocation0] sm:%s28]
    %s31 = sshllo.u32 0, 1
    %32 = vst [vmem:[%s1] sm:%s31] %v30

// kernel: vae_forward.16
$region0: #{vae_forward.16}
  #allocation0 [shape = 'u32[]', space=smem, size = 0x4, offset = 0x4, fixed_abs, tag = 'smem constant byte address 0x4 - core index']
  #allocation1 [shape = 'u32[144,128]{1,0:T(1,128)}', space=vmem, size = 0x12000, scoped, tag = 'internal scratch']
  %s0 = inlined_call_operand.vmem [shape: bf16[512,256], index: 0, kind: input, shape index: {}]
  %s1 = inlined_call_operand.vmem [shape: bf16[256,128], index: 1, kind: input, shape index: {}]
  %s2 = inlined_call_operand.vmem [shape: f32[1,128], index: 2, kind: input, shape index: {}]
  %s3 = inlined_call_operand.vmem [shape: f32[512,128], index: 3, kind: output, shape index: {}]
  %s4 = sld [smem:[#allocation0]]
  $region45: #{vae_forward.16} parent=0
    _
  %s6 = ssub.s32 1, %s4
  %s7 = scalar_select 0, %s6, %s4
  loop: start=0, step=1, limit=4
  $region2: #{vae_forward.16} parent=0 // loop_pre_header
    _
  $region3: #{vae_forward.16} parent=0 // loop_header
    %s9 = sphi 0, %s13
    %p10 = scmp.ge.s32.totalorder %s9, 4
    %s19 = sphi 0, %s21
    %s22 = sphi 0, %s19
    %s23 = sphi 0, %s22
    %s39 = sphi 0, %s23
    %s43 = sphi 0, %s43
    %s45 = sphi 0, %s43
    %s46 = sphi 0, %s45
    %s60 = sphi 0, %s46
    %s64 = sphi 0, %s64
    %s66 = sphi 0, %s64
    %s67 = sphi 0, %s66
    %s81 = sphi 0, %s67
    %s87 = sphi 0, %s89
    %s90 = sphi 0, %s87
    %s91 = sphi 0, %s90
    %s107 = sphi 0, %s91
  $region4: #{vae_forward.16} parent=0 // loop_header_branch
    %12 = sbr.rel (%p10) target = $region8
  $region5: #{vae_forward.16} parent=0 // loop_body
    %s14 = ssub.s32 %s9, 1
    %s15 = ssub.s32 %s9, 2
    %s16 = sadd.s32 %s9, 1
    %s17 = ssub.s32 %s9, %s16
    %p18 = scmp.eq.s32.totalorder %s17, 0
    %s20 = sadd.s32 %s19, 1
    %s21 = scalar_select %p18, %s19, %s20
    %p24 = pneg %p18
    %p25 = scmp.eq.s32.totalorder %s9, 1
    %p26 = por %p24, %p25
    %p27 = scmp.ne.s32.totalorder %s19, %s22
    %p28 = scmp.eq.s32.totalorder %s9, 0
    %p29 = por %p27, %p28
    %p30 = scmp.ne.s32.totalorder %s19, %s22
    %p31 = scmp.eq.s32.totalorder %s14, 1
    %p32 = por %p30, %p31
    %p33 = scmp.ne.s32.totalorder %s22, %s23
    %p34 = scmp.eq.s32.totalorder %s14, 0
    %p35 = por %p33, %p34
    %p36 = scmp.ne.s32.totalorder %s22, %s23
    %p37 = scmp.eq.s32.totalorder %s15, 1
    %p38 = por %p36, %p37
    %p40 = scmp.ne.s32.totalorder %s23, %s39
    %p41 = scmp.eq.s32.totalorder %s15, 0
    %p42 = por %p40, %p41
    %s44 = sadd.s32 %s43, 1
    %p47 = scmp.eq.s32.totalorder %s9, 1
    %p48 = scmp.ne.s32.totalorder %s43, %s45
    %p49 = scmp.eq.s32.totalorder %s9, 0
    %p50 = por %p48, %p49
    %p51 = scmp.ne.s32.totalorder %s43, %s45
    %p52 = scmp.eq.s32.totalorder %s14, 1
    %p53 = por %p51, %p52
    %p54 = scmp.ne.s32.totalorder %s45, %s46
    %p55 = scmp.eq.s32.totalorder %s14, 0
    %p56 = por %p54, %p55
    %p57 = scmp.ne.s32.totalorder %s45, %s46
    %p58 = scmp.eq.s32.totalorder %s15, 1
    %p59 = por %p57, %p58
    %p61 = scmp.ne.s32.totalorder %s46, %s60
    %p62 = scmp.eq.s32.totalorder %s15, 0
    %p63 = por %p61, %p62
    %s65 = sadd.s32 %s64, 1
    %p68 = scmp.eq.s32.totalorder %s9, 1
    %p69 = scmp.ne.s32.totalorder %s64, %s66
    %p70 = scmp.eq.s32.totalorder %s9, 0
    %p71 = por %p69, %p70
    %p72 = scmp.ne.s32.totalorder %s64, %s66
    %p73 = scmp.eq.s32.totalorder %s14, 1
    %p74 = por %p72, %p73
    %p75 = scmp.ne.s32.totalorder %s66, %s67
    %p76 = scmp.eq.s32.totalorder %s14, 0
    %p77 = por %p75, %p76
    %p78 = scmp.ne.s32.totalorder %s66, %s67
    %p79 = scmp.eq.s32.totalorder %s15, 1
    %p80 = por %p78, %p79
    %p82 = scmp.ne.s32.totalorder %s67, %s81
    %p83 = scmp.eq.s32.totalorder %s15, 0
    %p84 = por %p82, %p83
    %s85 = ssub.s32 %s9, %s16
    %p86 = scmp.eq.s32.totalorder %s85, 0
    %s88 = sadd.s32 %s87, 1
    %s89 = scalar_select %p86, %s87, %s88
    %p92 = pneg %p86
    %p93 = scmp.eq.s32.totalorder %s9, 1
    %p94 = por %p92, %p93
    %p95 = scmp.ne.s32.totalorder %s87, %s90
    %p96 = scmp.eq.s32.totalorder %s9, 0
    %p97 = por %p95, %p96
    %p98 = scmp.ne.s32.totalorder %s87, %s90
    %p99 = scmp.eq.s32.totalorder %s14, 1
    %p100 = por %p98, %p99
    %p101 = scmp.ne.s32.totalorder %s90, %s91
    %p102 = scmp.eq.s32.totalorder %s14, 0
    %p103 = por %p101, %p102
    %p104 = scmp.ne.s32.totalorder %s90, %s91
    %p105 = scmp.eq.s32.totalorder %s15, 1
    %p106 = por %p104, %p105
    %p108 = scmp.ne.s32.totalorder %s91, %s107
    %p109 = scmp.eq.s32.totalorder %s15, 0
    %p110 = por %p108, %p109
    %p111 = scmp.le.s32.totalorder 1, %s9
    %p112 = scmp.lt.s32.totalorder %s9, 3
    %p113 = pnand %p111, %p112
    %p114 = pneg %p113
    // Predicated region
    $region9: #{vae_forward.16} parent=5 // pred_check
      _
    $region10: #{vae_forward.16} parent=5 // pred_check_branch
      %116 = sbr.rel (%p113) target = $region12
    $region11: #{vae_forward.16} parent=5 // pred_region
      %s117 = ssub.s32 %s9, 1
      // Predicated region
      $region13: #{vae_forward.16} parent=11 // pred_check
        %p118 = pneg %p56
      $region14: #{vae_forward.16} parent=11 // pred_check_branch
        %120 = sbr.rel (%p118) target = $region16
      $region15: #{vae_forward.16} parent=11 // pred_region
        _
      $region16: #{vae_forward.16} parent=11 // pred_fallthru
        _
      // Predicated region
      $region17: #{vae_forward.16} parent=11 // pred_check
        %p121 = pneg %p77
      $region18: #{vae_forward.16} parent=11 // pred_check_branch
        %123 = sbr.rel (%p121) target = $region20
      $region19: #{vae_forward.16} parent=11 // pred_region
        _
      $region20: #{vae_forward.16} parent=11 // pred_fallthru
        _
    $region12: #{vae_forward.16} parent=5 // pred_fallthru
      _
    %p124 = scmp.lt.s32.totalorder %s9, 2
    // Predicated region
    $region21: #{vae_forward.16} parent=5 // pred_check
      %p125 = pneg %p124
    $region22: #{vae_forward.16} parent=5 // pred_check_branch
      %127 = sbr.rel (%p125) target = $region24
    $region23: #{vae_forward.16} parent=5 // pred_region
      // Predicated region
      $region25: #{vae_forward.16} parent=23 // pred_check
        %p128 = pneg %p29
      $region26: #{vae_forward.16} parent=23 // pred_check_branch
        %130 = sbr.rel (%p128) target = $region28
      $region27: #{vae_forward.16} parent=23 // pred_region
        %s131 = smul.u32 32, %s9
        %p132 = scmp.lt.s32.totalorder %s131, 63
        %s133 = scalar_select %p132, %s131, 63
        %s134 = smul.addr %s133, 2
        %s135 = smul.addr %s134, 4
        %s136 = scalar_lea.vmem %s0, %s135
        %s137 = smul.u32 32, %s9
      $region28: #{vae_forward.16} parent=23 // pred_fallthru
        _
    $region24: #{vae_forward.16} parent=5 // pred_fallthru
      _
    %p138 = scmp.le.s32.totalorder 1, %s9
    %p139 = scmp.lt.s32.totalorder %s9, 3
    %p140 = pnand %p138, %p139
    %p141 = pneg %p140
    // Predicated region
    $region29: #{vae_forward.16} parent=5 // pred_check
      _
    $region30: #{vae_forward.16} parent=5 // pred_check_branch
      %143 = sbr.rel (%p140) target = $region32
    $region31: #{vae_forward.16} parent=5 // pred_region
      %s144 = ssub.s32 %s9, 1
      %s145 = smul.u32 32, %s14
      %p146 = scmp.lt.s32.totalorder %s145, 63
      %s147 = scalar_select %p146, %s145, 63
      %s148 = smul.addr %s147, 2
      %s149 = smul.addr %s148, 4
      %s150 = scalar_lea.vmem %s0, %s149
      %p151 = pneg %p35
      %p152 = pneg %p32
      %p153 = pneg %p56
      %p154 = pneg %p53
      %p155 = pneg %p77
      %p156 = pneg %p74
      %p157 = pneg %p103
      %p158 = pneg %p100
      %s159 = smul.u32 32, %s14
      %p160 = scmp.lt.s32.totalorder %s159, 63
      %s161 = scalar_select %p160, %s159, 63
      %s162 = smul.addr %s161, 8
      %s163 = scalar_lea.vmem %s3, %s162
      %s164 = smul.u32 32, %s14
      %p165 = scmp.lt.s32.totalorder %s164, 63
      %s166 = scalar_select %p165, %s164, 63
      %s167 = smul.addr %s166, 2
      %s168 = smul.addr %s167, 4
      %s169 = scalar_lea.vmem %s0, %s168
      %s170 = smul.u32 32, %s14
      %s171 = smul.u32 32, %s14
      %p172 = scmp.lt.s32.totalorder %s171, 63
      %s173 = scalar_select %p172, %s171, 63
      %s174 = smul.addr %s173, 8
      %s175 = scalar_lea.vmem %s3, %s174
      %s176 = smul.u32 32, %s14
      %v178 = vld [vmem:[%s169] sm:$0xff]
      %v179 = vld [vmem:[%s169 + $0x8] sm:$0xff]
      %v180 = vld [vmem:[%s169 + $0x10] sm:$0xff]
      %v181 = vld [vmem:[%s169 + $0x18] sm:$0xff]
      %v182 = vld [vmem:[%s169 + $0x20] sm:$0xff]
      %v183 = vld [vmem:[%s169 + $0x28] sm:$0xff]
      %v184 = vld [vmem:[%s169 + $0x30] sm:$0xff]
      %v185 = vld [vmem:[%s169 + $0x38] sm:$0xff]
      %v186 = vld [vmem:[%s169 + $0x40] sm:$0xff]
      %v187 = vld [vmem:[%s169 + $0x48] sm:$0xff]
      %v188 = vld [vmem:[%s169 + $0x50] sm:$0xff]
      %v189 = vld [vmem:[%s169 + $0x58] sm:$0xff]
      %v190 = vld [vmem:[%s169 + $0x60] sm:$0xff]
      %v191 = vld [vmem:[%s169 + $0x68] sm:$0xff]
      %v192 = vld [vmem:[%s169 + $0x70] sm:$0xff]
      %v193 = vld [vmem:[%s169 + $0x78] sm:$0xff]
      %v194 = vld [vmem:[%s169 + $0x80] sm:$0xff]
      %v195 = vld [vmem:[%s169 + $0x88] sm:$0xff]
      %v196 = vld [vmem:[%s169 + $0x90] sm:$0xff]
      %v197 = vld [vmem:[%s169 + $0x98] sm:$0xff]
      %v198 = vld [vmem:[%s169 + $0xa0] sm:$0xff]
      %v199 = vld [vmem:[%s169 + $0xa8] sm:$0xff]
      %v200 = vld [vmem:[%s169 + $0xb0] sm:$0xff]
      %v201 = vld [vmem:[%s169 + $0xb8] sm:$0xff]
      %v202 = vld [vmem:[%s169 + $0xc0] sm:$0xff]
      %v203 = vld [vmem:[%s169 + $0xc8] sm:$0xff]
      %v204 = vld [vmem:[%s169 + $0xd0] sm:$0xff]
      %v205 = vld [vmem:[%s169 + $0xd8] sm:$0xff]
      %v206 = vld [vmem:[%s169 + $0xe0] sm:$0xff]
      %v207 = vld [vmem:[%s169 + $0xe8] sm:$0xff]
      %v208 = vld [vmem:[%s169 + $0xf0] sm:$0xff]
      %v209 = vld [vmem:[%s169 + $0xf8] sm:$0xff]
      %v210 = vld [vmem:[%s1] sm:$0xf]
      %v211 = vld [vmem:[%s1 + $0x4] sm:$0xf]
      %v212 = vld [vmem:[%s1 + $0x8] sm:$0xf]
      %v213 = vld [vmem:[%s1 + $0xc] sm:$0xf]
      %v214 = vld [vmem:[%s1 + $0x10] sm:$0xf]
      %v215 = vld [vmem:[%s1 + $0x14] sm:$0xf]
      %v216 = vld [vmem:[%s1 + $0x18] sm:$0xf]
      %v217 = vld [vmem:[%s1 + $0x1c] sm:$0xf]
      %v218 = vld [vmem:[%s1 + $0x20] sm:$0xf]
      %v219 = vld [vmem:[%s1 + $0x24] sm:$0xf]
      %v220 = vld [vmem:[%s1 + $0x28] sm:$0xf]
      %v221 = vld [vmem:[%s1 + $0x2c] sm:$0xf]
      %v222 = vld [vmem:[%s1 + $0x30] sm:$0xf]
      %v223 = vld [vmem:[%s1 + $0x34] sm:$0xf]
      %v224 = vld [vmem:[%s1 + $0x38] sm:$0xf]
      %v225 = vld [vmem:[%s1 + $0x3c] sm:$0xf]
      %v226 = vld [vmem:[%s1 + $0x40] sm:$0xf]
      %v227 = vld [vmem:[%s1 + $0x44] sm:$0xf]
      %v228 = vld [vmem:[%s1 + $0x48] sm:$0xf]
      %v229 = vld [vmem:[%s1 + $0x4c] sm:$0xf]
      %v230 = vld [vmem:[%s1 + $0x50] sm:$0xf]
      %v231 = vld [vmem:[%s1 + $0x54] sm:$0xf]
      %v232 = vld [vmem:[%s1 + $0x58] sm:$0xf]
      %v233 = vld [vmem:[%s1 + $0x5c] sm:$0xf]
      %v234 = vld [vmem:[%s1 + $0x60] sm:$0xf]
      %v235 = vld [vmem:[%s1 + $0x64] sm:$0xf]
      %v236 = vld [vmem:[%s1 + $0x68] sm:$0xf]
      %v237 = vld [vmem:[%s1 + $0x6c] sm:$0xf]
      %v238 = vld [vmem:[%s1 + $0x70] sm:$0xf]
      %v239 = vld [vmem:[%s1 + $0x74] sm:$0xf]
      %v240 = vld [vmem:[%s1 + $0x78] sm:$0xf]
      %v241 = vld [vmem:[%s1 + $0x7c] sm:$0xf]
      %v242 = vld [vmem:[%s2] sm:$0x1]
      %v244 = vlaneseq
      %v245 = vshrl.u32 %v244, 7
      %v246 = vsub.s32 0, %v245
      %v247 = vrot.slane %v242, %v246
      %v281 = vunpack.c.l.b16 %v178
      %v282 = vunpack.c.h.b16 %v178
      %v283 = vunpack.c.l.b16 %v179
      %v284 = vunpack.c.h.b16 %v179
      %v285 = vunpack.c.l.b16 %v180
      %v286 = vunpack.c.h.b16 %v180
      %v287 = vunpack.c.l.b16 %v181
      %v288 = vunpack.c.h.b16 %v181
      %v289 = vunpack.c.l.b16 %v182
      %v290 = vunpack.c.h.b16 %v182
      %v291 = vunpack.c.l.b16 %v183
      %v292 = vunpack.c.h.b16 %v183
      %v293 = vunpack.c.l.b16 %v184
      %v294 = vunpack.c.h.b16 %v184
      %v295 = vunpack.c.l.b16 %v185
      %v296 = vunpack.c.h.b16 %v185
      %v297 = vunpack.c.l.b16 %v186
      %v298 = vunpack.c.h.b16 %v186
      %v299 = vunpack.c.l.b16 %v187
      %v300 = vunpack.c.h.b16 %v187
      %v301 = vunpack.c.l.b16 %v188
      %v302 = vunpack.c.h.b16 %v188
      %v303 = vunpack.c.l.b16 %v189
      %v304 = vunpack.c.h.b16 %v189
      %v305 = vunpack.c.l.b16 %v190
      %v306 = vunpack.c.h.b16 %v190
      %v307 = vunpack.c.l.b16 %v191
      %v308 = vunpack.c.h.b16 %v191
      %v309 = vunpack.c.l.b16 %v192
      %v310 = vunpack.c.h.b16 %v192
      %v311 = vunpack.c.l.b16 %v193
      %v312 = vunpack.c.h.b16 %v193
      %v313 = vunpack.c.l.b16 %v194
      %v314 = vunpack.c.h.b16 %v194
      %v315 = vunpack.c.l.b16 %v195
      %v316 = vunpack.c.h.b16 %v195
      %v317 = vunpack.c.l.b16 %v196
      %v318 = vunpack.c.h.b16 %v196
      %v319 = vunpack.c.l.b16 %v197
      %v320 = vunpack.c.h.b16 %v197
      %v321 = vunpack.c.l.b16 %v198
      %v322 = vunpack.c.h.b16 %v198
      %v323 = vunpack.c.l.b16 %v199
      %v324 = vunpack.c.h.b16 %v199
      %v325 = vunpack.c.l.b16 %v200
      %v326 = vunpack.c.h.b16 %v200
      %v327 = vunpack.c.l.b16 %v201
      %v328 = vunpack.c.h.b16 %v201
      %v329 = vunpack.c.l.b16 %v202
      %v330 = vunpack.c.h.b16 %v202
      %v331 = vunpack.c.l.b16 %v203
      %v332 = vunpack.c.h.b16 %v203
      %v333 = vunpack.c.l.b16 %v204
      %v334 = vunpack.c.h.b16 %v204
      %v335 = vunpack.c.l.b16 %v205
      %v336 = vunpack.c.h.b16 %v205
      %v337 = vunpack.c.l.b16 %v206
      %v338 = vunpack.c.h.b16 %v206
      %v339 = vunpack.c.l.b16 %v207
      %v340 = vunpack.c.h.b16 %v207
      %v341 = vunpack.c.l.b16 %v208
      %v342 = vunpack.c.h.b16 %v208
      %v343 = vunpack.c.l.b16 %v209
      %v344 = vunpack.c.h.b16 %v209
      %v345 = vpack.c.b16 %v283, %v281
      %v346 = vpack.c.b16 %v284, %v282
      %v347 = vpack.c.b16 %v287, %v285
      %v348 = vpack.c.b16 %v288, %v286
      %v349 = vpack.c.b16 %v291, %v289
      %v350 = vpack.c.b16 %v292, %v290
      %v351 = vpack.c.b16 %v295, %v293
      %v352 = vpack.c.b16 %v296, %v294
      %v353 = vpack.c.b16 %v299, %v297
      %v354 = vpack.c.b16 %v300, %v298
      %v355 = vpack.c.b16 %v303, %v301
      %v356 = vpack.c.b16 %v304, %v302
      %v357 = vpack.c.b16 %v307, %v305
      %v358 = vpack.c.b16 %v308, %v306
      %v359 = vpack.c.b16 %v311, %v309
      %v360 = vpack.c.b16 %v312, %v310
      %v361 = vpack.c.b16 %v315, %v313
      %v362 = vpack.c.b16 %v316, %v314
      %v363 = vpack.c.b16 %v319, %v317
      %v364 = vpack.c.b16 %v320, %v318
      %v365 = vpack.c.b16 %v323, %v321
      %v366 = vpack.c.b16 %v324, %v322
      %v367 = vpack.c.b16 %v327, %v325
      %v368 = vpack.c.b16 %v328, %v326
      %v369 = vpack.c.b16 %v331, %v329
      %v370 = vpack.c.b16 %v332, %v330
      %v371 = vpack.c.b16 %v335, %v333
      %v372 = vpack.c.b16 %v336, %v334
      %v373 = vpack.c.b16 %v339, %v337
      %v374 = vpack.c.b16 %v340, %v338
      %v375 = vpack.c.b16 %v343, %v341
      %v376 = vpack.c.b16 %v344, %v342
      %v441 = vunpack.c.l.b16 %v210
      %v442 = vunpack.c.l.b16 %v211
      %v443 = vunpack.c.l.b16 %v212
      %v444 = vunpack.c.l.b16 %v213
      %v445 = vunpack.c.l.b16 %v214
      %v446 = vunpack.c.l.b16 %v215
      %v447 = vunpack.c.l.b16 %v216
      %v448 = vunpack.c.l.b16 %v217
      %v449 = vunpack.c.l.b16 %v218
      %v450 = vunpack.c.l.b16 %v219
      %v451 = vunpack.c.l.b16 %v220
      %v452 = vunpack.c.l.b16 %v221
      %v453 = vunpack.c.l.b16 %v222
      %v454 = vunpack.c.l.b16 %v223
      %v455 = vunpack.c.l.b16 %v224
      %v456 = vunpack.c.l.b16 %v225
      %v457 = vunpack.c.l.b16 %v226
      %v458 = vunpack.c.l.b16 %v227
      %v459 = vunpack.c.l.b16 %v228
      %v460 = vunpack.c.l.b16 %v229
      %v461 = vunpack.c.l.b16 %v230
      %v462 = vunpack.c.l.b16 %v231
      %v463 = vunpack.c.l.b16 %v232
      %v464 = vunpack.c.l.b16 %v233
      %v465 = vunpack.c.l.b16 %v234
      %v466 = vunpack.c.l.b16 %v235
      %v467 = vunpack.c.l.b16 %v236
      %v468 = vunpack.c.l.b16 %v237
      %v469 = vunpack.c.l.b16 %v238
      %v470 = vunpack.c.l.b16 %v239
      %v471 = vunpack.c.l.b16 %v240
      %v472 = vunpack.c.l.b16 %v241
      %v473 = vpack.c.b16 %v442, %v441
      %v474 = vpack.c.b16 %v444, %v443
      %v475 = vpack.c.b16 %v446, %v445
      %v476 = vpack.c.b16 %v448, %v447
      %v477 = vpack.c.b16 %v450, %v449
      %v478 = vpack.c.b16 %v452, %v451
      %v479 = vpack.c.b16 %v454, %v453
      %v480 = vpack.c.b16 %v456, %v455
      %v481 = vpack.c.b16 %v458, %v457
      %v482 = vpack.c.b16 %v460, %v459
      %v483 = vpack.c.b16 %v462, %v461
      %v484 = vpack.c.b16 %v464, %v463
      %v485 = vpack.c.b16 %v466, %v465
      %v486 = vpack.c.b16 %v468, %v467
      %v487 = vpack.c.b16 %v470, %v469
      %v488 = vpack.c.b16 %v472, %v471
      %505 = vmatprep.subr.bf16.mxu0 0
      %506 = vmatpush1.bf16.msra.mxu0 %v473
      %507 = vmatprep.subr.bf16.mxu0 0
      %508 = vmatpush1.bf16.msra.mxu0 %v474
      %509 = vmatprep.subr.bf16.mxu0 0
      %510 = vmatpush1.bf16.msra.mxu0 %v475
      %511 = vmatprep.subr.bf16.mxu0 0
      %512 = vmatpush1.bf16.msra.mxu0 %v476
      %513 = vmatprep.subr.bf16.mxu0 0
      %514 = vmatpush1.bf16.msra.mxu0 %v477
      %515 = vmatprep.subr.bf16.mxu0 0
      %516 = vmatpush1.bf16.msra.mxu0 %v478
      %517 = vmatprep.subr.bf16.mxu0 0
      %518 = vmatpush1.bf16.msra.mxu0 %v479
      %519 = vmatprep.subr.bf16.mxu0 0
      %520 = vmatpush1.bf16.msra.mxu0 %v480
      %521 = vmatprep.subr.bf16.mxu0 0
      %522 = vmatpush1.bf16.msra.mxu0 %v481
      %523 = vmatprep.subr.bf16.mxu0 0
      %524 = vmatpush1.bf16.msra.mxu0 %v482
      %525 = vmatprep.subr.bf16.mxu0 0
      %526 = vmatpush1.bf16.msra.mxu0 %v483
      %527 = vmatprep.subr.bf16.mxu0 0
      %528 = vmatpush1.bf16.msra.mxu0 %v484
      %529 = vmatprep.subr.bf16.mxu0 0
      %530 = vmatpush1.bf16.msra.mxu0 %v485
      %531 = vmatprep.subr.bf16.mxu0 0
      %532 = vmatpush1.bf16.msra.mxu0 %v486
      %533 = vmatprep.subr.bf16.mxu0 0
      %534 = vmatpush1.bf16.msra.mxu0 %v487
      %535 = vmatprep.subr.bf16.mxu0 0
      %536 = vmatpush1.bf16.msra.mxu0 %v488
      %537 = vmatprep.mubr.bf16.mxu0 %v346
      %538 = vmatmul.mubr.bf16.gmra.mrb[0].mxu0 %v345
      %v539 = vpop.f32.mrb[0].mxu0
      %v540 = vadd.f32 %v247, %v539
      %v541 = vpop.f32.mrb[0].mxu0
      %v542 = vpop.f32.mrb[0].mxu0
      %v543 = vadd.f32 %v247, %v542
      %v544 = vpop.f32.mrb[0].mxu0
      %545 = vmatprep.mubr.bf16.mxu0 %v348
      %546 = vmatmul.mubr.bf16.gmra.mrb[0].mxu0 %v347
      %v547 = vpop.f32.mrb[0].mxu0
      %v548 = vadd.f32 %v247, %v547
      %v549 = vpop.f32.mrb[0].mxu0
      %v550 = vpop.f32.mrb[0].mxu0
      %v551 = vadd.f32 %v247, %v550
      %v552 = vpop.f32.mrb[0].mxu0
      %553 = vmatprep.mubr.bf16.mxu0 %v350
      %554 = vmatmul.mubr.bf16.gmra.mrb[0].mxu0 %v349
      %v555 = vpop.f32.mrb[0].mxu0
      %v556 = vadd.f32 %v247, %v555
      %v557 = vpop.f32.mrb[0].mxu0
      %v558 = vpop.f32.mrb[0].mxu0
      %v559 = vadd.f32 %v247, %v558
      %v560 = vpop.f32.mrb[0].mxu0
      %561 = vmatprep.mubr.bf16.mxu0 %v352
      %562 = vmatmul.mubr.bf16.gmra.mrb[0].mxu0 %v351
      %v563 = vpop.f32.mrb[0].mxu0
      %v564 = vadd.f32 %v247, %v563
      %v565 = vpop.f32.mrb[0].mxu0
      %v566 = vpop.f32.mrb[0].mxu0
      %v567 = vadd.f32 %v247, %v566
      %v568 = vpop.f32.mrb[0].mxu0
      %569 = vmatprep.mubr.bf16.mxu0 %v354
      %570 = vmatmul.mubr.bf16.gmra.mrb[0].mxu0 %v353
      %v571 = vpop.f32.mrb[0].mxu0
      %v572 = vadd.f32 %v247, %v571
      %v573 = vpop.f32.mrb[0].mxu0
      %v574 = vpop.f32.mrb[0].mxu0
      %v575 = vadd.f32 %v247, %v574
      %v576 = vpop.f32.mrb[0].mxu0
      %577 = vmatprep.mubr.bf16.mxu0 %v356
      %578 = vmatmul.mubr.bf16.gmra.mrb[0].mxu0 %v355
      %v579 = vpop.f32.mrb[0].mxu0
      %v580 = vadd.f32 %v247, %v579
      %v581 = vpop.f32.mrb[0].mxu0
      %v582 = vpop.f32.mrb[0].mxu0
      %v583 = vadd.f32 %v247, %v582
      %v584 = vpop.f32.mrb[0].mxu0
      %585 = vmatprep.mubr.bf16.mxu0 %v358
      %586 = vmatmul.mubr.bf16.gmra.mrb[0].mxu0 %v357
      %v587 = vpop.f32.mrb[0].mxu0
      %v588 = vadd.f32 %v247, %v587
      %v589 = vpop.f32.mrb[0].mxu0
      %v590 = vpop.f32.mrb[0].mxu0
      %v591 = vadd.f32 %v247, %v590
      %v592 = vpop.f32.mrb[0].mxu0
      %593 = vmatprep.mubr.bf16.mxu0 %v360
      %594 = vmatmul.mubr.bf16.gmra.mrb[0].mxu0 %v359
      %v595 = vpop.f32.mrb[0].mxu0
      %v596 = vadd.f32 %v247, %v595
      %v597 = vpop.f32.mrb[0].mxu0
      %v598 = vpop.f32.mrb[0].mxu0
      %v599 = vadd.f32 %v247, %v598
      %v600 = vpop.f32.mrb[0].mxu0
      %601 = vmatprep.mubr.bf16.mxu0 %v362
      %602 = vmatmul.mubr.bf16.gmra.mrb[0].mxu0 %v361
      %v603 = vpop.f32.mrb[0].mxu0
      %v604 = vadd.f32 %v247, %v603
      %v605 = vpop.f32.mrb[0].mxu0
      %v606 = vpop.f32.mrb[0].mxu0
      %v607 = vadd.f32 %v247, %v606
      %v608 = vpop.f32.mrb[0].mxu0
      %609 = vmatprep.mubr.bf16.mxu0 %v364
      %610 = vmatmul.mubr.bf16.gmra.mrb[0].mxu0 %v363
      %v611 = vpop.f32.mrb[0].mxu0
      %v612 = vadd.f32 %v247, %v611
      %v613 = vpop.f32.mrb[0].mxu0
      %v614 = vpop.f32.mrb[0].mxu0
      %v615 = vadd.f32 %v247, %v614
      %v616 = vpop.f32.mrb[0].mxu0
      %617 = vmatprep.mubr.bf16.mxu0 %v366
      %618 = vmatmul.mubr.bf16.gmra.mrb[0].mxu0 %v365
      %v619 = vpop.f32.mrb[0].mxu0
      %v620 = vadd.f32 %v247, %v619
      %v621 = vpop.f32.mrb[0].mxu0
      %v622 = vpop.f32.mrb[0].mxu0
      %v623 = vadd.f32 %v247, %v622
      %v624 = vpop.f32.mrb[0].mxu0
      %625 = vmatprep.mubr.bf16.mxu0 %v368
      %626 = vmatmul.mubr.bf16.gmra.mrb[0].mxu0 %v367
      %v627 = vpop.f32.mrb[0].mxu0
      %v628 = vadd.f32 %v247, %v627
      %v629 = vpop.f32.mrb[0].mxu0
      %v630 = vpop.f32.mrb[0].mxu0
      %v631 = vadd.f32 %v247, %v630
      %v632 = vpop.f32.mrb[0].mxu0
      %633 = vmatprep.mubr.bf16.mxu0 %v370
      %634 = vmatmul.mubr.bf16.gmra.mrb[0].mxu0 %v369
      %v635 = vpop.f32.mrb[0].mxu0
      %v636 = vadd.f32 %v247, %v635
      %v637 = vpop.f32.mrb[0].mxu0
      %v638 = vpop.f32.mrb[0].mxu0
      %v639 = vadd.f32 %v247, %v638
      %v640 = vpop.f32.mrb[0].mxu0
      %641 = vmatprep.mubr.bf16.mxu0 %v372
      %642 = vmatmul.mubr.bf16.gmra.mrb[0].mxu0 %v371
      %v643 = vpop.f32.mrb[0].mxu0
      %v644 = vadd.f32 %v247, %v643
      %v645 = vpop.f32.mrb[0].mxu0
      %v646 = vpop.f32.mrb[0].mxu0
      %v647 = vadd.f32 %v247, %v646
      %v648 = vpop.f32.mrb[0].mxu0
      %649 = vmatprep.mubr.bf16.mxu0 %v374
      %650 = vmatmul.mubr.bf16.gmra.mrb[0].mxu0 %v373
      %v651 = vpop.f32.mrb[0].mxu0
      %v652 = vadd.f32 %v247, %v651
      %v653 = vpop.f32.mrb[0].mxu0
      %v654 = vpop.f32.mrb[0].mxu0
      %v655 = vadd.f32 %v247, %v654
      %v656 = vpop.f32.mrb[0].mxu0
      %657 = vmatprep.mubr.bf16.mxu0 %v376
      %658 = vmatmul.mubr.bf16.gmra.mrb[0].mxu0 %v375
      %v659 = vpop.f32.mrb[0].mxu0
      %v660 = vadd.f32 %v247, %v659
      %v661 = vpop.f32.mrb[0].mxu0
      %v662 = vpop.f32.mrb[0].mxu0
      %v663 = vadd.f32 %v247, %v662
      %v664 = vpop.f32.mrb[0].mxu0
      %665 = vdwg.mxu0
      %vm666 = vcmp.gt.f32.partialorder %v540, 0.0
      %vm667 = vcmp.gt.f32.partialorder %v543, 0.0
      %vm668 = vcmp.gt.f32.partialorder %v548, 0.0
      %vm669 = vcmp.gt.f32.partialorder %v551, 0.0
      %vm670 = vcmp.gt.f32.partialorder %v556, 0.0
      %vm671 = vcmp.gt.f32.partialorder %v559, 0.0
      %vm672 = vcmp.gt.f32.partialorder %v564, 0.0
      %vm673 = vcmp.gt.f32.partialorder %v567, 0.0
      %vm674 = vcmp.gt.f32.partialorder %v572, 0.0
      %vm675 = vcmp.gt.f32.partialorder %v575, 0.0
      %vm676 = vcmp.gt.f32.partialorder %v580, 0.0
      %vm677 = vcmp.gt.f32.partialorder %v583, 0.0
      %vm678 = vcmp.gt.f32.partialorder %v588, 0.0
      %vm679 = vcmp.gt.f32.partialorder %v591, 0.0
      %vm680 = vcmp.gt.f32.partialorder %v596, 0.0
      %vm681 = vcmp.gt.f32.partialorder %v599, 0.0
      %vm682 = vcmp.gt.f32.partialorder %v604, 0.0
      %vm683 = vcmp.gt.f32.partialorder %v607, 0.0
      %vm684 = vcmp.gt.f32.partialorder %v612, 0.0
      %vm685 = vcmp.gt.f32.partialorder %v615, 0.0
      %vm686 = vcmp.gt.f32.partialorder %v620, 0.0
      %vm687 = vcmp.gt.f32.partialorder %v623, 0.0
      %vm688 = vcmp.gt.f32.partialorder %v628, 0.0
      %vm689 = vcmp.gt.f32.partialorder %v631, 0.0
      %vm690 = vcmp.gt.f32.partialorder %v636, 0.0
      %vm691 = vcmp.gt.f32.partialorder %v639, 0.0
      %vm692 = vcmp.gt.f32.partialorder %v644, 0.0
      %vm693 = vcmp.gt.f32.partialorder %v647, 0.0
      %vm694 = vcmp.gt.f32.partialorder %v652, 0.0
      %vm695 = vcmp.gt.f32.partialorder %v655, 0.0
      %vm696 = vcmp.gt.f32.partialorder %v660, 0.0
      %vm697 = vcmp.gt.f32.partialorder %v663, 0.0
      %v698 = vmul.f32 %v540, 1.442695
      %v699 = vpow.pop %v698
      %v700 = vmul.f32 %v543, 1.442695
      %v701 = vpow.pop %v700
      %v702 = vmul.f32 %v548, 1.442695
      %v703 = vpow.pop %v702
      %v704 = vmul.f32 %v551, 1.442695
      %v705 = vpow.pop %v704
      %v706 = vmul.f32 %v556, 1.442695
      %v707 = vpow.pop %v706
      %v708 = vmul.f32 %v559, 1.442695
      %v709 = vpow.pop %v708
      %v710 = vmul.f32 %v564, 1.442695
      %v711 = vpow.pop %v710
      %v712 = vmul.f32 %v567, 1.442695
      %v713 = vpow.pop %v712
      %v714 = vmul.f32 %v572, 1.442695
      %v715 = vpow.pop %v714
      %v716 = vmul.f32 %v575, 1.442695
      %v717 = vpow.pop %v716
      %v718 = vmul.f32 %v580, 1.442695
      %v719 = vpow.pop %v718
      %v720 = vmul.f32 %v583, 1.442695
      %v721 = vpow.pop %v720
      %v722 = vmul.f32 %v588, 1.442695
      %v723 = vpow.pop %v722
      %v724 = vmul.f32 %v591, 1.442695
      %v725 = vpow.pop %v724
      %v726 = vmul.f32 %v596, 1.442695
      %v727 = vpow.pop %v726
      %v728 = vmul.f32 %v599, 1.442695
      %v729 = vpow.pop %v728
      %v730 = vmul.f32 %v604, 1.442695
      %v731 = vpow.pop %v730
      %v732 = vmul.f32 %v607, 1.442695
      %v733 = vpow.pop %v732
      %v734 = vmul.f32 %v612, 1.442695
      %v735 = vpow.pop %v734
      %v736 = vmul.f32 %v615, 1.442695
      %v737 = vpow.pop %v736
      %v738 = vmul.f32 %v620, 1.442695
      %v739 = vpow.pop %v738
      %v740 = vmul.f32 %v623, 1.442695
      %v741 = vpow.pop %v740
      %v742 = vmul.f32 %v628, 1.442695
      %v743 = vpow.pop %v742
      %v744 = vmul.f32 %v631, 1.442695
      %v745 = vpow.pop %v744
      %v746 = vmul.f32 %v636, 1.442695
      %v747 = vpow.pop %v746
      %v748 = vmul.f32 %v639, 1.442695
      %v749 = vpow.pop %v748
      %v750 = vmul.f32 %v644, 1.442695
      %v751 = vpow.pop %v750
      %v752 = vmul.f32 %v647, 1.442695
      %v753 = vpow.pop %v752
      %v754 = vmul.f32 %v652, 1.442695
      %v755 = vpow.pop %v754
      %v756 = vmul.f32 %v655, 1.442695
      %v757 = vpow.pop %v756
      %v758 = vmul.f32 %v660, 1.442695
      %v759 = vpow.pop %v758
      %v760 = vmul.f32 %v663, 1.442695
      %v761 = vpow.pop %v760
      %v762 = vsub.f32 %v699, 1.0
      %v763 = vsub.f32 %v701, 1.0
      %v764 = vsub.f32 %v703, 1.0
      %v765 = vsub.f32 %v705, 1.0
      %v766 = vsub.f32 %v707, 1.0
      %v767 = vsub.f32 %v709, 1.0
      %v768 = vsub.f32 %v711, 1.0
      %v769 = vsub.f32 %v713, 1.0
      %v770 = vsub.f32 %v715, 1.0
      %v771 = vsub.f32 %v717, 1.0
      %v772 = vsub.f32 %v719, 1.0
      %v773 = vsub.f32 %v721, 1.0
      %v774 = vsub.f32 %v723, 1.0
      %v775 = vsub.f32 %v725, 1.0
      %v776 = vsub.f32 %v727, 1.0
      %v777 = vsub.f32 %v729, 1.0
      %v778 = vsub.f32 %v731, 1.0
      %v779 = vsub.f32 %v733, 1.0
      %v780 = vsub.f32 %v735, 1.0
      %v781 = vsub.f32 %v737, 1.0
      %v782 = vsub.f32 %v739, 1.0
      %v783 = vsub.f32 %v741, 1.0
      %v784 = vsub.f32 %v743, 1.0
      %v785 = vsub.f32 %v745, 1.0
      %v786 = vsub.f32 %v747, 1.0
      %v787 = vsub.f32 %v749, 1.0
      %v788 = vsub.f32 %v751, 1.0
      %v789 = vsub.f32 %v753, 1.0
      %v790 = vsub.f32 %v755, 1.0
      %v791 = vsub.f32 %v757, 1.0
      %v792 = vsub.f32 %v759, 1.0
      %v793 = vsub.f32 %v761, 1.0
      %v794 = vsel %vm666, %v540, %v762
      %v795 = vsel %vm667, %v543, %v763
      %v796 = vsel %vm668, %v548, %v764
      %v797 = vsel %vm669, %v551, %v765
      %v798 = vsel %vm670, %v556, %v766
      %v799 = vsel %vm671, %v559, %v767
      %v800 = vsel %vm672, %v564, %v768
      %v801 = vsel %vm673, %v567, %v769
      %v802 = vsel %vm674, %v572, %v770
      %v803 = vsel %vm675, %v575, %v771
      %v804 = vsel %vm676, %v580, %v772
      %v805 = vsel %vm677, %v583, %v773
      %v806 = vsel %vm678, %v588, %v774
      %v807 = vsel %vm679, %v591, %v775
      %v808 = vsel %vm680, %v596, %v776
      %v809 = vsel %vm681, %v599, %v777
      %v810 = vsel %vm682, %v604, %v778
      %v811 = vsel %vm683, %v607, %v779
      %v812 = vsel %vm684, %v612, %v780
      %v813 = vsel %vm685, %v615, %v781
      %v814 = vsel %vm686, %v620, %v782
      %v815 = vsel %vm687, %v623, %v783
      %v816 = vsel %vm688, %v628, %v784
      %v817 = vsel %vm689, %v631, %v785
      %v818 = vsel %vm690, %v636, %v786
      %v819 = vsel %vm691, %v639, %v787
      %v820 = vsel %vm692, %v644, %v788
      %v821 = vsel %vm693, %v647, %v789
      %v822 = vsel %vm694, %v652, %v790
      %v823 = vsel %vm695, %v655, %v791
      %v824 = vsel %vm696, %v660, %v792
      %v825 = vsel %vm697, %v663, %v793
      %826 = vst [vmem:[%s175] sm:$0xff] %v794
      %827 = vst [vmem:[%s175 + $0x8] sm:$0xff] %v795
      %828 = vst [vmem:[%s175 + $0x10] sm:$0xff] %v796
      %829 = vst [vmem:[%s175 + $0x18] sm:$0xff] %v797
      %830 = vst [vmem:[%s175 + $0x20] sm:$0xff] %v798
      %831 = vst [vmem:[%s175 + $0x28] sm:$0xff] %v799
      %832 = vst [vmem:[%s175 + $0x30] sm:$0xff] %v800
      %833 = vst [vmem:[%s175 + $0x38] sm:$0xff] %v801
      %834 = vst [vmem:[%s175 + $0x40] sm:$0xff] %v802
      %835 = vst [vmem:[%s175 + $0x48] sm:$0xff] %v803
      %836 = vst [vmem:[%s175 + $0x50] sm:$0xff] %v804
      %837 = vst [vmem:[%s175 + $0x58] sm:$0xff] %v805
      %838 = vst [vmem:[%s175 + $0x60] sm:$0xff] %v806
      %839 = vst [vmem:[%s175 + $0x68] sm:$0xff] %v807
      %840 = vst [vmem:[%s175 + $0x70] sm:$0xff] %v808
      %841 = vst [vmem:[%s175 + $0x78] sm:$0xff] %v809
      %842 = vst [vmem:[%s175 + $0x80] sm:$0xff] %v810
      %843 = vst [vmem:[%s175 + $0x88] sm:$0xff] %v811
      %844 = vst [vmem:[%s175 + $0x90] sm:$0xff] %v812
      %845 = vst [vmem:[%s175 + $0x98] sm:$0xff] %v813
      %846 = vst [vmem:[%s175 + $0xa0] sm:$0xff] %v814
      %847 = vst [vmem:[%s175 + $0xa8] sm:$0xff] %v815
      %848 = vst [vmem:[%s175 + $0xb0] sm:$0xff] %v816
      %849 = vst [vmem:[%s175 + $0xb8] sm:$0xff] %v817
      %850 = vst [vmem:[%s175 + $0xc0] sm:$0xff] %v818
      %851 = vst [vmem:[%s175 + $0xc8] sm:$0xff] %v819
      %852 = vst [vmem:[%s175 + $0xd0] sm:$0xff] %v820
      %853 = vst [vmem:[%s175 + $0xd8] sm:$0xff] %v821
      %854 = vst [vmem:[%s175 + $0xe0] sm:$0xff] %v822
      %855 = vst [vmem:[%s175 + $0xe8] sm:$0xff] %v823
      %856 = vst [vmem:[%s175 + $0xf0] sm:$0xff] %v824
      %857 = vst [vmem:[%s175 + $0xf8] sm:$0xff] %v825
      %s858 = smul.u32 32, %s14
      %p859 = scmp.lt.s32.totalorder %s858, 63
      %s860 = scalar_select %p859, %s858, 63
      %s861 = smul.addr %s860, 8
      %s862 = scalar_lea.vmem %s3, %s861
      // Predicated region
      $region33: #{vae_forward.16} parent=31 // pred_check
        %p863 = pneg %p100
      $region34: #{vae_forward.16} parent=31 // pred_check_branch
        %865 = sbr.rel (%p863) target = $region36
      $region35: #{vae_forward.16} parent=31 // pred_region
        %s866 = smul.u32 32, %s14
      $region36: #{vae_forward.16} parent=31 // pred_fallthru
        _
    $region32: #{vae_forward.16} parent=5 // pred_fallthru
      _
    %p867 = scmp.le.s32.totalorder 2, %s9
    // Predicated region
    $region37: #{vae_forward.16} parent=5 // pred_check
      %p868 = pneg %p867
    $region38: #{vae_forward.16} parent=5 // pred_check_branch
      %870 = sbr.rel (%p868) target = $region40
    $region39: #{vae_forward.16} parent=5 // pred_region
      %s871 = ssub.s32 %s9, 2
      // Predicated region
      $region41: #{vae_forward.16} parent=39 // pred_check
        %p872 = pneg %p106
      $region42: #{vae_forward.16} parent=39 // pred_check_branch
        %874 = sbr.rel (%p872) target = $region44
      $region43: #{vae_forward.16} parent=39 // pred_region
        %s875 = smul.u32 32, %s15
        %p876 = scmp.lt.s32.totalorder %s875, 63
        %s877 = scalar_select %p876, %s875, 63
        %s878 = smul.addr %s877, 8
        %s879 = scalar_lea.vmem %s3, %s878
      $region44: #{vae_forward.16} parent=39 // pred_fallthru
        _
    $region40: #{vae_forward.16} parent=5 // pred_fallthru
      _
  $region6: #{vae_forward.16} parent=0 // loop_footer
    %s13 = sadd.s32 1, %s9
  $region7: #{vae_forward.16} parent=0 // loop_footer_branch
    %8 = sbr.rel target = $region3
  $region8: #{vae_forward.16} parent=0 // loop_exit
    _

// kernel: tile.38
$region0: #{tile.38}
  #allocation0 [shape = 's32[1]{0}', space=sflag, size = 0x4, scoped, tag = 'scoped memory for tile.38']
  %s0 = inlined_call_operand.vmem [shape: f32[3], index: 0, kind: input, shape index: {}]
  %s1 = inlined_call_operand.vmem [shape: f32[4,3], index: 1, kind: output, shape index: {}]
  // Predicated region
  $region2: #{tile.38} parent=0 // pred_check
    _
  $region3: #{tile.38} parent=0 // pred_check_branch
    %3 = sbr.rel (0) target = $region5
  $region4: #{tile.38} parent=0 // pred_region
    _
  $region5: #{tile.38} parent=0 // pred_fallthru
    _
  %v4 = vld [vmem:[%s0] ss:$0 sm:$0xff]
  %5 = vst [vmem:[%s1] sm:$0xf] %v4

// kernel: tile.39
$region0: #{tile.39}
  %s0 = inlined_call_operand.vmem [shape: f32[4,3], index: 0, kind: input, shape index: {}]
  %s1 = inlined_call_operand.vmem [shape: f32[12], index: 1, kind: output, shape index: {}]
  $region1: #{tile.39} parent=0
    #allocation0 [shape = 'u8[4096]{0}', space=vmem, size = 0x1000, scoped, tag = 'scoped mem for output reshape']
    #allocation1 [shape = 'u8[4096]{0}', space=vmem, size = 0x1000, scoped, tag = 'scoped mem for input reshape']
    %s3 = sshllo.u32 0, 4
    %v4 = vld [vmem:[%s0] sm:%s3]
    %5 = vst [vmem:[#allocation1] sm:%s3] %v4
    %v6 = vld [vmem:[#allocation1] sm:$0x1]
    %vm7 = vcmask 23552
    %8 = vst.msk [vmem:[#allocation0] sm:$0x1] %vm7, %v6
    %s9 = scalar_lea.vmem [#allocation1], 3
    %v10 = vld [vmem:[%s9] sm:$0x1]
    %11 = vrot.lane.b32.xlu0 %v10, 9
    %v12 = vpop.permute.xlu0 %11
    %vm13 = vcmask 97352
    %14 = vst.msk [vmem:[#allocation0] sm:$0x1] %vm13, %v12
    %s15 = scalar_lea.vmem [#allocation1], 2
    %v16 = vld [vmem:[%s15] sm:$0x1]
    %17 = vrot.lane.b32.xlu0 %v16, 6
    %v18 = vpop.permute.xlu0 %17
    %vm19 = vcmask 72752
    %20 = vst.msk [vmem:[#allocation0] sm:$0x1] %vm19, %v18
    %s21 = scalar_lea.vmem [#allocation1], 1
    %v22 = vld [vmem:[%s21] sm:$0x1]
    %23 = vrot.lane.b32.xlu0 %v22, 3
    %v24 = vpop.permute.xlu0 %23
    %vm25 = vcmask 48152
    %26 = vst.msk [vmem:[#allocation0] sm:$0x1] %vm25, %v24
    %s28 = sshllo.u32 0, 1
    %v30 = vld [vmem:[#allocation0] sm:%s28]
    %s31 = sshllo.u32 0, 1
    %32 = vst [vmem:[%s1] sm:%s31] %v30

// kernel: vae_forward.17
$region0: #{vae_forward.17}
  #allocation0 [shape = 'u32[]', space=smem, size = 0x4, offset = 0x4, fixed_abs, tag = 'smem constant byte address 0x4 - core index']
  #allocation1 [shape = 'u32[144,128]{1,0:T(1,128)}', space=vmem, size = 0x12000, scoped, tag = 'internal scratch']
  %s0 = inlined_call_operand.vmem [shape: bf16[2048,32], index: 0, kind: input, shape index: {}]
  %s1 = inlined_call_operand.vmem [shape: bf16[32,128], index: 1, kind: input, shape index: {}]
  %s2 = inlined_call_operand.vmem [shape: f32[1,128], index: 2, kind: input, shape index: {}]
  %s3 = inlined_call_operand.vmem [shape: f32[2048,128], index: 3, kind: output, shape index: {}]
  %s4 = sld [smem:[#allocation0]]
  $region45: #{vae_forward.17} parent=0
    _
  %s6 = ssub.s32 1, %s4
  %s7 = scalar_select 0, %s6, %s4
  loop: start=0, step=1, limit=6
  $region2: #{vae_forward.17} parent=0 // loop_pre_header
    _
  $region3: #{vae_forward.17} parent=0 // loop_header
    %s9 = sphi 0, %s13
    %p10 = scmp.ge.s32.totalorder %s9, 6
    %s19 = sphi 0, %s21
    %s22 = sphi 0, %s19
    %s23 = sphi 0, %s22
    %s39 = sphi 0, %s23
    %s43 = sphi 0, %s43
    %s45 = sphi 0, %s43
    %s46 = sphi 0, %s45
    %s60 = sphi 0, %s46
    %s64 = sphi 0, %s64
    %s66 = sphi 0, %s64
    %s67 = sphi 0, %s66
    %s81 = sphi 0, %s67
    %s87 = sphi 0, %s89
    %s90 = sphi 0, %s87
    %s91 = sphi 0, %s90
    %s107 = sphi 0, %s91
  $region4: #{vae_forward.17} parent=0 // loop_header_branch
    %12 = sbr.rel (%p10) target = $region8
  $region5: #{vae_forward.17} parent=0 // loop_body
    %s14 = ssub.s32 %s9, 1
    %s15 = ssub.s32 %s9, 2
    %s16 = sadd.s32 %s9, 1
    %s17 = ssub.s32 %s9, %s16
    %p18 = scmp.eq.s32.totalorder %s17, 0
    %s20 = sadd.s32 %s19, 1
    %s21 = scalar_select %p18, %s19, %s20
    %p24 = pneg %p18
    %p25 = scmp.eq.s32.totalorder %s9, 3
    %p26 = por %p24, %p25
    %p27 = scmp.ne.s32.totalorder %s19, %s22
    %p28 = scmp.eq.s32.totalorder %s9, 0
    %p29 = por %p27, %p28
    %p30 = scmp.ne.s32.totalorder %s19, %s22
    %p31 = scmp.eq.s32.totalorder %s14, 3
    %p32 = por %p30, %p31
    %p33 = scmp.ne.s32.totalorder %s22, %s23
    %p34 = scmp.eq.s32.totalorder %s14, 0
    %p35 = por %p33, %p34
    %p36 = scmp.ne.s32.totalorder %s22, %s23
    %p37 = scmp.eq.s32.totalorder %s15, 3
    %p38 = por %p36, %p37
    %p40 = scmp.ne.s32.totalorder %s23, %s39
    %p41 = scmp.eq.s32.totalorder %s15, 0
    %p42 = por %p40, %p41
    %s44 = sadd.s32 %s43, 1
    %p47 = scmp.eq.s32.totalorder %s9, 3
    %p48 = scmp.ne.s32.totalorder %s43, %s45
    %p49 = scmp.eq.s32.totalorder %s9, 0
    %p50 = por %p48, %p49
    %p51 = scmp.ne.s32.totalorder %s43, %s45
    %p52 = scmp.eq.s32.totalorder %s14, 3
    %p53 = por %p51, %p52
    %p54 = scmp.ne.s32.totalorder %s45, %s46
    %p55 = scmp.eq.s32.totalorder %s14, 0
    %p56 = por %p54, %p55
    %p57 = scmp.ne.s32.totalorder %s45, %s46
    %p58 = scmp.eq.s32.totalorder %s15, 3
    %p59 = por %p57, %p58
    %p61 = scmp.ne.s32.totalorder %s46, %s60
    %p62 = scmp.eq.s32.totalorder %s15, 0
    %p63 = por %p61, %p62
    %s65 = sadd.s32 %s64, 1
    %p68 = scmp.eq.s32.totalorder %s9, 3
    %p69 = scmp.ne.s32.totalorder %s64, %s66
    %p70 = scmp.eq.s32.totalorder %s9, 0
    %p71 = por %p69, %p70
    %p72 = scmp.ne.s32.totalorder %s64, %s66
    %p73 = scmp.eq.s32.totalorder %s14, 3
    %p74 = por %p72, %p73
    %p75 = scmp.ne.s32.totalorder %s66, %s67
    %p76 = scmp.eq.s32.totalorder %s14, 0
    %p77 = por %p75, %p76
    %p78 = scmp.ne.s32.totalorder %s66, %s67
    %p79 = scmp.eq.s32.totalorder %s15, 3
    %p80 = por %p78, %p79
    %p82 = scmp.ne.s32.totalorder %s67, %s81
    %p83 = scmp.eq.s32.totalorder %s15, 0
    %p84 = por %p82, %p83
    %s85 = ssub.s32 %s9, %s16
    %p86 = scmp.eq.s32.totalorder %s85, 0
    %s88 = sadd.s32 %s87, 1
    %s89 = scalar_select %p86, %s87, %s88
    %p92 = pneg %p86
    %p93 = scmp.eq.s32.totalorder %s9, 3
    %p94 = por %p92, %p93
    %p95 = scmp.ne.s32.totalorder %s87, %s90
    %p96 = scmp.eq.s32.totalorder %s9, 0
    %p97 = por %p95, %p96
    %p98 = scmp.ne.s32.totalorder %s87, %s90
    %p99 = scmp.eq.s32.totalorder %s14, 3
    %p100 = por %p98, %p99
    %p101 = scmp.ne.s32.totalorder %s90, %s91
    %p102 = scmp.eq.s32.totalorder %s14, 0
    %p103 = por %p101, %p102
    %p104 = scmp.ne.s32.totalorder %s90, %s91
    %p105 = scmp.eq.s32.totalorder %s15, 3
    %p106 = por %p104, %p105
    %p108 = scmp.ne.s32.totalorder %s91, %s107
    %p109 = scmp.eq.s32.totalorder %s15, 0
    %p110 = por %p108, %p109
    %p111 = scmp.le.s32.totalorder 1, %s9
    %p112 = scmp.lt.s32.totalorder %s9, 5
    %p113 = pnand %p111, %p112
    %p114 = pneg %p113
    // Predicated region
    $region9: #{vae_forward.17} parent=5 // pred_check
      _
    $region10: #{vae_forward.17} parent=5 // pred_check_branch
      %116 = sbr.rel (%p113) target = $region12
    $region11: #{vae_forward.17} parent=5 // pred_region
      %s117 = ssub.s32 %s9, 1
      // Predicated region
      $region13: #{vae_forward.17} parent=11 // pred_check
        %p118 = pneg %p56
      $region14: #{vae_forward.17} parent=11 // pred_check_branch
        %120 = sbr.rel (%p118) target = $region16
      $region15: #{vae_forward.17} parent=11 // pred_region
        _
      $region16: #{vae_forward.17} parent=11 // pred_fallthru
        _
      // Predicated region
      $region17: #{vae_forward.17} parent=11 // pred_check
        %p121 = pneg %p77
      $region18: #{vae_forward.17} parent=11 // pred_check_branch
        %123 = sbr.rel (%p121) target = $region20
      $region19: #{vae_forward.17} parent=11 // pred_region
        _
      $region20: #{vae_forward.17} parent=11 // pred_fallthru
        _
    $region12: #{vae_forward.17} parent=5 // pred_fallthru
      _
    %p124 = scmp.lt.s32.totalorder %s9, 4
    // Predicated region
    $region21: #{vae_forward.17} parent=5 // pred_check
      %p125 = pneg %p124
    $region22: #{vae_forward.17} parent=5 // pred_check_branch
      %127 = sbr.rel (%p125) target = $region24
    $region23: #{vae_forward.17} parent=5 // pred_region
      // Predicated region
      $region25: #{vae_forward.17} parent=23 // pred_check
        %p128 = pneg %p29
      $region26: #{vae_forward.17} parent=23 // pred_check_branch
        %130 = sbr.rel (%p128) target = $region28
      $region27: #{vae_forward.17} parent=23 // pred_region
        %s131 = smul.u32 64, %s9
        %p132 = scmp.lt.s32.totalorder %s131, 255
        %s133 = scalar_select %p132, %s131, 255
        %s134 = smul.addr %s133, 4
        %s135 = scalar_lea.vmem %s0, %s134
        %s136 = smul.u32 64, %s9
      $region28: #{vae_forward.17} parent=23 // pred_fallthru
        _
    $region24: #{vae_forward.17} parent=5 // pred_fallthru
      _
    %p137 = scmp.le.s32.totalorder 1, %s9
    %p138 = scmp.lt.s32.totalorder %s9, 5
    %p139 = pnand %p137, %p138
    %p140 = pneg %p139
    // Predicated region
    $region29: #{vae_forward.17} parent=5 // pred_check
      _
    $region30: #{vae_forward.17} parent=5 // pred_check_branch
      %142 = sbr.rel (%p139) target = $region32
    $region31: #{vae_forward.17} parent=5 // pred_region
      %s143 = ssub.s32 %s9, 1
      %s144 = smul.u32 64, %s14
      %p145 = scmp.lt.s32.totalorder %s144, 255
      %s146 = scalar_select %p145, %s144, 255
      %s147 = smul.addr %s146, 4
      %s148 = scalar_lea.vmem %s0, %s147
      %p149 = pneg %p35
      %p150 = pneg %p32
      %p151 = pneg %p56
      %p152 = pneg %p53
      %p153 = pneg %p77
      %p154 = pneg %p74
      %p155 = pneg %p103
      %p156 = pneg %p100
      %s157 = smul.u32 64, %s14
      %p158 = scmp.lt.s32.totalorder %s157, 255
      %s159 = scalar_select %p158, %s157, 255
      %s160 = smul.addr %s159, 8
      %s161 = scalar_lea.vmem %s3, %s160
      %s162 = smul.u32 64, %s14
      %p163 = scmp.lt.s32.totalorder %s162, 255
      %s164 = scalar_select %p163, %s162, 255
      %s165 = smul.addr %s164, 4
      %s166 = scalar_lea.vmem %s0, %s165
      %s167 = smul.u32 64, %s14
      %s168 = smul.u32 64, %s14
      %p169 = scmp.lt.s32.totalorder %s168, 255
      %s170 = scalar_select %p169, %s168, 255
      %s171 = smul.addr %s170, 8
      %s172 = scalar_lea.vmem %s3, %s171
      %s173 = smul.u32 64, %s14
      %v175 = vld [vmem:[%s166] sm:$0xf]
      %v176 = vld [vmem:[%s166 + $0x4] sm:$0xf]
      %v177 = vld [vmem:[%s166 + $0x8] sm:$0xf]
      %v178 = vld [vmem:[%s166 + $0xc] sm:$0xf]
      %v179 = vld [vmem:[%s166 + $0x10] sm:$0xf]
      %v180 = vld [vmem:[%s166 + $0x14] sm:$0xf]
      %v181 = vld [vmem:[%s166 + $0x18] sm:$0xf]
      %v182 = vld [vmem:[%s166 + $0x1c] sm:$0xf]
      %v183 = vld [vmem:[%s166 + $0x20] sm:$0xf]
      %v184 = vld [vmem:[%s166 + $0x24] sm:$0xf]
      %v185 = vld [vmem:[%s166 + $0x28] sm:$0xf]
      %v186 = vld [vmem:[%s166 + $0x2c] sm:$0xf]
      %v187 = vld [vmem:[%s166 + $0x30] sm:$0xf]
      %v188 = vld [vmem:[%s166 + $0x34] sm:$0xf]
      %v189 = vld [vmem:[%s166 + $0x38] sm:$0xf]
      %v190 = vld [vmem:[%s166 + $0x3c] sm:$0xf]
      %v191 = vld [vmem:[%s166 + $0x40] sm:$0xf]
      %v192 = vld [vmem:[%s166 + $0x44] sm:$0xf]
      %v193 = vld [vmem:[%s166 + $0x48] sm:$0xf]
      %v194 = vld [vmem:[%s166 + $0x4c] sm:$0xf]
      %v195 = vld [vmem:[%s166 + $0x50] sm:$0xf]
      %v196 = vld [vmem:[%s166 + $0x54] sm:$0xf]
      %v197 = vld [vmem:[%s166 + $0x58] sm:$0xf]
      %v198 = vld [vmem:[%s166 + $0x5c] sm:$0xf]
      %v199 = vld [vmem:[%s166 + $0x60] sm:$0xf]
      %v200 = vld [vmem:[%s166 + $0x64] sm:$0xf]
      %v201 = vld [vmem:[%s166 + $0x68] sm:$0xf]
      %v202 = vld [vmem:[%s166 + $0x6c] sm:$0xf]
      %v203 = vld [vmem:[%s166 + $0x70] sm:$0xf]
      %v204 = vld [vmem:[%s166 + $0x74] sm:$0xf]
      %v205 = vld [vmem:[%s166 + $0x78] sm:$0xf]
      %v206 = vld [vmem:[%s166 + $0x7c] sm:$0xf]
      %v207 = vld [vmem:[%s166 + $0x80] sm:$0xf]
      %v208 = vld [vmem:[%s166 + $0x84] sm:$0xf]
      %v209 = vld [vmem:[%s166 + $0x88] sm:$0xf]
      %v210 = vld [vmem:[%s166 + $0x8c] sm:$0xf]
      %v211 = vld [vmem:[%s166 + $0x90] sm:$0xf]
      %v212 = vld [vmem:[%s166 + $0x94] sm:$0xf]
      %v213 = vld [vmem:[%s166 + $0x98] sm:$0xf]
      %v214 = vld [vmem:[%s166 + $0x9c] sm:$0xf]
      %v215 = vld [vmem:[%s166 + $0xa0] sm:$0xf]
      %v216 = vld [vmem:[%s166 + $0xa4] sm:$0xf]
      %v217 = vld [vmem:[%s166 + $0xa8] sm:$0xf]
      %v218 = vld [vmem:[%s166 + $0xac] sm:$0xf]
      %v219 = vld [vmem:[%s166 + $0xb0] sm:$0xf]
      %v220 = vld [vmem:[%s166 + $0xb4] sm:$0xf]
      %v221 = vld [vmem:[%s166 + $0xb8] sm:$0xf]
      %v222 = vld [vmem:[%s166 + $0xbc] sm:$0xf]
      %v223 = vld [vmem:[%s166 + $0xc0] sm:$0xf]
      %v224 = vld [vmem:[%s166 + $0xc4] sm:$0xf]
      %v225 = vld [vmem:[%s166 + $0xc8] sm:$0xf]
      %v226 = vld [vmem:[%s166 + $0xcc] sm:$0xf]
      %v227 = vld [vmem:[%s166 + $0xd0] sm:$0xf]
      %v228 = vld [vmem:[%s166 + $0xd4] sm:$0xf]
      %v229 = vld [vmem:[%s166 + $0xd8] sm:$0xf]
      %v230 = vld [vmem:[%s166 + $0xdc] sm:$0xf]
      %v231 = vld [vmem:[%s166 + $0xe0] sm:$0xf]
      %v232 = vld [vmem:[%s166 + $0xe4] sm:$0xf]
      %v233 = vld [vmem:[%s166 + $0xe8] sm:$0xf]
      %v234 = vld [vmem:[%s166 + $0xec] sm:$0xf]
      %v235 = vld [vmem:[%s166 + $0xf0] sm:$0xf]
      %v236 = vld [vmem:[%s166 + $0xf4] sm:$0xf]
      %v237 = vld [vmem:[%s166 + $0xf8] sm:$0xf]
      %v238 = vld [vmem:[%s166 + $0xfc] sm:$0xf]
      %v239 = vld [vmem:[%s1] sm:$0xf]
      %v240 = vld [vmem:[%s1 + $0x4] sm:$0xf]
      %v241 = vld [vmem:[%s1 + $0x8] sm:$0xf]
      %v242 = vld [vmem:[%s1 + $0xc] sm:$0xf]
      %v243 = vld [vmem:[%s2] sm:$0x1]
      %v245 = vlaneseq
      %v246 = vshrl.u32 %v245, 7
      %v247 = vsub.s32 0, %v246
      %v248 = vrot.slane %v243, %v247
      %v314 = vunpack.c.l.b16 %v175
      %v315 = vunpack.c.l.b16 %v176
      %v316 = vunpack.c.l.b16 %v177
      %v317 = vunpack.c.l.b16 %v178
      %v318 = vunpack.c.l.b16 %v179
      %v319 = vunpack.c.l.b16 %v180
      %v320 = vunpack.c.l.b16 %v181
      %v321 = vunpack.c.l.b16 %v182
      %v322 = vunpack.c.l.b16 %v183
      %v323 = vunpack.c.l.b16 %v184
      %v324 = vunpack.c.l.b16 %v185
      %v325 = vunpack.c.l.b16 %v186
      %v326 = vunpack.c.l.b16 %v187
      %v327 = vunpack.c.l.b16 %v188
      %v328 = vunpack.c.l.b16 %v189
      %v329 = vunpack.c.l.b16 %v190
      %v330 = vunpack.c.l.b16 %v191
      %v331 = vunpack.c.l.b16 %v192
      %v332 = vunpack.c.l.b16 %v193
      %v333 = vunpack.c.l.b16 %v194
      %v334 = vunpack.c.l.b16 %v195
      %v335 = vunpack.c.l.b16 %v196
      %v336 = vunpack.c.l.b16 %v197
      %v337 = vunpack.c.l.b16 %v198
      %v338 = vunpack.c.l.b16 %v199
      %v339 = vunpack.c.l.b16 %v200
      %v340 = vunpack.c.l.b16 %v201
      %v341 = vunpack.c.l.b16 %v202
      %v342 = vunpack.c.l.b16 %v203
      %v343 = vunpack.c.l.b16 %v204
      %v344 = vunpack.c.l.b16 %v205
      %v345 = vunpack.c.l.b16 %v206
      %v346 = vunpack.c.l.b16 %v207
      %v347 = vunpack.c.l.b16 %v208
      %v348 = vunpack.c.l.b16 %v209
      %v349 = vunpack.c.l.b16 %v210
      %v350 = vunpack.c.l.b16 %v211
      %v351 = vunpack.c.l.b16 %v212
      %v352 = vunpack.c.l.b16 %v213
      %v353 = vunpack.c.l.b16 %v214
      %v354 = vunpack.c.l.b16 %v215
      %v355 = vunpack.c.l.b16 %v216
      %v356 = vunpack.c.l.b16 %v217
      %v357 = vunpack.c.l.b16 %v218
      %v358 = vunpack.c.l.b16 %v219
      %v359 = vunpack.c.l.b16 %v220
      %v360 = vunpack.c.l.b16 %v221
      %v361 = vunpack.c.l.b16 %v222
      %v362 = vunpack.c.l.b16 %v223
      %v363 = vunpack.c.l.b16 %v224
      %v364 = vunpack.c.l.b16 %v225
      %v365 = vunpack.c.l.b16 %v226
      %v366 = vunpack.c.l.b16 %v227
      %v367 = vunpack.c.l.b16 %v228
      %v368 = vunpack.c.l.b16 %v229
      %v369 = vunpack.c.l.b16 %v230
      %v370 = vunpack.c.l.b16 %v231
      %v371 = vunpack.c.l.b16 %v232
      %v372 = vunpack.c.l.b16 %v233
      %v373 = vunpack.c.l.b16 %v234
      %v374 = vunpack.c.l.b16 %v235
      %v375 = vunpack.c.l.b16 %v236
      %v376 = vunpack.c.l.b16 %v237
      %v377 = vunpack.c.l.b16 %v238
      %v378 = vpack.c.b16 %v315, %v314
      %v379 = vpack.c.b16 %v317, %v316
      %v380 = vpack.c.b16 %v319, %v318
      %v381 = vpack.c.b16 %v321, %v320
      %v382 = vpack.c.b16 %v323, %v322
      %v383 = vpack.c.b16 %v325, %v324
      %v384 = vpack.c.b16 %v327, %v326
      %v385 = vpack.c.b16 %v329, %v328
      %v386 = vpack.c.b16 %v331, %v330
      %v387 = vpack.c.b16 %v333, %v332
      %v388 = vpack.c.b16 %v335, %v334
      %v389 = vpack.c.b16 %v337, %v336
      %v390 = vpack.c.b16 %v339, %v338
      %v391 = vpack.c.b16 %v341, %v340
      %v392 = vpack.c.b16 %v343, %v342
      %v393 = vpack.c.b16 %v345, %v344
      %v394 = vpack.c.b16 %v347, %v346
      %v395 = vpack.c.b16 %v349, %v348
      %v396 = vpack.c.b16 %v351, %v350
      %v397 = vpack.c.b16 %v353, %v352
      %v398 = vpack.c.b16 %v355, %v354
      %v399 = vpack.c.b16 %v357, %v356
      %v400 = vpack.c.b16 %v359, %v358
      %v401 = vpack.c.b16 %v361, %v360
      %v402 = vpack.c.b16 %v363, %v362
      %v403 = vpack.c.b16 %v365, %v364
      %v404 = vpack.c.b16 %v367, %v366
      %v405 = vpack.c.b16 %v369, %v368
      %v406 = vpack.c.b16 %v371, %v370
      %v407 = vpack.c.b16 %v373, %v372
      %v408 = vpack.c.b16 %v375, %v374
      %v409 = vpack.c.b16 %v377, %v376
      %v414 = vunpack.c.l.b16 %v239
      %v415 = vunpack.c.l.b16 %v240
      %v416 = vunpack.c.l.b16 %v241
      %v417 = vunpack.c.l.b16 %v242
      %v418 = vpack.c.b16 %v415, %v414
      %v419 = vpack.c.b16 %v417, %v416
      %vm422 = vcmask 261120
      %v424 = vsel %vm422, %v378, 0
      %v427 = vsel %vm422, %v379, 0
      %v430 = vsel %vm422, %v380, 0
      %v433 = vsel %vm422, %v381, 0
      %v436 = vsel %vm422, %v382, 0
      %v439 = vsel %vm422, %v383, 0
      %v442 = vsel %vm422, %v384, 0
      %v445 = vsel %vm422, %v385, 0
      %v448 = vsel %vm422, %v386, 0
      %v451 = vsel %vm422, %v387, 0
      %v454 = vsel %vm422, %v388, 0
      %v457 = vsel %vm422, %v389, 0
      %v460 = vsel %vm422, %v390, 0
      %v463 = vsel %vm422, %v391, 0
      %v466 = vsel %vm422, %v392, 0
      %v469 = vsel %vm422, %v393, 0
      %v472 = vsel %vm422, %v394, 0
      %v475 = vsel %vm422, %v395, 0
      %v478 = vsel %vm422, %v396, 0
      %v481 = vsel %vm422, %v397, 0
      %v484 = vsel %vm422, %v398, 0
      %v487 = vsel %vm422, %v399, 0
      %v490 = vsel %vm422, %v400, 0
      %v493 = vsel %vm422, %v401, 0
      %v496 = vsel %vm422, %v402, 0
      %v499 = vsel %vm422, %v403, 0
      %v502 = vsel %vm422, %v404, 0
      %v505 = vsel %vm422, %v405, 0
      %v508 = vsel %vm422, %v406, 0
      %v511 = vsel %vm422, %v407, 0
      %v514 = vsel %vm422, %v408, 0
      %v517 = vsel %vm422, %v409, 0
      %519 = vmatprep.subr.bf16.mxu0 0
      %520 = vmatpush1.bf16.msra.mxu0 %v418
      %521 = vmatprep.subr.bf16.mxu0 0
      %522 = vmatpush1.bf16.msra.mxu0 %v419
      %523 = vmatprep.subr.bf16.mxu0 0
      %524 = vmatpush1.bf16.msra.mxu0 0
      %525 = vmatprep.subr.bf16.mxu0 0
      %526 = vmatpush1.bf16.msra.mxu0 0
      %527 = vmatprep.subr.bf16.mxu0 0
      %528 = vmatpush1.bf16.msra.mxu0 0
      %529 = vmatprep.subr.bf16.mxu0 0
      %530 = vmatpush1.bf16.msra.mxu0 0
      %531 = vmatprep.subr.bf16.mxu0 0
      %532 = vmatpush1.bf16.msra.mxu0 0
      %533 = vmatprep.subr.bf16.mxu0 0
      %534 = vmatpush1.bf16.msra.mxu0 0
      %535 = vmatprep.subr.bf16.mxu0 0
      %536 = vmatpush1.bf16.msra.mxu0 0
      %537 = vmatprep.subr.bf16.mxu0 0
      %538 = vmatpush1.bf16.msra.mxu0 0
      %539 = vmatprep.subr.bf16.mxu0 0
      %540 = vmatpush1.bf16.msra.mxu0 0
      %541 = vmatprep.subr.bf16.mxu0 0
      %542 = vmatpush1.bf16.msra.mxu0 0
      %543 = vmatprep.subr.bf16.mxu0 0
      %544 = vmatpush1.bf16.msra.mxu0 0
      %545 = vmatprep.subr.bf16.mxu0 0
      %546 = vmatpush1.bf16.msra.mxu0 0
      %547 = vmatprep.subr.bf16.mxu0 0
      %548 = vmatpush1.bf16.msra.mxu0 0
      %549 = vmatprep.subr.bf16.mxu0 0
      %550 = vmatpush1.bf16.msra.mxu0 0
      %551 = vmatprep.mubr.bf16.mxu0 0
      %552 = vmatmul.mubr.bf16.gmra.mrb[0].mxu0 %v424
      %v553 = vpop.f32.mrb[0].mxu0
      %v554 = vadd.f32 %v248, %v553
      %v555 = vpop.f32.mrb[0].mxu0
      %v556 = vpop.f32.mrb[0].mxu0
      %v557 = vadd.f32 %v248, %v556
      %v558 = vpop.f32.mrb[0].mxu0
      %559 = vmatprep.mubr.bf16.mxu0 0
      %560 = vmatmul.mubr.bf16.gmra.mrb[0].mxu0 %v427
      %v561 = vpop.f32.mrb[0].mxu0
      %v562 = vadd.f32 %v248, %v561
      %v563 = vpop.f32.mrb[0].mxu0
      %v564 = vpop.f32.mrb[0].mxu0
      %v565 = vadd.f32 %v248, %v564
      %v566 = vpop.f32.mrb[0].mxu0
      %567 = vmatprep.mubr.bf16.mxu0 0
      %568 = vmatmul.mubr.bf16.gmra.mrb[0].mxu0 %v430
      %v569 = vpop.f32.mrb[0].mxu0
      %v570 = vadd.f32 %v248, %v569
      %v571 = vpop.f32.mrb[0].mxu0
      %v572 = vpop.f32.mrb[0].mxu0
      %v573 = vadd.f32 %v248, %v572
      %v574 = vpop.f32.mrb[0].mxu0
      %575 = vmatprep.mubr.bf16.mxu0 0
      %576 = vmatmul.mubr.bf16.gmra.mrb[0].mxu0 %v433
      %v577 = vpop.f32.mrb[0].mxu0
      %v578 = vadd.f32 %v248, %v577
      %v579 = vpop.f32.mrb[0].mxu0
      %v580 = vpop.f32.mrb[0].mxu0
      %v581 = vadd.f32 %v248, %v580
      %v582 = vpop.f32.mrb[0].mxu0
      %583 = vmatprep.mubr.bf16.mxu0 0
      %584 = vmatmul.mubr.bf16.gmra.mrb[0].mxu0 %v436
      %v585 = vpop.f32.mrb[0].mxu0
      %v586 = vadd.f32 %v248, %v585
      %v587 = vpop.f32.mrb[0].mxu0
      %v588 = vpop.f32.mrb[0].mxu0
      %v589 = vadd.f32 %v248, %v588
      %v590 = vpop.f32.mrb[0].mxu0
      %591 = vmatprep.mubr.bf16.mxu0 0
      %592 = vmatmul.mubr.bf16.gmra.mrb[0].mxu0 %v439
      %v593 = vpop.f32.mrb[0].mxu0
      %v594 = vadd.f32 %v248, %v593
      %v595 = vpop.f32.mrb[0].mxu0
      %v596 = vpop.f32.mrb[0].mxu0
      %v597 = vadd.f32 %v248, %v596
      %v598 = vpop.f32.mrb[0].mxu0
      %599 = vmatprep.mubr.bf16.mxu0 0
      %600 = vmatmul.mubr.bf16.gmra.mrb[0].mxu0 %v442
      %v601 = vpop.f32.mrb[0].mxu0
      %v602 = vadd.f32 %v248, %v601
      %v603 = vpop.f32.mrb[0].mxu0
      %v604 = vpop.f32.mrb[0].mxu0
      %v605 = vadd.f32 %v248, %v604
      %v606 = vpop.f32.mrb[0].mxu0
      %607 = vmatprep.mubr.bf16.mxu0 0
      %608 = vmatmul.mubr.bf16.gmra.mrb[0].mxu0 %v445
      %v609 = vpop.f32.mrb[0].mxu0
      %v610 = vadd.f32 %v248, %v609
      %v611 = vpop.f32.mrb[0].mxu0
      %v612 = vpop.f32.mrb[0].mxu0
      %v613 = vadd.f32 %v248, %v612
      %v614 = vpop.f32.mrb[0].mxu0
      %615 = vmatprep.mubr.bf16.mxu0 0
      %616 = vmatmul.mubr.bf16.gmra.mrb[0].mxu0 %v448
      %v617 = vpop.f32.mrb[0].mxu0
      %v618 = vadd.f32 %v248, %v617
      %v619 = vpop.f32.mrb[0].mxu0
      %v620 = vpop.f32.mrb[0].mxu0
      %v621 = vadd.f32 %v248, %v620
      %v622 = vpop.f32.mrb[0].mxu0
      %623 = vmatprep.mubr.bf16.mxu0 0
      %624 = vmatmul.mubr.bf16.gmra.mrb[0].mxu0 %v451
      %v625 = vpop.f32.mrb[0].mxu0
      %v626 = vadd.f32 %v248, %v625
      %v627 = vpop.f32.mrb[0].mxu0
      %v628 = vpop.f32.mrb[0].mxu0
      %v629 = vadd.f32 %v248, %v628
      %v630 = vpop.f32.mrb[0].mxu0
      %631 = vmatprep.mubr.bf16.mxu0 0
      %632 = vmatmul.mubr.bf16.gmra.mrb[0].mxu0 %v454
      %v633 = vpop.f32.mrb[0].mxu0
      %v634 = vadd.f32 %v248, %v633
      %v635 = vpop.f32.mrb[0].mxu0
      %v636 = vpop.f32.mrb[0].mxu0
      %v637 = vadd.f32 %v248, %v636
      %v638 = vpop.f32.mrb[0].mxu0
      %639 = vmatprep.mubr.bf16.mxu0 0
      %640 = vmatmul.mubr.bf16.gmra.mrb[0].mxu0 %v457
      %v641 = vpop.f32.mrb[0].mxu0
      %v642 = vadd.f32 %v248, %v641
      %v643 = vpop.f32.mrb[0].mxu0
      %v644 = vpop.f32.mrb[0].mxu0
      %v645 = vadd.f32 %v248, %v644
      %v646 = vpop.f32.mrb[0].mxu0
      %647 = vmatprep.mubr.bf16.mxu0 0
      %648 = vmatmul.mubr.bf16.gmra.mrb[0].mxu0 %v460
      %v649 = vpop.f32.mrb[0].mxu0
      %v650 = vadd.f32 %v248, %v649
      %v651 = vpop.f32.mrb[0].mxu0
      %v652 = vpop.f32.mrb[0].mxu0
      %v653 = vadd.f32 %v248, %v652
      %v654 = vpop.f32.mrb[0].mxu0
      %655 = vmatprep.mubr.bf16.mxu0 0
      %656 = vmatmul.mubr.bf16.gmra.mrb[0].mxu0 %v463
      %v657 = vpop.f32.mrb[0].mxu0
      %v658 = vadd.f32 %v248, %v657
      %v659 = vpop.f32.mrb[0].mxu0
      %v660 = vpop.f32.mrb[0].mxu0
      %v661 = vadd.f32 %v248, %v660
      %v662 = vpop.f32.mrb[0].mxu0
      %663 = vmatprep.mubr.bf16.mxu0 0
      %664 = vmatmul.mubr.bf16.gmra.mrb[0].mxu0 %v466
      %v665 = vpop.f32.mrb[0].mxu0
      %v666 = vadd.f32 %v248, %v665
      %v667 = vpop.f32.mrb[0].mxu0
      %v668 = vpop.f32.mrb[0].mxu0
      %v669 = vadd.f32 %v248, %v668
      %v670 = vpop.f32.mrb[0].mxu0
      %671 = vmatprep.mubr.bf16.mxu0 0
      %672 = vmatmul.mubr.bf16.gmra.mrb[0].mxu0 %v469
      %v673 = vpop.f32.mrb[0].mxu0
      %v674 = vadd.f32 %v248, %v673
      %v675 = vpop.f32.mrb[0].mxu0
      %v676 = vpop.f32.mrb[0].mxu0
      %v677 = vadd.f32 %v248, %v676
      %v678 = vpop.f32.mrb[0].mxu0
      %679 = vmatprep.mubr.bf16.mxu0 0
      %680 = vmatmul.mubr.bf16.gmra.mrb[0].mxu0 %v472
      %v681 = vpop.f32.mrb[0].mxu0
      %v682 = vadd.f32 %v248, %v681
      %v683 = vpop.f32.mrb[0].mxu0
      %v684 = vpop.f32.mrb[0].mxu0
      %v685 = vadd.f32 %v248, %v684
      %v686 = vpop.f32.mrb[0].mxu0
      %687 = vmatprep.mubr.bf16.mxu0 0
      %688 = vmatmul.mubr.bf16.gmra.mrb[0].mxu0 %v475
      %v689 = vpop.f32.mrb[0].mxu0
      %v690 = vadd.f32 %v248, %v689
      %v691 = vpop.f32.mrb[0].mxu0
      %v692 = vpop.f32.mrb[0].mxu0
      %v693 = vadd.f32 %v248, %v692
      %v694 = vpop.f32.mrb[0].mxu0
      %695 = vmatprep.mubr.bf16.mxu0 0
      %696 = vmatmul.mubr.bf16.gmra.mrb[0].mxu0 %v478
      %v697 = vpop.f32.mrb[0].mxu0
      %v698 = vadd.f32 %v248, %v697
      %v699 = vpop.f32.mrb[0].mxu0
      %v700 = vpop.f32.mrb[0].mxu0
      %v701 = vadd.f32 %v248, %v700
      %v702 = vpop.f32.mrb[0].mxu0
      %703 = vmatprep.mubr.bf16.mxu0 0
      %704 = vmatmul.mubr.bf16.gmra.mrb[0].mxu0 %v481
      %v705 = vpop.f32.mrb[0].mxu0
      %v706 = vadd.f32 %v248, %v705
      %v707 = vpop.f32.mrb[0].mxu0
      %v708 = vpop.f32.mrb[0].mxu0
      %v709 = vadd.f32 %v248, %v708
      %v710 = vpop.f32.mrb[0].mxu0
      %711 = vmatprep.mubr.bf16.mxu0 0
      %712 = vmatmul.mubr.bf16.gmra.mrb[0].mxu0 %v484
      %v713 = vpop.f32.mrb[0].mxu0
      %v714 = vadd.f32 %v248, %v713
      %v715 = vpop.f32.mrb[0].mxu0
      %v716 = vpop.f32.mrb[0].mxu0
      %v717 = vadd.f32 %v248, %v716
      %v718 = vpop.f32.mrb[0].mxu0
      %719 = vmatprep.mubr.bf16.mxu0 0
      %720 = vmatmul.mubr.bf16.gmra.mrb[0].mxu0 %v487
      %v721 = vpop.f32.mrb[0].mxu0
      %v722 = vadd.f32 %v248, %v721
      %v723 = vpop.f32.mrb[0].mxu0
      %v724 = vpop.f32.mrb[0].mxu0
      %v725 = vadd.f32 %v248, %v724
      %v726 = vpop.f32.mrb[0].mxu0
      %727 = vmatprep.mubr.bf16.mxu0 0
      %728 = vmatmul.mubr.bf16.gmra.mrb[0].mxu0 %v490
      %v729 = vpop.f32.mrb[0].mxu0
      %v730 = vadd.f32 %v248, %v729
      %v731 = vpop.f32.mrb[0].mxu0
      %v732 = vpop.f32.mrb[0].mxu0
      %v733 = vadd.f32 %v248, %v732
      %v734 = vpop.f32.mrb[0].mxu0
      %735 = vmatprep.mubr.bf16.mxu0 0
      %736 = vmatmul.mubr.bf16.gmra.mrb[0].mxu0 %v493
      %v737 = vpop.f32.mrb[0].mxu0
      %v738 = vadd.f32 %v248, %v737
      %v739 = vpop.f32.mrb[0].mxu0
      %v740 = vpop.f32.mrb[0].mxu0
      %v741 = vadd.f32 %v248, %v740
      %v742 = vpop.f32.mrb[0].mxu0
      %743 = vmatprep.mubr.bf16.mxu0 0
      %744 = vmatmul.mubr.bf16.gmra.mrb[0].mxu0 %v496
      %v745 = vpop.f32.mrb[0].mxu0
      %v746 = vadd.f32 %v248, %v745
      %v747 = vpop.f32.mrb[0].mxu0
      %v748 = vpop.f32.mrb[0].mxu0
      %v749 = vadd.f32 %v248, %v748
      %v750 = vpop.f32.mrb[0].mxu0
      %751 = vmatprep.mubr.bf16.mxu0 0
      %752 = vmatmul.mubr.bf16.gmra.mrb[0].mxu0 %v499
      %v753 = vpop.f32.mrb[0].mxu0
      %v754 = vadd.f32 %v248, %v753
      %v755 = vpop.f32.mrb[0].mxu0
      %v756 = vpop.f32.mrb[0].mxu0
      %v757 = vadd.f32 %v248, %v756
      %v758 = vpop.f32.mrb[0].mxu0
      %759 = vmatprep.mubr.bf16.mxu0 0
      %760 = vmatmul.mubr.bf16.gmra.mrb[0].mxu0 %v502
      %v761 = vpop.f32.mrb[0].mxu0
      %v762 = vadd.f32 %v248, %v761
      %v763 = vpop.f32.mrb[0].mxu0
      %v764 = vpop.f32.mrb[0].mxu0
      %v765 = vadd.f32 %v248, %v764
      %v766 = vpop.f32.mrb[0].mxu0
      %767 = vmatprep.mubr.bf16.mxu0 0
      %768 = vmatmul.mubr.bf16.gmra.mrb[0].mxu0 %v505
      %v769 = vpop.f32.mrb[0].mxu0
      %v770 = vadd.f32 %v248, %v769
      %v771 = vpop.f32.mrb[0].mxu0
      %v772 = vpop.f32.mrb[0].mxu0
      %v773 = vadd.f32 %v248, %v772
      %v774 = vpop.f32.mrb[0].mxu0
      %775 = vmatprep.mubr.bf16.mxu0 0
      %776 = vmatmul.mubr.bf16.gmra.mrb[0].mxu0 %v508
      %v777 = vpop.f32.mrb[0].mxu0
      %v778 = vadd.f32 %v248, %v777
      %v779 = vpop.f32.mrb[0].mxu0
      %v780 = vpop.f32.mrb[0].mxu0
      %v781 = vadd.f32 %v248, %v780
      %v782 = vpop.f32.mrb[0].mxu0
      %783 = vmatprep.mubr.bf16.mxu0 0
      %784 = vmatmul.mubr.bf16.gmra.mrb[0].mxu0 %v511
      %v785 = vpop.f32.mrb[0].mxu0
      %v786 = vadd.f32 %v248, %v785
      %v787 = vpop.f32.mrb[0].mxu0
      %v788 = vpop.f32.mrb[0].mxu0
      %v789 = vadd.f32 %v248, %v788
      %v790 = vpop.f32.mrb[0].mxu0
      %791 = vmatprep.mubr.bf16.mxu0 0
      %792 = vmatmul.mubr.bf16.gmra.mrb[0].mxu0 %v514
      %v793 = vpop.f32.mrb[0].mxu0
      %v794 = vadd.f32 %v248, %v793
      %v795 = vpop.f32.mrb[0].mxu0
      %v796 = vpop.f32.mrb[0].mxu0
      %v797 = vadd.f32 %v248, %v796
      %v798 = vpop.f32.mrb[0].mxu0
      %799 = vmatprep.mubr.bf16.mxu0 0
      %800 = vmatmul.mubr.bf16.gmra.mrb[0].mxu0 %v517
      %v801 = vpop.f32.mrb[0].mxu0
      %v802 = vadd.f32 %v248, %v801
      %v803 = vpop.f32.mrb[0].mxu0
      %v804 = vpop.f32.mrb[0].mxu0
      %v805 = vadd.f32 %v248, %v804
      %v806 = vpop.f32.mrb[0].mxu0
      %807 = vdwg.mxu0
      %v808 = vmul.f32 %v554, 0.5
      %v809 = vmul.f32 %v557, 0.5
      %v810 = vmul.f32 %v562, 0.5
      %v811 = vmul.f32 %v565, 0.5
      %v812 = vmul.f32 %v570, 0.5
      %v813 = vmul.f32 %v573, 0.5
      %v814 = vmul.f32 %v578, 0.5
      %v815 = vmul.f32 %v581, 0.5
      %v816 = vmul.f32 %v586, 0.5
      %v817 = vmul.f32 %v589, 0.5
      %v818 = vmul.f32 %v594, 0.5
      %v819 = vmul.f32 %v597, 0.5
      %v820 = vmul.f32 %v602, 0.5
      %v821 = vmul.f32 %v605, 0.5
      %v822 = vmul.f32 %v610, 0.5
      %v823 = vmul.f32 %v613, 0.5
      %v824 = vmul.f32 %v618, 0.5
      %v825 = vmul.f32 %v621, 0.5
      %v826 = vmul.f32 %v626, 0.5
      %v827 = vmul.f32 %v629, 0.5
      %v828 = vmul.f32 %v634, 0.5
      %v829 = vmul.f32 %v637, 0.5
      %v830 = vmul.f32 %v642, 0.5
      %v831 = vmul.f32 %v645, 0.5
      %v832 = vmul.f32 %v650, 0.5
      %v833 = vmul.f32 %v653, 0.5
      %v834 = vmul.f32 %v658, 0.5
      %v835 = vmul.f32 %v661, 0.5
      %v836 = vmul.f32 %v666, 0.5
      %v837 = vmul.f32 %v669, 0.5
      %v838 = vmul.f32 %v674, 0.5
      %v839 = vmul.f32 %v677, 0.5
      %v840 = vmul.f32 %v682, 0.5
      %v841 = vmul.f32 %v685, 0.5
      %v842 = vmul.f32 %v690, 0.5
      %v843 = vmul.f32 %v693, 0.5
      %v844 = vmul.f32 %v698, 0.5
      %v845 = vmul.f32 %v701, 0.5
      %v846 = vmul.f32 %v706, 0.5
      %v847 = vmul.f32 %v709, 0.5
      %v848 = vmul.f32 %v714, 0.5
      %v849 = vmul.f32 %v717, 0.5
      %v850 = vmul.f32 %v722, 0.5
      %v851 = vmul.f32 %v725, 0.5
      %v852 = vmul.f32 %v730, 0.5
      %v853 = vmul.f32 %v733, 0.5
      %v854 = vmul.f32 %v738, 0.5
      %v855 = vmul.f32 %v741, 0.5
      %v856 = vmul.f32 %v746, 0.5
      %v857 = vmul.f32 %v749, 0.5
      %v858 = vmul.f32 %v754, 0.5
      %v859 = vmul.f32 %v757, 0.5
      %v860 = vmul.f32 %v762, 0.5
      %v861 = vmul.f32 %v765, 0.5
      %v862 = vmul.f32 %v770, 0.5
      %v863 = vmul.f32 %v773, 0.5
      %v864 = vmul.f32 %v778, 0.5
      %v865 = vmul.f32 %v781, 0.5
      %v866 = vmul.f32 %v786, 0.5
      %v867 = vmul.f32 %v789, 0.5
      %v868 = vmul.f32 %v794, 0.5
      %v869 = vmul.f32 %v797, 0.5
      %v870 = vmul.f32 %v802, 0.5
      %v871 = vmul.f32 %v805, 0.5
      %v872 = vtanh.pop %v808
      %v873 = vtanh.pop %v809
      %v874 = vtanh.pop %v810
      %v875 = vtanh.pop %v811
      %v876 = vtanh.pop %v812
      %v877 = vtanh.pop %v813
      %v878 = vtanh.pop %v814
      %v879 = vtanh.pop %v815
      %v880 = vtanh.pop %v816
      %v881 = vtanh.pop %v817
      %v882 = vtanh.pop %v818
      %v883 = vtanh.pop %v819
      %v884 = vtanh.pop %v820
      %v885 = vtanh.pop %v821
      %v886 = vtanh.pop %v822
      %v887 = vtanh.pop %v823
      %v888 = vtanh.pop %v824
      %v889 = vtanh.pop %v825
      %v890 = vtanh.pop %v826
      %v891 = vtanh.pop %v827
      %v892 = vtanh.pop %v828
      %v893 = vtanh.pop %v829
      %v894 = vtanh.pop %v830
      %v895 = vtanh.pop %v831
      %v896 = vtanh.pop %v832
      %v897 = vtanh.pop %v833
      %v898 = vtanh.pop %v834
      %v899 = vtanh.pop %v835
      %v900 = vtanh.pop %v836
      %v901 = vtanh.pop %v837
      %v902 = vtanh.pop %v838
      %v903 = vtanh.pop %v839
      %v904 = vtanh.pop %v840
      %v905 = vtanh.pop %v841
      %v906 = vtanh.pop %v842
      %v907 = vtanh.pop %v843
      %v908 = vtanh.pop %v844
      %v909 = vtanh.pop %v845
      %v910 = vtanh.pop %v846
      %v911 = vtanh.pop %v847
      %v912 = vtanh.pop %v848
      %v913 = vtanh.pop %v849
      %v914 = vtanh.pop %v850
      %v915 = vtanh.pop %v851
      %v916 = vtanh.pop %v852
      %v917 = vtanh.pop %v853
      %v918 = vtanh.pop %v854
      %v919 = vtanh.pop %v855
      %v920 = vtanh.pop %v856
      %v921 = vtanh.pop %v857
      %v922 = vtanh.pop %v858
      %v923 = vtanh.pop %v859
      %v924 = vtanh.pop %v860
      %v925 = vtanh.pop %v861
      %v926 = vtanh.pop %v862
      %v927 = vtanh.pop %v863
      %v928 = vtanh.pop %v864
      %v929 = vtanh.pop %v865
      %v930 = vtanh.pop %v866
      %v931 = vtanh.pop %v867
      %v932 = vtanh.pop %v868
      %v933 = vtanh.pop %v869
      %v934 = vtanh.pop %v870
      %v935 = vtanh.pop %v871
      %v936 = vadd.f32 %v872, 1.0
      %v937 = vadd.f32 %v873, 1.0
      %v938 = vadd.f32 %v874, 1.0
      %v939 = vadd.f32 %v875, 1.0
      %v940 = vadd.f32 %v876, 1.0
      %v941 = vadd.f32 %v877, 1.0
      %v942 = vadd.f32 %v878, 1.0
      %v943 = vadd.f32 %v879, 1.0
      %v944 = vadd.f32 %v880, 1.0
      %v945 = vadd.f32 %v881, 1.0
      %v946 = vadd.f32 %v882, 1.0
      %v947 = vadd.f32 %v883, 1.0
      %v948 = vadd.f32 %v884, 1.0
      %v949 = vadd.f32 %v885, 1.0
      %v950 = vadd.f32 %v886, 1.0
      %v951 = vadd.f32 %v887, 1.0
      %v952 = vadd.f32 %v888, 1.0
      %v953 = vadd.f32 %v889, 1.0
      %v954 = vadd.f32 %v890, 1.0
      %v955 = vadd.f32 %v891, 1.0
      %v956 = vadd.f32 %v892, 1.0
      %v957 = vadd.f32 %v893, 1.0
      %v958 = vadd.f32 %v894, 1.0
      %v959 = vadd.f32 %v895, 1.0
      %v960 = vadd.f32 %v896, 1.0
      %v961 = vadd.f32 %v897, 1.0
      %v962 = vadd.f32 %v898, 1.0
      %v963 = vadd.f32 %v899, 1.0
      %v964 = vadd.f32 %v900, 1.0
      %v965 = vadd.f32 %v901, 1.0
      %v966 = vadd.f32 %v902, 1.0
      %v967 = vadd.f32 %v903, 1.0
      %v968 = vadd.f32 %v904, 1.0
      %v969 = vadd.f32 %v905, 1.0
      %v970 = vadd.f32 %v906, 1.0
      %v971 = vadd.f32 %v907, 1.0
      %v972 = vadd.f32 %v908, 1.0
      %v973 = vadd.f32 %v909, 1.0
      %v974 = vadd.f32 %v910, 1.0
      %v975 = vadd.f32 %v911, 1.0
      %v976 = vadd.f32 %v912, 1.0
      %v977 = vadd.f32 %v913, 1.0
      %v978 = vadd.f32 %v914, 1.0
      %v979 = vadd.f32 %v915, 1.0
      %v980 = vadd.f32 %v916, 1.0
      %v981 = vadd.f32 %v917, 1.0
      %v982 = vadd.f32 %v918, 1.0
      %v983 = vadd.f32 %v919, 1.0
      %v984 = vadd.f32 %v920, 1.0
      %v985 = vadd.f32 %v921, 1.0
      %v986 = vadd.f32 %v922, 1.0
      %v987 = vadd.f32 %v923, 1.0
      %v988 = vadd.f32 %v924, 1.0
      %v989 = vadd.f32 %v925, 1.0
      %v990 = vadd.f32 %v926, 1.0
      %v991 = vadd.f32 %v927, 1.0
      %v992 = vadd.f32 %v928, 1.0
      %v993 = vadd.f32 %v929, 1.0
      %v994 = vadd.f32 %v930, 1.0
      %v995 = vadd.f32 %v931, 1.0
      %v996 = vadd.f32 %v932, 1.0
      %v997 = vadd.f32 %v933, 1.0
      %v998 = vadd.f32 %v934, 1.0
      %v999 = vadd.f32 %v935, 1.0
      %v1000 = vmul.f32 %v936, 0.5
      %v1001 = vmul.f32 %v937, 0.5
      %v1002 = vmul.f32 %v938, 0.5
      %v1003 = vmul.f32 %v939, 0.5
      %v1004 = vmul.f32 %v940, 0.5
      %v1005 = vmul.f32 %v941, 0.5
      %v1006 = vmul.f32 %v942, 0.5
      %v1007 = vmul.f32 %v943, 0.5
      %v1008 = vmul.f32 %v944, 0.5
      %v1009 = vmul.f32 %v945, 0.5
      %v1010 = vmul.f32 %v946, 0.5
      %v1011 = vmul.f32 %v947, 0.5
      %v1012 = vmul.f32 %v948, 0.5
      %v1013 = vmul.f32 %v949, 0.5
      %v1014 = vmul.f32 %v950, 0.5
      %v1015 = vmul.f32 %v951, 0.5
      %v1016 = vmul.f32 %v952, 0.5
      %v1017 = vmul.f32 %v953, 0.5
      %v1018 = vmul.f32 %v954, 0.5
      %v1019 = vmul.f32 %v955, 0.5
      %v1020 = vmul.f32 %v956, 0.5
      %v1021 = vmul.f32 %v957, 0.5
      %v1022 = vmul.f32 %v958, 0.5
      %v1023 = vmul.f32 %v959, 0.5
      %v1024 = vmul.f32 %v960, 0.5
      %v1025 = vmul.f32 %v961, 0.5
      %v1026 = vmul.f32 %v962, 0.5
      %v1027 = vmul.f32 %v963, 0.5
      %v1028 = vmul.f32 %v964, 0.5
      %v1029 = vmul.f32 %v965, 0.5
      %v1030 = vmul.f32 %v966, 0.5
      %v1031 = vmul.f32 %v967, 0.5
      %v1032 = vmul.f32 %v968, 0.5
      %v1033 = vmul.f32 %v969, 0.5
      %v1034 = vmul.f32 %v970, 0.5
      %v1035 = vmul.f32 %v971, 0.5
      %v1036 = vmul.f32 %v972, 0.5
      %v1037 = vmul.f32 %v973, 0.5
      %v1038 = vmul.f32 %v974, 0.5
      %v1039 = vmul.f32 %v975, 0.5
      %v1040 = vmul.f32 %v976, 0.5
      %v1041 = vmul.f32 %v977, 0.5
      %v1042 = vmul.f32 %v978, 0.5
      %v1043 = vmul.f32 %v979, 0.5
      %v1044 = vmul.f32 %v980, 0.5
      %v1045 = vmul.f32 %v981, 0.5
      %v1046 = vmul.f32 %v982, 0.5
      %v1047 = vmul.f32 %v983, 0.5
      %v1048 = vmul.f32 %v984, 0.5
      %v1049 = vmul.f32 %v985, 0.5
      %v1050 = vmul.f32 %v986, 0.5
      %v1051 = vmul.f32 %v987, 0.5
      %v1052 = vmul.f32 %v988, 0.5
      %v1053 = vmul.f32 %v989, 0.5
      %v1054 = vmul.f32 %v990, 0.5
      %v1055 = vmul.f32 %v991, 0.5
      %v1056 = vmul.f32 %v992, 0.5
      %v1057 = vmul.f32 %v993, 0.5
      %v1058 = vmul.f32 %v994, 0.5
      %v1059 = vmul.f32 %v995, 0.5
      %v1060 = vmul.f32 %v996, 0.5
      %v1061 = vmul.f32 %v997, 0.5
      %v1062 = vmul.f32 %v998, 0.5
      %v1063 = vmul.f32 %v999, 0.5
      %1064 = vst [vmem:[%s172] sm:$0xff] %v1000
      %1065 = vst [vmem:[%s172 + $0x8] sm:$0xff] %v1001
      %1066 = vst [vmem:[%s172 + $0x10] sm:$0xff] %v1002
      %1067 = vst [vmem:[%s172 + $0x18] sm:$0xff] %v1003
      %1068 = vst [vmem:[%s172 + $0x20] sm:$0xff] %v1004
      %1069 = vst [vmem:[%s172 + $0x28] sm:$0xff] %v1005
      %1070 = vst [vmem:[%s172 + $0x30] sm:$0xff] %v1006
      %1071 = vst [vmem:[%s172 + $0x38] sm:$0xff] %v1007
      %1072 = vst [vmem:[%s172 + $0x40] sm:$0xff] %v1008
      %1073 = vst [vmem:[%s172 + $0x48] sm:$0xff] %v1009
      %1074 = vst [vmem:[%s172 + $0x50] sm:$0xff] %v1010
      %1075 = vst [vmem:[%s172 + $0x58] sm:$0xff] %v1011
      %1076 = vst [vmem:[%s172 + $0x60] sm:$0xff] %v1012
      %1077 = vst [vmem:[%s172 + $0x68] sm:$0xff] %v1013
      %1078 = vst [vmem:[%s172 + $0x70] sm:$0xff] %v1014
      %1079 = vst [vmem:[%s172 + $0x78] sm:$0xff] %v1015
      %1080 = vst [vmem:[%s172 + $0x80] sm:$0xff] %v1016
      %1081 = vst [vmem:[%s172 + $0x88] sm:$0xff] %v1017
      %1082 = vst [vmem:[%s172 + $0x90] sm:$0xff] %v1018
      %1083 = vst [vmem:[%s172 + $0x98] sm:$0xff] %v1019
      %1084 = vst [vmem:[%s172 + $0xa0] sm:$0xff] %v1020
      %1085 = vst [vmem:[%s172 + $0xa8] sm:$0xff] %v1021
      %1086 = vst [vmem:[%s172 + $0xb0] sm:$0xff] %v1022
      %1087 = vst [vmem:[%s172 + $0xb8] sm:$0xff] %v1023
      %1088 = vst [vmem:[%s172 + $0xc0] sm:$0xff] %v1024
      %1089 = vst [vmem:[%s172 + $0xc8] sm:$0xff] %v1025
      %1090 = vst [vmem:[%s172 + $0xd0] sm:$0xff] %v1026
      %1091 = vst [vmem:[%s172 + $0xd8] sm:$0xff] %v1027
      %1092 = vst [vmem:[%s172 + $0xe0] sm:$0xff] %v1028
      %1093 = vst [vmem:[%s172 + $0xe8] sm:$0xff] %v1029
      %1094 = vst [vmem:[%s172 + $0xf0] sm:$0xff] %v1030
      %1095 = vst [vmem:[%s172 + $0xf8] sm:$0xff] %v1031
      %1096 = vst [vmem:[%s172 + $0x100] sm:$0xff] %v1032
      %1097 = vst [vmem:[%s172 + $0x108] sm:$0xff] %v1033
      %1098 = vst [vmem:[%s172 + $0x110] sm:$0xff] %v1034
      %1099 = vst [vmem:[%s172 + $0x118] sm:$0xff] %v1035
      %1100 = vst [vmem:[%s172 + $0x120] sm:$0xff] %v1036
      %1101 = vst [vmem:[%s172 + $0x128] sm:$0xff] %v1037
      %1102 = vst [vmem:[%s172 + $0x130] sm:$0xff] %v1038
      %1103 = vst [vmem:[%s172 + $0x138] sm:$0xff] %v1039
      %1104 = vst [vmem:[%s172 + $0x140] sm:$0xff] %v1040
      %1105 = vst [vmem:[%s172 + $0x148] sm:$0xff] %v1041
      %1106 = vst [vmem:[%s172 + $0x150] sm:$0xff] %v1042
      %1107 = vst [vmem:[%s172 + $0x158] sm:$0xff] %v1043
      %1108 = vst [vmem:[%s172 + $0x160] sm:$0xff] %v1044
      %1109 = vst [vmem:[%s172 + $0x168] sm:$0xff] %v1045
      %1110 = vst [vmem:[%s172 + $0x170] sm:$0xff] %v1046
      %1111 = vst [vmem:[%s172 + $0x178] sm:$0xff] %v1047
      %1112 = vst [vmem:[%s172 + $0x180] sm:$0xff] %v1048
      %1113 = vst [vmem:[%s172 + $0x188] sm:$0xff] %v1049
      %1114 = vst [vmem:[%s172 + $0x190] sm:$0xff] %v1050
      %1115 = vst [vmem:[%s172 + $0x198] sm:$0xff] %v1051
      %1116 = vst [vmem:[%s172 + $0x1a0] sm:$0xff] %v1052
      %1117 = vst [vmem:[%s172 + $0x1a8] sm:$0xff] %v1053
      %1118 = vst [vmem:[%s172 + $0x1b0] sm:$0xff] %v1054
      %1119 = vst [vmem:[%s172 + $0x1b8] sm:$0xff] %v1055
      %1120 = vst [vmem:[%s172 + $0x1c0] sm:$0xff] %v1056
      %1121 = vst [vmem:[%s172 + $0x1c8] sm:$0xff] %v1057
      %1122 = vst [vmem:[%s172 + $0x1d0] sm:$0xff] %v1058
      %1123 = vst [vmem:[%s172 + $0x1d8] sm:$0xff] %v1059
      %1124 = vst [vmem:[%s172 + $0x1e0] sm:$0xff] %v1060
      %1125 = vst [vmem:[%s172 + $0x1e8] sm:$0xff] %v1061
      %1126 = vst [vmem:[%s172 + $0x1f0] sm:$0xff] %v1062
      %1127 = vst [vmem:[%s172 + $0x1f8] sm:$0xff] %v1063
      %s1128 = smul.u32 64, %s14
      %p1129 = scmp.lt.s32.totalorder %s1128, 255
      %s1130 = scalar_select %p1129, %s1128, 255
      %s1131 = smul.addr %s1130, 8
      %s1132 = scalar_lea.vmem %s3, %s1131
      // Predicated region
      $region33: #{vae_forward.17} parent=31 // pred_check
        %p1133 = pneg %p100
      $region34: #{vae_forward.17} parent=31 // pred_check_branch
        %1135 = sbr.rel (%p1133) target = $region36
      $region35: #{vae_forward.17} parent=31 // pred_region
        %s1136 = smul.u32 64, %s14
      $region36: #{vae_forward.17} parent=31 // pred_fallthru
        _
    $region32: #{vae_forward.17} parent=5 // pred_fallthru
      _
    %p1137 = scmp.le.s32.totalorder 2, %s9
    // Predicated region
    $region37: #{vae_forward.17} parent=5 // pred_check
      %p1138 = pneg %p1137
    $region38: #{vae_forward.17} parent=5 // pred_check_branch
      %1140 = sbr.rel (%p1138) target = $region40
    $region39: #{vae_forward.17} parent=5 // pred_region
      %s1141 = ssub.s32 %s9, 2
      // Predicated region
      $region41: #{vae_forward.17} parent=39 // pred_check
        %p1142 = pneg %p106
      $region42: #{vae_forward.17} parent=39 // pred_check_branch
        %1144 = sbr.rel (%p1142) target = $region44
      $region43: #{vae_forward.17} parent=39 // pred_region
        %s1145 = smul.u32 64, %s15
        %p1146 = scmp.lt.s32.totalorder %s1145, 255
        %s1147 = scalar_select %p1146, %s1145, 255
        %s1148 = smul.addr %s1147, 8
        %s1149 = scalar_lea.vmem %s3, %s1148
      $region44: #{vae_forward.17} parent=39 // pred_fallthru
        _
    $region40: #{vae_forward.17} parent=5 // pred_fallthru
      _
  $region6: #{vae_forward.17} parent=0 // loop_footer
    %s13 = sadd.s32 1, %s9
  $region7: #{vae_forward.17} parent=0 // loop_footer_branch
    %8 = sbr.rel target = $region3
  $region8: #{vae_forward.17} parent=0 // loop_exit
    _

</llo_original>
